<compile_context>
chip_gen: v7x
topology: tpu7x:2x2x1
jax: 0.10.0
libtpu: 0.0.40
codegen_flags: <defaults>
</compile_context>

<pallas_src>
import functools

import jax
import jax.numpy as jnp
from jax import lax
from jax.experimental import pallas as pl
from jax.experimental.pallas import tpu as pltpu

N_ACTIONS = 7  # env.action_space.n (SIMPLE_MOVEMENT SuperMarioBros) — synthetic

_VMEM_LIMIT = 32 << 20  # safe on every generation incl. v7x (64 MiB physical)


# ----------------------------------------------------------------------------
# Pallas kernels
# ----------------------------------------------------------------------------
def _mm_bias_kernel(x_ref, w_ref, b_ref, o_ref, *, relu):
    # x: (TM, K) bf16, w: (K, N) bf16, b: (1, N) f32
    acc = jnp.dot(x_ref[...], w_ref[...], preferred_element_type=jnp.float32)
    acc = acc + b_ref[...]
    if relu:
        acc = jnp.maximum(acc, 0.0)
    o_ref[...] = acc.astype(o_ref.dtype)


def _pick_tile_m(m, target=512):
    """Largest multiple-of-8 tile <= target dividing m; if none divides, use a
    ragged grid (Pallas masks the boundary writes)."""
    if m <= target:
        return m
    t = (target // 8) * 8
    while t >= 8:
        if m % t == 0:
            return t
        t -= 8
    return (target // 8) * 8


def grouped_matmul_bias(x, w, b, *, relu, out_dtype=jnp.float32, target_tile_m=512):
    """Block-diagonal (per-group-weight) matmul:  y[g] = act(x[g] @ w[g] + b[g]).
    x: (G, M, K) bf16, w: (G, K, N) bf16, b: (G, 1, N) f32 -> (G, M, N)."""
    G, M, K = x.shape
    N = w.shape[2]
    tm = _pick_tile_m(M, target_tile_m)
    kernel = functools.partial(_mm_bias_kernel, relu=relu)
    return pl.pallas_call(
        kernel,
        out_shape=jax.ShapeDtypeStruct((G, M, N), out_dtype),
        grid=(G, pl.cdiv(M, tm)),
        in_specs=[
            pl.BlockSpec((None, tm, K), lambda g, m: (g, m, 0)),
            pl.BlockSpec((None, K, N), lambda g, m: (g, 0, 0)),   # resident per g
            pl.BlockSpec((None, 1, N), lambda g, m: (g, 0, 0)),
        ],
        out_specs=pl.BlockSpec((None, tm, N), lambda g, m: (g, m, 0)),
        compiler_params=pltpu.CompilerParams(
            dimension_semantics=("parallel", "parallel"),
            vmem_limit_bytes=_VMEM_LIMIT,
        ),
    )(x, w, b)


def _fc_head_kernel(x_ref, w1_ref, b1_ref, w2_ref, b2_ref, o_ref):
    # fused Linear(3136,512) + ReLU + Linear(512,128-padded) for one head tile
    h = jnp.dot(x_ref[...], w1_ref[...], preferred_element_type=jnp.float32)
    h = jnp.maximum(h + b1_ref[...], 0.0).astype(w2_ref.dtype)
    o = jnp.dot(h, w2_ref[...], preferred_element_type=jnp.float32) + b2_ref[...]
    o_ref[...] = o.astype(o_ref.dtype)


def fc_head(x, w1, b1, w2, b2, *, target_tile_m=256):
    """x: (2, B, 3136) bf16 -> (2, B, 128) f32; grid over (head, M tiles).
    Weights are indexed only by the head axis, so they stay VMEM-resident
    across M tiles."""
    G, M, K = x.shape
    H = w1.shape[2]
    N = w2.shape[2]
    tm = _pick_tile_m(M, target_tile_m)
    return pl.pallas_call(
        _fc_head_kernel,
        out_shape=jax.ShapeDtypeStruct((G, M, N), jnp.float32),
        grid=(G, pl.cdiv(M, tm)),
        in_specs=[
            pl.BlockSpec((None, tm, K), lambda g, m: (g, m, 0)),
            pl.BlockSpec((None, K, H), lambda g, m: (g, 0, 0)),
            pl.BlockSpec((None, 1, H), lambda g, m: (g, 0, 0)),
            pl.BlockSpec((None, H, N), lambda g, m: (g, 0, 0)),
            pl.BlockSpec((None, 1, N), lambda g, m: (g, 0, 0)),
        ],
        out_specs=pl.BlockSpec((None, tm, N), lambda g, m: (g, m, 0)),
        compiler_params=pltpu.CompilerParams(
            dimension_semantics=("parallel", "parallel"),
            vmem_limit_bytes=_VMEM_LIMIT,
        ),
    )(x, w1, b1, w2, b2)


# ----------------------------------------------------------------------------
# Patch extraction glue (one XLA op per conv layer; feature order = (C, KH, KW),
# matching PyTorch's weight.reshape(OC, IC*KH*KW))
# ----------------------------------------------------------------------------
def _patches(x, ksize, stride, dn):
    return lax.conv_general_dilated_patches(
        x, (ksize, ksize), (stride, stride), "VALID", dimension_numbers=dn)


# ----------------------------------------------------------------------------
# Params: PyTorch-layout init, then a one-time repack into the kernel layout
# ----------------------------------------------------------------------------
def init_head(key, n_out):
    ks = jax.random.split(key, 10)
    scale = 0.02
    return {
        "c1_w": jax.random.normal(ks[0], (32, 4, 8, 8), jnp.float32) * scale,
        "c1_b": jax.random.normal(ks[1], (32,), jnp.float32) * scale,
        "c2_w": jax.random.normal(ks[2], (64, 32, 4, 4), jnp.float32) * scale,
        "c2_b": jax.random.normal(ks[3], (64,), jnp.float32) * scale,
        "c3_w": jax.random.normal(ks[4], (64, 64, 3, 3), jnp.float32) * scale,
        "c3_b": jax.random.normal(ks[5], (64,), jnp.float32) * scale,
        "fc1_w": jax.random.normal(ks[6], (3136, 512), jnp.float32) * scale,
        "fc1_b": jax.random.normal(ks[7], (512,), jnp.float32) * scale,
        "fc2_w": jax.random.normal(ks[8], (512, n_out), jnp.float32) * scale,
        "fc2_b": jax.random.normal(ks[9], (n_out,), jnp.float32) * scale,
    }


def prepare_params(actor_p, critic_p, n_pad=128):
    """One-time repack: fuse/stack actor+critic, permute fc1 rows to the NHWC
    flatten order, pad fc2 to 128 lanes, cast matmul weights to bf16."""
    def conv_w(w):  # (OC, IC, KH, KW) -> (IC*KH*KW, OC)
        return w.reshape(w.shape[0], -1).T

    def fc1_perm(w):  # rows (C,H,W) -> (H,W,C) to match NHWC flatten
        return w.reshape(64, 7, 7, 512).transpose(1, 2, 0, 3).reshape(3136, 512)

    def fc2_pad(w, b):
        wp = jnp.zeros((512, n_pad), w.dtype).at[:, : w.shape[1]].set(w)
        bp = jnp.zeros((n_pad,), b.dtype).at[: b.shape[0]].set(b)
        return wp, bp

    p = {}
    # conv1: shared input -> fuse along OC (N = 64, lane-denser output)
    p["c1_w"] = jnp.concatenate(
        [conv_w(actor_p["c1_w"]), conv_w(critic_p["c1_w"])], axis=1
    )[None].astype(jnp.bfloat16)                                        # (1,256,64)
    p["c1_b"] = jnp.concatenate(
        [actor_p["c1_b"], critic_p["c1_b"]])[None, None, :].astype(jnp.float32)
    # conv2 / conv3: group-stacked weights (group 0 = actor, 1 = critic)
    for name in ("c2", "c3"):
        p[name + "_w"] = jnp.stack(
            [conv_w(actor_p[name + "_w"]), conv_w(critic_p[name + "_w"])]
        ).astype(jnp.bfloat16)
        p[name + "_b"] = jnp.stack(
            [actor_p[name + "_b"], critic_p[name + "_b"]])[:, None, :].astype(jnp.float32)
    # fc1 / fc2
    p["fc1_w"] = jnp.stack(
        [fc1_perm(actor_p["fc1_w"]), fc1_perm(critic_p["fc1_w"])]).astype(jnp.bfloat16)
    p["fc1_b"] = jnp.stack(
        [actor_p["fc1_b"], critic_p["fc1_b"]])[:, None, :].astype(jnp.float32)
    wa, ba = fc2_pad(actor_p["fc2_w"], actor_p["fc2_b"])
    wc, bc = fc2_pad(critic_p["fc2_w"], critic_p["fc2_b"])
    p["fc2_w"] = jnp.stack([wa, wc]).astype(jnp.bfloat16)               # (2,512,128)
    p["fc2_b"] = jnp.stack([ba, bc])[:, None, :].astype(jnp.float32)    # (2,1,128)
    return p


# ----------------------------------------------------------------------------
# Forward
# ----------------------------------------------------------------------------
@jax.jit
def model_forward(params, obs):
    """obs: (B, 4, 84, 84) float32 NCHW (PyTorch convention)."""
    B = obs.shape[0]
    obs = obs.astype(jnp.bfloat16)

    # conv1 (shared patches, actor+critic fused along N): 84x84 -> 20x20
    p1 = _patches(obs, 8, 4, ("NCHW", "OIHW", "NHWC"))          # (B,20,20,256)
    y1 = grouped_matmul_bias(p1.reshape(1, -1, p1.shape[-1]),
                             params["c1_w"], params["c1_b"],
                             relu=True, out_dtype=jnp.bfloat16)  # (1,B*400,64)
    oh1 = p1.shape[1]
    y1 = y1.reshape(B, oh1, oh1, 64)
    # split heads, stack along batch (actor first, then critic)
    x2 = jnp.concatenate([y1[..., :32], y1[..., 32:]], axis=0)   # (2B,20,20,32)

    # conv2: 20x20 -> 9x9
    p2 = _patches(x2, 4, 2, ("NHWC", "OIHW", "NHWC"))            # (2B,9,9,512)
    y2 = grouped_matmul_bias(p2.reshape(2, -1, p2.shape[-1]),
                             params["c2_w"], params["c2_b"],
                             relu=True, out_dtype=jnp.bfloat16)  # (2,B*81,64)
    oh2 = p2.shape[1]
    x3 = y2.reshape(2 * B, oh2, oh2, 64)

    # conv3: 9x9 -> 7x7
    p3 = _patches(x3, 3, 1, ("NHWC", "OIHW", "NHWC"))            # (2B,7,7,576)
    y3 = grouped_matmul_bias(p3.reshape(2, -1, p3.shape[-1]),
                             params["c3_w"], params["c3_b"],
                             relu=True, out_dtype=jnp.bfloat16)  # (2,B*49,64)
    oh3 = p3.shape[1]

    # flatten in (H, W, C) order (fc1 weight rows were permuted at init to match)
    x_fc = y3.reshape(2, B, oh3 * oh3 * 64)                      # (2,B,3136)
    out = fc_head(x_fc, params["fc1_w"], params["fc1_b"],
                  params["fc2_w"], params["fc2_b"])              # (2,B,128) f32

    logits = out[0, :, :N_ACTIONS]          # actor head
    value = out[1, :, 0]                    # critic head, reshape(-1)
    # TODO(synk): torch.distributions.Categorical has no Pallas/array equivalent;
    # we return the logits that parameterize it.
    return logits, value


if __name__ == "__main__":
    key = jax.random.PRNGKey(0)
    k_obs, k_actor, k_critic = jax.random.split(key, 3)

    # Input spatial size is fixed by Linear(3136, 512): (B, 4, 84, 84); small B.
    obs = jax.random.uniform(k_obs, (2, 4, 84, 84), jnp.float32)

    actor_params = init_head(k_actor, N_ACTIONS)
    critic_params = init_head(k_critic, 1)
    params = prepare_params(actor_params, critic_params)

    logits, value = model_forward(params, obs)
    jax.block_until_ready((logits, value))

    assert logits.shape == (2, N_ACTIONS)
    assert value.shape == (2,)
    print("KERNEL_OK")
</pallas_src>

<mosaic_0001>
module attributes {stable_mosaic.version = 11 : i64} {
  func.func @_mm_bias_kernel(%arg0: i32, %arg1: i32, %arg2: memref<1x400x256xbf16, #tpu.memory_space<vmem>>, %arg3: memref<1x256x64xbf16, #tpu.memory_space<vmem>>, %arg4: memref<1x1x64xf32, #tpu.memory_space<vmem>>, %arg5: memref<1x400x64xbf16, #tpu.memory_space<vmem>>) attributes {dimension_semantics = [#tpu.dimension_semantics<parallel>, #tpu.dimension_semantics<parallel>], iteration_bounds = array<i64: 1, 2>, scalar_prefetch = 0 : i64, scratch_operands = 0 : i64, tpu.core_type = #tpu.core_type<tc>, window_params = [{transform_indices = @transform_0, window_bounds = array<i64: 1, 400, 256>}, {transform_indices = @transform_1, window_bounds = array<i64: 1, 256, 64>}, {transform_indices = @transform_2, window_bounds = array<i64: 1, 1, 64>}, {transform_indices = @transform_3, window_bounds = array<i64: 1, 400, 64>}]} {
    %c0 = arith.constant 0 : index
    %c0_0 = arith.constant 0 : index
    %c0_1 = arith.constant 0 : index
    %0 = vector.load %arg2[%c0, %c0_0, %c0_1] : memref<1x400x256xbf16, #tpu.memory_space<vmem>>, vector<1x400x256xbf16>
    %1 = vector.shape_cast %0 : vector<1x400x256xbf16> to vector<400x256xbf16>
    %c0_2 = arith.constant 0 : index
    %c0_3 = arith.constant 0 : index
    %c0_4 = arith.constant 0 : index
    %2 = vector.load %arg3[%c0_2, %c0_3, %c0_4] : memref<1x256x64xbf16, #tpu.memory_space<vmem>>, vector<1x256x64xbf16>
    %3 = vector.shape_cast %2 : vector<1x256x64xbf16> to vector<256x64xbf16>
    %cst = arith.constant dense<0.000000e+00> : vector<400x64xf32>
    %4 = tpu.matmul %1, %3, %cst {dimension_numbers = #tpu.dot_dimension_numbers<[1], [0], [0], [1], [0, 0, 1, 1], [], []>} : vector<400x256xbf16>, vector<256x64xbf16>, vector<400x64xf32> -> vector<400x64xf32>
    %c0_5 = arith.constant 0 : index
    %c0_6 = arith.constant 0 : index
    %c0_7 = arith.constant 0 : index
    %5 = vector.load %arg4[%c0_5, %c0_6, %c0_7] : memref<1x1x64xf32, #tpu.memory_space<vmem>>, vector<1x1x64xf32>
    %6 = vector.shape_cast %5 : vector<1x1x64xf32> to vector<1x64xf32>
    %7 = vector.broadcast %6 : vector<1x64xf32> to vector<400x64xf32>
    %8 = arith.addf %4, %7 : vector<400x64xf32>
    %cst_8 = arith.constant 0.000000e+00 : f32
    %9 = vector.broadcast %cst_8 : f32 to vector<400x64xf32>
    %10 = arith.maximumf %8, %9 : vector<400x64xf32>
    %11 = arith.truncf %10 : vector<400x64xf32> to vector<400x64xbf16>
    %c0_9 = arith.constant 0 : index
    %c0_10 = arith.constant 0 : index
    %c0_11 = arith.constant 0 : index
    %12 = vector.load %arg5[%c0_9, %c0_10, %c0_11] : memref<1x400x64xbf16, #tpu.memory_space<vmem>>, vector<1x400x64xbf16>
    %13 = vector.shape_cast %12 : vector<1x400x64xbf16> to vector<400x64xbf16>
    %14 = vector.shape_cast %11 : vector<400x64xbf16> to vector<1x400x64xbf16>
    tpu.vector_store %arg5[%c0_9, %c0_10, %c0_11], %14 {strides = array<i32>} : memref<1x400x64xbf16, #tpu.memory_space<vmem>>, vector<1x400x64xbf16>,
    return
  }
  func.func @transform_0(%arg0: i32, %arg1: i32) -> (i32, i32, i32) {
    %c0_i32 = arith.constant 0 : i32
    %c0_i32_0 = arith.constant 0 : i32
    return %arg0, %arg1, %c0_i32 : i32, i32, i32
  }
  func.func @transform_1(%arg0: i32, %arg1: i32) -> (i32, i32, i32) {
    %c0_i32 = arith.constant 0 : i32
    %c0_i32_0 = arith.constant 0 : i32
    %c0_i32_1 = arith.constant 0 : i32
    return %arg0, %c0_i32, %c0_i32_0 : i32, i32, i32
  }
  func.func @transform_2(%arg0: i32, %arg1: i32) -> (i32, i32, i32) {
    %c0_i32 = arith.constant 0 : i32
    %c0_i32_0 = arith.constant 0 : i32
    %c0_i32_1 = arith.constant 0 : i32
    return %arg0, %c0_i32, %c0_i32_0 : i32, i32, i32
  }
  func.func @transform_3(%arg0: i32, %arg1: i32) -> (i32, i32, i32) {
    %c0_i32 = arith.constant 0 : i32
    %c0_i32_0 = arith.constant 0 : i32
    return %arg0, %arg1, %c0_i32 : i32, i32, i32
  }
}

module attributes {stable_mosaic.version = 11 : i64} {
  func.func @_mm_bias_kernel(%arg0: i32, %arg1: i32, %arg2: memref<1x162x512xbf16, #tpu.memory_space<vmem>>, %arg3: memref<1x512x64xbf16, #tpu.memory_space<vmem>>, %arg4: memref<1x1x64xf32, #tpu.memory_space<vmem>>, %arg5: memref<1x162x64xbf16, #tpu.memory_space<vmem>>) attributes {dimension_semantics = [#tpu.dimension_semantics<parallel>, #tpu.dimension_semantics<parallel>], iteration_bounds = array<i64: 2, 1>, scalar_prefetch = 0 : i64, scratch_operands = 0 : i64, tpu.core_type = #tpu.core_type<tc>, window_params = [{transform_indices = @transform_0, window_bounds = array<i64: 1, 162, 512>}, {transform_indices = @transform_1, window_bounds = array<i64: 1, 512, 64>}, {transform_indices = @transform_2, window_bounds = array<i64: 1, 1, 64>}, {transform_indices = @transform_3, window_bounds = array<i64: 1, 162, 64>}]} {
    %c0 = arith.constant 0 : index
    %c0_0 = arith.constant 0 : index
    %c0_1 = arith.constant 0 : index
    %0 = vector.load %arg2[%c0, %c0_0, %c0_1] : memref<1x162x512xbf16, #tpu.memory_space<vmem>>, vector<1x162x512xbf16>
    %1 = vector.shape_cast %0 : vector<1x162x512xbf16> to vector<162x512xbf16>
    %c0_2 = arith.constant 0 : index
    %c0_3 = arith.constant 0 : index
    %c0_4 = arith.constant 0 : index
    %2 = vector.load %arg3[%c0_2, %c0_3, %c0_4] : memref<1x512x64xbf16, #tpu.memory_space<vmem>>, vector<1x512x64xbf16>
    %3 = vector.shape_cast %2 : vector<1x512x64xbf16> to vector<512x64xbf16>
    %cst = arith.constant dense<0.000000e+00> : vector<162x64xf32>
    %4 = tpu.matmul %1, %3, %cst {dimension_numbers = #tpu.dot_dimension_numbers<[1], [0], [0], [1], [0, 0, 1, 1], [], []>} : vector<162x512xbf16>, vector<512x64xbf16>, vector<162x64xf32> -> vector<162x64xf32>
    %c0_5 = arith.constant 0 : index
    %c0_6 = arith.constant 0 : index
    %c0_7 = arith.constant 0 : index
    %5 = vector.load %arg4[%c0_5, %c0_6, %c0_7] : memref<1x1x64xf32, #tpu.memory_space<vmem>>, vector<1x1x64xf32>
    %6 = vector.shape_cast %5 : vector<1x1x64xf32> to vector<1x64xf32>
    %7 = vector.broadcast %6 : vector<1x64xf32> to vector<162x64xf32>
    %8 = arith.addf %4, %7 : vector<162x64xf32>
    %cst_8 = arith.constant 0.000000e+00 : f32
    %9 = vector.broadcast %cst_8 : f32 to vector<162x64xf32>
    %10 = arith.maximumf %8, %9 : vector<162x64xf32>
    %11 = arith.truncf %10 : vector<162x64xf32> to vector<162x64xbf16>
    %c0_9 = arith.constant 0 : index
    %c0_10 = arith.constant 0 : index
    %c0_11 = arith.constant 0 : index
    %12 = vector.load %arg5[%c0_9, %c0_10, %c0_11] : memref<1x162x64xbf16, #tpu.memory_space<vmem>>, vector<1x162x64xbf16>
    %13 = vector.shape_cast %12 : vector<1x162x64xbf16> to vector<162x64xbf16>
    %14 = vector.shape_cast %11 : vector<162x64xbf16> to vector<1x162x64xbf16>
    tpu.vector_store %arg5[%c0_9, %c0_10, %c0_11], %14 {strides = array<i32>} : memref<1x162x64xbf16, #tpu.memory_space<vmem>>, vector<1x162x64xbf16>,
    return
  }
  func.func @transform_0(%arg0: i32, %arg1: i32) -> (i32, i32, i32) {
    %c0_i32 = arith.constant 0 : i32
    %c0_i32_0 = arith.constant 0 : i32
    return %arg0, %arg1, %c0_i32 : i32, i32, i32
  }
  func.func @transform_1(%arg0: i32, %arg1: i32) -> (i32, i32, i32) {
    %c0_i32 = arith.constant 0 : i32
    %c0_i32_0 = arith.constant 0 : i32
    %c0_i32_1 = arith.constant 0 : i32
    return %arg0, %c0_i32, %c0_i32_0 : i32, i32, i32
  }
  func.func @transform_2(%arg0: i32, %arg1: i32) -> (i32, i32, i32) {
    %c0_i32 = arith.constant 0 : i32
    %c0_i32_0 = arith.constant 0 : i32
    %c0_i32_1 = arith.constant 0 : i32
    return %arg0, %c0_i32, %c0_i32_0 : i32, i32, i32
  }
  func.func @transform_3(%arg0: i32, %arg1: i32) -> (i32, i32, i32) {
    %c0_i32 = arith.constant 0 : i32
    %c0_i32_0 = arith.constant 0 : i32
    return %arg0, %arg1, %c0_i32 : i32, i32, i32
  }
}

module attributes {stable_mosaic.version = 11 : i64} {
  func.func @_mm_bias_kernel(%arg0: i32, %arg1: i32, %arg2: memref<1x98x576xbf16, #tpu.memory_space<vmem>>, %arg3: memref<1x576x64xbf16, #tpu.memory_space<vmem>>, %arg4: memref<1x1x64xf32, #tpu.memory_space<vmem>>, %arg5: memref<1x98x64xbf16, #tpu.memory_space<vmem>>) attributes {dimension_semantics = [#tpu.dimension_semantics<parallel>, #tpu.dimension_semantics<parallel>], iteration_bounds = array<i64: 2, 1>, scalar_prefetch = 0 : i64, scratch_operands = 0 : i64, tpu.core_type = #tpu.core_type<tc>, window_params = [{transform_indices = @transform_0, window_bounds = array<i64: 1, 98, 576>}, {transform_indices = @transform_1, window_bounds = array<i64: 1, 576, 64>}, {transform_indices = @transform_2, window_bounds = array<i64: 1, 1, 64>}, {transform_indices = @transform_3, window_bounds = array<i64: 1, 98, 64>}]} {
    %c0 = arith.constant 0 : index
    %c0_0 = arith.constant 0 : index
    %c0_1 = arith.constant 0 : index
    %0 = vector.load %arg2[%c0, %c0_0, %c0_1] : memref<1x98x576xbf16, #tpu.memory_space<vmem>>, vector<1x98x576xbf16>
    %1 = vector.shape_cast %0 : vector<1x98x576xbf16> to vector<98x576xbf16>
    %c0_2 = arith.constant 0 : index
    %c0_3 = arith.constant 0 : index
    %c0_4 = arith.constant 0 : index
    %2 = vector.load %arg3[%c0_2, %c0_3, %c0_4] : memref<1x576x64xbf16, #tpu.memory_space<vmem>>, vector<1x576x64xbf16>
    %3 = vector.shape_cast %2 : vector<1x576x64xbf16> to vector<576x64xbf16>
    %cst = arith.constant dense<0.000000e+00> : vector<98x64xf32>
    %4 = tpu.matmul %1, %3, %cst {dimension_numbers = #tpu.dot_dimension_numbers<[1], [0], [0], [1], [0, 0, 1, 1], [], []>} : vector<98x576xbf16>, vector<576x64xbf16>, vector<98x64xf32> -> vector<98x64xf32>
    %c0_5 = arith.constant 0 : index
    %c0_6 = arith.constant 0 : index
    %c0_7 = arith.constant 0 : index
    %5 = vector.load %arg4[%c0_5, %c0_6, %c0_7] : memref<1x1x64xf32, #tpu.memory_space<vmem>>, vector<1x1x64xf32>
    %6 = vector.shape_cast %5 : vector<1x1x64xf32> to vector<1x64xf32>
    %7 = vector.broadcast %6 : vector<1x64xf32> to vector<98x64xf32>
    %8 = arith.addf %4, %7 : vector<98x64xf32>
    %cst_8 = arith.constant 0.000000e+00 : f32
    %9 = vector.broadcast %cst_8 : f32 to vector<98x64xf32>
    %10 = arith.maximumf %8, %9 : vector<98x64xf32>
    %11 = arith.truncf %10 : vector<98x64xf32> to vector<98x64xbf16>
    %c0_9 = arith.constant 0 : index
    %c0_10 = arith.constant 0 : index
    %c0_11 = arith.constant 0 : index
    %12 = vector.load %arg5[%c0_9, %c0_10, %c0_11] : memref<1x98x64xbf16, #tpu.memory_space<vmem>>, vector<1x98x64xbf16>
    %13 = vector.shape_cast %12 : vector<1x98x64xbf16> to vector<98x64xbf16>
    %14 = vector.shape_cast %11 : vector<98x64xbf16> to vector<1x98x64xbf16>
    tpu.vector_store %arg5[%c0_9, %c0_10, %c0_11], %14 {strides = array<i32>} : memref<1x98x64xbf16, #tpu.memory_space<vmem>>, vector<1x98x64xbf16>,
    return
  }
  func.func @transform_0(%arg0: i32, %arg1: i32) -> (i32, i32, i32) {
    %c0_i32 = arith.constant 0 : i32
    %c0_i32_0 = arith.constant 0 : i32
    return %arg0, %arg1, %c0_i32 : i32, i32, i32
  }
  func.func @transform_1(%arg0: i32, %arg1: i32) -> (i32, i32, i32) {
    %c0_i32 = arith.constant 0 : i32
    %c0_i32_0 = arith.constant 0 : i32
    %c0_i32_1 = arith.constant 0 : i32
    return %arg0, %c0_i32, %c0_i32_0 : i32, i32, i32
  }
  func.func @transform_2(%arg0: i32, %arg1: i32) -> (i32, i32, i32) {
    %c0_i32 = arith.constant 0 : i32
    %c0_i32_0 = arith.constant 0 : i32
    %c0_i32_1 = arith.constant 0 : i32
    return %arg0, %c0_i32, %c0_i32_0 : i32, i32, i32
  }
  func.func @transform_3(%arg0: i32, %arg1: i32) -> (i32, i32, i32) {
    %c0_i32 = arith.constant 0 : i32
    %c0_i32_0 = arith.constant 0 : i32
    return %arg0, %arg1, %c0_i32 : i32, i32, i32
  }
}

module attributes {stable_mosaic.version = 11 : i64} {
  func.func @_fc_head_kernel(%arg0: i32, %arg1: i32, %arg2: memref<1x2x3136xbf16, #tpu.memory_space<vmem>>, %arg3: memref<1x3136x512xbf16, #tpu.memory_space<vmem>>, %arg4: memref<1x1x512xf32, #tpu.memory_space<vmem>>, %arg5: memref<1x512x128xbf16, #tpu.memory_space<vmem>>, %arg6: memref<1x1x128xf32, #tpu.memory_space<vmem>>, %arg7: memref<1x2x128xf32, #tpu.memory_space<vmem>>) attributes {dimension_semantics = [#tpu.dimension_semantics<parallel>, #tpu.dimension_semantics<parallel>], iteration_bounds = array<i64: 2, 1>, scalar_prefetch = 0 : i64, scratch_operands = 0 : i64, tpu.core_type = #tpu.core_type<tc>, window_params = [{transform_indices = @transform_0, window_bounds = array<i64: 1, 2, 3136>}, {transform_indices = @transform_1, window_bounds = array<i64: 1, 3136, 512>}, {transform_indices = @transform_2, window_bounds = array<i64: 1, 1, 512>}, {transform_indices = @transform_3, window_bounds = array<i64: 1, 512, 128>}, {transform_indices = @transform_4, window_bounds = array<i64: 1, 1, 128>}, {transform_indices = @transform_5, window_bounds = array<i64: 1, 2, 128>}]} {
    %c0 = arith.constant 0 : index
    %c0_0 = arith.constant 0 : index
    %c0_1 = arith.constant 0 : index
    %0 = vector.load %arg2[%c0, %c0_0, %c0_1] : memref<1x2x3136xbf16, #tpu.memory_space<vmem>>, vector<1x2x3136xbf16>
    %1 = vector.shape_cast %0 : vector<1x2x3136xbf16> to vector<2x3136xbf16>
    %c0_2 = arith.constant 0 : index
    %c0_3 = arith.constant 0 : index
    %c0_4 = arith.constant 0 : index
    %2 = vector.load %arg3[%c0_2, %c0_3, %c0_4] : memref<1x3136x512xbf16, #tpu.memory_space<vmem>>, vector<1x3136x512xbf16>
    %3 = vector.shape_cast %2 : vector<1x3136x512xbf16> to vector<3136x512xbf16>
    %cst = arith.constant dense<0.000000e+00> : vector<2x512xf32>
    %4 = tpu.matmul %1, %3, %cst {dimension_numbers = #tpu.dot_dimension_numbers<[1], [0], [0], [1], [0, 0, 1, 1], [], []>} : vector<2x3136xbf16>, vector<3136x512xbf16>, vector<2x512xf32> -> vector<2x512xf32>
    %c0_5 = arith.constant 0 : index
    %c0_6 = arith.constant 0 : index
    %c0_7 = arith.constant 0 : index
    %5 = vector.load %arg4[%c0_5, %c0_6, %c0_7] : memref<1x1x512xf32, #tpu.memory_space<vmem>>, vector<1x1x512xf32>
    %6 = vector.shape_cast %5 : vector<1x1x512xf32> to vector<1x512xf32>
    %7 = vector.broadcast %6 : vector<1x512xf32> to vector<2x512xf32>
    %8 = arith.addf %4, %7 : vector<2x512xf32>
    %cst_8 = arith.constant 0.000000e+00 : f32
    %9 = vector.broadcast %cst_8 : f32 to vector<2x512xf32>
    %10 = arith.maximumf %8, %9 : vector<2x512xf32>
    %11 = arith.truncf %10 : vector<2x512xf32> to vector<2x512xbf16>
    %c0_9 = arith.constant 0 : index
    %c0_10 = arith.constant 0 : index
    %c0_11 = arith.constant 0 : index
    %12 = vector.load %arg5[%c0_9, %c0_10, %c0_11] : memref<1x512x128xbf16, #tpu.memory_space<vmem>>, vector<1x512x128xbf16>
    %13 = vector.shape_cast %12 : vector<1x512x128xbf16> to vector<512x128xbf16>
    %cst_12 = arith.constant dense<0.000000e+00> : vector<2x128xf32>
    %14 = tpu.matmul %11, %13, %cst_12 {dimension_numbers = #tpu.dot_dimension_numbers<[1], [0], [0], [1], [0, 0, 1, 1], [], []>} : vector<2x512xbf16>, vector<512x128xbf16>, vector<2x128xf32> -> vector<2x128xf32>
    %c0_13 = arith.constant 0 : index
    %c0_14 = arith.constant 0 : index
    %c0_15 = arith.constant 0 : index
    %15 = vector.load %arg6[%c0_13, %c0_14, %c0_15] : memref<1x1x128xf32, #tpu.memory_space<vmem>>, vector<1x1x128xf32>
    %16 = vector.shape_cast %15 : vector<1x1x128xf32> to vector<1x128xf32>
    %17 = vector.broadcast %16 : vector<1x128xf32> to vector<2x128xf32>
    %18 = arith.addf %14, %17 : vector<2x128xf32>
    %c0_16 = arith.constant 0 : index
    %c0_17 = arith.constant 0 : index
    %c0_18 = arith.constant 0 : index
    %19 = vector.load %arg7[%c0_16, %c0_17, %c0_18] : memref<1x2x128xf32, #tpu.memory_space<vmem>>, vector<1x2x128xf32>
    %20 = vector.shape_cast %19 : vector<1x2x128xf32> to vector<2x128xf32>
    %21 = vector.shape_cast %18 : vector<2x128xf32> to vector<1x2x128xf32>
    tpu.vector_store %arg7[%c0_16, %c0_17, %c0_18], %21 {strides = array<i32>} : memref<1x2x128xf32, #tpu.memory_space<vmem>>, vector<1x2x128xf32>,
    return
  }
  func.func @transform_0(%arg0: i32, %arg1: i32) -> (i32, i32, i32) {
    %c0_i32 = arith.constant 0 : i32
    %c0_i32_0 = arith.constant 0 : i32
    return %arg0, %arg1, %c0_i32 : i32, i32, i32
  }
  func.func @transform_1(%arg0: i32, %arg1: i32) -> (i32, i32, i32) {
    %c0_i32 = arith.constant 0 : i32
    %c0_i32_0 = arith.constant 0 : i32
    %c0_i32_1 = arith.constant 0 : i32
    return %arg0, %c0_i32, %c0_i32_0 : i32, i32, i32
  }
  func.func @transform_2(%arg0: i32, %arg1: i32) -> (i32, i32, i32) {
    %c0_i32 = arith.constant 0 : i32
    %c0_i32_0 = arith.constant 0 : i32
    %c0_i32_1 = arith.constant 0 : i32
    return %arg0, %c0_i32, %c0_i32_0 : i32, i32, i32
  }
  func.func @transform_3(%arg0: i32, %arg1: i32) -> (i32, i32, i32) {
    %c0_i32 = arith.constant 0 : i32
    %c0_i32_0 = arith.constant 0 : i32
    %c0_i32_1 = arith.constant 0 : i32
    return %arg0, %c0_i32, %c0_i32_0 : i32, i32, i32
  }
  func.func @transform_4(%arg0: i32, %arg1: i32) -> (i32, i32, i32) {
    %c0_i32 = arith.constant 0 : i32
    %c0_i32_0 = arith.constant 0 : i32
    %c0_i32_1 = arith.constant 0 : i32
    return %arg0, %c0_i32, %c0_i32_0 : i32, i32, i32
  }
  func.func @transform_5(%arg0: i32, %arg1: i32) -> (i32, i32, i32) {
    %c0_i32 = arith.constant 0 : i32
    %c0_i32_0 = arith.constant 0 : i32
    return %arg0, %arg1, %c0_i32 : i32, i32, i32
  }
}

</mosaic_0001>

<llo_original>
// kernel: model_forward.4
$region0: #{model_forward.4}
  #allocation0 [shape = 'u32[]', space=smem, size = 0x4, offset = 0x4, fixed_abs, tag = 'smem constant byte address 0x4 - core index']
  #allocation1 [shape = 'u32[144,128]{1,0:T(1,128)}', space=vmem, size = 0x12000, scoped, tag = 'internal scratch']
  %s0 = inlined_call_operand.vmem [shape: bf16[1,800,256], index: 0, kind: input, shape index: {}]
  %s1 = inlined_call_operand.vmem [shape: bf16[1,256,64], index: 1, kind: input, shape index: {}]
  %s2 = inlined_call_operand.vmem [shape: f32[1,1,64], index: 2, kind: input, shape index: {}]
  %s3 = inlined_call_operand.vmem [shape: bf16[1,800,64], index: 3, kind: output, shape index: {}]
  %s4 = sld [smem:[#allocation0]]
  $region45: #{model_forward.4} parent=0
    _
  %s6 = ssub.s32 1, %s4
  %s7 = scalar_select 0, %s6, %s4
  loop: start=0, step=1, limit=4
  $region2: #{model_forward.4} parent=0 // loop_pre_header
    _
  $region3: #{model_forward.4} parent=0 // loop_header
    %s9 = sphi 0, %s13
    %p10 = scmp.ge.s32.totalorder %s9, 4
    %s16 = sphi 0, %s28
    %s17 = sphi 0, %s24
    %s18 = sphi 0, %s16
    %s19 = sphi 0, %s17
    %s20 = sphi 0, %s18
    %s21 = sphi 0, %s19
    %s33 = sphi 0, %s35
    %s36 = sphi 0, %s33
    %s37 = sphi 0, %s36
    %s53 = sphi 0, %s37
    %s59 = sphi 0, %s61
    %s62 = sphi 0, %s59
    %s63 = sphi 0, %s62
    %s79 = sphi 0, %s63
    %s85 = sphi 0, %s87
    %s88 = sphi 0, %s85
    %s89 = sphi 0, %s88
    %s105 = sphi 0, %s89
    %s113 = sphi 0, %s115
    %s116 = sphi 0, %s113
    %s117 = sphi 0, %s116
    %s133 = sphi 0, %s117
  $region4: #{model_forward.4} parent=0 // loop_header_branch
    %12 = sbr.rel (%p10) target = $region8
  $region5: #{model_forward.4} parent=0 // loop_body
    %s14 = ssub.s32 %s9, 1
    %s15 = ssub.s32 %s9, 2
    %s22 = sadd.s32 1, %s17
    %p23 = scmp.ge.s32.totalorder %s22, 2
    %s24 = scalar_select %p23, 0, %s22
    %s25 = sadd.s32 1, %s16
    %s26 = scalar_select %p23, %s25, %s16
    %p27 = scmp.ge.s32.totalorder %s26, 1
    %s28 = scalar_select %p27, 0, %s26
    %s29 = ssub.s32 %s16, %s28
    %s30 = ssub.s32 %s17, %s24
    %s31 = sor.u32 %s29, %s30
    %p32 = scmp.eq.s32.totalorder %s31, 0
    %s34 = sadd.s32 %s33, 1
    %s35 = scalar_select %p32, %s33, %s34
    %p38 = pneg %p32
    %p39 = scmp.eq.s32.totalorder %s9, 1
    %p40 = por %p38, %p39
    %p41 = scmp.ne.s32.totalorder %s33, %s36
    %p42 = scmp.eq.s32.totalorder %s9, 0
    %p43 = por %p41, %p42
    %p44 = scmp.ne.s32.totalorder %s33, %s36
    %p45 = scmp.eq.s32.totalorder %s14, 1
    %p46 = por %p44, %p45
    %p47 = scmp.ne.s32.totalorder %s36, %s37
    %p48 = scmp.eq.s32.totalorder %s14, 0
    %p49 = por %p47, %p48
    %p50 = scmp.ne.s32.totalorder %s36, %s37
    %p51 = scmp.eq.s32.totalorder %s15, 1
    %p52 = por %p50, %p51
    %p54 = scmp.ne.s32.totalorder %s37, %s53
    %p55 = scmp.eq.s32.totalorder %s15, 0
    %p56 = por %p54, %p55
    %s57 = ssub.s32 %s16, %s28
    %p58 = scmp.eq.s32.totalorder %s57, 0
    %s60 = sadd.s32 %s59, 1
    %s61 = scalar_select %p58, %s59, %s60
    %p64 = pneg %p58
    %p65 = scmp.eq.s32.totalorder %s9, 1
    %p66 = por %p64, %p65
    %p67 = scmp.ne.s32.totalorder %s59, %s62
    %p68 = scmp.eq.s32.totalorder %s9, 0
    %p69 = por %p67, %p68
    %p70 = scmp.ne.s32.totalorder %s59, %s62
    %p71 = scmp.eq.s32.totalorder %s14, 1
    %p72 = por %p70, %p71
    %p73 = scmp.ne.s32.totalorder %s62, %s63
    %p74 = scmp.eq.s32.totalorder %s14, 0
    %p75 = por %p73, %p74
    %p76 = scmp.ne.s32.totalorder %s62, %s63
    %p77 = scmp.eq.s32.totalorder %s15, 1
    %p78 = por %p76, %p77
    %p80 = scmp.ne.s32.totalorder %s63, %s79
    %p81 = scmp.eq.s32.totalorder %s15, 0
    %p82 = por %p80, %p81
    %s83 = ssub.s32 %s16, %s28
    %p84 = scmp.eq.s32.totalorder %s83, 0
    %s86 = sadd.s32 %s85, 1
    %s87 = scalar_select %p84, %s85, %s86
    %p90 = pneg %p84
    %p91 = scmp.eq.s32.totalorder %s9, 1
    %p92 = por %p90, %p91
    %p93 = scmp.ne.s32.totalorder %s85, %s88
    %p94 = scmp.eq.s32.totalorder %s9, 0
    %p95 = por %p93, %p94
    %p96 = scmp.ne.s32.totalorder %s85, %s88
    %p97 = scmp.eq.s32.totalorder %s14, 1
    %p98 = por %p96, %p97
    %p99 = scmp.ne.s32.totalorder %s88, %s89
    %p100 = scmp.eq.s32.totalorder %s14, 0
    %p101 = por %p99, %p100
    %p102 = scmp.ne.s32.totalorder %s88, %s89
    %p103 = scmp.eq.s32.totalorder %s15, 1
    %p104 = por %p102, %p103
    %p106 = scmp.ne.s32.totalorder %s89, %s105
    %p107 = scmp.eq.s32.totalorder %s15, 0
    %p108 = por %p106, %p107
    %s109 = ssub.s32 %s16, %s28
    %s110 = ssub.s32 %s17, %s24
    %s111 = sor.u32 %s109, %s110
    %p112 = scmp.eq.s32.totalorder %s111, 0
    %s114 = sadd.s32 %s113, 1
    %s115 = scalar_select %p112, %s113, %s114
    %p118 = pneg %p112
    %p119 = scmp.eq.s32.totalorder %s9, 1
    %p120 = por %p118, %p119
    %p121 = scmp.ne.s32.totalorder %s113, %s116
    %p122 = scmp.eq.s32.totalorder %s9, 0
    %p123 = por %p121, %p122
    %p124 = scmp.ne.s32.totalorder %s113, %s116
    %p125 = scmp.eq.s32.totalorder %s14, 1
    %p126 = por %p124, %p125
    %p127 = scmp.ne.s32.totalorder %s116, %s117
    %p128 = scmp.eq.s32.totalorder %s14, 0
    %p129 = por %p127, %p128
    %p130 = scmp.ne.s32.totalorder %s116, %s117
    %p131 = scmp.eq.s32.totalorder %s15, 1
    %p132 = por %p130, %p131
    %p134 = scmp.ne.s32.totalorder %s117, %s133
    %p135 = scmp.eq.s32.totalorder %s15, 0
    %p136 = por %p134, %p135
    %p137 = scmp.le.s32.totalorder 1, %s9
    %p138 = scmp.lt.s32.totalorder %s9, 3
    %p139 = pnand %p137, %p138
    %p140 = pneg %p139
    // Predicated region
    $region9: #{model_forward.4} parent=5 // pred_check
      _
    $region10: #{model_forward.4} parent=5 // pred_check_branch
      %142 = sbr.rel (%p139) target = $region12
    $region11: #{model_forward.4} parent=5 // pred_region
      %s143 = ssub.s32 %s9, 1
      // Predicated region
      $region13: #{model_forward.4} parent=11 // pred_check
        %p144 = pneg %p75
      $region14: #{model_forward.4} parent=11 // pred_check_branch
        %146 = sbr.rel (%p144) target = $region16
      $region15: #{model_forward.4} parent=11 // pred_region
        %p147 = scmp.lt.s32.totalorder %s18, 0
        %s148 = scalar_select %p147, %s18, 0
        %s149 = smul.addr %s148, 32
        %s150 = smul.addr %s149, 4
        %s151 = scalar_lea.vmem %s1, %s150
      $region16: #{model_forward.4} parent=11 // pred_fallthru
        _
      // Predicated region
      $region17: #{model_forward.4} parent=11 // pred_check
        %p152 = pneg %p101
      $region18: #{model_forward.4} parent=11 // pred_check_branch
        %154 = sbr.rel (%p152) target = $region20
      $region19: #{model_forward.4} parent=11 // pred_region
        %p155 = scmp.lt.s32.totalorder %s18, 0
        %s156 = scalar_select %p155, %s18, 0
        %s157 = scalar_lea.vmem %s2, %s156
      $region20: #{model_forward.4} parent=11 // pred_fallthru
        _
    $region12: #{model_forward.4} parent=5 // pred_fallthru
      _
    %p158 = scmp.lt.s32.totalorder %s9, 2
    // Predicated region
    $region21: #{model_forward.4} parent=5 // pred_check
      %p159 = pneg %p158
    $region22: #{model_forward.4} parent=5 // pred_check_branch
      %161 = sbr.rel (%p159) target = $region24
    $region23: #{model_forward.4} parent=5 // pred_region
      // Predicated region
      $region25: #{model_forward.4} parent=23 // pred_check
        %p162 = pneg %p43
      $region26: #{model_forward.4} parent=23 // pred_check_branch
        %164 = sbr.rel (%p162) target = $region28
      $region27: #{model_forward.4} parent=23 // pred_region
        %s165 = smul.u32 50, %s17
        %p166 = scmp.lt.s32.totalorder %s16, 0
        %s167 = scalar_select %p166, %s16, 0
        %p168 = scmp.lt.s32.totalorder %s165, 99
        %s169 = scalar_select %p168, %s165, 99
        %s170 = smul.addr %s169, 2
        %s171 = smul.addr %s167, 200
        %s172 = sadd.s32 %s170, %s171
        %s173 = smul.addr %s172, 4
        %s174 = scalar_lea.vmem %s0, %s173
        %s175 = smul.u32 50, %s17
      $region28: #{model_forward.4} parent=23 // pred_fallthru
        _
    $region24: #{model_forward.4} parent=5 // pred_fallthru
      _
    %p176 = scmp.le.s32.totalorder 1, %s9
    %p177 = scmp.lt.s32.totalorder %s9, 3
    %p178 = pnand %p176, %p177
    %p179 = pneg %p178
    // Predicated region
    $region29: #{model_forward.4} parent=5 // pred_check
      _
    $region30: #{model_forward.4} parent=5 // pred_check_branch
      %181 = sbr.rel (%p178) target = $region32
    $region31: #{model_forward.4} parent=5 // pred_region
      %s182 = ssub.s32 %s9, 1
      %s183 = smul.u32 50, %s19
      %p184 = scmp.lt.s32.totalorder %s18, 0
      %s185 = scalar_select %p184, %s18, 0
      %p186 = scmp.lt.s32.totalorder %s183, 99
      %s187 = scalar_select %p186, %s183, 99
      %s188 = smul.addr %s187, 2
      %s189 = smul.addr %s185, 200
      %s190 = sadd.s32 %s188, %s189
      %s191 = smul.addr %s190, 4
      %s192 = scalar_lea.vmem %s0, %s191
      %p193 = pneg %p49
      %p194 = pneg %p46
      %p195 = scmp.lt.s32.totalorder %s18, 0
      %s196 = scalar_select %p195, %s18, 0
      %s197 = smul.addr %s196, 32
      %s198 = smul.addr %s197, 4
      %s199 = scalar_lea.vmem %s1, %s198
      %p200 = pneg %p75
      %p201 = pneg %p72
      %p202 = scmp.lt.s32.totalorder %s18, 0
      %s203 = scalar_select %p202, %s18, 0
      %s204 = scalar_lea.vmem %s2, %s203
      %p205 = pneg %p101
      %p206 = pneg %p98
      %p207 = pneg %p129
      %p208 = pneg %p126
      %s209 = smul.u32 50, %s19
      %p210 = scmp.lt.s32.totalorder %s18, 0
      %s211 = scalar_select %p210, %s18, 0
      %p212 = scmp.lt.s32.totalorder %s209, 99
      %s213 = scalar_select %p212, %s209, 99
      %s214 = smul.addr %s211, 100
      %s215 = sadd.s32 %s213, %s214
      %s216 = smul.addr %s215, 4
      %s217 = scalar_lea.vmem %s3, %s216
      %s218 = smul.u32 50, %s19
      %p219 = scmp.lt.s32.totalorder %s18, 0
      %s220 = scalar_select %p219, %s18, 0
      %p221 = scmp.lt.s32.totalorder %s218, 99
      %s222 = scalar_select %p221, %s218, 99
      %s223 = smul.addr %s222, 2
      %s224 = smul.addr %s220, 200
      %s225 = sadd.s32 %s223, %s224
      %s226 = smul.addr %s225, 4
      %s227 = scalar_lea.vmem %s0, %s226
      %s228 = smul.u32 50, %s19
      %p229 = scmp.lt.s32.totalorder %s18, 0
      %s230 = scalar_select %p229, %s18, 0
      %s231 = smul.addr %s230, 32
      %s232 = smul.addr %s231, 4
      %s233 = scalar_lea.vmem %s1, %s232
      %p234 = scmp.lt.s32.totalorder %s18, 0
      %s235 = scalar_select %p234, %s18, 0
      %s236 = scalar_lea.vmem %s2, %s235
      %s237 = smul.u32 50, %s19
      %p238 = scmp.lt.s32.totalorder %s18, 0
      %s239 = scalar_select %p238, %s18, 0
      %p240 = scmp.lt.s32.totalorder %s237, 99
      %s241 = scalar_select %p240, %s237, 99
      %s242 = smul.addr %s239, 100
      %s243 = sadd.s32 %s241, %s242
      %s244 = smul.addr %s243, 4
      %s245 = scalar_lea.vmem %s3, %s244
      %s246 = smul.u32 50, %s19
      %v248 = vld [vmem:[%s227] sm:$0xff]
      %v249 = vld [vmem:[%s227 + $0x8] sm:$0xff]
      %v250 = vld [vmem:[%s227 + $0x10] sm:$0xff]
      %v251 = vld [vmem:[%s227 + $0x18] sm:$0xff]
      %v252 = vld [vmem:[%s227 + $0x20] sm:$0xff]
      %v253 = vld [vmem:[%s227 + $0x28] sm:$0xff]
      %v254 = vld [vmem:[%s227 + $0x30] sm:$0xff]
      %v255 = vld [vmem:[%s227 + $0x38] sm:$0xff]
      %v256 = vld [vmem:[%s227 + $0x40] sm:$0xff]
      %v257 = vld [vmem:[%s227 + $0x48] sm:$0xff]
      %v258 = vld [vmem:[%s227 + $0x50] sm:$0xff]
      %v259 = vld [vmem:[%s227 + $0x58] sm:$0xff]
      %v260 = vld [vmem:[%s227 + $0x60] sm:$0xff]
      %v261 = vld [vmem:[%s227 + $0x68] sm:$0xff]
      %v262 = vld [vmem:[%s227 + $0x70] sm:$0xff]
      %v263 = vld [vmem:[%s227 + $0x78] sm:$0xff]
      %v264 = vld [vmem:[%s227 + $0x80] sm:$0xff]
      %v265 = vld [vmem:[%s227 + $0x88] sm:$0xff]
      %v266 = vld [vmem:[%s227 + $0x90] sm:$0xff]
      %v267 = vld [vmem:[%s227 + $0x98] sm:$0xff]
      %v268 = vld [vmem:[%s227 + $0xa0] sm:$0xff]
      %v269 = vld [vmem:[%s227 + $0xa8] sm:$0xff]
      %v270 = vld [vmem:[%s227 + $0xb0] sm:$0xff]
      %v271 = vld [vmem:[%s227 + $0xb8] sm:$0xff]
      %v272 = vld [vmem:[%s227 + $0xc0] sm:$0xff]
      %v273 = vld [vmem:[%s227 + $0xc8] sm:$0xff]
      %v274 = vld [vmem:[%s227 + $0xd0] sm:$0xff]
      %v275 = vld [vmem:[%s227 + $0xd8] sm:$0xff]
      %v276 = vld [vmem:[%s227 + $0xe0] sm:$0xff]
      %v277 = vld [vmem:[%s227 + $0xe8] sm:$0xff]
      %v278 = vld [vmem:[%s227 + $0xf0] sm:$0xff]
      %v279 = vld [vmem:[%s227 + $0xf8] sm:$0xff]
      %v280 = vld [vmem:[%s227 + $0x100] sm:$0xff]
      %v281 = vld [vmem:[%s227 + $0x108] sm:$0xff]
      %v282 = vld [vmem:[%s227 + $0x110] sm:$0xff]
      %v283 = vld [vmem:[%s227 + $0x118] sm:$0xff]
      %v284 = vld [vmem:[%s227 + $0x120] sm:$0xff]
      %v285 = vld [vmem:[%s227 + $0x128] sm:$0xff]
      %v286 = vld [vmem:[%s227 + $0x130] sm:$0xff]
      %v287 = vld [vmem:[%s227 + $0x138] sm:$0xff]
      %v288 = vld [vmem:[%s227 + $0x140] sm:$0xff]
      %v289 = vld [vmem:[%s227 + $0x148] sm:$0xff]
      %v290 = vld [vmem:[%s227 + $0x150] sm:$0xff]
      %v291 = vld [vmem:[%s227 + $0x158] sm:$0xff]
      %v292 = vld [vmem:[%s227 + $0x160] sm:$0xff]
      %v293 = vld [vmem:[%s227 + $0x168] sm:$0xff]
      %v294 = vld [vmem:[%s227 + $0x170] sm:$0xff]
      %v295 = vld [vmem:[%s227 + $0x178] sm:$0xff]
      %v296 = vld [vmem:[%s227 + $0x180] sm:$0xff]
      %v297 = vld [vmem:[%s227 + $0x188] sm:$0xff]
      %v298 = vld [vmem:[%s233] sm:$0xf]
      %v299 = vld [vmem:[%s233 + $0x4] sm:$0xf]
      %v300 = vld [vmem:[%s233 + $0x8] sm:$0xf]
      %v301 = vld [vmem:[%s233 + $0xc] sm:$0xf]
      %v302 = vld [vmem:[%s233 + $0x10] sm:$0xf]
      %v303 = vld [vmem:[%s233 + $0x14] sm:$0xf]
      %v304 = vld [vmem:[%s233 + $0x18] sm:$0xf]
      %v305 = vld [vmem:[%s233 + $0x1c] sm:$0xf]
      %v306 = vld [vmem:[%s233 + $0x20] sm:$0xf]
      %v307 = vld [vmem:[%s233 + $0x24] sm:$0xf]
      %v308 = vld [vmem:[%s233 + $0x28] sm:$0xf]
      %v309 = vld [vmem:[%s233 + $0x2c] sm:$0xf]
      %v310 = vld [vmem:[%s233 + $0x30] sm:$0xf]
      %v311 = vld [vmem:[%s233 + $0x34] sm:$0xf]
      %v312 = vld [vmem:[%s233 + $0x38] sm:$0xf]
      %v313 = vld [vmem:[%s233 + $0x3c] sm:$0xf]
      %v314 = vld [vmem:[%s233 + $0x40] sm:$0xf]
      %v315 = vld [vmem:[%s233 + $0x44] sm:$0xf]
      %v316 = vld [vmem:[%s233 + $0x48] sm:$0xf]
      %v317 = vld [vmem:[%s233 + $0x4c] sm:$0xf]
      %v318 = vld [vmem:[%s233 + $0x50] sm:$0xf]
      %v319 = vld [vmem:[%s233 + $0x54] sm:$0xf]
      %v320 = vld [vmem:[%s233 + $0x58] sm:$0xf]
      %v321 = vld [vmem:[%s233 + $0x5c] sm:$0xf]
      %v322 = vld [vmem:[%s233 + $0x60] sm:$0xf]
      %v323 = vld [vmem:[%s233 + $0x64] sm:$0xf]
      %v324 = vld [vmem:[%s233 + $0x68] sm:$0xf]
      %v325 = vld [vmem:[%s233 + $0x6c] sm:$0xf]
      %v326 = vld [vmem:[%s233 + $0x70] sm:$0xf]
      %v327 = vld [vmem:[%s233 + $0x74] sm:$0xf]
      %v328 = vld [vmem:[%s233 + $0x78] sm:$0xf]
      %v329 = vld [vmem:[%s233 + $0x7c] sm:$0xf]
      %v330 = vld [vmem:[%s236] sm:$0x1]
      %v332 = vlaneseq
      %v333 = vshrl.u32 %v332, 7
      %v334 = vsub.s32 0, %v333
      %v335 = vrot.slane %v330, %v334
      %v387 = vunpack.c.l.b16 %v248
      %v388 = vunpack.c.h.b16 %v248
      %v389 = vunpack.c.l.b16 %v249
      %v390 = vunpack.c.h.b16 %v249
      %v391 = vunpack.c.l.b16 %v250
      %v392 = vunpack.c.h.b16 %v250
      %v393 = vunpack.c.l.b16 %v251
      %v394 = vunpack.c.h.b16 %v251
      %v395 = vunpack.c.l.b16 %v252
      %v396 = vunpack.c.h.b16 %v252
      %v397 = vunpack.c.l.b16 %v253
      %v398 = vunpack.c.h.b16 %v253
      %v399 = vunpack.c.l.b16 %v254
      %v400 = vunpack.c.h.b16 %v254
      %v401 = vunpack.c.l.b16 %v255
      %v402 = vunpack.c.h.b16 %v255
      %v403 = vunpack.c.l.b16 %v256
      %v404 = vunpack.c.h.b16 %v256
      %v405 = vunpack.c.l.b16 %v257
      %v406 = vunpack.c.h.b16 %v257
      %v407 = vunpack.c.l.b16 %v258
      %v408 = vunpack.c.h.b16 %v258
      %v409 = vunpack.c.l.b16 %v259
      %v410 = vunpack.c.h.b16 %v259
      %v411 = vunpack.c.l.b16 %v260
      %v412 = vunpack.c.h.b16 %v260
      %v413 = vunpack.c.l.b16 %v261
      %v414 = vunpack.c.h.b16 %v261
      %v415 = vunpack.c.l.b16 %v262
      %v416 = vunpack.c.h.b16 %v262
      %v417 = vunpack.c.l.b16 %v263
      %v418 = vunpack.c.h.b16 %v263
      %v419 = vunpack.c.l.b16 %v264
      %v420 = vunpack.c.h.b16 %v264
      %v421 = vunpack.c.l.b16 %v265
      %v422 = vunpack.c.h.b16 %v265
      %v423 = vunpack.c.l.b16 %v266
      %v424 = vunpack.c.h.b16 %v266
      %v425 = vunpack.c.l.b16 %v267
      %v426 = vunpack.c.h.b16 %v267
      %v427 = vunpack.c.l.b16 %v268
      %v428 = vunpack.c.h.b16 %v268
      %v429 = vunpack.c.l.b16 %v269
      %v430 = vunpack.c.h.b16 %v269
      %v431 = vunpack.c.l.b16 %v270
      %v432 = vunpack.c.h.b16 %v270
      %v433 = vunpack.c.l.b16 %v271
      %v434 = vunpack.c.h.b16 %v271
      %v435 = vunpack.c.l.b16 %v272
      %v436 = vunpack.c.h.b16 %v272
      %v437 = vunpack.c.l.b16 %v273
      %v438 = vunpack.c.h.b16 %v273
      %v439 = vunpack.c.l.b16 %v274
      %v440 = vunpack.c.h.b16 %v274
      %v441 = vunpack.c.l.b16 %v275
      %v442 = vunpack.c.h.b16 %v275
      %v443 = vunpack.c.l.b16 %v276
      %v444 = vunpack.c.h.b16 %v276
      %v445 = vunpack.c.l.b16 %v277
      %v446 = vunpack.c.h.b16 %v277
      %v447 = vunpack.c.l.b16 %v278
      %v448 = vunpack.c.h.b16 %v278
      %v449 = vunpack.c.l.b16 %v279
      %v450 = vunpack.c.h.b16 %v279
      %v451 = vunpack.c.l.b16 %v280
      %v452 = vunpack.c.h.b16 %v280
      %v453 = vunpack.c.l.b16 %v281
      %v454 = vunpack.c.h.b16 %v281
      %v455 = vunpack.c.l.b16 %v282
      %v456 = vunpack.c.h.b16 %v282
      %v457 = vunpack.c.l.b16 %v283
      %v458 = vunpack.c.h.b16 %v283
      %v459 = vunpack.c.l.b16 %v284
      %v460 = vunpack.c.h.b16 %v284
      %v461 = vunpack.c.l.b16 %v285
      %v462 = vunpack.c.h.b16 %v285
      %v463 = vunpack.c.l.b16 %v286
      %v464 = vunpack.c.h.b16 %v286
      %v465 = vunpack.c.l.b16 %v287
      %v466 = vunpack.c.h.b16 %v287
      %v467 = vunpack.c.l.b16 %v288
      %v468 = vunpack.c.h.b16 %v288
      %v469 = vunpack.c.l.b16 %v289
      %v470 = vunpack.c.h.b16 %v289
      %v471 = vunpack.c.l.b16 %v290
      %v472 = vunpack.c.h.b16 %v290
      %v473 = vunpack.c.l.b16 %v291
      %v474 = vunpack.c.h.b16 %v291
      %v475 = vunpack.c.l.b16 %v292
      %v476 = vunpack.c.h.b16 %v292
      %v477 = vunpack.c.l.b16 %v293
      %v478 = vunpack.c.h.b16 %v293
      %v479 = vunpack.c.l.b16 %v294
      %v480 = vunpack.c.h.b16 %v294
      %v481 = vunpack.c.l.b16 %v295
      %v482 = vunpack.c.h.b16 %v295
      %v483 = vunpack.c.l.b16 %v296
      %v484 = vunpack.c.h.b16 %v296
      %v485 = vunpack.c.l.b16 %v297
      %v486 = vunpack.c.h.b16 %v297
      %v487 = vpack.c.b16 %v389, %v387
      %v488 = vpack.c.b16 %v390, %v388
      %v489 = vpack.c.b16 %v393, %v391
      %v490 = vpack.c.b16 %v394, %v392
      %v491 = vpack.c.b16 %v397, %v395
      %v492 = vpack.c.b16 %v398, %v396
      %v493 = vpack.c.b16 %v401, %v399
      %v494 = vpack.c.b16 %v402, %v400
      %v495 = vpack.c.b16 %v405, %v403
      %v496 = vpack.c.b16 %v406, %v404
      %v497 = vpack.c.b16 %v409, %v407
      %v498 = vpack.c.b16 %v410, %v408
      %v499 = vpack.c.b16 %v413, %v411
      %v500 = vpack.c.b16 %v414, %v412
      %v501 = vpack.c.b16 %v417, %v415
      %v502 = vpack.c.b16 %v418, %v416
      %v503 = vpack.c.b16 %v421, %v419
      %v504 = vpack.c.b16 %v422, %v420
      %v505 = vpack.c.b16 %v425, %v423
      %v506 = vpack.c.b16 %v426, %v424
      %v507 = vpack.c.b16 %v429, %v427
      %v508 = vpack.c.b16 %v430, %v428
      %v509 = vpack.c.b16 %v433, %v431
      %v510 = vpack.c.b16 %v434, %v432
      %v511 = vpack.c.b16 %v437, %v435
      %v512 = vpack.c.b16 %v438, %v436
      %v513 = vpack.c.b16 %v441, %v439
      %v514 = vpack.c.b16 %v442, %v440
      %v515 = vpack.c.b16 %v445, %v443
      %v516 = vpack.c.b16 %v446, %v444
      %v517 = vpack.c.b16 %v449, %v447
      %v518 = vpack.c.b16 %v450, %v448
      %v519 = vpack.c.b16 %v453, %v451
      %v520 = vpack.c.b16 %v454, %v452
      %v521 = vpack.c.b16 %v457, %v455
      %v522 = vpack.c.b16 %v458, %v456
      %v523 = vpack.c.b16 %v461, %v459
      %v524 = vpack.c.b16 %v462, %v460
      %v525 = vpack.c.b16 %v465, %v463
      %v526 = vpack.c.b16 %v466, %v464
      %v527 = vpack.c.b16 %v469, %v467
      %v528 = vpack.c.b16 %v470, %v468
      %v529 = vpack.c.b16 %v473, %v471
      %v530 = vpack.c.b16 %v474, %v472
      %v531 = vpack.c.b16 %v477, %v475
      %v532 = vpack.c.b16 %v478, %v476
      %v533 = vpack.c.b16 %v481, %v479
      %v534 = vpack.c.b16 %v482, %v480
      %v535 = vpack.c.b16 %v485, %v483
      %v536 = vpack.c.b16 %v486, %v484
      %v619 = vunpack.c.l.b16 %v298
      %v620 = vunpack.c.l.b16 %v299
      %v621 = vunpack.c.l.b16 %v300
      %v622 = vunpack.c.l.b16 %v301
      %v623 = vunpack.c.l.b16 %v302
      %v624 = vunpack.c.l.b16 %v303
      %v625 = vunpack.c.l.b16 %v304
      %v626 = vunpack.c.l.b16 %v305
      %v627 = vunpack.c.l.b16 %v306
      %v628 = vunpack.c.l.b16 %v307
      %v629 = vunpack.c.l.b16 %v308
      %v630 = vunpack.c.l.b16 %v309
      %v631 = vunpack.c.l.b16 %v310
      %v632 = vunpack.c.l.b16 %v311
      %v633 = vunpack.c.l.b16 %v312
      %v634 = vunpack.c.l.b16 %v313
      %v635 = vunpack.c.l.b16 %v314
      %v636 = vunpack.c.l.b16 %v315
      %v637 = vunpack.c.l.b16 %v316
      %v638 = vunpack.c.l.b16 %v317
      %v639 = vunpack.c.l.b16 %v318
      %v640 = vunpack.c.l.b16 %v319
      %v641 = vunpack.c.l.b16 %v320
      %v642 = vunpack.c.l.b16 %v321
      %v643 = vunpack.c.l.b16 %v322
      %v644 = vunpack.c.l.b16 %v323
      %v645 = vunpack.c.l.b16 %v324
      %v646 = vunpack.c.l.b16 %v325
      %v647 = vunpack.c.l.b16 %v326
      %v648 = vunpack.c.l.b16 %v327
      %v649 = vunpack.c.l.b16 %v328
      %v650 = vunpack.c.l.b16 %v329
      %v651 = vpack.c.b16 %v620, %v619
      %v652 = vpack.c.b16 %v622, %v621
      %v653 = vpack.c.b16 %v624, %v623
      %v654 = vpack.c.b16 %v626, %v625
      %v655 = vpack.c.b16 %v628, %v627
      %v656 = vpack.c.b16 %v630, %v629
      %v657 = vpack.c.b16 %v632, %v631
      %v658 = vpack.c.b16 %v634, %v633
      %v659 = vpack.c.b16 %v636, %v635
      %v660 = vpack.c.b16 %v638, %v637
      %v661 = vpack.c.b16 %v640, %v639
      %v662 = vpack.c.b16 %v642, %v641
      %v663 = vpack.c.b16 %v644, %v643
      %v664 = vpack.c.b16 %v646, %v645
      %v665 = vpack.c.b16 %v648, %v647
      %v666 = vpack.c.b16 %v650, %v649
      %683 = vmatprep.subr.bf16.mxu0 0
      %684 = vmatpush1.bf16.msra.mxu0 %v651
      %685 = vmatprep.subr.bf16.mxu0 0
      %686 = vmatpush1.bf16.msra.mxu0 %v652
      %687 = vmatprep.subr.bf16.mxu0 0
      %688 = vmatpush1.bf16.msra.mxu0 %v653
      %689 = vmatprep.subr.bf16.mxu0 0
      %690 = vmatpush1.bf16.msra.mxu0 %v654
      %691 = vmatprep.subr.bf16.mxu0 0
      %692 = vmatpush1.bf16.msra.mxu0 %v655
      %693 = vmatprep.subr.bf16.mxu0 0
      %694 = vmatpush1.bf16.msra.mxu0 %v656
      %695 = vmatprep.subr.bf16.mxu0 0
      %696 = vmatpush1.bf16.msra.mxu0 %v657
      %697 = vmatprep.subr.bf16.mxu0 0
      %698 = vmatpush1.bf16.msra.mxu0 %v658
      %699 = vmatprep.subr.bf16.mxu0 0
      %700 = vmatpush1.bf16.msra.mxu0 %v659
      %701 = vmatprep.subr.bf16.mxu0 0
      %702 = vmatpush1.bf16.msra.mxu0 %v660
      %703 = vmatprep.subr.bf16.mxu0 0
      %704 = vmatpush1.bf16.msra.mxu0 %v661
      %705 = vmatprep.subr.bf16.mxu0 0
      %706 = vmatpush1.bf16.msra.mxu0 %v662
      %707 = vmatprep.subr.bf16.mxu0 0
      %708 = vmatpush1.bf16.msra.mxu0 %v663
      %709 = vmatprep.subr.bf16.mxu0 0
      %710 = vmatpush1.bf16.msra.mxu0 %v664
      %711 = vmatprep.subr.bf16.mxu0 0
      %712 = vmatpush1.bf16.msra.mxu0 %v665
      %713 = vmatprep.subr.bf16.mxu0 0
      %714 = vmatpush1.bf16.msra.mxu0 %v666
      %715 = vmatprep.mubr.bf16.mxu0 %v488
      %716 = vmatmul.mubr.bf16.gmra.mrb[0].mxu0 %v487
      %v717 = vpop.f32.mrb[0].mxu0
      %v718 = vadd.f32 %v335, %v717
      %v719 = vpop.f32.mrb[0].mxu0
      %v720 = vpop.f32.mrb[0].mxu0
      %v721 = vadd.f32 %v335, %v720
      %v722 = vpop.f32.mrb[0].mxu0
      %723 = vmatprep.mubr.bf16.mxu0 %v490
      %724 = vmatmul.mubr.bf16.gmra.mrb[0].mxu0 %v489
      %v725 = vpop.f32.mrb[0].mxu0
      %v726 = vadd.f32 %v335, %v725
      %v727 = vpop.f32.mrb[0].mxu0
      %v728 = vpop.f32.mrb[0].mxu0
      %v729 = vadd.f32 %v335, %v728
      %v730 = vpop.f32.mrb[0].mxu0
      %731 = vmatprep.mubr.bf16.mxu0 %v492
      %732 = vmatmul.mubr.bf16.gmra.mrb[0].mxu0 %v491
      %v733 = vpop.f32.mrb[0].mxu0
      %v734 = vadd.f32 %v335, %v733
      %v735 = vpop.f32.mrb[0].mxu0
      %v736 = vpop.f32.mrb[0].mxu0
      %v737 = vadd.f32 %v335, %v736
      %v738 = vpop.f32.mrb[0].mxu0
      %739 = vmatprep.mubr.bf16.mxu0 %v494
      %740 = vmatmul.mubr.bf16.gmra.mrb[0].mxu0 %v493
      %v741 = vpop.f32.mrb[0].mxu0
      %v742 = vadd.f32 %v335, %v741
      %v743 = vpop.f32.mrb[0].mxu0
      %v744 = vpop.f32.mrb[0].mxu0
      %v745 = vadd.f32 %v335, %v744
      %v746 = vpop.f32.mrb[0].mxu0
      %747 = vmatprep.mubr.bf16.mxu0 %v496
      %748 = vmatmul.mubr.bf16.gmra.mrb[0].mxu0 %v495
      %v749 = vpop.f32.mrb[0].mxu0
      %v750 = vadd.f32 %v335, %v749
      %v751 = vpop.f32.mrb[0].mxu0
      %v752 = vpop.f32.mrb[0].mxu0
      %v753 = vadd.f32 %v335, %v752
      %v754 = vpop.f32.mrb[0].mxu0
      %755 = vmatprep.mubr.bf16.mxu0 %v498
      %756 = vmatmul.mubr.bf16.gmra.mrb[0].mxu0 %v497
      %v757 = vpop.f32.mrb[0].mxu0
      %v758 = vadd.f32 %v335, %v757
      %v759 = vpop.f32.mrb[0].mxu0
      %v760 = vpop.f32.mrb[0].mxu0
      %v761 = vadd.f32 %v335, %v760
      %v762 = vpop.f32.mrb[0].mxu0
      %763 = vmatprep.mubr.bf16.mxu0 %v500
      %764 = vmatmul.mubr.bf16.gmra.mrb[0].mxu0 %v499
      %v765 = vpop.f32.mrb[0].mxu0
      %v766 = vadd.f32 %v335, %v765
      %v767 = vpop.f32.mrb[0].mxu0
      %v768 = vpop.f32.mrb[0].mxu0
      %v769 = vadd.f32 %v335, %v768
      %v770 = vpop.f32.mrb[0].mxu0
      %771 = vmatprep.mubr.bf16.mxu0 %v502
      %772 = vmatmul.mubr.bf16.gmra.mrb[0].mxu0 %v501
      %v773 = vpop.f32.mrb[0].mxu0
      %v774 = vadd.f32 %v335, %v773
      %v775 = vpop.f32.mrb[0].mxu0
      %v776 = vpop.f32.mrb[0].mxu0
      %v777 = vadd.f32 %v335, %v776
      %v778 = vpop.f32.mrb[0].mxu0
      %779 = vmatprep.mubr.bf16.mxu0 %v504
      %780 = vmatmul.mubr.bf16.gmra.mrb[0].mxu0 %v503
      %v781 = vpop.f32.mrb[0].mxu0
      %v782 = vadd.f32 %v335, %v781
      %v783 = vpop.f32.mrb[0].mxu0
      %v784 = vpop.f32.mrb[0].mxu0
      %v785 = vadd.f32 %v335, %v784
      %v786 = vpop.f32.mrb[0].mxu0
      %787 = vmatprep.mubr.bf16.mxu0 %v506
      %788 = vmatmul.mubr.bf16.gmra.mrb[0].mxu0 %v505
      %v789 = vpop.f32.mrb[0].mxu0
      %v790 = vadd.f32 %v335, %v789
      %v791 = vpop.f32.mrb[0].mxu0
      %v792 = vpop.f32.mrb[0].mxu0
      %v793 = vadd.f32 %v335, %v792
      %v794 = vpop.f32.mrb[0].mxu0
      %795 = vmatprep.mubr.bf16.mxu0 %v508
      %796 = vmatmul.mubr.bf16.gmra.mrb[0].mxu0 %v507
      %v797 = vpop.f32.mrb[0].mxu0
      %v798 = vadd.f32 %v335, %v797
      %v799 = vpop.f32.mrb[0].mxu0
      %v800 = vpop.f32.mrb[0].mxu0
      %v801 = vadd.f32 %v335, %v800
      %v802 = vpop.f32.mrb[0].mxu0
      %803 = vmatprep.mubr.bf16.mxu0 %v510
      %804 = vmatmul.mubr.bf16.gmra.mrb[0].mxu0 %v509
      %v805 = vpop.f32.mrb[0].mxu0
      %v806 = vadd.f32 %v335, %v805
      %v807 = vpop.f32.mrb[0].mxu0
      %v808 = vpop.f32.mrb[0].mxu0
      %v809 = vadd.f32 %v335, %v808
      %v810 = vpop.f32.mrb[0].mxu0
      %811 = vmatprep.mubr.bf16.mxu0 %v512
      %812 = vmatmul.mubr.bf16.gmra.mrb[0].mxu0 %v511
      %v813 = vpop.f32.mrb[0].mxu0
      %v814 = vadd.f32 %v335, %v813
      %v815 = vpop.f32.mrb[0].mxu0
      %v816 = vpop.f32.mrb[0].mxu0
      %v817 = vadd.f32 %v335, %v816
      %v818 = vpop.f32.mrb[0].mxu0
      %819 = vmatprep.mubr.bf16.mxu0 %v514
      %820 = vmatmul.mubr.bf16.gmra.mrb[0].mxu0 %v513
      %v821 = vpop.f32.mrb[0].mxu0
      %v822 = vadd.f32 %v335, %v821
      %v823 = vpop.f32.mrb[0].mxu0
      %v824 = vpop.f32.mrb[0].mxu0
      %v825 = vadd.f32 %v335, %v824
      %v826 = vpop.f32.mrb[0].mxu0
      %827 = vmatprep.mubr.bf16.mxu0 %v516
      %828 = vmatmul.mubr.bf16.gmra.mrb[0].mxu0 %v515
      %v829 = vpop.f32.mrb[0].mxu0
      %v830 = vadd.f32 %v335, %v829
      %v831 = vpop.f32.mrb[0].mxu0
      %v832 = vpop.f32.mrb[0].mxu0
      %v833 = vadd.f32 %v335, %v832
      %v834 = vpop.f32.mrb[0].mxu0
      %835 = vmatprep.mubr.bf16.mxu0 %v518
      %836 = vmatmul.mubr.bf16.gmra.mrb[0].mxu0 %v517
      %v837 = vpop.f32.mrb[0].mxu0
      %v838 = vadd.f32 %v335, %v837
      %v839 = vpop.f32.mrb[0].mxu0
      %v840 = vpop.f32.mrb[0].mxu0
      %v841 = vadd.f32 %v335, %v840
      %v842 = vpop.f32.mrb[0].mxu0
      %843 = vmatprep.mubr.bf16.mxu0 %v520
      %844 = vmatmul.mubr.bf16.gmra.mrb[0].mxu0 %v519
      %v845 = vpop.f32.mrb[0].mxu0
      %v846 = vadd.f32 %v335, %v845
      %v847 = vpop.f32.mrb[0].mxu0
      %v848 = vpop.f32.mrb[0].mxu0
      %v849 = vadd.f32 %v335, %v848
      %v850 = vpop.f32.mrb[0].mxu0
      %851 = vmatprep.mubr.bf16.mxu0 %v522
      %852 = vmatmul.mubr.bf16.gmra.mrb[0].mxu0 %v521
      %v853 = vpop.f32.mrb[0].mxu0
      %v854 = vadd.f32 %v335, %v853
      %v855 = vpop.f32.mrb[0].mxu0
      %v856 = vpop.f32.mrb[0].mxu0
      %v857 = vadd.f32 %v335, %v856
      %v858 = vpop.f32.mrb[0].mxu0
      %859 = vmatprep.mubr.bf16.mxu0 %v524
      %860 = vmatmul.mubr.bf16.gmra.mrb[0].mxu0 %v523
      %v861 = vpop.f32.mrb[0].mxu0
      %v862 = vadd.f32 %v335, %v861
      %v863 = vpop.f32.mrb[0].mxu0
      %v864 = vpop.f32.mrb[0].mxu0
      %v865 = vadd.f32 %v335, %v864
      %v866 = vpop.f32.mrb[0].mxu0
      %867 = vmatprep.mubr.bf16.mxu0 %v526
      %868 = vmatmul.mubr.bf16.gmra.mrb[0].mxu0 %v525
      %v869 = vpop.f32.mrb[0].mxu0
      %v870 = vadd.f32 %v335, %v869
      %v871 = vpop.f32.mrb[0].mxu0
      %v872 = vpop.f32.mrb[0].mxu0
      %v873 = vadd.f32 %v335, %v872
      %v874 = vpop.f32.mrb[0].mxu0
      %875 = vmatprep.mubr.bf16.mxu0 %v528
      %876 = vmatmul.mubr.bf16.gmra.mrb[0].mxu0 %v527
      %v877 = vpop.f32.mrb[0].mxu0
      %v878 = vadd.f32 %v335, %v877
      %v879 = vpop.f32.mrb[0].mxu0
      %v880 = vpop.f32.mrb[0].mxu0
      %v881 = vadd.f32 %v335, %v880
      %v882 = vpop.f32.mrb[0].mxu0
      %883 = vmatprep.mubr.bf16.mxu0 %v530
      %884 = vmatmul.mubr.bf16.gmra.mrb[0].mxu0 %v529
      %v885 = vpop.f32.mrb[0].mxu0
      %v886 = vadd.f32 %v335, %v885
      %v887 = vpop.f32.mrb[0].mxu0
      %v888 = vpop.f32.mrb[0].mxu0
      %v889 = vadd.f32 %v335, %v888
      %v890 = vpop.f32.mrb[0].mxu0
      %891 = vmatprep.mubr.bf16.mxu0 %v532
      %892 = vmatmul.mubr.bf16.gmra.mrb[0].mxu0 %v531
      %v893 = vpop.f32.mrb[0].mxu0
      %v894 = vadd.f32 %v335, %v893
      %v895 = vpop.f32.mrb[0].mxu0
      %v896 = vpop.f32.mrb[0].mxu0
      %v897 = vadd.f32 %v335, %v896
      %v898 = vpop.f32.mrb[0].mxu0
      %899 = vmatprep.mubr.bf16.mxu0 %v534
      %900 = vmatmul.mubr.bf16.gmra.mrb[0].mxu0 %v533
      %v901 = vpop.f32.mrb[0].mxu0
      %v902 = vadd.f32 %v335, %v901
      %v903 = vpop.f32.mrb[0].mxu0
      %v904 = vpop.f32.mrb[0].mxu0
      %v905 = vadd.f32 %v335, %v904
      %v906 = vpop.f32.mrb[0].mxu0
      %907 = vmatprep.mubr.bf16.mxu0 %v536
      %908 = vmatmul.mubr.bf16.gmra.mrb[0].mxu0 %v535
      %v909 = vpop.f32.mrb[0].mxu0
      %v910 = vadd.f32 %v335, %v909
      %v911 = vpop.f32.mrb[0].mxu0
      %v912 = vpop.f32.mrb[0].mxu0
      %v913 = vadd.f32 %v335, %v912
      %v914 = vpop.f32.mrb[0].mxu0
      %915 = vdwg.mxu0
      %v916 = vmax.f32 %v718, 0.0
      %v917 = vmax.f32 %v721, 0.0
      %v918 = vmax.f32 %v726, 0.0
      %v919 = vmax.f32 %v729, 0.0
      %v920 = vmax.f32 %v734, 0.0
      %v921 = vmax.f32 %v737, 0.0
      %v922 = vmax.f32 %v742, 0.0
      %v923 = vmax.f32 %v745, 0.0
      %v924 = vmax.f32 %v750, 0.0
      %v925 = vmax.f32 %v753, 0.0
      %v926 = vmax.f32 %v758, 0.0
      %v927 = vmax.f32 %v761, 0.0
      %v928 = vmax.f32 %v766, 0.0
      %v929 = vmax.f32 %v769, 0.0
      %v930 = vmax.f32 %v774, 0.0
      %v931 = vmax.f32 %v777, 0.0
      %v932 = vmax.f32 %v782, 0.0
      %v933 = vmax.f32 %v785, 0.0
      %v934 = vmax.f32 %v790, 0.0
      %v935 = vmax.f32 %v793, 0.0
      %v936 = vmax.f32 %v798, 0.0
      %v937 = vmax.f32 %v801, 0.0
      %v938 = vmax.f32 %v806, 0.0
      %v939 = vmax.f32 %v809, 0.0
      %v940 = vmax.f32 %v814, 0.0
      %v941 = vmax.f32 %v817, 0.0
      %v942 = vmax.f32 %v822, 0.0
      %v943 = vmax.f32 %v825, 0.0
      %v944 = vmax.f32 %v830, 0.0
      %v945 = vmax.f32 %v833, 0.0
      %v946 = vmax.f32 %v838, 0.0
      %v947 = vmax.f32 %v841, 0.0
      %v948 = vmax.f32 %v846, 0.0
      %v949 = vmax.f32 %v849, 0.0
      %v950 = vmax.f32 %v854, 0.0
      %v951 = vmax.f32 %v857, 0.0
      %v952 = vmax.f32 %v862, 0.0
      %v953 = vmax.f32 %v865, 0.0
      %v954 = vmax.f32 %v870, 0.0
      %v955 = vmax.f32 %v873, 0.0
      %v956 = vmax.f32 %v878, 0.0
      %v957 = vmax.f32 %v881, 0.0
      %v958 = vmax.f32 %v886, 0.0
      %v959 = vmax.f32 %v889, 0.0
      %v960 = vmax.f32 %v894, 0.0
      %v961 = vmax.f32 %v897, 0.0
      %v962 = vmax.f32 %v902, 0.0
      %v963 = vmax.f32 %v905, 0.0
      %v964 = vmax.f32 %v910, 0.0
      %v965 = vmax.f32 %v913, 0.0
      %v966 = vpack.c.bf16 %v917, %v916
      %v967 = vpack.c.bf16 %v919, %v918
      %v968 = vpack.c.bf16 %v921, %v920
      %v969 = vpack.c.bf16 %v923, %v922
      %v970 = vpack.c.bf16 %v925, %v924
      %v971 = vpack.c.bf16 %v927, %v926
      %v972 = vpack.c.bf16 %v929, %v928
      %v973 = vpack.c.bf16 %v931, %v930
      %v974 = vpack.c.bf16 %v933, %v932
      %v975 = vpack.c.bf16 %v935, %v934
      %v976 = vpack.c.bf16 %v937, %v936
      %v977 = vpack.c.bf16 %v939, %v938
      %v978 = vpack.c.bf16 %v941, %v940
      %v979 = vpack.c.bf16 %v943, %v942
      %v980 = vpack.c.bf16 %v945, %v944
      %v981 = vpack.c.bf16 %v947, %v946
      %v982 = vpack.c.bf16 %v949, %v948
      %v983 = vpack.c.bf16 %v951, %v950
      %v984 = vpack.c.bf16 %v953, %v952
      %v985 = vpack.c.bf16 %v955, %v954
      %v986 = vpack.c.bf16 %v957, %v956
      %v987 = vpack.c.bf16 %v959, %v958
      %v988 = vpack.c.bf16 %v961, %v960
      %v989 = vpack.c.bf16 %v963, %v962
      %v990 = vpack.c.bf16 %v965, %v964
      %v1016 = vunpack.c.l.b16 %v966
      %v1017 = vunpack.c.h.b16 %v966
      %v1018 = vunpack.c.l.b16 %v967
      %v1019 = vunpack.c.h.b16 %v967
      %v1020 = vunpack.c.l.b16 %v968
      %v1021 = vunpack.c.h.b16 %v968
      %v1022 = vunpack.c.l.b16 %v969
      %v1023 = vunpack.c.h.b16 %v969
      %v1024 = vunpack.c.l.b16 %v970
      %v1025 = vunpack.c.h.b16 %v970
      %v1026 = vunpack.c.l.b16 %v971
      %v1027 = vunpack.c.h.b16 %v971
      %v1028 = vunpack.c.l.b16 %v972
      %v1029 = vunpack.c.h.b16 %v972
      %v1030 = vunpack.c.l.b16 %v973
      %v1031 = vunpack.c.h.b16 %v973
      %v1032 = vunpack.c.l.b16 %v974
      %v1033 = vunpack.c.h.b16 %v974
      %v1034 = vunpack.c.l.b16 %v975
      %v1035 = vunpack.c.h.b16 %v975
      %v1036 = vunpack.c.l.b16 %v976
      %v1037 = vunpack.c.h.b16 %v976
      %v1038 = vunpack.c.l.b16 %v977
      %v1039 = vunpack.c.h.b16 %v977
      %v1040 = vunpack.c.l.b16 %v978
      %v1041 = vunpack.c.h.b16 %v978
      %v1042 = vunpack.c.l.b16 %v979
      %v1043 = vunpack.c.h.b16 %v979
      %v1044 = vunpack.c.l.b16 %v980
      %v1045 = vunpack.c.h.b16 %v980
      %v1046 = vunpack.c.l.b16 %v981
      %v1047 = vunpack.c.h.b16 %v981
      %v1048 = vunpack.c.l.b16 %v982
      %v1049 = vunpack.c.h.b16 %v982
      %v1050 = vunpack.c.l.b16 %v983
      %v1051 = vunpack.c.h.b16 %v983
      %v1052 = vunpack.c.l.b16 %v984
      %v1053 = vunpack.c.h.b16 %v984
      %v1054 = vunpack.c.l.b16 %v985
      %v1055 = vunpack.c.h.b16 %v985
      %v1056 = vunpack.c.l.b16 %v986
      %v1057 = vunpack.c.h.b16 %v986
      %v1058 = vunpack.c.l.b16 %v987
      %v1059 = vunpack.c.h.b16 %v987
      %v1060 = vunpack.c.l.b16 %v988
      %v1061 = vunpack.c.h.b16 %v988
      %v1062 = vunpack.c.l.b16 %v989
      %v1063 = vunpack.c.h.b16 %v989
      %v1064 = vunpack.c.l.b16 %v990
      %v1065 = vunpack.c.h.b16 %v990
      %v1066 = vpack.c.b16 %v1016, %v1016
      %v1067 = vpack.c.b16 %v1017, %v1017
      %v1068 = vpack.c.b16 %v1018, %v1018
      %v1069 = vpack.c.b16 %v1019, %v1019
      %v1070 = vpack.c.b16 %v1020, %v1020
      %v1071 = vpack.c.b16 %v1021, %v1021
      %v1072 = vpack.c.b16 %v1022, %v1022
      %v1073 = vpack.c.b16 %v1023, %v1023
      %v1074 = vpack.c.b16 %v1024, %v1024
      %v1075 = vpack.c.b16 %v1025, %v1025
      %v1076 = vpack.c.b16 %v1026, %v1026
      %v1077 = vpack.c.b16 %v1027, %v1027
      %v1078 = vpack.c.b16 %v1028, %v1028
      %v1079 = vpack.c.b16 %v1029, %v1029
      %v1080 = vpack.c.b16 %v1030, %v1030
      %v1081 = vpack.c.b16 %v1031, %v1031
      %v1082 = vpack.c.b16 %v1032, %v1032
      %v1083 = vpack.c.b16 %v1033, %v1033
      %v1084 = vpack.c.b16 %v1034, %v1034
      %v1085 = vpack.c.b16 %v1035, %v1035
      %v1086 = vpack.c.b16 %v1036, %v1036
      %v1087 = vpack.c.b16 %v1037, %v1037
      %v1088 = vpack.c.b16 %v1038, %v1038
      %v1089 = vpack.c.b16 %v1039, %v1039
      %v1090 = vpack.c.b16 %v1040, %v1040
      %v1091 = vpack.c.b16 %v1041, %v1041
      %v1092 = vpack.c.b16 %v1042, %v1042
      %v1093 = vpack.c.b16 %v1043, %v1043
      %v1094 = vpack.c.b16 %v1044, %v1044
      %v1095 = vpack.c.b16 %v1045, %v1045
      %v1096 = vpack.c.b16 %v1046, %v1046
      %v1097 = vpack.c.b16 %v1047, %v1047
      %v1098 = vpack.c.b16 %v1048, %v1048
      %v1099 = vpack.c.b16 %v1049, %v1049
      %v1100 = vpack.c.b16 %v1050, %v1050
      %v1101 = vpack.c.b16 %v1051, %v1051
      %v1102 = vpack.c.b16 %v1052, %v1052
      %v1103 = vpack.c.b16 %v1053, %v1053
      %v1104 = vpack.c.b16 %v1054, %v1054
      %v1105 = vpack.c.b16 %v1055, %v1055
      %v1106 = vpack.c.b16 %v1056, %v1056
      %v1107 = vpack.c.b16 %v1057, %v1057
      %v1108 = vpack.c.b16 %v1058, %v1058
      %v1109 = vpack.c.b16 %v1059, %v1059
      %v1110 = vpack.c.b16 %v1060, %v1060
      %v1111 = vpack.c.b16 %v1061, %v1061
      %v1112 = vpack.c.b16 %v1062, %v1062
      %v1113 = vpack.c.b16 %v1063, %v1063
      %v1114 = vpack.c.b16 %v1064, %v1064
      %v1115 = vpack.c.b16 %v1065, %v1065
      %vm1166 = vcmask 519168
      %1167 = vst.msk [vmem:[%s245] sm:$0xf] %vm1166, %v1066
      %1168 = vst.msk [vmem:[%s245 + $0x4] sm:$0xf] %vm1166, %v1067
      %1169 = vst.msk [vmem:[%s245 + $0x8] sm:$0xf] %vm1166, %v1068
      %1170 = vst.msk [vmem:[%s245 + $0xc] sm:$0xf] %vm1166, %v1069
      %1171 = vst.msk [vmem:[%s245 + $0x10] sm:$0xf] %vm1166, %v1070
      %1172 = vst.msk [vmem:[%s245 + $0x14] sm:$0xf] %vm1166, %v1071
      %1173 = vst.msk [vmem:[%s245 + $0x18] sm:$0xf] %vm1166, %v1072
      %1174 = vst.msk [vmem:[%s245 + $0x1c] sm:$0xf] %vm1166, %v1073
      %1175 = vst.msk [vmem:[%s245 + $0x20] sm:$0xf] %vm1166, %v1074
      %1176 = vst.msk [vmem:[%s245 + $0x24] sm:$0xf] %vm1166, %v1075
      %1177 = vst.msk [vmem:[%s245 + $0x28] sm:$0xf] %vm1166, %v1076
      %1178 = vst.msk [vmem:[%s245 + $0x2c] sm:$0xf] %vm1166, %v1077
      %1179 = vst.msk [vmem:[%s245 + $0x30] sm:$0xf] %vm1166, %v1078
      %1180 = vst.msk [vmem:[%s245 + $0x34] sm:$0xf] %vm1166, %v1079
      %1181 = vst.msk [vmem:[%s245 + $0x38] sm:$0xf] %vm1166, %v1080
      %1182 = vst.msk [vmem:[%s245 + $0x3c] sm:$0xf] %vm1166, %v1081
      %1183 = vst.msk [vmem:[%s245 + $0x40] sm:$0xf] %vm1166, %v1082
      %1184 = vst.msk [vmem:[%s245 + $0x44] sm:$0xf] %vm1166, %v1083
      %1185 = vst.msk [vmem:[%s245 + $0x48] sm:$0xf] %vm1166, %v1084
      %1186 = vst.msk [vmem:[%s245 + $0x4c] sm:$0xf] %vm1166, %v1085
      %1187 = vst.msk [vmem:[%s245 + $0x50] sm:$0xf] %vm1166, %v1086
      %1188 = vst.msk [vmem:[%s245 + $0x54] sm:$0xf] %vm1166, %v1087
      %1189 = vst.msk [vmem:[%s245 + $0x58] sm:$0xf] %vm1166, %v1088
      %1190 = vst.msk [vmem:[%s245 + $0x5c] sm:$0xf] %vm1166, %v1089
      %1191 = vst.msk [vmem:[%s245 + $0x60] sm:$0xf] %vm1166, %v1090
      %1192 = vst.msk [vmem:[%s245 + $0x64] sm:$0xf] %vm1166, %v1091
      %1193 = vst.msk [vmem:[%s245 + $0x68] sm:$0xf] %vm1166, %v1092
      %1194 = vst.msk [vmem:[%s245 + $0x6c] sm:$0xf] %vm1166, %v1093
      %1195 = vst.msk [vmem:[%s245 + $0x70] sm:$0xf] %vm1166, %v1094
      %1196 = vst.msk [vmem:[%s245 + $0x74] sm:$0xf] %vm1166, %v1095
      %1197 = vst.msk [vmem:[%s245 + $0x78] sm:$0xf] %vm1166, %v1096
      %1198 = vst.msk [vmem:[%s245 + $0x7c] sm:$0xf] %vm1166, %v1097
      %1199 = vst.msk [vmem:[%s245 + $0x80] sm:$0xf] %vm1166, %v1098
      %1200 = vst.msk [vmem:[%s245 + $0x84] sm:$0xf] %vm1166, %v1099
      %1201 = vst.msk [vmem:[%s245 + $0x88] sm:$0xf] %vm1166, %v1100
      %1202 = vst.msk [vmem:[%s245 + $0x8c] sm:$0xf] %vm1166, %v1101
      %1203 = vst.msk [vmem:[%s245 + $0x90] sm:$0xf] %vm1166, %v1102
      %1204 = vst.msk [vmem:[%s245 + $0x94] sm:$0xf] %vm1166, %v1103
      %1205 = vst.msk [vmem:[%s245 + $0x98] sm:$0xf] %vm1166, %v1104
      %1206 = vst.msk [vmem:[%s245 + $0x9c] sm:$0xf] %vm1166, %v1105
      %1207 = vst.msk [vmem:[%s245 + $0xa0] sm:$0xf] %vm1166, %v1106
      %1208 = vst.msk [vmem:[%s245 + $0xa4] sm:$0xf] %vm1166, %v1107
      %1209 = vst.msk [vmem:[%s245 + $0xa8] sm:$0xf] %vm1166, %v1108
      %1210 = vst.msk [vmem:[%s245 + $0xac] sm:$0xf] %vm1166, %v1109
      %1211 = vst.msk [vmem:[%s245 + $0xb0] sm:$0xf] %vm1166, %v1110
      %1212 = vst.msk [vmem:[%s245 + $0xb4] sm:$0xf] %vm1166, %v1111
      %1213 = vst.msk [vmem:[%s245 + $0xb8] sm:$0xf] %vm1166, %v1112
      %1214 = vst.msk [vmem:[%s245 + $0xbc] sm:$0xf] %vm1166, %v1113
      %1215 = vst.msk [vmem:[%s245 + $0xc0] sm:$0xf] %vm1166, %v1114
      %1216 = vst.msk [vmem:[%s245 + $0xc4] sm:$0xf] %vm1166, %v1115
      %s1217 = smul.u32 50, %s19
      %p1218 = scmp.lt.s32.totalorder %s18, 0
      %s1219 = scalar_select %p1218, %s18, 0
      %p1220 = scmp.lt.s32.totalorder %s1217, 99
      %s1221 = scalar_select %p1220, %s1217, 99
      %s1222 = smul.addr %s1219, 100
      %s1223 = sadd.s32 %s1221, %s1222
      %s1224 = smul.addr %s1223, 4
      %s1225 = scalar_lea.vmem %s3, %s1224
      // Predicated region
      $region33: #{model_forward.4} parent=31 // pred_check
        %p1226 = pneg %p126
      $region34: #{model_forward.4} parent=31 // pred_check_branch
        %1228 = sbr.rel (%p1226) target = $region36
      $region35: #{model_forward.4} parent=31 // pred_region
        %s1229 = smul.u32 50, %s19
      $region36: #{model_forward.4} parent=31 // pred_fallthru
        _
    $region32: #{model_forward.4} parent=5 // pred_fallthru
      _
    %p1230 = scmp.le.s32.totalorder 2, %s9
    // Predicated region
    $region37: #{model_forward.4} parent=5 // pred_check
      %p1231 = pneg %p1230
    $region38: #{model_forward.4} parent=5 // pred_check_branch
      %1233 = sbr.rel (%p1231) target = $region40
    $region39: #{model_forward.4} parent=5 // pred_region
      %s1234 = ssub.s32 %s9, 2
      // Predicated region
      $region41: #{model_forward.4} parent=39 // pred_check
        %p1235 = pneg %p132
      $region42: #{model_forward.4} parent=39 // pred_check_branch
        %1237 = sbr.rel (%p1235) target = $region44
      $region43: #{model_forward.4} parent=39 // pred_region
        %s1238 = smul.u32 50, %s21
        %p1239 = scmp.lt.s32.totalorder %s20, 0
        %s1240 = scalar_select %p1239, %s20, 0
        %p1241 = scmp.lt.s32.totalorder %s1238, 99
        %s1242 = scalar_select %p1241, %s1238, 99
        %s1243 = smul.addr %s1240, 100
        %s1244 = sadd.s32 %s1242, %s1243
        %s1245 = smul.addr %s1244, 4
        %s1246 = scalar_lea.vmem %s3, %s1245
      $region44: #{model_forward.4} parent=39 // pred_fallthru
        _
    $region40: #{model_forward.4} parent=5 // pred_fallthru
      _
  $region6: #{model_forward.4} parent=0 // loop_footer
    %s13 = sadd.s32 1, %s9
  $region7: #{model_forward.4} parent=0 // loop_footer_branch
    %8 = sbr.rel target = $region3
  $region8: #{model_forward.4} parent=0 // loop_exit
    _

// kernel: model_forward.5
$region0: #{model_forward.5}
  #allocation0 [shape = 'u32[]', space=smem, size = 0x4, offset = 0x4, fixed_abs, tag = 'smem constant byte address 0x4 - core index']
  #allocation1 [shape = 'u32[144,128]{1,0:T(1,128)}', space=vmem, size = 0x12000, scoped, tag = 'internal scratch']
  %s0 = inlined_call_operand.vmem [shape: bf16[2,162,512], index: 0, kind: input, shape index: {}]
  %s1 = inlined_call_operand.vmem [shape: bf16[2,512,64], index: 1, kind: input, shape index: {}]
  %s2 = inlined_call_operand.vmem [shape: f32[2,1,64], index: 2, kind: input, shape index: {}]
  %s3 = inlined_call_operand.vmem [shape: bf16[2,162,64], index: 3, kind: output, shape index: {}]
  %s4 = sld [smem:[#allocation0]]
  $region45: #{model_forward.5} parent=0
    _
  %s6 = ssub.s32 1, %s4
  %s7 = scalar_select 0, %s6, %s4
  loop: start=0, step=1, limit=4
  $region2: #{model_forward.5} parent=0 // loop_pre_header
    _
  $region3: #{model_forward.5} parent=0 // loop_header
    %s9 = sphi 0, %s13
    %p10 = scmp.ge.s32.totalorder %s9, 4
    %s16 = sphi 0, %s28
    %s17 = sphi 0, %s24
    %s18 = sphi 0, %s16
    %s19 = sphi 0, %s17
    %s20 = sphi 0, %s18
    %s21 = sphi 0, %s19
    %s33 = sphi 0, %s35
    %s36 = sphi 0, %s33
    %s37 = sphi 0, %s36
    %s53 = sphi 0, %s37
    %s59 = sphi 0, %s61
    %s62 = sphi 0, %s59
    %s63 = sphi 0, %s62
    %s79 = sphi 0, %s63
    %s85 = sphi 0, %s87
    %s88 = sphi 0, %s85
    %s89 = sphi 0, %s88
    %s105 = sphi 0, %s89
    %s113 = sphi 0, %s115
    %s116 = sphi 0, %s113
    %s117 = sphi 0, %s116
    %s133 = sphi 0, %s117
  $region4: #{model_forward.5} parent=0 // loop_header_branch
    %12 = sbr.rel (%p10) target = $region8
  $region5: #{model_forward.5} parent=0 // loop_body
    %s14 = ssub.s32 %s9, 1
    %s15 = ssub.s32 %s9, 2
    %s22 = sadd.s32 1, %s17
    %p23 = scmp.ge.s32.totalorder %s22, 1
    %s24 = scalar_select %p23, 0, %s22
    %s25 = sadd.s32 1, %s16
    %s26 = scalar_select %p23, %s25, %s16
    %p27 = scmp.ge.s32.totalorder %s26, 2
    %s28 = scalar_select %p27, 0, %s26
    %s29 = ssub.s32 %s16, %s28
    %s30 = ssub.s32 %s17, %s24
    %s31 = sor.u32 %s29, %s30
    %p32 = scmp.eq.s32.totalorder %s31, 0
    %s34 = sadd.s32 %s33, 1
    %s35 = scalar_select %p32, %s33, %s34
    %p38 = pneg %p32
    %p39 = scmp.eq.s32.totalorder %s9, 1
    %p40 = por %p38, %p39
    %p41 = scmp.ne.s32.totalorder %s33, %s36
    %p42 = scmp.eq.s32.totalorder %s9, 0
    %p43 = por %p41, %p42
    %p44 = scmp.ne.s32.totalorder %s33, %s36
    %p45 = scmp.eq.s32.totalorder %s14, 1
    %p46 = por %p44, %p45
    %p47 = scmp.ne.s32.totalorder %s36, %s37
    %p48 = scmp.eq.s32.totalorder %s14, 0
    %p49 = por %p47, %p48
    %p50 = scmp.ne.s32.totalorder %s36, %s37
    %p51 = scmp.eq.s32.totalorder %s15, 1
    %p52 = por %p50, %p51
    %p54 = scmp.ne.s32.totalorder %s37, %s53
    %p55 = scmp.eq.s32.totalorder %s15, 0
    %p56 = por %p54, %p55
    %s57 = ssub.s32 %s16, %s28
    %p58 = scmp.eq.s32.totalorder %s57, 0
    %s60 = sadd.s32 %s59, 1
    %s61 = scalar_select %p58, %s59, %s60
    %p64 = pneg %p58
    %p65 = scmp.eq.s32.totalorder %s9, 1
    %p66 = por %p64, %p65
    %p67 = scmp.ne.s32.totalorder %s59, %s62
    %p68 = scmp.eq.s32.totalorder %s9, 0
    %p69 = por %p67, %p68
    %p70 = scmp.ne.s32.totalorder %s59, %s62
    %p71 = scmp.eq.s32.totalorder %s14, 1
    %p72 = por %p70, %p71
    %p73 = scmp.ne.s32.totalorder %s62, %s63
    %p74 = scmp.eq.s32.totalorder %s14, 0
    %p75 = por %p73, %p74
    %p76 = scmp.ne.s32.totalorder %s62, %s63
    %p77 = scmp.eq.s32.totalorder %s15, 1
    %p78 = por %p76, %p77
    %p80 = scmp.ne.s32.totalorder %s63, %s79
    %p81 = scmp.eq.s32.totalorder %s15, 0
    %p82 = por %p80, %p81
    %s83 = ssub.s32 %s16, %s28
    %p84 = scmp.eq.s32.totalorder %s83, 0
    %s86 = sadd.s32 %s85, 1
    %s87 = scalar_select %p84, %s85, %s86
    %p90 = pneg %p84
    %p91 = scmp.eq.s32.totalorder %s9, 1
    %p92 = por %p90, %p91
    %p93 = scmp.ne.s32.totalorder %s85, %s88
    %p94 = scmp.eq.s32.totalorder %s9, 0
    %p95 = por %p93, %p94
    %p96 = scmp.ne.s32.totalorder %s85, %s88
    %p97 = scmp.eq.s32.totalorder %s14, 1
    %p98 = por %p96, %p97
    %p99 = scmp.ne.s32.totalorder %s88, %s89
    %p100 = scmp.eq.s32.totalorder %s14, 0
    %p101 = por %p99, %p100
    %p102 = scmp.ne.s32.totalorder %s88, %s89
    %p103 = scmp.eq.s32.totalorder %s15, 1
    %p104 = por %p102, %p103
    %p106 = scmp.ne.s32.totalorder %s89, %s105
    %p107 = scmp.eq.s32.totalorder %s15, 0
    %p108 = por %p106, %p107
    %s109 = ssub.s32 %s16, %s28
    %s110 = ssub.s32 %s17, %s24
    %s111 = sor.u32 %s109, %s110
    %p112 = scmp.eq.s32.totalorder %s111, 0
    %s114 = sadd.s32 %s113, 1
    %s115 = scalar_select %p112, %s113, %s114
    %p118 = pneg %p112
    %p119 = scmp.eq.s32.totalorder %s9, 1
    %p120 = por %p118, %p119
    %p121 = scmp.ne.s32.totalorder %s113, %s116
    %p122 = scmp.eq.s32.totalorder %s9, 0
    %p123 = por %p121, %p122
    %p124 = scmp.ne.s32.totalorder %s113, %s116
    %p125 = scmp.eq.s32.totalorder %s14, 1
    %p126 = por %p124, %p125
    %p127 = scmp.ne.s32.totalorder %s116, %s117
    %p128 = scmp.eq.s32.totalorder %s14, 0
    %p129 = por %p127, %p128
    %p130 = scmp.ne.s32.totalorder %s116, %s117
    %p131 = scmp.eq.s32.totalorder %s15, 1
    %p132 = por %p130, %p131
    %p134 = scmp.ne.s32.totalorder %s117, %s133
    %p135 = scmp.eq.s32.totalorder %s15, 0
    %p136 = por %p134, %p135
    %p137 = scmp.le.s32.totalorder 1, %s9
    %p138 = scmp.lt.s32.totalorder %s9, 3
    %p139 = pnand %p137, %p138
    %p140 = pneg %p139
    // Predicated region
    $region9: #{model_forward.5} parent=5 // pred_check
      _
    $region10: #{model_forward.5} parent=5 // pred_check_branch
      %142 = sbr.rel (%p139) target = $region12
    $region11: #{model_forward.5} parent=5 // pred_region
      %s143 = ssub.s32 %s9, 1
    $region12: #{model_forward.5} parent=5 // pred_fallthru
      _
    %p144 = scmp.lt.s32.totalorder %s9, 2
    // Predicated region
    $region13: #{model_forward.5} parent=5 // pred_check
      %p145 = pneg %p144
    $region14: #{model_forward.5} parent=5 // pred_check_branch
      %147 = sbr.rel (%p145) target = $region16
    $region15: #{model_forward.5} parent=5 // pred_region
      // Predicated region
      $region17: #{model_forward.5} parent=15 // pred_check
        %p148 = pneg %p43
      $region18: #{model_forward.5} parent=15 // pred_check_branch
        %150 = sbr.rel (%p148) target = $region20
      $region19: #{model_forward.5} parent=15 // pred_region
        %s151 = smul.u32 21, %s17
        %p152 = scmp.lt.s32.totalorder %s16, 1
        %s153 = scalar_select %p152, %s16, 1
        %p154 = scmp.lt.s32.totalorder %s151, 20
        %s155 = scalar_select %p154, %s151, 20
        %s156 = smul.addr %s155, 4
        %s157 = smul.addr %s153, 84
        %s158 = sadd.s32 %s156, %s157
        %s159 = smul.addr %s158, 4
        %s160 = scalar_lea.vmem %s0, %s159
        %s161 = smul.u32 21, %s17
      $region20: #{model_forward.5} parent=15 // pred_fallthru
        _
      // Predicated region
      $region21: #{model_forward.5} parent=15 // pred_check
        %p162 = pneg %p69
      $region22: #{model_forward.5} parent=15 // pred_check_branch
        %164 = sbr.rel (%p162) target = $region24
      $region23: #{model_forward.5} parent=15 // pred_region
        %p165 = scmp.lt.s32.totalorder %s16, 1
        %s166 = scalar_select %p165, %s16, 1
        %s167 = smul.addr %s166, 64
        %s168 = smul.addr %s167, 4
        %s169 = scalar_lea.vmem %s1, %s168
      $region24: #{model_forward.5} parent=15 // pred_fallthru
        _
      // Predicated region
      $region25: #{model_forward.5} parent=15 // pred_check
        %p170 = pneg %p95
      $region26: #{model_forward.5} parent=15 // pred_check_branch
        %172 = sbr.rel (%p170) target = $region28
      $region27: #{model_forward.5} parent=15 // pred_region
        %p173 = scmp.lt.s32.totalorder %s16, 1
        %s174 = scalar_select %p173, %s16, 1
        %s175 = scalar_lea.vmem %s2, %s174
      $region28: #{model_forward.5} parent=15 // pred_fallthru
        _
    $region16: #{model_forward.5} parent=5 // pred_fallthru
      _
    %p176 = scmp.le.s32.totalorder 1, %s9
    %p177 = scmp.lt.s32.totalorder %s9, 3
    %p178 = pnand %p176, %p177
    %p179 = pneg %p178
    // Predicated region
    $region29: #{model_forward.5} parent=5 // pred_check
      _
    $region30: #{model_forward.5} parent=5 // pred_check_branch
      %181 = sbr.rel (%p178) target = $region32
    $region31: #{model_forward.5} parent=5 // pred_region
      %s182 = ssub.s32 %s9, 1
      %s183 = smul.u32 21, %s19
      %p184 = scmp.lt.s32.totalorder %s18, 1
      %s185 = scalar_select %p184, %s18, 1
      %p186 = scmp.lt.s32.totalorder %s183, 20
      %s187 = scalar_select %p186, %s183, 20
      %s188 = smul.addr %s187, 4
      %s189 = smul.addr %s185, 84
      %s190 = sadd.s32 %s188, %s189
      %s191 = smul.addr %s190, 4
      %s192 = scalar_lea.vmem %s0, %s191
      %p193 = pneg %p49
      %p194 = pneg %p46
      %p195 = scmp.lt.s32.totalorder %s18, 1
      %s196 = scalar_select %p195, %s18, 1
      %s197 = smul.addr %s196, 64
      %s198 = smul.addr %s197, 4
      %s199 = scalar_lea.vmem %s1, %s198
      %p200 = pneg %p75
      %p201 = pneg %p72
      %p202 = scmp.lt.s32.totalorder %s18, 1
      %s203 = scalar_select %p202, %s18, 1
      %s204 = scalar_lea.vmem %s2, %s203
      %p205 = pneg %p101
      %p206 = pneg %p98
      %p207 = pneg %p129
      %p208 = pneg %p126
      %s209 = smul.u32 21, %s19
      %p210 = scmp.lt.s32.totalorder %s18, 1
      %s211 = scalar_select %p210, %s18, 1
      %p212 = scmp.lt.s32.totalorder %s209, 20
      %s213 = scalar_select %p212, %s209, 20
      %s214 = smul.addr %s211, 21
      %s215 = sadd.s32 %s213, %s214
      %s216 = smul.addr %s215, 4
      %s217 = scalar_lea.vmem %s3, %s216
      %s218 = smul.u32 21, %s19
      %p219 = scmp.lt.s32.totalorder %s18, 1
      %s220 = scalar_select %p219, %s18, 1
      %p221 = scmp.lt.s32.totalorder %s218, 20
      %s222 = scalar_select %p221, %s218, 20
      %s223 = smul.addr %s222, 4
      %s224 = smul.addr %s220, 84
      %s225 = sadd.s32 %s223, %s224
      %s226 = smul.addr %s225, 4
      %s227 = scalar_lea.vmem %s0, %s226
      %s228 = smul.u32 21, %s19
      %p229 = scmp.lt.s32.totalorder %s18, 1
      %s230 = scalar_select %p229, %s18, 1
      %s231 = smul.addr %s230, 64
      %s232 = smul.addr %s231, 4
      %s233 = scalar_lea.vmem %s1, %s232
      %p234 = scmp.lt.s32.totalorder %s18, 1
      %s235 = scalar_select %p234, %s18, 1
      %s236 = scalar_lea.vmem %s2, %s235
      %s237 = smul.u32 21, %s19
      %p238 = scmp.lt.s32.totalorder %s18, 1
      %s239 = scalar_select %p238, %s18, 1
      %p240 = scmp.lt.s32.totalorder %s237, 20
      %s241 = scalar_select %p240, %s237, 20
      %s242 = smul.addr %s239, 21
      %s243 = sadd.s32 %s241, %s242
      %s244 = smul.addr %s243, 4
      %s245 = scalar_lea.vmem %s3, %s244
      %s246 = smul.u32 21, %s19
      %v248 = vld [vmem:[%s227] sm:$0xff]
      %v249 = vld [vmem:[%s227 + $0x8] sm:$0xff]
      %v250 = vld [vmem:[%s227 + $0x10] sm:$0xff]
      %v251 = vld [vmem:[%s227 + $0x18] sm:$0xff]
      %v252 = vld [vmem:[%s227 + $0x20] sm:$0xff]
      %v253 = vld [vmem:[%s227 + $0x28] sm:$0xff]
      %v254 = vld [vmem:[%s227 + $0x30] sm:$0xff]
      %v255 = vld [vmem:[%s227 + $0x38] sm:$0xff]
      %v256 = vld [vmem:[%s227 + $0x40] sm:$0xff]
      %v257 = vld [vmem:[%s227 + $0x48] sm:$0xff]
      %v258 = vld [vmem:[%s227 + $0x50] sm:$0xff]
      %v259 = vld [vmem:[%s227 + $0x58] sm:$0xff]
      %v260 = vld [vmem:[%s227 + $0x60] sm:$0xff]
      %v261 = vld [vmem:[%s227 + $0x68] sm:$0xff]
      %v262 = vld [vmem:[%s227 + $0x70] sm:$0xff]
      %v263 = vld [vmem:[%s227 + $0x78] sm:$0xff]
      %v264 = vld [vmem:[%s227 + $0x80] sm:$0xff]
      %v265 = vld [vmem:[%s227 + $0x88] sm:$0xff]
      %v266 = vld [vmem:[%s227 + $0x90] sm:$0xff]
      %v267 = vld [vmem:[%s227 + $0x98] sm:$0xff]
      %v268 = vld [vmem:[%s227 + $0xa0] sm:$0xff]
      %v269 = vld [vmem:[%s227 + $0xa8] sm:$0xff]
      %v270 = vld [vmem:[%s227 + $0xb0] sm:$0xff]
      %v271 = vld [vmem:[%s227 + $0xb8] sm:$0xff]
      %v272 = vld [vmem:[%s227 + $0xc0] sm:$0xff]
      %v273 = vld [vmem:[%s227 + $0xc8] sm:$0xff]
      %v274 = vld [vmem:[%s227 + $0xd0] sm:$0xff]
      %v275 = vld [vmem:[%s227 + $0xd8] sm:$0xff]
      %v276 = vld [vmem:[%s227 + $0xe0] sm:$0xff]
      %v277 = vld [vmem:[%s227 + $0xe8] sm:$0xff]
      %v278 = vld [vmem:[%s227 + $0xf0] sm:$0xff]
      %v279 = vld [vmem:[%s227 + $0xf8] sm:$0xff]
      %v280 = vld [vmem:[%s227 + $0x100] sm:$0xff]
      %v281 = vld [vmem:[%s227 + $0x108] sm:$0xff]
      %v282 = vld [vmem:[%s227 + $0x110] sm:$0xff]
      %v283 = vld [vmem:[%s227 + $0x118] sm:$0xff]
      %v284 = vld [vmem:[%s227 + $0x120] sm:$0xff]
      %v285 = vld [vmem:[%s227 + $0x128] sm:$0xff]
      %v286 = vld [vmem:[%s227 + $0x130] sm:$0xff]
      %v287 = vld [vmem:[%s227 + $0x138] sm:$0xff]
      %v288 = vld [vmem:[%s227 + $0x140] sm:$0x11]
      %v289 = vld [vmem:[%s227 + $0x148] sm:$0x11]
      %v290 = vld [vmem:[%s233] sm:$0xf]
      %v291 = vld [vmem:[%s233 + $0x4] sm:$0xf]
      %v292 = vld [vmem:[%s233 + $0x8] sm:$0xf]
      %v293 = vld [vmem:[%s233 + $0xc] sm:$0xf]
      %v294 = vld [vmem:[%s233 + $0x10] sm:$0xf]
      %v295 = vld [vmem:[%s233 + $0x14] sm:$0xf]
      %v296 = vld [vmem:[%s233 + $0x18] sm:$0xf]
      %v297 = vld [vmem:[%s233 + $0x1c] sm:$0xf]
      %v298 = vld [vmem:[%s233 + $0x20] sm:$0xf]
      %v299 = vld [vmem:[%s233 + $0x24] sm:$0xf]
      %v300 = vld [vmem:[%s233 + $0x28] sm:$0xf]
      %v301 = vld [vmem:[%s233 + $0x2c] sm:$0xf]
      %v302 = vld [vmem:[%s233 + $0x30] sm:$0xf]
      %v303 = vld [vmem:[%s233 + $0x34] sm:$0xf]
      %v304 = vld [vmem:[%s233 + $0x38] sm:$0xf]
      %v305 = vld [vmem:[%s233 + $0x3c] sm:$0xf]
      %v306 = vld [vmem:[%s233 + $0x40] sm:$0xf]
      %v307 = vld [vmem:[%s233 + $0x44] sm:$0xf]
      %v308 = vld [vmem:[%s233 + $0x48] sm:$0xf]
      %v309 = vld [vmem:[%s233 + $0x4c] sm:$0xf]
      %v310 = vld [vmem:[%s233 + $0x50] sm:$0xf]
      %v311 = vld [vmem:[%s233 + $0x54] sm:$0xf]
      %v312 = vld [vmem:[%s233 + $0x58] sm:$0xf]
      %v313 = vld [vmem:[%s233 + $0x5c] sm:$0xf]
      %v314 = vld [vmem:[%s233 + $0x60] sm:$0xf]
      %v315 = vld [vmem:[%s233 + $0x64] sm:$0xf]
      %v316 = vld [vmem:[%s233 + $0x68] sm:$0xf]
      %v317 = vld [vmem:[%s233 + $0x6c] sm:$0xf]
      %v318 = vld [vmem:[%s233 + $0x70] sm:$0xf]
      %v319 = vld [vmem:[%s233 + $0x74] sm:$0xf]
      %v320 = vld [vmem:[%s233 + $0x78] sm:$0xf]
      %v321 = vld [vmem:[%s233 + $0x7c] sm:$0xf]
      %v322 = vld [vmem:[%s233 + $0x80] sm:$0xf]
      %v323 = vld [vmem:[%s233 + $0x84] sm:$0xf]
      %v324 = vld [vmem:[%s233 + $0x88] sm:$0xf]
      %v325 = vld [vmem:[%s233 + $0x8c] sm:$0xf]
      %v326 = vld [vmem:[%s233 + $0x90] sm:$0xf]
      %v327 = vld [vmem:[%s233 + $0x94] sm:$0xf]
      %v328 = vld [vmem:[%s233 + $0x98] sm:$0xf]
      %v329 = vld [vmem:[%s233 + $0x9c] sm:$0xf]
      %v330 = vld [vmem:[%s233 + $0xa0] sm:$0xf]
      %v331 = vld [vmem:[%s233 + $0xa4] sm:$0xf]
      %v332 = vld [vmem:[%s233 + $0xa8] sm:$0xf]
      %v333 = vld [vmem:[%s233 + $0xac] sm:$0xf]
      %v334 = vld [vmem:[%s233 + $0xb0] sm:$0xf]
      %v335 = vld [vmem:[%s233 + $0xb4] sm:$0xf]
      %v336 = vld [vmem:[%s233 + $0xb8] sm:$0xf]
      %v337 = vld [vmem:[%s233 + $0xbc] sm:$0xf]
      %v338 = vld [vmem:[%s233 + $0xc0] sm:$0xf]
      %v339 = vld [vmem:[%s233 + $0xc4] sm:$0xf]
      %v340 = vld [vmem:[%s233 + $0xc8] sm:$0xf]
      %v341 = vld [vmem:[%s233 + $0xcc] sm:$0xf]
      %v342 = vld [vmem:[%s233 + $0xd0] sm:$0xf]
      %v343 = vld [vmem:[%s233 + $0xd4] sm:$0xf]
      %v344 = vld [vmem:[%s233 + $0xd8] sm:$0xf]
      %v345 = vld [vmem:[%s233 + $0xdc] sm:$0xf]
      %v346 = vld [vmem:[%s233 + $0xe0] sm:$0xf]
      %v347 = vld [vmem:[%s233 + $0xe4] sm:$0xf]
      %v348 = vld [vmem:[%s233 + $0xe8] sm:$0xf]
      %v349 = vld [vmem:[%s233 + $0xec] sm:$0xf]
      %v350 = vld [vmem:[%s233 + $0xf0] sm:$0xf]
      %v351 = vld [vmem:[%s233 + $0xf4] sm:$0xf]
      %v352 = vld [vmem:[%s233 + $0xf8] sm:$0xf]
      %v353 = vld [vmem:[%s233 + $0xfc] sm:$0xf]
      %v354 = vld [vmem:[%s236] sm:$0x1]
      %v356 = vlaneseq
      %v357 = vshrl.u32 %v356, 7
      %v358 = vsub.s32 0, %v357
      %v359 = vrot.slane %v354, %v358
      %v403 = vunpack.c.l.b16 %v248
      %v404 = vunpack.c.h.b16 %v248
      %v405 = vunpack.c.l.b16 %v249
      %v406 = vunpack.c.h.b16 %v249
      %v407 = vunpack.c.l.b16 %v250
      %v408 = vunpack.c.h.b16 %v250
      %v409 = vunpack.c.l.b16 %v251
      %v410 = vunpack.c.h.b16 %v251
      %v411 = vunpack.c.l.b16 %v252
      %v412 = vunpack.c.h.b16 %v252
      %v413 = vunpack.c.l.b16 %v253
      %v414 = vunpack.c.h.b16 %v253
      %v415 = vunpack.c.l.b16 %v254
      %v416 = vunpack.c.h.b16 %v254
      %v417 = vunpack.c.l.b16 %v255
      %v418 = vunpack.c.h.b16 %v255
      %v419 = vunpack.c.l.b16 %v256
      %v420 = vunpack.c.h.b16 %v256
      %v421 = vunpack.c.l.b16 %v257
      %v422 = vunpack.c.h.b16 %v257
      %v423 = vunpack.c.l.b16 %v258
      %v424 = vunpack.c.h.b16 %v258
      %v425 = vunpack.c.l.b16 %v259
      %v426 = vunpack.c.h.b16 %v259
      %v427 = vunpack.c.l.b16 %v260
      %v428 = vunpack.c.h.b16 %v260
      %v429 = vunpack.c.l.b16 %v261
      %v430 = vunpack.c.h.b16 %v261
      %v431 = vunpack.c.l.b16 %v262
      %v432 = vunpack.c.h.b16 %v262
      %v433 = vunpack.c.l.b16 %v263
      %v434 = vunpack.c.h.b16 %v263
      %v435 = vunpack.c.l.b16 %v264
      %v436 = vunpack.c.h.b16 %v264
      %v437 = vunpack.c.l.b16 %v265
      %v438 = vunpack.c.h.b16 %v265
      %v439 = vunpack.c.l.b16 %v266
      %v440 = vunpack.c.h.b16 %v266
      %v441 = vunpack.c.l.b16 %v267
      %v442 = vunpack.c.h.b16 %v267
      %v443 = vunpack.c.l.b16 %v268
      %v444 = vunpack.c.h.b16 %v268
      %v445 = vunpack.c.l.b16 %v269
      %v446 = vunpack.c.h.b16 %v269
      %v447 = vunpack.c.l.b16 %v270
      %v448 = vunpack.c.h.b16 %v270
      %v449 = vunpack.c.l.b16 %v271
      %v450 = vunpack.c.h.b16 %v271
      %v451 = vunpack.c.l.b16 %v272
      %v452 = vunpack.c.h.b16 %v272
      %v453 = vunpack.c.l.b16 %v273
      %v454 = vunpack.c.h.b16 %v273
      %v455 = vunpack.c.l.b16 %v274
      %v456 = vunpack.c.h.b16 %v274
      %v457 = vunpack.c.l.b16 %v275
      %v458 = vunpack.c.h.b16 %v275
      %v459 = vunpack.c.l.b16 %v276
      %v460 = vunpack.c.h.b16 %v276
      %v461 = vunpack.c.l.b16 %v277
      %v462 = vunpack.c.h.b16 %v277
      %v463 = vunpack.c.l.b16 %v278
      %v464 = vunpack.c.h.b16 %v278
      %v465 = vunpack.c.l.b16 %v279
      %v466 = vunpack.c.h.b16 %v279
      %v467 = vunpack.c.l.b16 %v280
      %v468 = vunpack.c.h.b16 %v280
      %v469 = vunpack.c.l.b16 %v281
      %v470 = vunpack.c.h.b16 %v281
      %v471 = vunpack.c.l.b16 %v282
      %v472 = vunpack.c.h.b16 %v282
      %v473 = vunpack.c.l.b16 %v283
      %v474 = vunpack.c.h.b16 %v283
      %v475 = vunpack.c.l.b16 %v284
      %v476 = vunpack.c.h.b16 %v284
      %v477 = vunpack.c.l.b16 %v285
      %v478 = vunpack.c.h.b16 %v285
      %v479 = vunpack.c.l.b16 %v286
      %v480 = vunpack.c.h.b16 %v286
      %v481 = vunpack.c.l.b16 %v287
      %v482 = vunpack.c.h.b16 %v287
      %v483 = vunpack.c.l.b16 %v288
      %v484 = vunpack.c.h.b16 %v288
      %v485 = vunpack.c.l.b16 %v289
      %v486 = vunpack.c.h.b16 %v289
      %v487 = vpack.c.b16 %v407, %v403
      %v488 = vpack.c.b16 %v408, %v404
      %v489 = vpack.c.b16 %v409, %v405
      %v490 = vpack.c.b16 %v410, %v406
      %v491 = vpack.c.b16 %v415, %v411
      %v492 = vpack.c.b16 %v416, %v412
      %v493 = vpack.c.b16 %v417, %v413
      %v494 = vpack.c.b16 %v418, %v414
      %v495 = vpack.c.b16 %v423, %v419
      %v496 = vpack.c.b16 %v424, %v420
      %v497 = vpack.c.b16 %v425, %v421
      %v498 = vpack.c.b16 %v426, %v422
      %v499 = vpack.c.b16 %v431, %v427
      %v500 = vpack.c.b16 %v432, %v428
      %v501 = vpack.c.b16 %v433, %v429
      %v502 = vpack.c.b16 %v434, %v430
      %v503 = vpack.c.b16 %v439, %v435
      %v504 = vpack.c.b16 %v440, %v436
      %v505 = vpack.c.b16 %v441, %v437
      %v506 = vpack.c.b16 %v442, %v438
      %v507 = vpack.c.b16 %v447, %v443
      %v508 = vpack.c.b16 %v448, %v444
      %v509 = vpack.c.b16 %v449, %v445
      %v510 = vpack.c.b16 %v450, %v446
      %v511 = vpack.c.b16 %v455, %v451
      %v512 = vpack.c.b16 %v456, %v452
      %v513 = vpack.c.b16 %v457, %v453
      %v514 = vpack.c.b16 %v458, %v454
      %v515 = vpack.c.b16 %v463, %v459
      %v516 = vpack.c.b16 %v464, %v460
      %v517 = vpack.c.b16 %v465, %v461
      %v518 = vpack.c.b16 %v466, %v462
      %v519 = vpack.c.b16 %v471, %v467
      %v520 = vpack.c.b16 %v472, %v468
      %v521 = vpack.c.b16 %v473, %v469
      %v522 = vpack.c.b16 %v474, %v470
      %v523 = vpack.c.b16 %v479, %v475
      %v524 = vpack.c.b16 %v480, %v476
      %v525 = vpack.c.b16 %v481, %v477
      %v526 = vpack.c.b16 %v482, %v478
      %v527 = vpack.c.b16 %v483, %v483
      %v528 = vpack.c.b16 %v484, %v484
      %v529 = vpack.c.b16 %v485, %v485
      %v530 = vpack.c.b16 %v486, %v486
      %v639 = vunpack.c.l.b16 %v290
      %v640 = vunpack.c.l.b16 %v291
      %v641 = vunpack.c.l.b16 %v292
      %v642 = vunpack.c.l.b16 %v293
      %v643 = vunpack.c.l.b16 %v294
      %v644 = vunpack.c.l.b16 %v295
      %v645 = vunpack.c.l.b16 %v296
      %v646 = vunpack.c.l.b16 %v297
      %v647 = vunpack.c.l.b16 %v298
      %v648 = vunpack.c.l.b16 %v299
      %v649 = vunpack.c.l.b16 %v300
      %v650 = vunpack.c.l.b16 %v301
      %v651 = vunpack.c.l.b16 %v302
      %v652 = vunpack.c.l.b16 %v303
      %v653 = vunpack.c.l.b16 %v304
      %v654 = vunpack.c.l.b16 %v305
      %v655 = vunpack.c.l.b16 %v306
      %v656 = vunpack.c.l.b16 %v307
      %v657 = vunpack.c.l.b16 %v308
      %v658 = vunpack.c.l.b16 %v309
      %v659 = vunpack.c.l.b16 %v310
      %v660 = vunpack.c.l.b16 %v311
      %v661 = vunpack.c.l.b16 %v312
      %v662 = vunpack.c.l.b16 %v313
      %v663 = vunpack.c.l.b16 %v314
      %v664 = vunpack.c.l.b16 %v315
      %v665 = vunpack.c.l.b16 %v316
      %v666 = vunpack.c.l.b16 %v317
      %v667 = vunpack.c.l.b16 %v318
      %v668 = vunpack.c.l.b16 %v319
      %v669 = vunpack.c.l.b16 %v320
      %v670 = vunpack.c.l.b16 %v321
      %v671 = vunpack.c.l.b16 %v322
      %v672 = vunpack.c.l.b16 %v323
      %v673 = vunpack.c.l.b16 %v324
      %v674 = vunpack.c.l.b16 %v325
      %v675 = vunpack.c.l.b16 %v326
      %v676 = vunpack.c.l.b16 %v327
      %v677 = vunpack.c.l.b16 %v328
      %v678 = vunpack.c.l.b16 %v329
      %v679 = vunpack.c.l.b16 %v330
      %v680 = vunpack.c.l.b16 %v331
      %v681 = vunpack.c.l.b16 %v332
      %v682 = vunpack.c.l.b16 %v333
      %v683 = vunpack.c.l.b16 %v334
      %v684 = vunpack.c.l.b16 %v335
      %v685 = vunpack.c.l.b16 %v336
      %v686 = vunpack.c.l.b16 %v337
      %v687 = vunpack.c.l.b16 %v338
      %v688 = vunpack.c.l.b16 %v339
      %v689 = vunpack.c.l.b16 %v340
      %v690 = vunpack.c.l.b16 %v341
      %v691 = vunpack.c.l.b16 %v342
      %v692 = vunpack.c.l.b16 %v343
      %v693 = vunpack.c.l.b16 %v344
      %v694 = vunpack.c.l.b16 %v345
      %v695 = vunpack.c.l.b16 %v346
      %v696 = vunpack.c.l.b16 %v347
      %v697 = vunpack.c.l.b16 %v348
      %v698 = vunpack.c.l.b16 %v349
      %v699 = vunpack.c.l.b16 %v350
      %v700 = vunpack.c.l.b16 %v351
      %v701 = vunpack.c.l.b16 %v352
      %v702 = vunpack.c.l.b16 %v353
      %v703 = vpack.c.b16 %v640, %v639
      %v704 = vpack.c.b16 %v642, %v641
      %v705 = vpack.c.b16 %v644, %v643
      %v706 = vpack.c.b16 %v646, %v645
      %v707 = vpack.c.b16 %v648, %v647
      %v708 = vpack.c.b16 %v650, %v649
      %v709 = vpack.c.b16 %v652, %v651
      %v710 = vpack.c.b16 %v654, %v653
      %v711 = vpack.c.b16 %v656, %v655
      %v712 = vpack.c.b16 %v658, %v657
      %v713 = vpack.c.b16 %v660, %v659
      %v714 = vpack.c.b16 %v662, %v661
      %v715 = vpack.c.b16 %v664, %v663
      %v716 = vpack.c.b16 %v666, %v665
      %v717 = vpack.c.b16 %v668, %v667
      %v718 = vpack.c.b16 %v670, %v669
      %v719 = vpack.c.b16 %v672, %v671
      %v720 = vpack.c.b16 %v674, %v673
      %v721 = vpack.c.b16 %v676, %v675
      %v722 = vpack.c.b16 %v678, %v677
      %v723 = vpack.c.b16 %v680, %v679
      %v724 = vpack.c.b16 %v682, %v681
      %v725 = vpack.c.b16 %v684, %v683
      %v726 = vpack.c.b16 %v686, %v685
      %v727 = vpack.c.b16 %v688, %v687
      %v728 = vpack.c.b16 %v690, %v689
      %v729 = vpack.c.b16 %v692, %v691
      %v730 = vpack.c.b16 %v694, %v693
      %v731 = vpack.c.b16 %v696, %v695
      %v732 = vpack.c.b16 %v698, %v697
      %v733 = vpack.c.b16 %v700, %v699
      %v734 = vpack.c.b16 %v702, %v701
      %767 = vmatprep.subr.bf16.mxu0 0
      %768 = vmatpush1.bf16.msra.mxu0 %v703
      %769 = vmatprep.subr.bf16.mxu0 0
      %770 = vmatpush1.bf16.msra.mxu0 %v704
      %771 = vmatprep.subr.bf16.mxu0 0
      %772 = vmatpush1.bf16.msra.mxu0 %v705
      %773 = vmatprep.subr.bf16.mxu0 0
      %774 = vmatpush1.bf16.msra.mxu0 %v706
      %775 = vmatprep.subr.bf16.mxu0 0
      %776 = vmatpush1.bf16.msra.mxu0 %v707
      %777 = vmatprep.subr.bf16.mxu0 0
      %778 = vmatpush1.bf16.msra.mxu0 %v708
      %779 = vmatprep.subr.bf16.mxu0 0
      %780 = vmatpush1.bf16.msra.mxu0 %v709
      %781 = vmatprep.subr.bf16.mxu0 0
      %782 = vmatpush1.bf16.msra.mxu0 %v710
      %783 = vmatprep.subr.bf16.mxu0 0
      %784 = vmatpush1.bf16.msra.mxu0 %v711
      %785 = vmatprep.subr.bf16.mxu0 0
      %786 = vmatpush1.bf16.msra.mxu0 %v712
      %787 = vmatprep.subr.bf16.mxu0 0
      %788 = vmatpush1.bf16.msra.mxu0 %v713
      %789 = vmatprep.subr.bf16.mxu0 0
      %790 = vmatpush1.bf16.msra.mxu0 %v714
      %791 = vmatprep.subr.bf16.mxu0 0
      %792 = vmatpush1.bf16.msra.mxu0 %v715
      %793 = vmatprep.subr.bf16.mxu0 0
      %794 = vmatpush1.bf16.msra.mxu0 %v716
      %795 = vmatprep.subr.bf16.mxu0 0
      %796 = vmatpush1.bf16.msra.mxu0 %v717
      %797 = vmatprep.subr.bf16.mxu0 0
      %798 = vmatpush1.bf16.msra.mxu0 %v718
      %799 = vmatprep.mubr.bf16.mxu0 %v488
      %800 = vmatmul.mubr.bf16.gmra.mrb[0].mxu0 %v487
      %v801 = vpop.f32.mrb[0].mxu0
      %v802 = vadd.f32 %v359, %v801
      %v803 = vpop.f32.mrb[0].mxu0
      %v804 = vpop.f32.mrb[0].mxu0
      %v805 = vadd.f32 %v359, %v804
      %v806 = vpop.f32.mrb[0].mxu0
      %807 = vmatprep.mubr.bf16.mxu0 %v492
      %808 = vmatmul.mubr.bf16.gmra.mrb[0].mxu0 %v491
      %v809 = vpop.f32.mrb[0].mxu0
      %v810 = vadd.f32 %v359, %v809
      %v811 = vpop.f32.mrb[0].mxu0
      %v812 = vpop.f32.mrb[0].mxu0
      %v813 = vadd.f32 %v359, %v812
      %v814 = vpop.f32.mrb[0].mxu0
      %815 = vmatprep.mubr.bf16.mxu0 %v496
      %816 = vmatmul.mubr.bf16.gmra.mrb[0].mxu0 %v495
      %v817 = vpop.f32.mrb[0].mxu0
      %v818 = vadd.f32 %v359, %v817
      %v819 = vpop.f32.mrb[0].mxu0
      %v820 = vpop.f32.mrb[0].mxu0
      %v821 = vadd.f32 %v359, %v820
      %v822 = vpop.f32.mrb[0].mxu0
      %823 = vmatprep.mubr.bf16.mxu0 %v500
      %824 = vmatmul.mubr.bf16.gmra.mrb[0].mxu0 %v499
      %v825 = vpop.f32.mrb[0].mxu0
      %v826 = vadd.f32 %v359, %v825
      %v827 = vpop.f32.mrb[0].mxu0
      %v828 = vpop.f32.mrb[0].mxu0
      %v829 = vadd.f32 %v359, %v828
      %v830 = vpop.f32.mrb[0].mxu0
      %831 = vmatprep.mubr.bf16.mxu0 %v504
      %832 = vmatmul.mubr.bf16.gmra.mrb[0].mxu0 %v503
      %v833 = vpop.f32.mrb[0].mxu0
      %v834 = vadd.f32 %v359, %v833
      %v835 = vpop.f32.mrb[0].mxu0
      %v836 = vpop.f32.mrb[0].mxu0
      %v837 = vadd.f32 %v359, %v836
      %v838 = vpop.f32.mrb[0].mxu0
      %839 = vmatprep.mubr.bf16.mxu0 %v508
      %840 = vmatmul.mubr.bf16.gmra.mrb[0].mxu0 %v507
      %v841 = vpop.f32.mrb[0].mxu0
      %v842 = vadd.f32 %v359, %v841
      %v843 = vpop.f32.mrb[0].mxu0
      %v844 = vpop.f32.mrb[0].mxu0
      %v845 = vadd.f32 %v359, %v844
      %v846 = vpop.f32.mrb[0].mxu0
      %847 = vmatprep.mubr.bf16.mxu0 %v512
      %848 = vmatmul.mubr.bf16.gmra.mrb[0].mxu0 %v511
      %v849 = vpop.f32.mrb[0].mxu0
      %v850 = vadd.f32 %v359, %v849
      %v851 = vpop.f32.mrb[0].mxu0
      %v852 = vpop.f32.mrb[0].mxu0
      %v853 = vadd.f32 %v359, %v852
      %v854 = vpop.f32.mrb[0].mxu0
      %855 = vmatprep.mubr.bf16.mxu0 %v516
      %856 = vmatmul.mubr.bf16.gmra.mrb[0].mxu0 %v515
      %v857 = vpop.f32.mrb[0].mxu0
      %v858 = vadd.f32 %v359, %v857
      %v859 = vpop.f32.mrb[0].mxu0
      %v860 = vpop.f32.mrb[0].mxu0
      %v861 = vadd.f32 %v359, %v860
      %v862 = vpop.f32.mrb[0].mxu0
      %863 = vmatprep.mubr.bf16.mxu0 %v520
      %864 = vmatmul.mubr.bf16.gmra.mrb[0].mxu0 %v519
      %v865 = vpop.f32.mrb[0].mxu0
      %v866 = vadd.f32 %v359, %v865
      %v867 = vpop.f32.mrb[0].mxu0
      %v868 = vpop.f32.mrb[0].mxu0
      %v869 = vadd.f32 %v359, %v868
      %v870 = vpop.f32.mrb[0].mxu0
      %871 = vmatprep.mubr.bf16.mxu0 %v524
      %872 = vmatmul.mubr.bf16.gmra.mrb[0].mxu0 %v523
      %v873 = vpop.f32.mrb[0].mxu0
      %v874 = vadd.f32 %v359, %v873
      %v875 = vpop.f32.mrb[0].mxu0
      %v876 = vpop.f32.mrb[0].mxu0
      %v877 = vadd.f32 %v359, %v876
      %v878 = vpop.f32.mrb[0].mxu0
      %879 = vmatprep.mubr.bf16.mxu0 %v528
      %880 = vmatmul.mubr.bf16.gmra.mrb[0].mxu0 %v527
      %v881 = vpop.f32.mrb[0].mxu0
      %v882 = vadd.f32 %v359, %v881
      %v883 = vpop.f32.mrb[0].mxu0
      %v884 = vpop.f32.mrb[0].mxu0
      %v885 = vpop.f32.mrb[0].mxu0
      %886 = vdwg.mxu0
      %887 = vmatprep.subr.bf16.mxu0 0
      %888 = vmatpush1.bf16.msra.mxu0 %v719
      %889 = vmatprep.subr.bf16.mxu0 0
      %890 = vmatpush1.bf16.msra.mxu0 %v720
      %891 = vmatprep.subr.bf16.mxu0 0
      %892 = vmatpush1.bf16.msra.mxu0 %v721
      %893 = vmatprep.subr.bf16.mxu0 0
      %894 = vmatpush1.bf16.msra.mxu0 %v722
      %895 = vmatprep.subr.bf16.mxu0 0
      %896 = vmatpush1.bf16.msra.mxu0 %v723
      %897 = vmatprep.subr.bf16.mxu0 0
      %898 = vmatpush1.bf16.msra.mxu0 %v724
      %899 = vmatprep.subr.bf16.mxu0 0
      %900 = vmatpush1.bf16.msra.mxu0 %v725
      %901 = vmatprep.subr.bf16.mxu0 0
      %902 = vmatpush1.bf16.msra.mxu0 %v726
      %903 = vmatprep.subr.bf16.mxu0 0
      %904 = vmatpush1.bf16.msra.mxu0 %v727
      %905 = vmatprep.subr.bf16.mxu0 0
      %906 = vmatpush1.bf16.msra.mxu0 %v728
      %907 = vmatprep.subr.bf16.mxu0 0
      %908 = vmatpush1.bf16.msra.mxu0 %v729
      %909 = vmatprep.subr.bf16.mxu0 0
      %910 = vmatpush1.bf16.msra.mxu0 %v730
      %911 = vmatprep.subr.bf16.mxu0 0
      %912 = vmatpush1.bf16.msra.mxu0 %v731
      %913 = vmatprep.subr.bf16.mxu0 0
      %914 = vmatpush1.bf16.msra.mxu0 %v732
      %915 = vmatprep.subr.bf16.mxu0 0
      %916 = vmatpush1.bf16.msra.mxu0 %v733
      %917 = vmatprep.subr.bf16.mxu0 0
      %918 = vmatpush1.bf16.msra.mxu0 %v734
      %919 = vmatprep.mubr.bf16.mxu0 %v490
      %920 = vmatmul.mubr.bf16.gmra.mrb[0].mxu0 %v489
      %v921 = vpop.f32.mrb[0].mxu0
      %v922 = vadd.f32 %v802, %v921
      %v923 = vpop.f32.mrb[0].mxu0
      %v924 = vpop.f32.mrb[0].mxu0
      %v925 = vadd.f32 %v805, %v924
      %v926 = vpop.f32.mrb[0].mxu0
      %927 = vmatprep.mubr.bf16.mxu0 %v494
      %928 = vmatmul.mubr.bf16.gmra.mrb[0].mxu0 %v493
      %v929 = vpop.f32.mrb[0].mxu0
      %v930 = vadd.f32 %v810, %v929
      %v931 = vpop.f32.mrb[0].mxu0
      %v932 = vpop.f32.mrb[0].mxu0
      %v933 = vadd.f32 %v813, %v932
      %v934 = vpop.f32.mrb[0].mxu0
      %935 = vmatprep.mubr.bf16.mxu0 %v498
      %936 = vmatmul.mubr.bf16.gmra.mrb[0].mxu0 %v497
      %v937 = vpop.f32.mrb[0].mxu0
      %v938 = vadd.f32 %v818, %v937
      %v939 = vpop.f32.mrb[0].mxu0
      %v940 = vpop.f32.mrb[0].mxu0
      %v941 = vadd.f32 %v821, %v940
      %v942 = vpop.f32.mrb[0].mxu0
      %943 = vmatprep.mubr.bf16.mxu0 %v502
      %944 = vmatmul.mubr.bf16.gmra.mrb[0].mxu0 %v501
      %v945 = vpop.f32.mrb[0].mxu0
      %v946 = vadd.f32 %v826, %v945
      %v947 = vpop.f32.mrb[0].mxu0
      %v948 = vpop.f32.mrb[0].mxu0
      %v949 = vadd.f32 %v829, %v948
      %v950 = vpop.f32.mrb[0].mxu0
      %951 = vmatprep.mubr.bf16.mxu0 %v506
      %952 = vmatmul.mubr.bf16.gmra.mrb[0].mxu0 %v505
      %v953 = vpop.f32.mrb[0].mxu0
      %v954 = vadd.f32 %v834, %v953
      %v955 = vpop.f32.mrb[0].mxu0
      %v956 = vpop.f32.mrb[0].mxu0
      %v957 = vadd.f32 %v837, %v956
      %v958 = vpop.f32.mrb[0].mxu0
      %959 = vmatprep.mubr.bf16.mxu0 %v510
      %960 = vmatmul.mubr.bf16.gmra.mrb[0].mxu0 %v509
      %v961 = vpop.f32.mrb[0].mxu0
      %v962 = vadd.f32 %v842, %v961
      %v963 = vpop.f32.mrb[0].mxu0
      %v964 = vpop.f32.mrb[0].mxu0
      %v965 = vadd.f32 %v845, %v964
      %v966 = vpop.f32.mrb[0].mxu0
      %967 = vmatprep.mubr.bf16.mxu0 %v514
      %968 = vmatmul.mubr.bf16.gmra.mrb[0].mxu0 %v513
      %v969 = vpop.f32.mrb[0].mxu0
      %v970 = vadd.f32 %v850, %v969
      %v971 = vpop.f32.mrb[0].mxu0
      %v972 = vpop.f32.mrb[0].mxu0
      %v973 = vadd.f32 %v853, %v972
      %v974 = vpop.f32.mrb[0].mxu0
      %975 = vmatprep.mubr.bf16.mxu0 %v518
      %976 = vmatmul.mubr.bf16.gmra.mrb[0].mxu0 %v517
      %v977 = vpop.f32.mrb[0].mxu0
      %v978 = vadd.f32 %v858, %v977
      %v979 = vpop.f32.mrb[0].mxu0
      %v980 = vpop.f32.mrb[0].mxu0
      %v981 = vadd.f32 %v861, %v980
      %v982 = vpop.f32.mrb[0].mxu0
      %983 = vmatprep.mubr.bf16.mxu0 %v522
      %984 = vmatmul.mubr.bf16.gmra.mrb[0].mxu0 %v521
      %v985 = vpop.f32.mrb[0].mxu0
      %v986 = vadd.f32 %v866, %v985
      %v987 = vpop.f32.mrb[0].mxu0
      %v988 = vpop.f32.mrb[0].mxu0
      %v989 = vadd.f32 %v869, %v988
      %v990 = vpop.f32.mrb[0].mxu0
      %991 = vmatprep.mubr.bf16.mxu0 %v526
      %992 = vmatmul.mubr.bf16.gmra.mrb[0].mxu0 %v525
      %v993 = vpop.f32.mrb[0].mxu0
      %v994 = vadd.f32 %v874, %v993
      %v995 = vpop.f32.mrb[0].mxu0
      %v996 = vpop.f32.mrb[0].mxu0
      %v997 = vadd.f32 %v877, %v996
      %v998 = vpop.f32.mrb[0].mxu0
      %999 = vmatprep.mubr.bf16.mxu0 %v530
      %1000 = vmatmul.mubr.bf16.gmra.mrb[0].mxu0 %v529
      %v1001 = vpop.f32.mrb[0].mxu0
      %v1002 = vadd.f32 %v882, %v1001
      %v1003 = vpop.f32.mrb[0].mxu0
      %v1004 = vpop.f32.mrb[0].mxu0
      %v1005 = vpop.f32.mrb[0].mxu0
      %1006 = vdwg.mxu0
      %v1007 = vmax.f32 %v922, 0.0
      %v1008 = vmax.f32 %v925, 0.0
      %v1009 = vmax.f32 %v930, 0.0
      %v1010 = vmax.f32 %v933, 0.0
      %v1011 = vmax.f32 %v938, 0.0
      %v1012 = vmax.f32 %v941, 0.0
      %v1013 = vmax.f32 %v946, 0.0
      %v1014 = vmax.f32 %v949, 0.0
      %v1015 = vmax.f32 %v954, 0.0
      %v1016 = vmax.f32 %v957, 0.0
      %v1017 = vmax.f32 %v962, 0.0
      %v1018 = vmax.f32 %v965, 0.0
      %v1019 = vmax.f32 %v970, 0.0
      %v1020 = vmax.f32 %v973, 0.0
      %v1021 = vmax.f32 %v978, 0.0
      %v1022 = vmax.f32 %v981, 0.0
      %v1023 = vmax.f32 %v986, 0.0
      %v1024 = vmax.f32 %v989, 0.0
      %v1025 = vmax.f32 %v994, 0.0
      %v1026 = vmax.f32 %v997, 0.0
      %v1027 = vmax.f32 %v1002, 0.0
      %v1028 = vpack.c.bf16 %v1008, %v1007
      %v1029 = vpack.c.bf16 %v1010, %v1009
      %v1030 = vpack.c.bf16 %v1012, %v1011
      %v1031 = vpack.c.bf16 %v1014, %v1013
      %v1032 = vpack.c.bf16 %v1016, %v1015
      %v1033 = vpack.c.bf16 %v1018, %v1017
      %v1034 = vpack.c.bf16 %v1020, %v1019
      %v1035 = vpack.c.bf16 %v1022, %v1021
      %v1036 = vpack.c.bf16 %v1024, %v1023
      %v1037 = vpack.c.bf16 %v1026, %v1025
      %v1038 = vpack.c.bf16 %v1027, %v1027
      %v1050 = vunpack.c.l.b16 %v1028
      %v1051 = vunpack.c.h.b16 %v1028
      %v1052 = vunpack.c.l.b16 %v1029
      %v1053 = vunpack.c.h.b16 %v1029
      %v1054 = vunpack.c.l.b16 %v1030
      %v1055 = vunpack.c.h.b16 %v1030
      %v1056 = vunpack.c.l.b16 %v1031
      %v1057 = vunpack.c.h.b16 %v1031
      %v1058 = vunpack.c.l.b16 %v1032
      %v1059 = vunpack.c.h.b16 %v1032
      %v1060 = vunpack.c.l.b16 %v1033
      %v1061 = vunpack.c.h.b16 %v1033
      %v1062 = vunpack.c.l.b16 %v1034
      %v1063 = vunpack.c.h.b16 %v1034
      %v1064 = vunpack.c.l.b16 %v1035
      %v1065 = vunpack.c.h.b16 %v1035
      %v1066 = vunpack.c.l.b16 %v1036
      %v1067 = vunpack.c.h.b16 %v1036
      %v1068 = vunpack.c.l.b16 %v1037
      %v1069 = vunpack.c.h.b16 %v1037
      %v1070 = vunpack.c.l.b16 %v1038
      %v1071 = vpack.c.b16 %v1050, %v1050
      %v1072 = vpack.c.b16 %v1051, %v1051
      %v1073 = vpack.c.b16 %v1052, %v1052
      %v1074 = vpack.c.b16 %v1053, %v1053
      %v1075 = vpack.c.b16 %v1054, %v1054
      %v1076 = vpack.c.b16 %v1055, %v1055
      %v1077 = vpack.c.b16 %v1056, %v1056
      %v1078 = vpack.c.b16 %v1057, %v1057
      %v1079 = vpack.c.b16 %v1058, %v1058
      %v1080 = vpack.c.b16 %v1059, %v1059
      %v1081 = vpack.c.b16 %v1060, %v1060
      %v1082 = vpack.c.b16 %v1061, %v1061
      %v1083 = vpack.c.b16 %v1062, %v1062
      %v1084 = vpack.c.b16 %v1063, %v1063
      %v1085 = vpack.c.b16 %v1064, %v1064
      %v1086 = vpack.c.b16 %v1065, %v1065
      %v1087 = vpack.c.b16 %v1066, %v1066
      %v1088 = vpack.c.b16 %v1067, %v1067
      %v1089 = vpack.c.b16 %v1068, %v1068
      %v1090 = vpack.c.b16 %v1069, %v1069
      %v1091 = vpack.c.b16 %v1070, %v1070
      %vm1113 = vcmask 519168
      %1114 = vst.msk [vmem:[%s245] sm:$0xf] %vm1113, %v1071
      %1115 = vst.msk [vmem:[%s245 + $0x4] sm:$0xf] %vm1113, %v1072
      %1116 = vst.msk [vmem:[%s245 + $0x8] sm:$0xf] %vm1113, %v1073
      %1117 = vst.msk [vmem:[%s245 + $0xc] sm:$0xf] %vm1113, %v1074
      %1118 = vst.msk [vmem:[%s245 + $0x10] sm:$0xf] %vm1113, %v1075
      %1119 = vst.msk [vmem:[%s245 + $0x14] sm:$0xf] %vm1113, %v1076
      %1120 = vst.msk [vmem:[%s245 + $0x18] sm:$0xf] %vm1113, %v1077
      %1121 = vst.msk [vmem:[%s245 + $0x1c] sm:$0xf] %vm1113, %v1078
      %1122 = vst.msk [vmem:[%s245 + $0x20] sm:$0xf] %vm1113, %v1079
      %1123 = vst.msk [vmem:[%s245 + $0x24] sm:$0xf] %vm1113, %v1080
      %1124 = vst.msk [vmem:[%s245 + $0x28] sm:$0xf] %vm1113, %v1081
      %1125 = vst.msk [vmem:[%s245 + $0x2c] sm:$0xf] %vm1113, %v1082
      %1126 = vst.msk [vmem:[%s245 + $0x30] sm:$0xf] %vm1113, %v1083
      %1127 = vst.msk [vmem:[%s245 + $0x34] sm:$0xf] %vm1113, %v1084
      %1128 = vst.msk [vmem:[%s245 + $0x38] sm:$0xf] %vm1113, %v1085
      %1129 = vst.msk [vmem:[%s245 + $0x3c] sm:$0xf] %vm1113, %v1086
      %1130 = vst.msk [vmem:[%s245 + $0x40] sm:$0xf] %vm1113, %v1087
      %1131 = vst.msk [vmem:[%s245 + $0x44] sm:$0xf] %vm1113, %v1088
      %1132 = vst.msk [vmem:[%s245 + $0x48] sm:$0xf] %vm1113, %v1089
      %1133 = vst.msk [vmem:[%s245 + $0x4c] sm:$0xf] %vm1113, %v1090
      %vm1134 = vcmask 516096
      %1135 = vst.msk [vmem:[%s245 + $0x50] sm:$0x1] %vm1134, %v1091
      %s1136 = smul.u32 21, %s19
      %p1137 = scmp.lt.s32.totalorder %s18, 1
      %s1138 = scalar_select %p1137, %s18, 1
      %p1139 = scmp.lt.s32.totalorder %s1136, 20
      %s1140 = scalar_select %p1139, %s1136, 20
      %s1141 = smul.addr %s1138, 21
      %s1142 = sadd.s32 %s1140, %s1141
      %s1143 = smul.addr %s1142, 4
      %s1144 = scalar_lea.vmem %s3, %s1143
      // Predicated region
      $region33: #{model_forward.5} parent=31 // pred_check
        %p1145 = pneg %p126
      $region34: #{model_forward.5} parent=31 // pred_check_branch
        %1147 = sbr.rel (%p1145) target = $region36
      $region35: #{model_forward.5} parent=31 // pred_region
        %s1148 = smul.u32 21, %s19
      $region36: #{model_forward.5} parent=31 // pred_fallthru
        _
    $region32: #{model_forward.5} parent=5 // pred_fallthru
      _
    %p1149 = scmp.le.s32.totalorder 2, %s9
    // Predicated region
    $region37: #{model_forward.5} parent=5 // pred_check
      %p1150 = pneg %p1149
    $region38: #{model_forward.5} parent=5 // pred_check_branch
      %1152 = sbr.rel (%p1150) target = $region40
    $region39: #{model_forward.5} parent=5 // pred_region
      %s1153 = ssub.s32 %s9, 2
      // Predicated region
      $region41: #{model_forward.5} parent=39 // pred_check
        %p1154 = pneg %p132
      $region42: #{model_forward.5} parent=39 // pred_check_branch
        %1156 = sbr.rel (%p1154) target = $region44
      $region43: #{model_forward.5} parent=39 // pred_region
        %s1157 = smul.u32 21, %s21
        %p1158 = scmp.lt.s32.totalorder %s20, 1
        %s1159 = scalar_select %p1158, %s20, 1
        %p1160 = scmp.lt.s32.totalorder %s1157, 20
        %s1161 = scalar_select %p1160, %s1157, 20
        %s1162 = smul.addr %s1159, 21
        %s1163 = sadd.s32 %s1161, %s1162
        %s1164 = smul.addr %s1163, 4
        %s1165 = scalar_lea.vmem %s3, %s1164
      $region44: #{model_forward.5} parent=39 // pred_fallthru
        _
    $region40: #{model_forward.5} parent=5 // pred_fallthru
      _
  $region6: #{model_forward.5} parent=0 // loop_footer
    %s13 = sadd.s32 1, %s9
  $region7: #{model_forward.5} parent=0 // loop_footer_branch
    %8 = sbr.rel target = $region3
  $region8: #{model_forward.5} parent=0 // loop_exit
    _

// kernel: model_forward.6
$region0: #{model_forward.6}
  #allocation0 [shape = 'u32[]', space=smem, size = 0x4, offset = 0x4, fixed_abs, tag = 'smem constant byte address 0x4 - core index']
  #allocation1 [shape = 'u32[144,128]{1,0:T(1,128)}', space=vmem, size = 0x12000, scoped, tag = 'internal scratch']
  %s0 = inlined_call_operand.vmem [shape: bf16[2,98,576], index: 0, kind: input, shape index: {}]
  %s1 = inlined_call_operand.vmem [shape: bf16[2,576,64], index: 1, kind: input, shape index: {}]
  %s2 = inlined_call_operand.vmem [shape: f32[2,1,64], index: 2, kind: input, shape index: {}]
  %s3 = inlined_call_operand.vmem [shape: bf16[2,98,64], index: 3, kind: output, shape index: {}]
  %s4 = sld [smem:[#allocation0]]
  $region45: #{model_forward.6} parent=0
    _
  %s6 = ssub.s32 1, %s4
  %s7 = scalar_select 0, %s6, %s4
  loop: start=0, step=1, limit=4
  $region2: #{model_forward.6} parent=0 // loop_pre_header
    _
  $region3: #{model_forward.6} parent=0 // loop_header
    %s9 = sphi 0, %s13
    %p10 = scmp.ge.s32.totalorder %s9, 4
    %s16 = sphi 0, %s28
    %s17 = sphi 0, %s24
    %s18 = sphi 0, %s16
    %s19 = sphi 0, %s17
    %s20 = sphi 0, %s18
    %s21 = sphi 0, %s19
    %s33 = sphi 0, %s35
    %s36 = sphi 0, %s33
    %s37 = sphi 0, %s36
    %s53 = sphi 0, %s37
    %s59 = sphi 0, %s61
    %s62 = sphi 0, %s59
    %s63 = sphi 0, %s62
    %s79 = sphi 0, %s63
    %s85 = sphi 0, %s87
    %s88 = sphi 0, %s85
    %s89 = sphi 0, %s88
    %s105 = sphi 0, %s89
    %s113 = sphi 0, %s115
    %s116 = sphi 0, %s113
    %s117 = sphi 0, %s116
    %s133 = sphi 0, %s117
  $region4: #{model_forward.6} parent=0 // loop_header_branch
    %12 = sbr.rel (%p10) target = $region8
  $region5: #{model_forward.6} parent=0 // loop_body
    %s14 = ssub.s32 %s9, 1
    %s15 = ssub.s32 %s9, 2
    %s22 = sadd.s32 1, %s17
    %p23 = scmp.ge.s32.totalorder %s22, 1
    %s24 = scalar_select %p23, 0, %s22
    %s25 = sadd.s32 1, %s16
    %s26 = scalar_select %p23, %s25, %s16
    %p27 = scmp.ge.s32.totalorder %s26, 2
    %s28 = scalar_select %p27, 0, %s26
    %s29 = ssub.s32 %s16, %s28
    %s30 = ssub.s32 %s17, %s24
    %s31 = sor.u32 %s29, %s30
    %p32 = scmp.eq.s32.totalorder %s31, 0
    %s34 = sadd.s32 %s33, 1
    %s35 = scalar_select %p32, %s33, %s34
    %p38 = pneg %p32
    %p39 = scmp.eq.s32.totalorder %s9, 1
    %p40 = por %p38, %p39
    %p41 = scmp.ne.s32.totalorder %s33, %s36
    %p42 = scmp.eq.s32.totalorder %s9, 0
    %p43 = por %p41, %p42
    %p44 = scmp.ne.s32.totalorder %s33, %s36
    %p45 = scmp.eq.s32.totalorder %s14, 1
    %p46 = por %p44, %p45
    %p47 = scmp.ne.s32.totalorder %s36, %s37
    %p48 = scmp.eq.s32.totalorder %s14, 0
    %p49 = por %p47, %p48
    %p50 = scmp.ne.s32.totalorder %s36, %s37
    %p51 = scmp.eq.s32.totalorder %s15, 1
    %p52 = por %p50, %p51
    %p54 = scmp.ne.s32.totalorder %s37, %s53
    %p55 = scmp.eq.s32.totalorder %s15, 0
    %p56 = por %p54, %p55
    %s57 = ssub.s32 %s16, %s28
    %p58 = scmp.eq.s32.totalorder %s57, 0
    %s60 = sadd.s32 %s59, 1
    %s61 = scalar_select %p58, %s59, %s60
    %p64 = pneg %p58
    %p65 = scmp.eq.s32.totalorder %s9, 1
    %p66 = por %p64, %p65
    %p67 = scmp.ne.s32.totalorder %s59, %s62
    %p68 = scmp.eq.s32.totalorder %s9, 0
    %p69 = por %p67, %p68
    %p70 = scmp.ne.s32.totalorder %s59, %s62
    %p71 = scmp.eq.s32.totalorder %s14, 1
    %p72 = por %p70, %p71
    %p73 = scmp.ne.s32.totalorder %s62, %s63
    %p74 = scmp.eq.s32.totalorder %s14, 0
    %p75 = por %p73, %p74
    %p76 = scmp.ne.s32.totalorder %s62, %s63
    %p77 = scmp.eq.s32.totalorder %s15, 1
    %p78 = por %p76, %p77
    %p80 = scmp.ne.s32.totalorder %s63, %s79
    %p81 = scmp.eq.s32.totalorder %s15, 0
    %p82 = por %p80, %p81
    %s83 = ssub.s32 %s16, %s28
    %p84 = scmp.eq.s32.totalorder %s83, 0
    %s86 = sadd.s32 %s85, 1
    %s87 = scalar_select %p84, %s85, %s86
    %p90 = pneg %p84
    %p91 = scmp.eq.s32.totalorder %s9, 1
    %p92 = por %p90, %p91
    %p93 = scmp.ne.s32.totalorder %s85, %s88
    %p94 = scmp.eq.s32.totalorder %s9, 0
    %p95 = por %p93, %p94
    %p96 = scmp.ne.s32.totalorder %s85, %s88
    %p97 = scmp.eq.s32.totalorder %s14, 1
    %p98 = por %p96, %p97
    %p99 = scmp.ne.s32.totalorder %s88, %s89
    %p100 = scmp.eq.s32.totalorder %s14, 0
    %p101 = por %p99, %p100
    %p102 = scmp.ne.s32.totalorder %s88, %s89
    %p103 = scmp.eq.s32.totalorder %s15, 1
    %p104 = por %p102, %p103
    %p106 = scmp.ne.s32.totalorder %s89, %s105
    %p107 = scmp.eq.s32.totalorder %s15, 0
    %p108 = por %p106, %p107
    %s109 = ssub.s32 %s16, %s28
    %s110 = ssub.s32 %s17, %s24
    %s111 = sor.u32 %s109, %s110
    %p112 = scmp.eq.s32.totalorder %s111, 0
    %s114 = sadd.s32 %s113, 1
    %s115 = scalar_select %p112, %s113, %s114
    %p118 = pneg %p112
    %p119 = scmp.eq.s32.totalorder %s9, 1
    %p120 = por %p118, %p119
    %p121 = scmp.ne.s32.totalorder %s113, %s116
    %p122 = scmp.eq.s32.totalorder %s9, 0
    %p123 = por %p121, %p122
    %p124 = scmp.ne.s32.totalorder %s113, %s116
    %p125 = scmp.eq.s32.totalorder %s14, 1
    %p126 = por %p124, %p125
    %p127 = scmp.ne.s32.totalorder %s116, %s117
    %p128 = scmp.eq.s32.totalorder %s14, 0
    %p129 = por %p127, %p128
    %p130 = scmp.ne.s32.totalorder %s116, %s117
    %p131 = scmp.eq.s32.totalorder %s15, 1
    %p132 = por %p130, %p131
    %p134 = scmp.ne.s32.totalorder %s117, %s133
    %p135 = scmp.eq.s32.totalorder %s15, 0
    %p136 = por %p134, %p135
    %p137 = scmp.le.s32.totalorder 1, %s9
    %p138 = scmp.lt.s32.totalorder %s9, 3
    %p139 = pnand %p137, %p138
    %p140 = pneg %p139
    // Predicated region
    $region9: #{model_forward.6} parent=5 // pred_check
      _
    $region10: #{model_forward.6} parent=5 // pred_check_branch
      %142 = sbr.rel (%p139) target = $region12
    $region11: #{model_forward.6} parent=5 // pred_region
      %s143 = ssub.s32 %s9, 1
    $region12: #{model_forward.6} parent=5 // pred_fallthru
      _
    %p144 = scmp.lt.s32.totalorder %s9, 2
    // Predicated region
    $region13: #{model_forward.6} parent=5 // pred_check
      %p145 = pneg %p144
    $region14: #{model_forward.6} parent=5 // pred_check_branch
      %147 = sbr.rel (%p145) target = $region16
    $region15: #{model_forward.6} parent=5 // pred_region
      // Predicated region
      $region17: #{model_forward.6} parent=15 // pred_check
        %p148 = pneg %p43
      $region18: #{model_forward.6} parent=15 // pred_check_branch
        %150 = sbr.rel (%p148) target = $region20
      $region19: #{model_forward.6} parent=15 // pred_region
        %s151 = smul.u32 13, %s17
        %p152 = scmp.lt.s32.totalorder %s16, 1
        %s153 = scalar_select %p152, %s16, 1
        %p154 = scmp.lt.s32.totalorder %s151, 12
        %s155 = scalar_select %p154, %s151, 12
        %s156 = smul.addr %s155, 5
        %s157 = smul.addr %s153, 65
        %s158 = sadd.s32 %s156, %s157
        %s159 = smul.addr %s158, 4
        %s160 = scalar_lea.vmem %s0, %s159
        %s161 = smul.u32 13, %s17
      $region20: #{model_forward.6} parent=15 // pred_fallthru
        _
      // Predicated region
      $region21: #{model_forward.6} parent=15 // pred_check
        %p162 = pneg %p69
      $region22: #{model_forward.6} parent=15 // pred_check_branch
        %164 = sbr.rel (%p162) target = $region24
      $region23: #{model_forward.6} parent=15 // pred_region
        %p165 = scmp.lt.s32.totalorder %s16, 1
        %s166 = scalar_select %p165, %s16, 1
        %s167 = smul.addr %s166, 72
        %s168 = smul.addr %s167, 4
        %s169 = scalar_lea.vmem %s1, %s168
      $region24: #{model_forward.6} parent=15 // pred_fallthru
        _
      // Predicated region
      $region25: #{model_forward.6} parent=15 // pred_check
        %p170 = pneg %p95
      $region26: #{model_forward.6} parent=15 // pred_check_branch
        %172 = sbr.rel (%p170) target = $region28
      $region27: #{model_forward.6} parent=15 // pred_region
        %p173 = scmp.lt.s32.totalorder %s16, 1
        %s174 = scalar_select %p173, %s16, 1
        %s175 = scalar_lea.vmem %s2, %s174
      $region28: #{model_forward.6} parent=15 // pred_fallthru
        _
    $region16: #{model_forward.6} parent=5 // pred_fallthru
      _
    %p176 = scmp.le.s32.totalorder 1, %s9
    %p177 = scmp.lt.s32.totalorder %s9, 3
    %p178 = pnand %p176, %p177
    %p179 = pneg %p178
    // Predicated region
    $region29: #{model_forward.6} parent=5 // pred_check
      _
    $region30: #{model_forward.6} parent=5 // pred_check_branch
      %181 = sbr.rel (%p178) target = $region32
    $region31: #{model_forward.6} parent=5 // pred_region
      %s182 = ssub.s32 %s9, 1
      %s183 = smul.u32 13, %s19
      %p184 = scmp.lt.s32.totalorder %s18, 1
      %s185 = scalar_select %p184, %s18, 1
      %p186 = scmp.lt.s32.totalorder %s183, 12
      %s187 = scalar_select %p186, %s183, 12
      %s188 = smul.addr %s187, 5
      %s189 = smul.addr %s185, 65
      %s190 = sadd.s32 %s188, %s189
      %s191 = smul.addr %s190, 4
      %s192 = scalar_lea.vmem %s0, %s191
      %p193 = pneg %p49
      %p194 = pneg %p46
      %p195 = scmp.lt.s32.totalorder %s18, 1
      %s196 = scalar_select %p195, %s18, 1
      %s197 = smul.addr %s196, 72
      %s198 = smul.addr %s197, 4
      %s199 = scalar_lea.vmem %s1, %s198
      %p200 = pneg %p75
      %p201 = pneg %p72
      %p202 = scmp.lt.s32.totalorder %s18, 1
      %s203 = scalar_select %p202, %s18, 1
      %s204 = scalar_lea.vmem %s2, %s203
      %p205 = pneg %p101
      %p206 = pneg %p98
      %p207 = pneg %p129
      %p208 = pneg %p126
      %s209 = smul.u32 13, %s19
      %p210 = scmp.lt.s32.totalorder %s18, 1
      %s211 = scalar_select %p210, %s18, 1
      %p212 = scmp.lt.s32.totalorder %s209, 12
      %s213 = scalar_select %p212, %s209, 12
      %s214 = smul.addr %s211, 13
      %s215 = sadd.s32 %s213, %s214
      %s216 = smul.addr %s215, 4
      %s217 = scalar_lea.vmem %s3, %s216
      %s218 = smul.u32 13, %s19
      %p219 = scmp.lt.s32.totalorder %s18, 1
      %s220 = scalar_select %p219, %s18, 1
      %p221 = scmp.lt.s32.totalorder %s218, 12
      %s222 = scalar_select %p221, %s218, 12
      %s223 = smul.addr %s222, 5
      %s224 = smul.addr %s220, 65
      %s225 = sadd.s32 %s223, %s224
      %s226 = smul.addr %s225, 4
      %s227 = scalar_lea.vmem %s0, %s226
      %s228 = smul.u32 13, %s19
      %p229 = scmp.lt.s32.totalorder %s18, 1
      %s230 = scalar_select %p229, %s18, 1
      %s231 = smul.addr %s230, 72
      %s232 = smul.addr %s231, 4
      %s233 = scalar_lea.vmem %s1, %s232
      %p234 = scmp.lt.s32.totalorder %s18, 1
      %s235 = scalar_select %p234, %s18, 1
      %s236 = scalar_lea.vmem %s2, %s235
      %s237 = smul.u32 13, %s19
      %p238 = scmp.lt.s32.totalorder %s18, 1
      %s239 = scalar_select %p238, %s18, 1
      %p240 = scmp.lt.s32.totalorder %s237, 12
      %s241 = scalar_select %p240, %s237, 12
      %s242 = smul.addr %s239, 13
      %s243 = sadd.s32 %s241, %s242
      %s244 = smul.addr %s243, 4
      %s245 = scalar_lea.vmem %s3, %s244
      %s246 = smul.u32 13, %s19
      %v248 = vld [vmem:[%s227] sm:$0xff]
      %v249 = vld [vmem:[%s227 + $0x8] sm:$0xff]
      %v250 = vld [vmem:[%s227 + $0x10] sm:$0xf]
      %v251 = vld [vmem:[%s227 + $0x14] sm:$0xff]
      %v252 = vld [vmem:[%s227 + $0x1c] sm:$0xff]
      %v253 = vld [vmem:[%s227 + $0x24] sm:$0xf]
      %v254 = vld [vmem:[%s227 + $0x28] sm:$0xff]
      %v255 = vld [vmem:[%s227 + $0x30] sm:$0xff]
      %v256 = vld [vmem:[%s227 + $0x38] sm:$0xf]
      %v257 = vld [vmem:[%s227 + $0x3c] sm:$0xff]
      %v258 = vld [vmem:[%s227 + $0x44] sm:$0xff]
      %v259 = vld [vmem:[%s227 + $0x4c] sm:$0xf]
      %v260 = vld [vmem:[%s227 + $0x50] sm:$0xff]
      %v261 = vld [vmem:[%s227 + $0x58] sm:$0xff]
      %v262 = vld [vmem:[%s227 + $0x60] sm:$0xf]
      %v263 = vld [vmem:[%s227 + $0x64] sm:$0xff]
      %v264 = vld [vmem:[%s227 + $0x6c] sm:$0xff]
      %v265 = vld [vmem:[%s227 + $0x74] sm:$0xf]
      %v266 = vld [vmem:[%s227 + $0x78] sm:$0xff]
      %v267 = vld [vmem:[%s227 + $0x80] sm:$0xff]
      %v268 = vld [vmem:[%s227 + $0x88] sm:$0xf]
      %v269 = vld [vmem:[%s227 + $0x8c] sm:$0xff]
      %v270 = vld [vmem:[%s227 + $0x94] sm:$0xff]
      %v271 = vld [vmem:[%s227 + $0x9c] sm:$0xf]
      %v272 = vld [vmem:[%s227 + $0xa0] sm:$0xff]
      %v273 = vld [vmem:[%s227 + $0xa8] sm:$0xff]
      %v274 = vld [vmem:[%s227 + $0xb0] sm:$0xf]
      %v275 = vld [vmem:[%s227 + $0xb4] sm:$0xff]
      %v276 = vld [vmem:[%s227 + $0xbc] sm:$0xff]
      %v277 = vld [vmem:[%s227 + $0xc4] sm:$0xf]
      %v278 = vld [vmem:[%s227 + $0xc8] sm:$0xff]
      %v279 = vld [vmem:[%s227 + $0xd0] sm:$0xff]
      %v280 = vld [vmem:[%s227 + $0xd8] sm:$0xf]
      %v281 = vld [vmem:[%s227 + $0xdc] sm:$0xff]
      %v282 = vld [vmem:[%s227 + $0xe4] sm:$0xff]
      %v283 = vld [vmem:[%s227 + $0xec] sm:$0xf]
      %v284 = vld [vmem:[%s227 + $0xf0] sm:$0x11]
      %v285 = vld [vmem:[%s227 + $0xf8] sm:$0x11]
      %v286 = vld [vmem:[%s227 + $0x100] sm:$0x1]
      %v287 = vld [vmem:[%s233] sm:$0xf]
      %v288 = vld [vmem:[%s233 + $0x4] sm:$0xf]
      %v289 = vld [vmem:[%s233 + $0x8] sm:$0xf]
      %v290 = vld [vmem:[%s233 + $0xc] sm:$0xf]
      %v291 = vld [vmem:[%s233 + $0x10] sm:$0xf]
      %v292 = vld [vmem:[%s233 + $0x14] sm:$0xf]
      %v293 = vld [vmem:[%s233 + $0x18] sm:$0xf]
      %v294 = vld [vmem:[%s233 + $0x1c] sm:$0xf]
      %v295 = vld [vmem:[%s233 + $0x20] sm:$0xf]
      %v296 = vld [vmem:[%s233 + $0x24] sm:$0xf]
      %v297 = vld [vmem:[%s233 + $0x28] sm:$0xf]
      %v298 = vld [vmem:[%s233 + $0x2c] sm:$0xf]
      %v299 = vld [vmem:[%s233 + $0x30] sm:$0xf]
      %v300 = vld [vmem:[%s233 + $0x34] sm:$0xf]
      %v301 = vld [vmem:[%s233 + $0x38] sm:$0xf]
      %v302 = vld [vmem:[%s233 + $0x3c] sm:$0xf]
      %v303 = vld [vmem:[%s233 + $0x40] sm:$0xf]
      %v304 = vld [vmem:[%s233 + $0x44] sm:$0xf]
      %v305 = vld [vmem:[%s233 + $0x48] sm:$0xf]
      %v306 = vld [vmem:[%s233 + $0x4c] sm:$0xf]
      %v307 = vld [vmem:[%s233 + $0x50] sm:$0xf]
      %v308 = vld [vmem:[%s233 + $0x54] sm:$0xf]
      %v309 = vld [vmem:[%s233 + $0x58] sm:$0xf]
      %v310 = vld [vmem:[%s233 + $0x5c] sm:$0xf]
      %v311 = vld [vmem:[%s233 + $0x60] sm:$0xf]
      %v312 = vld [vmem:[%s233 + $0x64] sm:$0xf]
      %v313 = vld [vmem:[%s233 + $0x68] sm:$0xf]
      %v314 = vld [vmem:[%s233 + $0x6c] sm:$0xf]
      %v315 = vld [vmem:[%s233 + $0x70] sm:$0xf]
      %v316 = vld [vmem:[%s233 + $0x74] sm:$0xf]
      %v317 = vld [vmem:[%s233 + $0x78] sm:$0xf]
      %v318 = vld [vmem:[%s233 + $0x7c] sm:$0xf]
      %v319 = vld [vmem:[%s233 + $0x80] sm:$0xf]
      %v320 = vld [vmem:[%s233 + $0x84] sm:$0xf]
      %v321 = vld [vmem:[%s233 + $0x88] sm:$0xf]
      %v322 = vld [vmem:[%s233 + $0x8c] sm:$0xf]
      %v323 = vld [vmem:[%s233 + $0x90] sm:$0xf]
      %v324 = vld [vmem:[%s233 + $0x94] sm:$0xf]
      %v325 = vld [vmem:[%s233 + $0x98] sm:$0xf]
      %v326 = vld [vmem:[%s233 + $0x9c] sm:$0xf]
      %v327 = vld [vmem:[%s233 + $0xa0] sm:$0xf]
      %v328 = vld [vmem:[%s233 + $0xa4] sm:$0xf]
      %v329 = vld [vmem:[%s233 + $0xa8] sm:$0xf]
      %v330 = vld [vmem:[%s233 + $0xac] sm:$0xf]
      %v331 = vld [vmem:[%s233 + $0xb0] sm:$0xf]
      %v332 = vld [vmem:[%s233 + $0xb4] sm:$0xf]
      %v333 = vld [vmem:[%s233 + $0xb8] sm:$0xf]
      %v334 = vld [vmem:[%s233 + $0xbc] sm:$0xf]
      %v335 = vld [vmem:[%s233 + $0xc0] sm:$0xf]
      %v336 = vld [vmem:[%s233 + $0xc4] sm:$0xf]
      %v337 = vld [vmem:[%s233 + $0xc8] sm:$0xf]
      %v338 = vld [vmem:[%s233 + $0xcc] sm:$0xf]
      %v339 = vld [vmem:[%s233 + $0xd0] sm:$0xf]
      %v340 = vld [vmem:[%s233 + $0xd4] sm:$0xf]
      %v341 = vld [vmem:[%s233 + $0xd8] sm:$0xf]
      %v342 = vld [vmem:[%s233 + $0xdc] sm:$0xf]
      %v343 = vld [vmem:[%s233 + $0xe0] sm:$0xf]
      %v344 = vld [vmem:[%s233 + $0xe4] sm:$0xf]
      %v345 = vld [vmem:[%s233 + $0xe8] sm:$0xf]
      %v346 = vld [vmem:[%s233 + $0xec] sm:$0xf]
      %v347 = vld [vmem:[%s233 + $0xf0] sm:$0xf]
      %v348 = vld [vmem:[%s233 + $0xf4] sm:$0xf]
      %v349 = vld [vmem:[%s233 + $0xf8] sm:$0xf]
      %v350 = vld [vmem:[%s233 + $0xfc] sm:$0xf]
      %v351 = vld [vmem:[%s233 + $0x100] sm:$0xf]
      %v352 = vld [vmem:[%s233 + $0x104] sm:$0xf]
      %v353 = vld [vmem:[%s233 + $0x108] sm:$0xf]
      %v354 = vld [vmem:[%s233 + $0x10c] sm:$0xf]
      %v355 = vld [vmem:[%s233 + $0x110] sm:$0xf]
      %v356 = vld [vmem:[%s233 + $0x114] sm:$0xf]
      %v357 = vld [vmem:[%s233 + $0x118] sm:$0xf]
      %v358 = vld [vmem:[%s233 + $0x11c] sm:$0xf]
      %v359 = vld [vmem:[%s236] sm:$0x1]
      %v361 = vlaneseq
      %v362 = vshrl.u32 %v361, 7
      %v363 = vsub.s32 0, %v362
      %v364 = vrot.slane %v359, %v363
      %v405 = vunpack.c.l.b16 %v248
      %v406 = vunpack.c.h.b16 %v248
      %v407 = vunpack.c.l.b16 %v249
      %v408 = vunpack.c.h.b16 %v249
      %v409 = vunpack.c.l.b16 %v250
      %v410 = vunpack.c.l.b16 %v251
      %v411 = vunpack.c.h.b16 %v251
      %v412 = vunpack.c.l.b16 %v252
      %v413 = vunpack.c.h.b16 %v252
      %v414 = vunpack.c.l.b16 %v253
      %v415 = vunpack.c.l.b16 %v254
      %v416 = vunpack.c.h.b16 %v254
      %v417 = vunpack.c.l.b16 %v255
      %v418 = vunpack.c.h.b16 %v255
      %v419 = vunpack.c.l.b16 %v256
      %v420 = vunpack.c.l.b16 %v257
      %v421 = vunpack.c.h.b16 %v257
      %v422 = vunpack.c.l.b16 %v258
      %v423 = vunpack.c.h.b16 %v258
      %v424 = vunpack.c.l.b16 %v259
      %v425 = vunpack.c.l.b16 %v260
      %v426 = vunpack.c.h.b16 %v260
      %v427 = vunpack.c.l.b16 %v261
      %v428 = vunpack.c.h.b16 %v261
      %v429 = vunpack.c.l.b16 %v262
      %v430 = vunpack.c.l.b16 %v263
      %v431 = vunpack.c.h.b16 %v263
      %v432 = vunpack.c.l.b16 %v264
      %v433 = vunpack.c.h.b16 %v264
      %v434 = vunpack.c.l.b16 %v265
      %v435 = vunpack.c.l.b16 %v266
      %v436 = vunpack.c.h.b16 %v266
      %v437 = vunpack.c.l.b16 %v267
      %v438 = vunpack.c.h.b16 %v267
      %v439 = vunpack.c.l.b16 %v268
      %v440 = vunpack.c.l.b16 %v269
      %v441 = vunpack.c.h.b16 %v269
      %v442 = vunpack.c.l.b16 %v270
      %v443 = vunpack.c.h.b16 %v270
      %v444 = vunpack.c.l.b16 %v271
      %v445 = vunpack.c.l.b16 %v272
      %v446 = vunpack.c.h.b16 %v272
      %v447 = vunpack.c.l.b16 %v273
      %v448 = vunpack.c.h.b16 %v273
      %v449 = vunpack.c.l.b16 %v274
      %v450 = vunpack.c.l.b16 %v275
      %v451 = vunpack.c.h.b16 %v275
      %v452 = vunpack.c.l.b16 %v276
      %v453 = vunpack.c.h.b16 %v276
      %v454 = vunpack.c.l.b16 %v277
      %v455 = vunpack.c.l.b16 %v278
      %v456 = vunpack.c.h.b16 %v278
      %v457 = vunpack.c.l.b16 %v279
      %v458 = vunpack.c.h.b16 %v279
      %v459 = vunpack.c.l.b16 %v280
      %v460 = vunpack.c.l.b16 %v281
      %v461 = vunpack.c.h.b16 %v281
      %v462 = vunpack.c.l.b16 %v282
      %v463 = vunpack.c.h.b16 %v282
      %v464 = vunpack.c.l.b16 %v283
      %v465 = vunpack.c.l.b16 %v284
      %v466 = vunpack.c.h.b16 %v284
      %v467 = vunpack.c.l.b16 %v285
      %v468 = vunpack.c.h.b16 %v285
      %v469 = vunpack.c.l.b16 %v286
      %v470 = vpack.c.b16 %v410, %v405
      %v471 = vpack.c.b16 %v411, %v406
      %v472 = vpack.c.b16 %v412, %v407
      %v473 = vpack.c.b16 %v413, %v408
      %v474 = vpack.c.b16 %v414, %v409
      %v475 = vpack.c.b16 %v420, %v415
      %v476 = vpack.c.b16 %v421, %v416
      %v477 = vpack.c.b16 %v422, %v417
      %v478 = vpack.c.b16 %v423, %v418
      %v479 = vpack.c.b16 %v424, %v419
      %v480 = vpack.c.b16 %v430, %v425
      %v481 = vpack.c.b16 %v431, %v426
      %v482 = vpack.c.b16 %v432, %v427
      %v483 = vpack.c.b16 %v433, %v428
      %v484 = vpack.c.b16 %v434, %v429
      %v485 = vpack.c.b16 %v440, %v435
      %v486 = vpack.c.b16 %v441, %v436
      %v487 = vpack.c.b16 %v442, %v437
      %v488 = vpack.c.b16 %v443, %v438
      %v489 = vpack.c.b16 %v444, %v439
      %v490 = vpack.c.b16 %v450, %v445
      %v491 = vpack.c.b16 %v451, %v446
      %v492 = vpack.c.b16 %v452, %v447
      %v493 = vpack.c.b16 %v453, %v448
      %v494 = vpack.c.b16 %v454, %v449
      %v495 = vpack.c.b16 %v460, %v455
      %v496 = vpack.c.b16 %v461, %v456
      %v497 = vpack.c.b16 %v462, %v457
      %v498 = vpack.c.b16 %v463, %v458
      %v499 = vpack.c.b16 %v464, %v459
      %v500 = vpack.c.b16 %v465, %v465
      %v501 = vpack.c.b16 %v466, %v466
      %v502 = vpack.c.b16 %v467, %v467
      %v503 = vpack.c.b16 %v468, %v468
      %v504 = vpack.c.b16 %v469, %v469
      %v605 = vunpack.c.l.b16 %v287
      %v606 = vunpack.c.l.b16 %v288
      %v607 = vunpack.c.l.b16 %v289
      %v608 = vunpack.c.l.b16 %v290
      %v609 = vunpack.c.l.b16 %v291
      %v610 = vunpack.c.l.b16 %v292
      %v611 = vunpack.c.l.b16 %v293
      %v612 = vunpack.c.l.b16 %v294
      %v613 = vunpack.c.l.b16 %v295
      %v614 = vunpack.c.l.b16 %v296
      %v615 = vunpack.c.l.b16 %v297
      %v616 = vunpack.c.l.b16 %v298
      %v617 = vunpack.c.l.b16 %v299
      %v618 = vunpack.c.l.b16 %v300
      %v619 = vunpack.c.l.b16 %v301
      %v620 = vunpack.c.l.b16 %v302
      %v621 = vunpack.c.l.b16 %v303
      %v622 = vunpack.c.l.b16 %v304
      %v623 = vunpack.c.l.b16 %v305
      %v624 = vunpack.c.l.b16 %v306
      %v625 = vunpack.c.l.b16 %v307
      %v626 = vunpack.c.l.b16 %v308
      %v627 = vunpack.c.l.b16 %v309
      %v628 = vunpack.c.l.b16 %v310
      %v629 = vunpack.c.l.b16 %v311
      %v630 = vunpack.c.l.b16 %v312
      %v631 = vunpack.c.l.b16 %v313
      %v632 = vunpack.c.l.b16 %v314
      %v633 = vunpack.c.l.b16 %v315
      %v634 = vunpack.c.l.b16 %v316
      %v635 = vunpack.c.l.b16 %v317
      %v636 = vunpack.c.l.b16 %v318
      %v637 = vunpack.c.l.b16 %v319
      %v638 = vunpack.c.l.b16 %v320
      %v639 = vunpack.c.l.b16 %v321
      %v640 = vunpack.c.l.b16 %v322
      %v641 = vunpack.c.l.b16 %v323
      %v642 = vunpack.c.l.b16 %v324
      %v643 = vunpack.c.l.b16 %v325
      %v644 = vunpack.c.l.b16 %v326
      %v645 = vunpack.c.l.b16 %v327
      %v646 = vunpack.c.l.b16 %v328
      %v647 = vunpack.c.l.b16 %v329
      %v648 = vunpack.c.l.b16 %v330
      %v649 = vunpack.c.l.b16 %v331
      %v650 = vunpack.c.l.b16 %v332
      %v651 = vunpack.c.l.b16 %v333
      %v652 = vunpack.c.l.b16 %v334
      %v653 = vunpack.c.l.b16 %v335
      %v654 = vunpack.c.l.b16 %v336
      %v655 = vunpack.c.l.b16 %v337
      %v656 = vunpack.c.l.b16 %v338
      %v657 = vunpack.c.l.b16 %v339
      %v658 = vunpack.c.l.b16 %v340
      %v659 = vunpack.c.l.b16 %v341
      %v660 = vunpack.c.l.b16 %v342
      %v661 = vunpack.c.l.b16 %v343
      %v662 = vunpack.c.l.b16 %v344
      %v663 = vunpack.c.l.b16 %v345
      %v664 = vunpack.c.l.b16 %v346
      %v665 = vunpack.c.l.b16 %v347
      %v666 = vunpack.c.l.b16 %v348
      %v667 = vunpack.c.l.b16 %v349
      %v668 = vunpack.c.l.b16 %v350
      %v669 = vunpack.c.l.b16 %v351
      %v670 = vunpack.c.l.b16 %v352
      %v671 = vunpack.c.l.b16 %v353
      %v672 = vunpack.c.l.b16 %v354
      %v673 = vunpack.c.l.b16 %v355
      %v674 = vunpack.c.l.b16 %v356
      %v675 = vunpack.c.l.b16 %v357
      %v676 = vunpack.c.l.b16 %v358
      %v677 = vpack.c.b16 %v606, %v605
      %v678 = vpack.c.b16 %v608, %v607
      %v679 = vpack.c.b16 %v610, %v609
      %v680 = vpack.c.b16 %v612, %v611
      %v681 = vpack.c.b16 %v614, %v613
      %v682 = vpack.c.b16 %v616, %v615
      %v683 = vpack.c.b16 %v618, %v617
      %v684 = vpack.c.b16 %v620, %v619
      %v685 = vpack.c.b16 %v622, %v621
      %v686 = vpack.c.b16 %v624, %v623
      %v687 = vpack.c.b16 %v626, %v625
      %v688 = vpack.c.b16 %v628, %v627
      %v689 = vpack.c.b16 %v630, %v629
      %v690 = vpack.c.b16 %v632, %v631
      %v691 = vpack.c.b16 %v634, %v633
      %v692 = vpack.c.b16 %v636, %v635
      %v693 = vpack.c.b16 %v638, %v637
      %v694 = vpack.c.b16 %v640, %v639
      %v695 = vpack.c.b16 %v642, %v641
      %v696 = vpack.c.b16 %v644, %v643
      %v697 = vpack.c.b16 %v646, %v645
      %v698 = vpack.c.b16 %v648, %v647
      %v699 = vpack.c.b16 %v650, %v649
      %v700 = vpack.c.b16 %v652, %v651
      %v701 = vpack.c.b16 %v654, %v653
      %v702 = vpack.c.b16 %v656, %v655
      %v703 = vpack.c.b16 %v658, %v657
      %v704 = vpack.c.b16 %v660, %v659
      %v705 = vpack.c.b16 %v662, %v661
      %v706 = vpack.c.b16 %v664, %v663
      %v707 = vpack.c.b16 %v666, %v665
      %v708 = vpack.c.b16 %v668, %v667
      %v709 = vpack.c.b16 %v670, %v669
      %v710 = vpack.c.b16 %v672, %v671
      %v711 = vpack.c.b16 %v674, %v673
      %v712 = vpack.c.b16 %v676, %v675
      %vm749 = vcmask 523264
      %v751 = vsel %vm749, %v474, 0
      %v754 = vsel %vm749, %v479, 0
      %v757 = vsel %vm749, %v484, 0
      %v760 = vsel %vm749, %v489, 0
      %v763 = vsel %vm749, %v494, 0
      %v766 = vsel %vm749, %v499, 0
      %v769 = vsel %vm749, %v504, 0
      %771 = vmatprep.subr.bf16.mxu0 0
      %772 = vmatpush1.bf16.msra.mxu0 %v677
      %773 = vmatprep.subr.bf16.mxu0 0
      %774 = vmatpush1.bf16.msra.mxu0 %v678
      %775 = vmatprep.subr.bf16.mxu0 0
      %776 = vmatpush1.bf16.msra.mxu0 %v679
      %777 = vmatprep.subr.bf16.mxu0 0
      %778 = vmatpush1.bf16.msra.mxu0 %v680
      %779 = vmatprep.subr.bf16.mxu0 0
      %780 = vmatpush1.bf16.msra.mxu0 %v681
      %781 = vmatprep.subr.bf16.mxu0 0
      %782 = vmatpush1.bf16.msra.mxu0 %v682
      %783 = vmatprep.subr.bf16.mxu0 0
      %784 = vmatpush1.bf16.msra.mxu0 %v683
      %785 = vmatprep.subr.bf16.mxu0 0
      %786 = vmatpush1.bf16.msra.mxu0 %v684
      %787 = vmatprep.subr.bf16.mxu0 0
      %788 = vmatpush1.bf16.msra.mxu0 %v685
      %789 = vmatprep.subr.bf16.mxu0 0
      %790 = vmatpush1.bf16.msra.mxu0 %v686
      %791 = vmatprep.subr.bf16.mxu0 0
      %792 = vmatpush1.bf16.msra.mxu0 %v687
      %793 = vmatprep.subr.bf16.mxu0 0
      %794 = vmatpush1.bf16.msra.mxu0 %v688
      %795 = vmatprep.subr.bf16.mxu0 0
      %796 = vmatpush1.bf16.msra.mxu0 %v689
      %797 = vmatprep.subr.bf16.mxu0 0
      %798 = vmatpush1.bf16.msra.mxu0 %v690
      %799 = vmatprep.subr.bf16.mxu0 0
      %800 = vmatpush1.bf16.msra.mxu0 %v691
      %801 = vmatprep.subr.bf16.mxu0 0
      %802 = vmatpush1.bf16.msra.mxu0 %v692
      %803 = vmatprep.mubr.bf16.mxu0 %v471
      %804 = vmatmul.mubr.bf16.gmra.mrb[0].mxu0 %v470
      %v805 = vpop.f32.mrb[0].mxu0
      %v806 = vadd.f32 %v364, %v805
      %v807 = vpop.f32.mrb[0].mxu0
      %v808 = vpop.f32.mrb[0].mxu0
      %v809 = vadd.f32 %v364, %v808
      %v810 = vpop.f32.mrb[0].mxu0
      %811 = vmatprep.mubr.bf16.mxu0 %v476
      %812 = vmatmul.mubr.bf16.gmra.mrb[0].mxu0 %v475
      %v813 = vpop.f32.mrb[0].mxu0
      %v814 = vadd.f32 %v364, %v813
      %v815 = vpop.f32.mrb[0].mxu0
      %v816 = vpop.f32.mrb[0].mxu0
      %v817 = vadd.f32 %v364, %v816
      %v818 = vpop.f32.mrb[0].mxu0
      %819 = vmatprep.mubr.bf16.mxu0 %v481
      %820 = vmatmul.mubr.bf16.gmra.mrb[0].mxu0 %v480
      %v821 = vpop.f32.mrb[0].mxu0
      %v822 = vadd.f32 %v364, %v821
      %v823 = vpop.f32.mrb[0].mxu0
      %v824 = vpop.f32.mrb[0].mxu0
      %v825 = vadd.f32 %v364, %v824
      %v826 = vpop.f32.mrb[0].mxu0
      %827 = vmatprep.mubr.bf16.mxu0 %v486
      %828 = vmatmul.mubr.bf16.gmra.mrb[0].mxu0 %v485
      %v829 = vpop.f32.mrb[0].mxu0
      %v830 = vadd.f32 %v364, %v829
      %v831 = vpop.f32.mrb[0].mxu0
      %v832 = vpop.f32.mrb[0].mxu0
      %v833 = vadd.f32 %v364, %v832
      %v834 = vpop.f32.mrb[0].mxu0
      %835 = vmatprep.mubr.bf16.mxu0 %v491
      %836 = vmatmul.mubr.bf16.gmra.mrb[0].mxu0 %v490
      %v837 = vpop.f32.mrb[0].mxu0
      %v838 = vadd.f32 %v364, %v837
      %v839 = vpop.f32.mrb[0].mxu0
      %v840 = vpop.f32.mrb[0].mxu0
      %v841 = vadd.f32 %v364, %v840
      %v842 = vpop.f32.mrb[0].mxu0
      %843 = vmatprep.mubr.bf16.mxu0 %v496
      %844 = vmatmul.mubr.bf16.gmra.mrb[0].mxu0 %v495
      %v845 = vpop.f32.mrb[0].mxu0
      %v846 = vadd.f32 %v364, %v845
      %v847 = vpop.f32.mrb[0].mxu0
      %v848 = vpop.f32.mrb[0].mxu0
      %v849 = vadd.f32 %v364, %v848
      %v850 = vpop.f32.mrb[0].mxu0
      %851 = vmatprep.mubr.bf16.mxu0 %v501
      %852 = vmatmul.mubr.bf16.gmra.mrb[0].mxu0 %v500
      %v853 = vpop.f32.mrb[0].mxu0
      %v854 = vadd.f32 %v364, %v853
      %v855 = vpop.f32.mrb[0].mxu0
      %v856 = vpop.f32.mrb[0].mxu0
      %v857 = vpop.f32.mrb[0].mxu0
      %858 = vdwg.mxu0
      %859 = vmatprep.subr.bf16.mxu0 0
      %860 = vmatpush1.bf16.msra.mxu0 %v693
      %861 = vmatprep.subr.bf16.mxu0 0
      %862 = vmatpush1.bf16.msra.mxu0 %v694
      %863 = vmatprep.subr.bf16.mxu0 0
      %864 = vmatpush1.bf16.msra.mxu0 %v695
      %865 = vmatprep.subr.bf16.mxu0 0
      %866 = vmatpush1.bf16.msra.mxu0 %v696
      %867 = vmatprep.subr.bf16.mxu0 0
      %868 = vmatpush1.bf16.msra.mxu0 %v697
      %869 = vmatprep.subr.bf16.mxu0 0
      %870 = vmatpush1.bf16.msra.mxu0 %v698
      %871 = vmatprep.subr.bf16.mxu0 0
      %872 = vmatpush1.bf16.msra.mxu0 %v699
      %873 = vmatprep.subr.bf16.mxu0 0
      %874 = vmatpush1.bf16.msra.mxu0 %v700
      %875 = vmatprep.subr.bf16.mxu0 0
      %876 = vmatpush1.bf16.msra.mxu0 %v701
      %877 = vmatprep.subr.bf16.mxu0 0
      %878 = vmatpush1.bf16.msra.mxu0 %v702
      %879 = vmatprep.subr.bf16.mxu0 0
      %880 = vmatpush1.bf16.msra.mxu0 %v703
      %881 = vmatprep.subr.bf16.mxu0 0
      %882 = vmatpush1.bf16.msra.mxu0 %v704
      %883 = vmatprep.subr.bf16.mxu0 0
      %884 = vmatpush1.bf16.msra.mxu0 %v705
      %885 = vmatprep.subr.bf16.mxu0 0
      %886 = vmatpush1.bf16.msra.mxu0 %v706
      %887 = vmatprep.subr.bf16.mxu0 0
      %888 = vmatpush1.bf16.msra.mxu0 %v707
      %889 = vmatprep.subr.bf16.mxu0 0
      %890 = vmatpush1.bf16.msra.mxu0 %v708
      %891 = vmatprep.mubr.bf16.mxu0 %v473
      %892 = vmatmul.mubr.bf16.gmra.mrb[0].mxu0 %v472
      %v893 = vpop.f32.mrb[0].mxu0
      %v894 = vadd.f32 %v806, %v893
      %v895 = vpop.f32.mrb[0].mxu0
      %v896 = vpop.f32.mrb[0].mxu0
      %v897 = vadd.f32 %v809, %v896
      %v898 = vpop.f32.mrb[0].mxu0
      %899 = vmatprep.mubr.bf16.mxu0 %v478
      %900 = vmatmul.mubr.bf16.gmra.mrb[0].mxu0 %v477
      %v901 = vpop.f32.mrb[0].mxu0
      %v902 = vadd.f32 %v814, %v901
      %v903 = vpop.f32.mrb[0].mxu0
      %v904 = vpop.f32.mrb[0].mxu0
      %v905 = vadd.f32 %v817, %v904
      %v906 = vpop.f32.mrb[0].mxu0
      %907 = vmatprep.mubr.bf16.mxu0 %v483
      %908 = vmatmul.mubr.bf16.gmra.mrb[0].mxu0 %v482
      %v909 = vpop.f32.mrb[0].mxu0
      %v910 = vadd.f32 %v822, %v909
      %v911 = vpop.f32.mrb[0].mxu0
      %v912 = vpop.f32.mrb[0].mxu0
      %v913 = vadd.f32 %v825, %v912
      %v914 = vpop.f32.mrb[0].mxu0
      %915 = vmatprep.mubr.bf16.mxu0 %v488
      %916 = vmatmul.mubr.bf16.gmra.mrb[0].mxu0 %v487
      %v917 = vpop.f32.mrb[0].mxu0
      %v918 = vadd.f32 %v830, %v917
      %v919 = vpop.f32.mrb[0].mxu0
      %v920 = vpop.f32.mrb[0].mxu0
      %v921 = vadd.f32 %v833, %v920
      %v922 = vpop.f32.mrb[0].mxu0
      %923 = vmatprep.mubr.bf16.mxu0 %v493
      %924 = vmatmul.mubr.bf16.gmra.mrb[0].mxu0 %v492
      %v925 = vpop.f32.mrb[0].mxu0
      %v926 = vadd.f32 %v838, %v925
      %v927 = vpop.f32.mrb[0].mxu0
      %v928 = vpop.f32.mrb[0].mxu0
      %v929 = vadd.f32 %v841, %v928
      %v930 = vpop.f32.mrb[0].mxu0
      %931 = vmatprep.mubr.bf16.mxu0 %v498
      %932 = vmatmul.mubr.bf16.gmra.mrb[0].mxu0 %v497
      %v933 = vpop.f32.mrb[0].mxu0
      %v934 = vadd.f32 %v846, %v933
      %v935 = vpop.f32.mrb[0].mxu0
      %v936 = vpop.f32.mrb[0].mxu0
      %v937 = vadd.f32 %v849, %v936
      %v938 = vpop.f32.mrb[0].mxu0
      %939 = vmatprep.mubr.bf16.mxu0 %v503
      %940 = vmatmul.mubr.bf16.gmra.mrb[0].mxu0 %v502
      %v941 = vpop.f32.mrb[0].mxu0
      %v942 = vadd.f32 %v854, %v941
      %v943 = vpop.f32.mrb[0].mxu0
      %v944 = vpop.f32.mrb[0].mxu0
      %v945 = vpop.f32.mrb[0].mxu0
      %946 = vdwg.mxu0
      %947 = vmatprep.subr.bf16.mxu0 0
      %948 = vmatpush1.bf16.msra.mxu0 %v709
      %949 = vmatprep.subr.bf16.mxu0 0
      %950 = vmatpush1.bf16.msra.mxu0 %v710
      %951 = vmatprep.subr.bf16.mxu0 0
      %952 = vmatpush1.bf16.msra.mxu0 %v711
      %953 = vmatprep.subr.bf16.mxu0 0
      %954 = vmatpush1.bf16.msra.mxu0 %v712
      %955 = vmatprep.subr.bf16.mxu0 0
      %956 = vmatpush1.bf16.msra.mxu0 0
      %957 = vmatprep.subr.bf16.mxu0 0
      %958 = vmatpush1.bf16.msra.mxu0 0
      %959 = vmatprep.subr.bf16.mxu0 0
      %960 = vmatpush1.bf16.msra.mxu0 0
      %961 = vmatprep.subr.bf16.mxu0 0
      %962 = vmatpush1.bf16.msra.mxu0 0
      %963 = vmatprep.subr.bf16.mxu0 0
      %964 = vmatpush1.bf16.msra.mxu0 0
      %965 = vmatprep.subr.bf16.mxu0 0
      %966 = vmatpush1.bf16.msra.mxu0 0
      %967 = vmatprep.subr.bf16.mxu0 0
      %968 = vmatpush1.bf16.msra.mxu0 0
      %969 = vmatprep.subr.bf16.mxu0 0
      %970 = vmatpush1.bf16.msra.mxu0 0
      %971 = vmatprep.subr.bf16.mxu0 0
      %972 = vmatpush1.bf16.msra.mxu0 0
      %973 = vmatprep.subr.bf16.mxu0 0
      %974 = vmatpush1.bf16.msra.mxu0 0
      %975 = vmatprep.subr.bf16.mxu0 0
      %976 = vmatpush1.bf16.msra.mxu0 0
      %977 = vmatprep.subr.bf16.mxu0 0
      %978 = vmatpush1.bf16.msra.mxu0 0
      %979 = vmatprep.mubr.bf16.mxu0 0
      %980 = vmatmul.mubr.bf16.gmra.mrb[0].mxu0 %v751
      %v981 = vpop.f32.mrb[0].mxu0
      %v982 = vadd.f32 %v894, %v981
      %v983 = vpop.f32.mrb[0].mxu0
      %v984 = vpop.f32.mrb[0].mxu0
      %v985 = vadd.f32 %v897, %v984
      %v986 = vpop.f32.mrb[0].mxu0
      %987 = vmatprep.mubr.bf16.mxu0 0
      %988 = vmatmul.mubr.bf16.gmra.mrb[0].mxu0 %v754
      %v989 = vpop.f32.mrb[0].mxu0
      %v990 = vadd.f32 %v902, %v989
      %v991 = vpop.f32.mrb[0].mxu0
      %v992 = vpop.f32.mrb[0].mxu0
      %v993 = vadd.f32 %v905, %v992
      %v994 = vpop.f32.mrb[0].mxu0
      %995 = vmatprep.mubr.bf16.mxu0 0
      %996 = vmatmul.mubr.bf16.gmra.mrb[0].mxu0 %v757
      %v997 = vpop.f32.mrb[0].mxu0
      %v998 = vadd.f32 %v910, %v997
      %v999 = vpop.f32.mrb[0].mxu0
      %v1000 = vpop.f32.mrb[0].mxu0
      %v1001 = vadd.f32 %v913, %v1000
      %v1002 = vpop.f32.mrb[0].mxu0
      %1003 = vmatprep.mubr.bf16.mxu0 0
      %1004 = vmatmul.mubr.bf16.gmra.mrb[0].mxu0 %v760
      %v1005 = vpop.f32.mrb[0].mxu0
      %v1006 = vadd.f32 %v918, %v1005
      %v1007 = vpop.f32.mrb[0].mxu0
      %v1008 = vpop.f32.mrb[0].mxu0
      %v1009 = vadd.f32 %v921, %v1008
      %v1010 = vpop.f32.mrb[0].mxu0
      %1011 = vmatprep.mubr.bf16.mxu0 0
      %1012 = vmatmul.mubr.bf16.gmra.mrb[0].mxu0 %v763
      %v1013 = vpop.f32.mrb[0].mxu0
      %v1014 = vadd.f32 %v926, %v1013
      %v1015 = vpop.f32.mrb[0].mxu0
      %v1016 = vpop.f32.mrb[0].mxu0
      %v1017 = vadd.f32 %v929, %v1016
      %v1018 = vpop.f32.mrb[0].mxu0
      %1019 = vmatprep.mubr.bf16.mxu0 0
      %1020 = vmatmul.mubr.bf16.gmra.mrb[0].mxu0 %v766
      %v1021 = vpop.f32.mrb[0].mxu0
      %v1022 = vadd.f32 %v934, %v1021
      %v1023 = vpop.f32.mrb[0].mxu0
      %v1024 = vpop.f32.mrb[0].mxu0
      %v1025 = vadd.f32 %v937, %v1024
      %v1026 = vpop.f32.mrb[0].mxu0
      %1027 = vmatprep.mubr.bf16.mxu0 0
      %1028 = vmatmul.mubr.bf16.gmra.mrb[0].mxu0 %v769
      %v1029 = vpop.f32.mrb[0].mxu0
      %v1030 = vadd.f32 %v942, %v1029
      %v1031 = vpop.f32.mrb[0].mxu0
      %v1032 = vpop.f32.mrb[0].mxu0
      %v1033 = vpop.f32.mrb[0].mxu0
      %1034 = vdwg.mxu0
      %v1035 = vmax.f32 %v982, 0.0
      %v1036 = vmax.f32 %v985, 0.0
      %v1037 = vmax.f32 %v990, 0.0
      %v1038 = vmax.f32 %v993, 0.0
      %v1039 = vmax.f32 %v998, 0.0
      %v1040 = vmax.f32 %v1001, 0.0
      %v1041 = vmax.f32 %v1006, 0.0
      %v1042 = vmax.f32 %v1009, 0.0
      %v1043 = vmax.f32 %v1014, 0.0
      %v1044 = vmax.f32 %v1017, 0.0
      %v1045 = vmax.f32 %v1022, 0.0
      %v1046 = vmax.f32 %v1025, 0.0
      %v1047 = vmax.f32 %v1030, 0.0
      %v1048 = vpack.c.bf16 %v1036, %v1035
      %v1049 = vpack.c.bf16 %v1038, %v1037
      %v1050 = vpack.c.bf16 %v1040, %v1039
      %v1051 = vpack.c.bf16 %v1042, %v1041
      %v1052 = vpack.c.bf16 %v1044, %v1043
      %v1053 = vpack.c.bf16 %v1046, %v1045
      %v1054 = vpack.c.bf16 %v1047, %v1047
      %v1062 = vunpack.c.l.b16 %v1048
      %v1063 = vunpack.c.h.b16 %v1048
      %v1064 = vunpack.c.l.b16 %v1049
      %v1065 = vunpack.c.h.b16 %v1049
      %v1066 = vunpack.c.l.b16 %v1050
      %v1067 = vunpack.c.h.b16 %v1050
      %v1068 = vunpack.c.l.b16 %v1051
      %v1069 = vunpack.c.h.b16 %v1051
      %v1070 = vunpack.c.l.b16 %v1052
      %v1071 = vunpack.c.h.b16 %v1052
      %v1072 = vunpack.c.l.b16 %v1053
      %v1073 = vunpack.c.h.b16 %v1053
      %v1074 = vunpack.c.l.b16 %v1054
      %v1075 = vpack.c.b16 %v1062, %v1062
      %v1076 = vpack.c.b16 %v1063, %v1063
      %v1077 = vpack.c.b16 %v1064, %v1064
      %v1078 = vpack.c.b16 %v1065, %v1065
      %v1079 = vpack.c.b16 %v1066, %v1066
      %v1080 = vpack.c.b16 %v1067, %v1067
      %v1081 = vpack.c.b16 %v1068, %v1068
      %v1082 = vpack.c.b16 %v1069, %v1069
      %v1083 = vpack.c.b16 %v1070, %v1070
      %v1084 = vpack.c.b16 %v1071, %v1071
      %v1085 = vpack.c.b16 %v1072, %v1072
      %v1086 = vpack.c.b16 %v1073, %v1073
      %v1087 = vpack.c.b16 %v1074, %v1074
      %vm1101 = vcmask 519168
      %1102 = vst.msk [vmem:[%s245] sm:$0xf] %vm1101, %v1075
      %1103 = vst.msk [vmem:[%s245 + $0x4] sm:$0xf] %vm1101, %v1076
      %1104 = vst.msk [vmem:[%s245 + $0x8] sm:$0xf] %vm1101, %v1077
      %1105 = vst.msk [vmem:[%s245 + $0xc] sm:$0xf] %vm1101, %v1078
      %1106 = vst.msk [vmem:[%s245 + $0x10] sm:$0xf] %vm1101, %v1079
      %1107 = vst.msk [vmem:[%s245 + $0x14] sm:$0xf] %vm1101, %v1080
      %1108 = vst.msk [vmem:[%s245 + $0x18] sm:$0xf] %vm1101, %v1081
      %1109 = vst.msk [vmem:[%s245 + $0x1c] sm:$0xf] %vm1101, %v1082
      %1110 = vst.msk [vmem:[%s245 + $0x20] sm:$0xf] %vm1101, %v1083
      %1111 = vst.msk [vmem:[%s245 + $0x24] sm:$0xf] %vm1101, %v1084
      %1112 = vst.msk [vmem:[%s245 + $0x28] sm:$0xf] %vm1101, %v1085
      %1113 = vst.msk [vmem:[%s245 + $0x2c] sm:$0xf] %vm1101, %v1086
      %vm1114 = vcmask 516096
      %1115 = vst.msk [vmem:[%s245 + $0x30] sm:$0x1] %vm1114, %v1087
      %s1116 = smul.u32 13, %s19
      %p1117 = scmp.lt.s32.totalorder %s18, 1
      %s1118 = scalar_select %p1117, %s18, 1
      %p1119 = scmp.lt.s32.totalorder %s1116, 12
      %s1120 = scalar_select %p1119, %s1116, 12
      %s1121 = smul.addr %s1118, 13
      %s1122 = sadd.s32 %s1120, %s1121
      %s1123 = smul.addr %s1122, 4
      %s1124 = scalar_lea.vmem %s3, %s1123
      // Predicated region
      $region33: #{model_forward.6} parent=31 // pred_check
        %p1125 = pneg %p126
      $region34: #{model_forward.6} parent=31 // pred_check_branch
        %1127 = sbr.rel (%p1125) target = $region36
      $region35: #{model_forward.6} parent=31 // pred_region
        %s1128 = smul.u32 13, %s19
      $region36: #{model_forward.6} parent=31 // pred_fallthru
        _
    $region32: #{model_forward.6} parent=5 // pred_fallthru
      _
    %p1129 = scmp.le.s32.totalorder 2, %s9
    // Predicated region
    $region37: #{model_forward.6} parent=5 // pred_check
      %p1130 = pneg %p1129
    $region38: #{model_forward.6} parent=5 // pred_check_branch
      %1132 = sbr.rel (%p1130) target = $region40
    $region39: #{model_forward.6} parent=5 // pred_region
      %s1133 = ssub.s32 %s9, 2
      // Predicated region
      $region41: #{model_forward.6} parent=39 // pred_check
        %p1134 = pneg %p132
      $region42: #{model_forward.6} parent=39 // pred_check_branch
        %1136 = sbr.rel (%p1134) target = $region44
      $region43: #{model_forward.6} parent=39 // pred_region
        %s1137 = smul.u32 13, %s21
        %p1138 = scmp.lt.s32.totalorder %s20, 1
        %s1139 = scalar_select %p1138, %s20, 1
        %p1140 = scmp.lt.s32.totalorder %s1137, 12
        %s1141 = scalar_select %p1140, %s1137, 12
        %s1142 = smul.addr %s1139, 13
        %s1143 = sadd.s32 %s1141, %s1142
        %s1144 = smul.addr %s1143, 4
        %s1145 = scalar_lea.vmem %s3, %s1144
      $region44: #{model_forward.6} parent=39 // pred_fallthru
        _
    $region40: #{model_forward.6} parent=5 // pred_fallthru
      _
  $region6: #{model_forward.6} parent=0 // loop_footer
    %s13 = sadd.s32 1, %s9
  $region7: #{model_forward.6} parent=0 // loop_footer_branch
    %8 = sbr.rel target = $region3
  $region8: #{model_forward.6} parent=0 // loop_exit
    _

// kernel: model_forward.7
$region0: #{model_forward.7}
  #allocation0 [shape = 'u32[]', space=smem, size = 0x4, offset = 0x4, fixed_abs, tag = 'smem constant byte address 0x4 - core index']
  #allocation1 [shape = 'u32[144,128]{1,0:T(1,128)}', space=vmem, size = 0x12000, scoped, tag = 'internal scratch']
  %s0 = inlined_call_operand.vmem [shape: bf16[2,2,3136], index: 0, kind: input, shape index: {}]
  %s1 = inlined_call_operand.vmem [shape: bf16[2,3136,512], index: 1, kind: input, shape index: {}]
  %s2 = inlined_call_operand.vmem [shape: f32[2,1,512], index: 2, kind: input, shape index: {}]
  %s3 = inlined_call_operand.vmem [shape: bf16[2,512,128], index: 3, kind: input, shape index: {}]
  %s4 = inlined_call_operand.vmem [shape: f32[2,1,128], index: 4, kind: input, shape index: {}]
  %s5 = inlined_call_operand.vmem [shape: f32[2,2,128], index: 5, kind: output, shape index: {}]
  %s6 = sld [smem:[#allocation0]]
  $region53: #{model_forward.7} parent=0
    _
  %s8 = ssub.s32 1, %s6
  %s9 = scalar_select 0, %s8, %s6
  loop: start=0, step=1, limit=4
  $region2: #{model_forward.7} parent=0 // loop_pre_header
    _
  $region3: #{model_forward.7} parent=0 // loop_header
    %s11 = sphi 0, %s15
    %p12 = scmp.ge.s32.totalorder %s11, 4
    %s18 = sphi 0, %s30
    %s19 = sphi 0, %s26
    %s20 = sphi 0, %s18
    %s21 = sphi 0, %s19
    %s22 = sphi 0, %s20
    %s23 = sphi 0, %s21
    %s35 = sphi 0, %s37
    %s38 = sphi 0, %s35
    %s39 = sphi 0, %s38
    %s55 = sphi 0, %s39
    %s61 = sphi 0, %s63
    %s64 = sphi 0, %s61
    %s65 = sphi 0, %s64
    %s81 = sphi 0, %s65
    %s87 = sphi 0, %s89
    %s90 = sphi 0, %s87
    %s91 = sphi 0, %s90
    %s107 = sphi 0, %s91
    %s113 = sphi 0, %s115
    %s116 = sphi 0, %s113
    %s117 = sphi 0, %s116
    %s133 = sphi 0, %s117
    %s139 = sphi 0, %s141
    %s142 = sphi 0, %s139
    %s143 = sphi 0, %s142
    %s159 = sphi 0, %s143
    %s167 = sphi 0, %s169
    %s170 = sphi 0, %s167
    %s171 = sphi 0, %s170
    %s187 = sphi 0, %s171
  $region4: #{model_forward.7} parent=0 // loop_header_branch
    %14 = sbr.rel (%p12) target = $region8
  $region5: #{model_forward.7} parent=0 // loop_body
    %s16 = ssub.s32 %s11, 1
    %s17 = ssub.s32 %s11, 2
    %s24 = sadd.s32 1, %s19
    %p25 = scmp.ge.s32.totalorder %s24, 1
    %s26 = scalar_select %p25, 0, %s24
    %s27 = sadd.s32 1, %s18
    %s28 = scalar_select %p25, %s27, %s18
    %p29 = scmp.ge.s32.totalorder %s28, 2
    %s30 = scalar_select %p29, 0, %s28
    %s31 = ssub.s32 %s18, %s30
    %s32 = ssub.s32 %s19, %s26
    %s33 = sor.u32 %s31, %s32
    %p34 = scmp.eq.s32.totalorder %s33, 0
    %s36 = sadd.s32 %s35, 1
    %s37 = scalar_select %p34, %s35, %s36
    %p40 = pneg %p34
    %p41 = scmp.eq.s32.totalorder %s11, 1
    %p42 = por %p40, %p41
    %p43 = scmp.ne.s32.totalorder %s35, %s38
    %p44 = scmp.eq.s32.totalorder %s11, 0
    %p45 = por %p43, %p44
    %p46 = scmp.ne.s32.totalorder %s35, %s38
    %p47 = scmp.eq.s32.totalorder %s16, 1
    %p48 = por %p46, %p47
    %p49 = scmp.ne.s32.totalorder %s38, %s39
    %p50 = scmp.eq.s32.totalorder %s16, 0
    %p51 = por %p49, %p50
    %p52 = scmp.ne.s32.totalorder %s38, %s39
    %p53 = scmp.eq.s32.totalorder %s17, 1
    %p54 = por %p52, %p53
    %p56 = scmp.ne.s32.totalorder %s39, %s55
    %p57 = scmp.eq.s32.totalorder %s17, 0
    %p58 = por %p56, %p57
    %s59 = ssub.s32 %s18, %s30
    %p60 = scmp.eq.s32.totalorder %s59, 0
    %s62 = sadd.s32 %s61, 1
    %s63 = scalar_select %p60, %s61, %s62
    %p66 = pneg %p60
    %p67 = scmp.eq.s32.totalorder %s11, 1
    %p68 = por %p66, %p67
    %p69 = scmp.ne.s32.totalorder %s61, %s64
    %p70 = scmp.eq.s32.totalorder %s11, 0
    %p71 = por %p69, %p70
    %p72 = scmp.ne.s32.totalorder %s61, %s64
    %p73 = scmp.eq.s32.totalorder %s16, 1
    %p74 = por %p72, %p73
    %p75 = scmp.ne.s32.totalorder %s64, %s65
    %p76 = scmp.eq.s32.totalorder %s16, 0
    %p77 = por %p75, %p76
    %p78 = scmp.ne.s32.totalorder %s64, %s65
    %p79 = scmp.eq.s32.totalorder %s17, 1
    %p80 = por %p78, %p79
    %p82 = scmp.ne.s32.totalorder %s65, %s81
    %p83 = scmp.eq.s32.totalorder %s17, 0
    %p84 = por %p82, %p83
    %s85 = ssub.s32 %s18, %s30
    %p86 = scmp.eq.s32.totalorder %s85, 0
    %s88 = sadd.s32 %s87, 1
    %s89 = scalar_select %p86, %s87, %s88
    %p92 = pneg %p86
    %p93 = scmp.eq.s32.totalorder %s11, 1
    %p94 = por %p92, %p93
    %p95 = scmp.ne.s32.totalorder %s87, %s90
    %p96 = scmp.eq.s32.totalorder %s11, 0
    %p97 = por %p95, %p96
    %p98 = scmp.ne.s32.totalorder %s87, %s90
    %p99 = scmp.eq.s32.totalorder %s16, 1
    %p100 = por %p98, %p99
    %p101 = scmp.ne.s32.totalorder %s90, %s91
    %p102 = scmp.eq.s32.totalorder %s16, 0
    %p103 = por %p101, %p102
    %p104 = scmp.ne.s32.totalorder %s90, %s91
    %p105 = scmp.eq.s32.totalorder %s17, 1
    %p106 = por %p104, %p105
    %p108 = scmp.ne.s32.totalorder %s91, %s107
    %p109 = scmp.eq.s32.totalorder %s17, 0
    %p110 = por %p108, %p109
    %s111 = ssub.s32 %s18, %s30
    %p112 = scmp.eq.s32.totalorder %s111, 0
    %s114 = sadd.s32 %s113, 1
    %s115 = scalar_select %p112, %s113, %s114
    %p118 = pneg %p112
    %p119 = scmp.eq.s32.totalorder %s11, 1
    %p120 = por %p118, %p119
    %p121 = scmp.ne.s32.totalorder %s113, %s116
    %p122 = scmp.eq.s32.totalorder %s11, 0
    %p123 = por %p121, %p122
    %p124 = scmp.ne.s32.totalorder %s113, %s116
    %p125 = scmp.eq.s32.totalorder %s16, 1
    %p126 = por %p124, %p125
    %p127 = scmp.ne.s32.totalorder %s116, %s117
    %p128 = scmp.eq.s32.totalorder %s16, 0
    %p129 = por %p127, %p128
    %p130 = scmp.ne.s32.totalorder %s116, %s117
    %p131 = scmp.eq.s32.totalorder %s17, 1
    %p132 = por %p130, %p131
    %p134 = scmp.ne.s32.totalorder %s117, %s133
    %p135 = scmp.eq.s32.totalorder %s17, 0
    %p136 = por %p134, %p135
    %s137 = ssub.s32 %s18, %s30
    %p138 = scmp.eq.s32.totalorder %s137, 0
    %s140 = sadd.s32 %s139, 1
    %s141 = scalar_select %p138, %s139, %s140
    %p144 = pneg %p138
    %p145 = scmp.eq.s32.totalorder %s11, 1
    %p146 = por %p144, %p145
    %p147 = scmp.ne.s32.totalorder %s139, %s142
    %p148 = scmp.eq.s32.totalorder %s11, 0
    %p149 = por %p147, %p148
    %p150 = scmp.ne.s32.totalorder %s139, %s142
    %p151 = scmp.eq.s32.totalorder %s16, 1
    %p152 = por %p150, %p151
    %p153 = scmp.ne.s32.totalorder %s142, %s143
    %p154 = scmp.eq.s32.totalorder %s16, 0
    %p155 = por %p153, %p154
    %p156 = scmp.ne.s32.totalorder %s142, %s143
    %p157 = scmp.eq.s32.totalorder %s17, 1
    %p158 = por %p156, %p157
    %p160 = scmp.ne.s32.totalorder %s143, %s159
    %p161 = scmp.eq.s32.totalorder %s17, 0
    %p162 = por %p160, %p161
    %s163 = ssub.s32 %s18, %s30
    %s164 = ssub.s32 %s19, %s26
    %s165 = sor.u32 %s163, %s164
    %p166 = scmp.eq.s32.totalorder %s165, 0
    %s168 = sadd.s32 %s167, 1
    %s169 = scalar_select %p166, %s167, %s168
    %p172 = pneg %p166
    %p173 = scmp.eq.s32.totalorder %s11, 1
    %p174 = por %p172, %p173
    %p175 = scmp.ne.s32.totalorder %s167, %s170
    %p176 = scmp.eq.s32.totalorder %s11, 0
    %p177 = por %p175, %p176
    %p178 = scmp.ne.s32.totalorder %s167, %s170
    %p179 = scmp.eq.s32.totalorder %s16, 1
    %p180 = por %p178, %p179
    %p181 = scmp.ne.s32.totalorder %s170, %s171
    %p182 = scmp.eq.s32.totalorder %s16, 0
    %p183 = por %p181, %p182
    %p184 = scmp.ne.s32.totalorder %s170, %s171
    %p185 = scmp.eq.s32.totalorder %s17, 1
    %p186 = por %p184, %p185
    %p188 = scmp.ne.s32.totalorder %s171, %s187
    %p189 = scmp.eq.s32.totalorder %s17, 0
    %p190 = por %p188, %p189
    %p191 = scmp.le.s32.totalorder 1, %s11
    %p192 = scmp.lt.s32.totalorder %s11, 3
    %p193 = pnand %p191, %p192
    %p194 = pneg %p193
    // Predicated region
    $region9: #{model_forward.7} parent=5 // pred_check
      _
    $region10: #{model_forward.7} parent=5 // pred_check_branch
      %196 = sbr.rel (%p193) target = $region12
    $region11: #{model_forward.7} parent=5 // pred_region
      %s197 = ssub.s32 %s11, 1
    $region12: #{model_forward.7} parent=5 // pred_fallthru
      _
    %p198 = scmp.lt.s32.totalorder %s11, 2
    // Predicated region
    $region13: #{model_forward.7} parent=5 // pred_check
      %p199 = pneg %p198
    $region14: #{model_forward.7} parent=5 // pred_check_branch
      %201 = sbr.rel (%p199) target = $region16
    $region15: #{model_forward.7} parent=5 // pred_region
      // Predicated region
      $region17: #{model_forward.7} parent=15 // pred_check
        %p202 = pneg %p45
      $region18: #{model_forward.7} parent=15 // pred_check_branch
        %204 = sbr.rel (%p202) target = $region20
      $region19: #{model_forward.7} parent=15 // pred_region
        %p205 = scmp.lt.s32.totalorder %s18, 1
        %s206 = scalar_select %p205, %s18, 1
        %p207 = scmp.lt.s32.totalorder %s19, 0
        %s208 = scalar_select %p207, %s19, 0
        %s209 = smul.addr %s208, 25
        %s210 = smul.addr %s206, 25
        %s211 = sadd.s32 %s209, %s210
        %s212 = scalar_lea.vmem %s0, %s211
      $region20: #{model_forward.7} parent=15 // pred_fallthru
        _
      // Predicated region
      $region21: #{model_forward.7} parent=15 // pred_check
        %p213 = pneg %p71
      $region22: #{model_forward.7} parent=15 // pred_check_branch
        %215 = sbr.rel (%p213) target = $region24
      $region23: #{model_forward.7} parent=15 // pred_region
        %p216 = scmp.lt.s32.totalorder %s18, 1
        %s217 = scalar_select %p216, %s18, 1
        %s218 = smul.addr %s217, 1568
        %s219 = smul.addr %s218, 4
        %s220 = scalar_lea.vmem %s1, %s219
      $region24: #{model_forward.7} parent=15 // pred_fallthru
        _
      // Predicated region
      $region25: #{model_forward.7} parent=15 // pred_check
        %p221 = pneg %p97
      $region26: #{model_forward.7} parent=15 // pred_check_branch
        %223 = sbr.rel (%p221) target = $region28
      $region27: #{model_forward.7} parent=15 // pred_region
        %p224 = scmp.lt.s32.totalorder %s18, 1
        %s225 = scalar_select %p224, %s18, 1
        %s226 = smul.addr %s225, 4
        %s227 = scalar_lea.vmem %s2, %s226
      $region28: #{model_forward.7} parent=15 // pred_fallthru
        _
      // Predicated region
      $region29: #{model_forward.7} parent=15 // pred_check
        %p228 = pneg %p123
      $region30: #{model_forward.7} parent=15 // pred_check_branch
        %230 = sbr.rel (%p228) target = $region32
      $region31: #{model_forward.7} parent=15 // pred_region
        %p231 = scmp.lt.s32.totalorder %s18, 1
        %s232 = scalar_select %p231, %s18, 1
        %s233 = smul.addr %s232, 64
        %s234 = smul.addr %s233, 4
        %s235 = scalar_lea.vmem %s3, %s234
      $region32: #{model_forward.7} parent=15 // pred_fallthru
        _
      // Predicated region
      $region33: #{model_forward.7} parent=15 // pred_check
        %p236 = pneg %p149
      $region34: #{model_forward.7} parent=15 // pred_check_branch
        %238 = sbr.rel (%p236) target = $region36
      $region35: #{model_forward.7} parent=15 // pred_region
        %p239 = scmp.lt.s32.totalorder %s18, 1
        %s240 = scalar_select %p239, %s18, 1
        %s241 = scalar_lea.vmem %s4, %s240
      $region36: #{model_forward.7} parent=15 // pred_fallthru
        _
    $region16: #{model_forward.7} parent=5 // pred_fallthru
      _
    %p242 = scmp.le.s32.totalorder 1, %s11
    %p243 = scmp.lt.s32.totalorder %s11, 3
    %p244 = pnand %p242, %p243
    %p245 = pneg %p244
    // Predicated region
    $region37: #{model_forward.7} parent=5 // pred_check
      _
    $region38: #{model_forward.7} parent=5 // pred_check_branch
      %247 = sbr.rel (%p244) target = $region40
    $region39: #{model_forward.7} parent=5 // pred_region
      %s248 = ssub.s32 %s11, 1
      %p249 = scmp.lt.s32.totalorder %s20, 1
      %s250 = scalar_select %p249, %s20, 1
      %p251 = scmp.lt.s32.totalorder %s21, 0
      %s252 = scalar_select %p251, %s21, 0
      %s253 = smul.addr %s252, 25
      %s254 = smul.addr %s250, 25
      %s255 = sadd.s32 %s253, %s254
      %s256 = scalar_lea.vmem %s0, %s255
      %p257 = pneg %p51
      %p258 = pneg %p48
      %p259 = scmp.lt.s32.totalorder %s20, 1
      %s260 = scalar_select %p259, %s20, 1
      %s261 = smul.addr %s260, 1568
      %s262 = smul.addr %s261, 4
      %s263 = scalar_lea.vmem %s1, %s262
      %p264 = pneg %p77
      %p265 = pneg %p74
      %p266 = scmp.lt.s32.totalorder %s20, 1
      %s267 = scalar_select %p266, %s20, 1
      %s268 = smul.addr %s267, 4
      %s269 = scalar_lea.vmem %s2, %s268
      %p270 = pneg %p103
      %p271 = pneg %p100
      %p272 = scmp.lt.s32.totalorder %s20, 1
      %s273 = scalar_select %p272, %s20, 1
      %s274 = smul.addr %s273, 64
      %s275 = smul.addr %s274, 4
      %s276 = scalar_lea.vmem %s3, %s275
      %p277 = pneg %p129
      %p278 = pneg %p126
      %p279 = scmp.lt.s32.totalorder %s20, 1
      %s280 = scalar_select %p279, %s20, 1
      %s281 = scalar_lea.vmem %s4, %s280
      %p282 = pneg %p155
      %p283 = pneg %p152
      %p284 = pneg %p183
      %p285 = pneg %p180
      %p286 = scmp.lt.s32.totalorder %s20, 1
      %s287 = scalar_select %p286, %s20, 1
      %p288 = scmp.lt.s32.totalorder %s21, 0
      %s289 = scalar_select %p288, %s21, 0
      %s290 = sadd.s32 %s289, %s287
      %s291 = smul.addr %s290, 2
      %s292 = scalar_lea.vmem %s5, %s291
      %p293 = scmp.lt.s32.totalorder %s20, 1
      %s294 = scalar_select %p293, %s20, 1
      %p295 = scmp.lt.s32.totalorder %s21, 0
      %s296 = scalar_select %p295, %s21, 0
      %s297 = smul.addr %s296, 25
      %s298 = smul.addr %s294, 25
      %s299 = sadd.s32 %s297, %s298
      %s300 = scalar_lea.vmem %s0, %s299
      %p301 = scmp.lt.s32.totalorder %s20, 1
      %s302 = scalar_select %p301, %s20, 1
      %s303 = smul.addr %s302, 1568
      %s304 = smul.addr %s303, 4
      %s305 = scalar_lea.vmem %s1, %s304
      %p306 = scmp.lt.s32.totalorder %s20, 1
      %s307 = scalar_select %p306, %s20, 1
      %s308 = smul.addr %s307, 4
      %s309 = scalar_lea.vmem %s2, %s308
      %p310 = scmp.lt.s32.totalorder %s20, 1
      %s311 = scalar_select %p310, %s20, 1
      %s312 = smul.addr %s311, 64
      %s313 = smul.addr %s312, 4
      %s314 = scalar_lea.vmem %s3, %s313
      %p315 = scmp.lt.s32.totalorder %s20, 1
      %s316 = scalar_select %p315, %s20, 1
      %s317 = scalar_lea.vmem %s4, %s316
      %p318 = scmp.lt.s32.totalorder %s20, 1
      %s319 = scalar_select %p318, %s20, 1
      %p320 = scmp.lt.s32.totalorder %s21, 0
      %s321 = scalar_select %p320, %s21, 0
      %s322 = sadd.s32 %s321, %s319
      %s323 = smul.addr %s322, 2
      %s324 = scalar_lea.vmem %s5, %s323
      %v326 = vld [vmem:[%s300] sm:$0xff]
      %v327 = vld [vmem:[%s300 + $0x8] sm:$0xff]
      %v328 = vld [vmem:[%s300 + $0x10] sm:$0xff]
      %v329 = vld [vmem:[%s300 + $0x18] sm:$0x1]
      %v330 = vld [vmem:[%s305] sm:$0xff]
      %v331 = vld [vmem:[%s305 + $0x8] sm:$0xff]
      %v332 = vld [vmem:[%s305 + $0x10] sm:$0xff]
      %v333 = vld [vmem:[%s305 + $0x18] sm:$0xff]
      %v334 = vld [vmem:[%s305 + $0x20] sm:$0xff]
      %v335 = vld [vmem:[%s305 + $0x28] sm:$0xff]
      %v336 = vld [vmem:[%s305 + $0x30] sm:$0xff]
      %v337 = vld [vmem:[%s305 + $0x38] sm:$0xff]
      %v338 = vld [vmem:[%s305 + $0x40] sm:$0xff]
      %v339 = vld [vmem:[%s305 + $0x48] sm:$0xff]
      %v340 = vld [vmem:[%s305 + $0x50] sm:$0xff]
      %v341 = vld [vmem:[%s305 + $0x58] sm:$0xff]
      %v342 = vld [vmem:[%s305 + $0x60] sm:$0xff]
      %v343 = vld [vmem:[%s305 + $0x68] sm:$0xff]
      %v344 = vld [vmem:[%s305 + $0x70] sm:$0xff]
      %v345 = vld [vmem:[%s305 + $0x78] sm:$0xff]
      %v346 = vld [vmem:[%s305 + $0x80] sm:$0xff]
      %v347 = vld [vmem:[%s305 + $0x88] sm:$0xff]
      %v348 = vld [vmem:[%s305 + $0x90] sm:$0xff]
      %v349 = vld [vmem:[%s305 + $0x98] sm:$0xff]
      %v350 = vld [vmem:[%s305 + $0xa0] sm:$0xff]
      %v351 = vld [vmem:[%s305 + $0xa8] sm:$0xff]
      %v352 = vld [vmem:[%s305 + $0xb0] sm:$0xff]
      %v353 = vld [vmem:[%s305 + $0xb8] sm:$0xff]
      %v354 = vld [vmem:[%s305 + $0xc0] sm:$0xff]
      %v355 = vld [vmem:[%s305 + $0xc8] sm:$0xff]
      %v356 = vld [vmem:[%s305 + $0xd0] sm:$0xff]
      %v357 = vld [vmem:[%s305 + $0xd8] sm:$0xff]
      %v358 = vld [vmem:[%s305 + $0xe0] sm:$0xff]
      %v359 = vld [vmem:[%s305 + $0xe8] sm:$0xff]
      %v360 = vld [vmem:[%s305 + $0xf0] sm:$0xff]
      %v361 = vld [vmem:[%s305 + $0xf8] sm:$0xff]
      %v362 = vld [vmem:[%s305 + $0x100] sm:$0xff]
      %v363 = vld [vmem:[%s305 + $0x108] sm:$0xff]
      %v364 = vld [vmem:[%s305 + $0x110] sm:$0xff]
      %v365 = vld [vmem:[%s305 + $0x118] sm:$0xff]
      %v366 = vld [vmem:[%s305 + $0x120] sm:$0xff]
      %v367 = vld [vmem:[%s305 + $0x128] sm:$0xff]
      %v368 = vld [vmem:[%s305 + $0x130] sm:$0xff]
      %v369 = vld [vmem:[%s305 + $0x138] sm:$0xff]
      %v370 = vld [vmem:[%s305 + $0x140] sm:$0xff]
      %v371 = vld [vmem:[%s305 + $0x148] sm:$0xff]
      %v372 = vld [vmem:[%s305 + $0x150] sm:$0xff]
      %v373 = vld [vmem:[%s305 + $0x158] sm:$0xff]
      %v374 = vld [vmem:[%s305 + $0x160] sm:$0xff]
      %v375 = vld [vmem:[%s305 + $0x168] sm:$0xff]
      %v376 = vld [vmem:[%s305 + $0x170] sm:$0xff]
      %v377 = vld [vmem:[%s305 + $0x178] sm:$0xff]
      %v378 = vld [vmem:[%s305 + $0x180] sm:$0xff]
      %v379 = vld [vmem:[%s305 + $0x188] sm:$0xff]
      %v380 = vld [vmem:[%s305 + $0x190] sm:$0xff]
      %v381 = vld [vmem:[%s305 + $0x198] sm:$0xff]
      %v382 = vld [vmem:[%s305 + $0x1a0] sm:$0xff]
      %v383 = vld [vmem:[%s305 + $0x1a8] sm:$0xff]
      %v384 = vld [vmem:[%s305 + $0x1b0] sm:$0xff]
      %v385 = vld [vmem:[%s305 + $0x1b8] sm:$0xff]
      %v386 = vld [vmem:[%s305 + $0x1c0] sm:$0xff]
      %v387 = vld [vmem:[%s305 + $0x1c8] sm:$0xff]
      %v388 = vld [vmem:[%s305 + $0x1d0] sm:$0xff]
      %v389 = vld [vmem:[%s305 + $0x1d8] sm:$0xff]
      %v390 = vld [vmem:[%s305 + $0x1e0] sm:$0xff]
      %v391 = vld [vmem:[%s305 + $0x1e8] sm:$0xff]
      %v392 = vld [vmem:[%s305 + $0x1f0] sm:$0xff]
      %v393 = vld [vmem:[%s305 + $0x1f8] sm:$0xff]
      %v394 = vld [vmem:[%s305 + $0x200] sm:$0xff]
      %v395 = vld [vmem:[%s305 + $0x208] sm:$0xff]
      %v396 = vld [vmem:[%s305 + $0x210] sm:$0xff]
      %v397 = vld [vmem:[%s305 + $0x218] sm:$0xff]
      %v398 = vld [vmem:[%s305 + $0x220] sm:$0xff]
      %v399 = vld [vmem:[%s305 + $0x228] sm:$0xff]
      %v400 = vld [vmem:[%s305 + $0x230] sm:$0xff]
      %v401 = vld [vmem:[%s305 + $0x238] sm:$0xff]
      %v402 = vld [vmem:[%s305 + $0x240] sm:$0xff]
      %v403 = vld [vmem:[%s305 + $0x248] sm:$0xff]
      %v404 = vld [vmem:[%s305 + $0x250] sm:$0xff]
      %v405 = vld [vmem:[%s305 + $0x258] sm:$0xff]
      %v406 = vld [vmem:[%s305 + $0x260] sm:$0xff]
      %v407 = vld [vmem:[%s305 + $0x268] sm:$0xff]
      %v408 = vld [vmem:[%s305 + $0x270] sm:$0xff]
      %v409 = vld [vmem:[%s305 + $0x278] sm:$0xff]
      %v410 = vld [vmem:[%s305 + $0x280] sm:$0xff]
      %v411 = vld [vmem:[%s305 + $0x288] sm:$0xff]
      %v412 = vld [vmem:[%s305 + $0x290] sm:$0xff]
      %v413 = vld [vmem:[%s305 + $0x298] sm:$0xff]
      %v414 = vld [vmem:[%s305 + $0x2a0] sm:$0xff]
      %v415 = vld [vmem:[%s305 + $0x2a8] sm:$0xff]
      %v416 = vld [vmem:[%s305 + $0x2b0] sm:$0xff]
      %v417 = vld [vmem:[%s305 + $0x2b8] sm:$0xff]
      %v418 = vld [vmem:[%s305 + $0x2c0] sm:$0xff]
      %v419 = vld [vmem:[%s305 + $0x2c8] sm:$0xff]
      %v420 = vld [vmem:[%s305 + $0x2d0] sm:$0xff]
      %v421 = vld [vmem:[%s305 + $0x2d8] sm:$0xff]
      %v422 = vld [vmem:[%s305 + $0x2e0] sm:$0xff]
      %v423 = vld [vmem:[%s305 + $0x2e8] sm:$0xff]
      %v424 = vld [vmem:[%s305 + $0x2f0] sm:$0xff]
      %v425 = vld [vmem:[%s305 + $0x2f8] sm:$0xff]
      %v426 = vld [vmem:[%s305 + $0x300] sm:$0xff]
      %v427 = vld [vmem:[%s305 + $0x308] sm:$0xff]
      %v428 = vld [vmem:[%s305 + $0x310] sm:$0xff]
      %v429 = vld [vmem:[%s305 + $0x318] sm:$0xff]
      %v430 = vld [vmem:[%s305 + $0x320] sm:$0xff]
      %v431 = vld [vmem:[%s305 + $0x328] sm:$0xff]
      %v432 = vld [vmem:[%s305 + $0x330] sm:$0xff]
      %v433 = vld [vmem:[%s305 + $0x338] sm:$0xff]
      %v434 = vld [vmem:[%s305 + $0x340] sm:$0xff]
      %v435 = vld [vmem:[%s305 + $0x348] sm:$0xff]
      %v436 = vld [vmem:[%s305 + $0x350] sm:$0xff]
      %v437 = vld [vmem:[%s305 + $0x358] sm:$0xff]
      %v438 = vld [vmem:[%s305 + $0x360] sm:$0xff]
      %v439 = vld [vmem:[%s305 + $0x368] sm:$0xff]
      %v440 = vld [vmem:[%s305 + $0x370] sm:$0xff]
      %v441 = vld [vmem:[%s305 + $0x378] sm:$0xff]
      %v442 = vld [vmem:[%s305 + $0x380] sm:$0xff]
      %v443 = vld [vmem:[%s305 + $0x388] sm:$0xff]
      %v444 = vld [vmem:[%s305 + $0x390] sm:$0xff]
      %v445 = vld [vmem:[%s305 + $0x398] sm:$0xff]
      %v446 = vld [vmem:[%s305 + $0x3a0] sm:$0xff]
      %v447 = vld [vmem:[%s305 + $0x3a8] sm:$0xff]
      %v448 = vld [vmem:[%s305 + $0x3b0] sm:$0xff]
      %v449 = vld [vmem:[%s305 + $0x3b8] sm:$0xff]
      %v450 = vld [vmem:[%s305 + $0x3c0] sm:$0xff]
      %v451 = vld [vmem:[%s305 + $0x3c8] sm:$0xff]
      %v452 = vld [vmem:[%s305 + $0x3d0] sm:$0xff]
      %v453 = vld [vmem:[%s305 + $0x3d8] sm:$0xff]
      %v454 = vld [vmem:[%s305 + $0x3e0] sm:$0xff]
      %v455 = vld [vmem:[%s305 + $0x3e8] sm:$0xff]
      %v456 = vld [vmem:[%s305 + $0x3f0] sm:$0xff]
      %v457 = vld [vmem:[%s305 + $0x3f8] sm:$0xff]
      %v458 = vld [vmem:[%s305 + $0x400] sm:$0xff]
      %v459 = vld [vmem:[%s305 + $0x408] sm:$0xff]
      %v460 = vld [vmem:[%s305 + $0x410] sm:$0xff]
      %v461 = vld [vmem:[%s305 + $0x418] sm:$0xff]
      %v462 = vld [vmem:[%s305 + $0x420] sm:$0xff]
      %v463 = vld [vmem:[%s305 + $0x428] sm:$0xff]
      %v464 = vld [vmem:[%s305 + $0x430] sm:$0xff]
      %v465 = vld [vmem:[%s305 + $0x438] sm:$0xff]
      %v466 = vld [vmem:[%s305 + $0x440] sm:$0xff]
      %v467 = vld [vmem:[%s305 + $0x448] sm:$0xff]
      %v468 = vld [vmem:[%s305 + $0x450] sm:$0xff]
      %v469 = vld [vmem:[%s305 + $0x458] sm:$0xff]
      %v470 = vld [vmem:[%s305 + $0x460] sm:$0xff]
      %v471 = vld [vmem:[%s305 + $0x468] sm:$0xff]
      %v472 = vld [vmem:[%s305 + $0x470] sm:$0xff]
      %v473 = vld [vmem:[%s305 + $0x478] sm:$0xff]
      %v474 = vld [vmem:[%s305 + $0x480] sm:$0xff]
      %v475 = vld [vmem:[%s305 + $0x488] sm:$0xff]
      %v476 = vld [vmem:[%s305 + $0x490] sm:$0xff]
      %v477 = vld [vmem:[%s305 + $0x498] sm:$0xff]
      %v478 = vld [vmem:[%s305 + $0x4a0] sm:$0xff]
      %v479 = vld [vmem:[%s305 + $0x4a8] sm:$0xff]
      %v480 = vld [vmem:[%s305 + $0x4b0] sm:$0xff]
      %v481 = vld [vmem:[%s305 + $0x4b8] sm:$0xff]
      %v482 = vld [vmem:[%s305 + $0x4c0] sm:$0xff]
      %v483 = vld [vmem:[%s305 + $0x4c8] sm:$0xff]
      %v484 = vld [vmem:[%s305 + $0x4d0] sm:$0xff]
      %v485 = vld [vmem:[%s305 + $0x4d8] sm:$0xff]
      %v486 = vld [vmem:[%s305 + $0x4e0] sm:$0xff]
      %v487 = vld [vmem:[%s305 + $0x4e8] sm:$0xff]
      %v488 = vld [vmem:[%s305 + $0x4f0] sm:$0xff]
      %v489 = vld [vmem:[%s305 + $0x4f8] sm:$0xff]
      %v490 = vld [vmem:[%s305 + $0x500] sm:$0xff]
      %v491 = vld [vmem:[%s305 + $0x508] sm:$0xff]
      %v492 = vld [vmem:[%s305 + $0x510] sm:$0xff]
      %v493 = vld [vmem:[%s305 + $0x518] sm:$0xff]
      %v494 = vld [vmem:[%s305 + $0x520] sm:$0xff]
      %v495 = vld [vmem:[%s305 + $0x528] sm:$0xff]
      %v496 = vld [vmem:[%s305 + $0x530] sm:$0xff]
      %v497 = vld [vmem:[%s305 + $0x538] sm:$0xff]
      %v498 = vld [vmem:[%s305 + $0x540] sm:$0xff]
      %v499 = vld [vmem:[%s305 + $0x548] sm:$0xff]
      %v500 = vld [vmem:[%s305 + $0x550] sm:$0xff]
      %v501 = vld [vmem:[%s305 + $0x558] sm:$0xff]
      %v502 = vld [vmem:[%s305 + $0x560] sm:$0xff]
      %v503 = vld [vmem:[%s305 + $0x568] sm:$0xff]
      %v504 = vld [vmem:[%s305 + $0x570] sm:$0xff]
      %v505 = vld [vmem:[%s305 + $0x578] sm:$0xff]
      %v506 = vld [vmem:[%s305 + $0x580] sm:$0xff]
      %v507 = vld [vmem:[%s305 + $0x588] sm:$0xff]
      %v508 = vld [vmem:[%s305 + $0x590] sm:$0xff]
      %v509 = vld [vmem:[%s305 + $0x598] sm:$0xff]
      %v510 = vld [vmem:[%s305 + $0x5a0] sm:$0xff]
      %v511 = vld [vmem:[%s305 + $0x5a8] sm:$0xff]
      %v512 = vld [vmem:[%s305 + $0x5b0] sm:$0xff]
      %v513 = vld [vmem:[%s305 + $0x5b8] sm:$0xff]
      %v514 = vld [vmem:[%s305 + $0x5c0] sm:$0xff]
      %v515 = vld [vmem:[%s305 + $0x5c8] sm:$0xff]
      %v516 = vld [vmem:[%s305 + $0x5d0] sm:$0xff]
      %v517 = vld [vmem:[%s305 + $0x5d8] sm:$0xff]
      %v518 = vld [vmem:[%s305 + $0x5e0] sm:$0xff]
      %v519 = vld [vmem:[%s305 + $0x5e8] sm:$0xff]
      %v520 = vld [vmem:[%s305 + $0x5f0] sm:$0xff]
      %v521 = vld [vmem:[%s305 + $0x5f8] sm:$0xff]
      %v522 = vld [vmem:[%s305 + $0x600] sm:$0xff]
      %v523 = vld [vmem:[%s305 + $0x608] sm:$0xff]
      %v524 = vld [vmem:[%s305 + $0x610] sm:$0xff]
      %v525 = vld [vmem:[%s305 + $0x618] sm:$0xff]
      %v526 = vld [vmem:[%s305 + $0x620] sm:$0xff]
      %v527 = vld [vmem:[%s305 + $0x628] sm:$0xff]
      %v528 = vld [vmem:[%s305 + $0x630] sm:$0xff]
      %v529 = vld [vmem:[%s305 + $0x638] sm:$0xff]
      %v530 = vld [vmem:[%s305 + $0x640] sm:$0xff]
      %v531 = vld [vmem:[%s305 + $0x648] sm:$0xff]
      %v532 = vld [vmem:[%s305 + $0x650] sm:$0xff]
      %v533 = vld [vmem:[%s305 + $0x658] sm:$0xff]
      %v534 = vld [vmem:[%s305 + $0x660] sm:$0xff]
      %v535 = vld [vmem:[%s305 + $0x668] sm:$0xff]
      %v536 = vld [vmem:[%s305 + $0x670] sm:$0xff]
      %v537 = vld [vmem:[%s305 + $0x678] sm:$0xff]
      %v538 = vld [vmem:[%s305 + $0x680] sm:$0xff]
      %v539 = vld [vmem:[%s305 + $0x688] sm:$0xff]
      %v540 = vld [vmem:[%s305 + $0x690] sm:$0xff]
      %v541 = vld [vmem:[%s305 + $0x698] sm:$0xff]
      %v542 = vld [vmem:[%s305 + $0x6a0] sm:$0xff]
      %v543 = vld [vmem:[%s305 + $0x6a8] sm:$0xff]
      %v544 = vld [vmem:[%s305 + $0x6b0] sm:$0xff]
      %v545 = vld [vmem:[%s305 + $0x6b8] sm:$0xff]
      %v546 = vld [vmem:[%s305 + $0x6c0] sm:$0xff]
      %v547 = vld [vmem:[%s305 + $0x6c8] sm:$0xff]
      %v548 = vld [vmem:[%s305 + $0x6d0] sm:$0xff]
      %v549 = vld [vmem:[%s305 + $0x6d8] sm:$0xff]
      %v550 = vld [vmem:[%s305 + $0x6e0] sm:$0xff]
      %v551 = vld [vmem:[%s305 + $0x6e8] sm:$0xff]
      %v552 = vld [vmem:[%s305 + $0x6f0] sm:$0xff]
      %v553 = vld [vmem:[%s305 + $0x6f8] sm:$0xff]
      %v554 = vld [vmem:[%s305 + $0x700] sm:$0xff]
      %v555 = vld [vmem:[%s305 + $0x708] sm:$0xff]
      %v556 = vld [vmem:[%s305 + $0x710] sm:$0xff]
      %v557 = vld [vmem:[%s305 + $0x718] sm:$0xff]
      %v558 = vld [vmem:[%s305 + $0x720] sm:$0xff]
      %v559 = vld [vmem:[%s305 + $0x728] sm:$0xff]
      %v560 = vld [vmem:[%s305 + $0x730] sm:$0xff]
      %v561 = vld [vmem:[%s305 + $0x738] sm:$0xff]
      %v562 = vld [vmem:[%s305 + $0x740] sm:$0xff]
      %v563 = vld [vmem:[%s305 + $0x748] sm:$0xff]
      %v564 = vld [vmem:[%s305 + $0x750] sm:$0xff]
      %v565 = vld [vmem:[%s305 + $0x758] sm:$0xff]
      %v566 = vld [vmem:[%s305 + $0x760] sm:$0xff]
      %v567 = vld [vmem:[%s305 + $0x768] sm:$0xff]
      %v568 = vld [vmem:[%s305 + $0x770] sm:$0xff]
      %v569 = vld [vmem:[%s305 + $0x778] sm:$0xff]
      %v570 = vld [vmem:[%s305 + $0x780] sm:$0xff]
      %v571 = vld [vmem:[%s305 + $0x788] sm:$0xff]
      %v572 = vld [vmem:[%s305 + $0x790] sm:$0xff]
      %v573 = vld [vmem:[%s305 + $0x798] sm:$0xff]
      %v574 = vld [vmem:[%s305 + $0x7a0] sm:$0xff]
      %v575 = vld [vmem:[%s305 + $0x7a8] sm:$0xff]
      %v576 = vld [vmem:[%s305 + $0x7b0] sm:$0xff]
      %v577 = vld [vmem:[%s305 + $0x7b8] sm:$0xff]
      %v578 = vld [vmem:[%s305 + $0x7c0] sm:$0xff]
      %v579 = vld [vmem:[%s305 + $0x7c8] sm:$0xff]
      %v580 = vld [vmem:[%s305 + $0x7d0] sm:$0xff]
      %v581 = vld [vmem:[%s305 + $0x7d8] sm:$0xff]
      %v582 = vld [vmem:[%s305 + $0x7e0] sm:$0xff]
      %v583 = vld [vmem:[%s305 + $0x7e8] sm:$0xff]
      %v584 = vld [vmem:[%s305 + $0x7f0] sm:$0xff]
      %v585 = vld [vmem:[%s305 + $0x7f8] sm:$0xff]
      %v586 = vld [vmem:[%s305 + $0x800] sm:$0xff]
      %v587 = vld [vmem:[%s305 + $0x808] sm:$0xff]
      %v588 = vld [vmem:[%s305 + $0x810] sm:$0xff]
      %v589 = vld [vmem:[%s305 + $0x818] sm:$0xff]
      %v590 = vld [vmem:[%s305 + $0x820] sm:$0xff]
      %v591 = vld [vmem:[%s305 + $0x828] sm:$0xff]
      %v592 = vld [vmem:[%s305 + $0x830] sm:$0xff]
      %v593 = vld [vmem:[%s305 + $0x838] sm:$0xff]
      %v594 = vld [vmem:[%s305 + $0x840] sm:$0xff]
      %v595 = vld [vmem:[%s305 + $0x848] sm:$0xff]
      %v596 = vld [vmem:[%s305 + $0x850] sm:$0xff]
      %v597 = vld [vmem:[%s305 + $0x858] sm:$0xff]
      %v598 = vld [vmem:[%s305 + $0x860] sm:$0xff]
      %v599 = vld [vmem:[%s305 + $0x868] sm:$0xff]
      %v600 = vld [vmem:[%s305 + $0x870] sm:$0xff]
      %v601 = vld [vmem:[%s305 + $0x878] sm:$0xff]
      %v602 = vld [vmem:[%s305 + $0x880] sm:$0xff]
      %v603 = vld [vmem:[%s305 + $0x888] sm:$0xff]
      %v604 = vld [vmem:[%s305 + $0x890] sm:$0xff]
      %v605 = vld [vmem:[%s305 + $0x898] sm:$0xff]
      %v606 = vld [vmem:[%s305 + $0x8a0] sm:$0xff]
      %v607 = vld [vmem:[%s305 + $0x8a8] sm:$0xff]
      %v608 = vld [vmem:[%s305 + $0x8b0] sm:$0xff]
      %v609 = vld [vmem:[%s305 + $0x8b8] sm:$0xff]
      %v610 = vld [vmem:[%s305 + $0x8c0] sm:$0xff]
      %v611 = vld [vmem:[%s305 + $0x8c8] sm:$0xff]
      %v612 = vld [vmem:[%s305 + $0x8d0] sm:$0xff]
      %v613 = vld [vmem:[%s305 + $0x8d8] sm:$0xff]
      %v614 = vld [vmem:[%s305 + $0x8e0] sm:$0xff]
      %v615 = vld [vmem:[%s305 + $0x8e8] sm:$0xff]
      %v616 = vld [vmem:[%s305 + $0x8f0] sm:$0xff]
      %v617 = vld [vmem:[%s305 + $0x8f8] sm:$0xff]
      %v618 = vld [vmem:[%s305 + $0x900] sm:$0xff]
      %v619 = vld [vmem:[%s305 + $0x908] sm:$0xff]
      %v620 = vld [vmem:[%s305 + $0x910] sm:$0xff]
      %v621 = vld [vmem:[%s305 + $0x918] sm:$0xff]
      %v622 = vld [vmem:[%s305 + $0x920] sm:$0xff]
      %v623 = vld [vmem:[%s305 + $0x928] sm:$0xff]
      %v624 = vld [vmem:[%s305 + $0x930] sm:$0xff]
      %v625 = vld [vmem:[%s305 + $0x938] sm:$0xff]
      %v626 = vld [vmem:[%s305 + $0x940] sm:$0xff]
      %v627 = vld [vmem:[%s305 + $0x948] sm:$0xff]
      %v628 = vld [vmem:[%s305 + $0x950] sm:$0xff]
      %v629 = vld [vmem:[%s305 + $0x958] sm:$0xff]
      %v630 = vld [vmem:[%s305 + $0x960] sm:$0xff]
      %v631 = vld [vmem:[%s305 + $0x968] sm:$0xff]
      %v632 = vld [vmem:[%s305 + $0x970] sm:$0xff]
      %v633 = vld [vmem:[%s305 + $0x978] sm:$0xff]
      %v634 = vld [vmem:[%s305 + $0x980] sm:$0xff]
      %v635 = vld [vmem:[%s305 + $0x988] sm:$0xff]
      %v636 = vld [vmem:[%s305 + $0x990] sm:$0xff]
      %v637 = vld [vmem:[%s305 + $0x998] sm:$0xff]
      %v638 = vld [vmem:[%s305 + $0x9a0] sm:$0xff]
      %v639 = vld [vmem:[%s305 + $0x9a8] sm:$0xff]
      %v640 = vld [vmem:[%s305 + $0x9b0] sm:$0xff]
      %v641 = vld [vmem:[%s305 + $0x9b8] sm:$0xff]
      %v642 = vld [vmem:[%s305 + $0x9c0] sm:$0xff]
      %v643 = vld [vmem:[%s305 + $0x9c8] sm:$0xff]
      %v644 = vld [vmem:[%s305 + $0x9d0] sm:$0xff]
      %v645 = vld [vmem:[%s305 + $0x9d8] sm:$0xff]
      %v646 = vld [vmem:[%s305 + $0x9e0] sm:$0xff]
      %v647 = vld [vmem:[%s305 + $0x9e8] sm:$0xff]
      %v648 = vld [vmem:[%s305 + $0x9f0] sm:$0xff]
      %v649 = vld [vmem:[%s305 + $0x9f8] sm:$0xff]
      %v650 = vld [vmem:[%s305 + $0xa00] sm:$0xff]
      %v651 = vld [vmem:[%s305 + $0xa08] sm:$0xff]
      %v652 = vld [vmem:[%s305 + $0xa10] sm:$0xff]
      %v653 = vld [vmem:[%s305 + $0xa18] sm:$0xff]
      %v654 = vld [vmem:[%s305 + $0xa20] sm:$0xff]
      %v655 = vld [vmem:[%s305 + $0xa28] sm:$0xff]
      %v656 = vld [vmem:[%s305 + $0xa30] sm:$0xff]
      %v657 = vld [vmem:[%s305 + $0xa38] sm:$0xff]
      %v658 = vld [vmem:[%s305 + $0xa40] sm:$0xff]
      %v659 = vld [vmem:[%s305 + $0xa48] sm:$0xff]
      %v660 = vld [vmem:[%s305 + $0xa50] sm:$0xff]
      %v661 = vld [vmem:[%s305 + $0xa58] sm:$0xff]
      %v662 = vld [vmem:[%s305 + $0xa60] sm:$0xff]
      %v663 = vld [vmem:[%s305 + $0xa68] sm:$0xff]
      %v664 = vld [vmem:[%s305 + $0xa70] sm:$0xff]
      %v665 = vld [vmem:[%s305 + $0xa78] sm:$0xff]
      %v666 = vld [vmem:[%s305 + $0xa80] sm:$0xff]
      %v667 = vld [vmem:[%s305 + $0xa88] sm:$0xff]
      %v668 = vld [vmem:[%s305 + $0xa90] sm:$0xff]
      %v669 = vld [vmem:[%s305 + $0xa98] sm:$0xff]
      %v670 = vld [vmem:[%s305 + $0xaa0] sm:$0xff]
      %v671 = vld [vmem:[%s305 + $0xaa8] sm:$0xff]
      %v672 = vld [vmem:[%s305 + $0xab0] sm:$0xff]
      %v673 = vld [vmem:[%s305 + $0xab8] sm:$0xff]
      %v674 = vld [vmem:[%s305 + $0xac0] sm:$0xff]
      %v675 = vld [vmem:[%s305 + $0xac8] sm:$0xff]
      %v676 = vld [vmem:[%s305 + $0xad0] sm:$0xff]
      %v677 = vld [vmem:[%s305 + $0xad8] sm:$0xff]
      %v678 = vld [vmem:[%s305 + $0xae0] sm:$0xff]
      %v679 = vld [vmem:[%s305 + $0xae8] sm:$0xff]
      %v680 = vld [vmem:[%s305 + $0xaf0] sm:$0xff]
      %v681 = vld [vmem:[%s305 + $0xaf8] sm:$0xff]
      %v682 = vld [vmem:[%s305 + $0xb00] sm:$0xff]
      %v683 = vld [vmem:[%s305 + $0xb08] sm:$0xff]
      %v684 = vld [vmem:[%s305 + $0xb10] sm:$0xff]
      %v685 = vld [vmem:[%s305 + $0xb18] sm:$0xff]
      %v686 = vld [vmem:[%s305 + $0xb20] sm:$0xff]
      %v687 = vld [vmem:[%s305 + $0xb28] sm:$0xff]
      %v688 = vld [vmem:[%s305 + $0xb30] sm:$0xff]
      %v689 = vld [vmem:[%s305 + $0xb38] sm:$0xff]
      %v690 = vld [vmem:[%s305 + $0xb40] sm:$0xff]
      %v691 = vld [vmem:[%s305 + $0xb48] sm:$0xff]
      %v692 = vld [vmem:[%s305 + $0xb50] sm:$0xff]
      %v693 = vld [vmem:[%s305 + $0xb58] sm:$0xff]
      %v694 = vld [vmem:[%s305 + $0xb60] sm:$0xff]
      %v695 = vld [vmem:[%s305 + $0xb68] sm:$0xff]
      %v696 = vld [vmem:[%s305 + $0xb70] sm:$0xff]
      %v697 = vld [vmem:[%s305 + $0xb78] sm:$0xff]
      %v698 = vld [vmem:[%s305 + $0xb80] sm:$0xff]
      %v699 = vld [vmem:[%s305 + $0xb88] sm:$0xff]
      %v700 = vld [vmem:[%s305 + $0xb90] sm:$0xff]
      %v701 = vld [vmem:[%s305 + $0xb98] sm:$0xff]
      %v702 = vld [vmem:[%s305 + $0xba0] sm:$0xff]
      %v703 = vld [vmem:[%s305 + $0xba8] sm:$0xff]
      %v704 = vld [vmem:[%s305 + $0xbb0] sm:$0xff]
      %v705 = vld [vmem:[%s305 + $0xbb8] sm:$0xff]
      %v706 = vld [vmem:[%s305 + $0xbc0] sm:$0xff]
      %v707 = vld [vmem:[%s305 + $0xbc8] sm:$0xff]
      %v708 = vld [vmem:[%s305 + $0xbd0] sm:$0xff]
      %v709 = vld [vmem:[%s305 + $0xbd8] sm:$0xff]
      %v710 = vld [vmem:[%s305 + $0xbe0] sm:$0xff]
      %v711 = vld [vmem:[%s305 + $0xbe8] sm:$0xff]
      %v712 = vld [vmem:[%s305 + $0xbf0] sm:$0xff]
      %v713 = vld [vmem:[%s305 + $0xbf8] sm:$0xff]
      %v714 = vld [vmem:[%s305 + $0xc00] sm:$0xff]
      %v715 = vld [vmem:[%s305 + $0xc08] sm:$0xff]
      %v716 = vld [vmem:[%s305 + $0xc10] sm:$0xff]
      %v717 = vld [vmem:[%s305 + $0xc18] sm:$0xff]
      %v718 = vld [vmem:[%s305 + $0xc20] sm:$0xff]
      %v719 = vld [vmem:[%s305 + $0xc28] sm:$0xff]
      %v720 = vld [vmem:[%s305 + $0xc30] sm:$0xff]
      %v721 = vld [vmem:[%s305 + $0xc38] sm:$0xff]
      %v722 = vld [vmem:[%s305 + $0xc40] sm:$0xff]
      %v723 = vld [vmem:[%s305 + $0xc48] sm:$0xff]
      %v724 = vld [vmem:[%s305 + $0xc50] sm:$0xff]
      %v725 = vld [vmem:[%s305 + $0xc58] sm:$0xff]
      %v726 = vld [vmem:[%s305 + $0xc60] sm:$0xff]
      %v727 = vld [vmem:[%s305 + $0xc68] sm:$0xff]
      %v728 = vld [vmem:[%s305 + $0xc70] sm:$0xff]
      %v729 = vld [vmem:[%s305 + $0xc78] sm:$0xff]
      %v730 = vld [vmem:[%s305 + $0xc80] sm:$0xff]
      %v731 = vld [vmem:[%s305 + $0xc88] sm:$0xff]
      %v732 = vld [vmem:[%s305 + $0xc90] sm:$0xff]
      %v733 = vld [vmem:[%s305 + $0xc98] sm:$0xff]
      %v734 = vld [vmem:[%s305 + $0xca0] sm:$0xff]
      %v735 = vld [vmem:[%s305 + $0xca8] sm:$0xff]
      %v736 = vld [vmem:[%s305 + $0xcb0] sm:$0xff]
      %v737 = vld [vmem:[%s305 + $0xcb8] sm:$0xff]
      %v738 = vld [vmem:[%s305 + $0xcc0] sm:$0xff]
      %v739 = vld [vmem:[%s305 + $0xcc8] sm:$0xff]
      %v740 = vld [vmem:[%s305 + $0xcd0] sm:$0xff]
      %v741 = vld [vmem:[%s305 + $0xcd8] sm:$0xff]
      %v742 = vld [vmem:[%s305 + $0xce0] sm:$0xff]
      %v743 = vld [vmem:[%s305 + $0xce8] sm:$0xff]
      %v744 = vld [vmem:[%s305 + $0xcf0] sm:$0xff]
      %v745 = vld [vmem:[%s305 + $0xcf8] sm:$0xff]
      %v746 = vld [vmem:[%s305 + $0xd00] sm:$0xff]
      %v747 = vld [vmem:[%s305 + $0xd08] sm:$0xff]
      %v748 = vld [vmem:[%s305 + $0xd10] sm:$0xff]
      %v749 = vld [vmem:[%s305 + $0xd18] sm:$0xff]
      %v750 = vld [vmem:[%s305 + $0xd20] sm:$0xff]
      %v751 = vld [vmem:[%s305 + $0xd28] sm:$0xff]
      %v752 = vld [vmem:[%s305 + $0xd30] sm:$0xff]
      %v753 = vld [vmem:[%s305 + $0xd38] sm:$0xff]
      %v754 = vld [vmem:[%s305 + $0xd40] sm:$0xff]
      %v755 = vld [vmem:[%s305 + $0xd48] sm:$0xff]
      %v756 = vld [vmem:[%s305 + $0xd50] sm:$0xff]
      %v757 = vld [vmem:[%s305 + $0xd58] sm:$0xff]
      %v758 = vld [vmem:[%s305 + $0xd60] sm:$0xff]
      %v759 = vld [vmem:[%s305 + $0xd68] sm:$0xff]
      %v760 = vld [vmem:[%s305 + $0xd70] sm:$0xff]
      %v761 = vld [vmem:[%s305 + $0xd78] sm:$0xff]
      %v762 = vld [vmem:[%s305 + $0xd80] sm:$0xff]
      %v763 = vld [vmem:[%s305 + $0xd88] sm:$0xff]
      %v764 = vld [vmem:[%s305 + $0xd90] sm:$0xff]
      %v765 = vld [vmem:[%s305 + $0xd98] sm:$0xff]
      %v766 = vld [vmem:[%s305 + $0xda0] sm:$0xff]
      %v767 = vld [vmem:[%s305 + $0xda8] sm:$0xff]
      %v768 = vld [vmem:[%s305 + $0xdb0] sm:$0xff]
      %v769 = vld [vmem:[%s305 + $0xdb8] sm:$0xff]
      %v770 = vld [vmem:[%s305 + $0xdc0] sm:$0xff]
      %v771 = vld [vmem:[%s305 + $0xdc8] sm:$0xff]
      %v772 = vld [vmem:[%s305 + $0xdd0] sm:$0xff]
      %v773 = vld [vmem:[%s305 + $0xdd8] sm:$0xff]
      %v774 = vld [vmem:[%s305 + $0xde0] sm:$0xff]
      %v775 = vld [vmem:[%s305 + $0xde8] sm:$0xff]
      %v776 = vld [vmem:[%s305 + $0xdf0] sm:$0xff]
      %v777 = vld [vmem:[%s305 + $0xdf8] sm:$0xff]
      %v778 = vld [vmem:[%s305 + $0xe00] sm:$0xff]
      %v779 = vld [vmem:[%s305 + $0xe08] sm:$0xff]
      %v780 = vld [vmem:[%s305 + $0xe10] sm:$0xff]
      %v781 = vld [vmem:[%s305 + $0xe18] sm:$0xff]
      %v782 = vld [vmem:[%s305 + $0xe20] sm:$0xff]
      %v783 = vld [vmem:[%s305 + $0xe28] sm:$0xff]
      %v784 = vld [vmem:[%s305 + $0xe30] sm:$0xff]
      %v785 = vld [vmem:[%s305 + $0xe38] sm:$0xff]
      %v786 = vld [vmem:[%s305 + $0xe40] sm:$0xff]
      %v787 = vld [vmem:[%s305 + $0xe48] sm:$0xff]
      %v788 = vld [vmem:[%s305 + $0xe50] sm:$0xff]
      %v789 = vld [vmem:[%s305 + $0xe58] sm:$0xff]
      %v790 = vld [vmem:[%s305 + $0xe60] sm:$0xff]
      %v791 = vld [vmem:[%s305 + $0xe68] sm:$0xff]
      %v792 = vld [vmem:[%s305 + $0xe70] sm:$0xff]
      %v793 = vld [vmem:[%s305 + $0xe78] sm:$0xff]
      %v794 = vld [vmem:[%s305 + $0xe80] sm:$0xff]
      %v795 = vld [vmem:[%s305 + $0xe88] sm:$0xff]
      %v796 = vld [vmem:[%s305 + $0xe90] sm:$0xff]
      %v797 = vld [vmem:[%s305 + $0xe98] sm:$0xff]
      %v798 = vld [vmem:[%s305 + $0xea0] sm:$0xff]
      %v799 = vld [vmem:[%s305 + $0xea8] sm:$0xff]
      %v800 = vld [vmem:[%s305 + $0xeb0] sm:$0xff]
      %v801 = vld [vmem:[%s305 + $0xeb8] sm:$0xff]
      %v802 = vld [vmem:[%s305 + $0xec0] sm:$0xff]
      %v803 = vld [vmem:[%s305 + $0xec8] sm:$0xff]
      %v804 = vld [vmem:[%s305 + $0xed0] sm:$0xff]
      %v805 = vld [vmem:[%s305 + $0xed8] sm:$0xff]
      %v806 = vld [vmem:[%s305 + $0xee0] sm:$0xff]
      %v807 = vld [vmem:[%s305 + $0xee8] sm:$0xff]
      %v808 = vld [vmem:[%s305 + $0xef0] sm:$0xff]
      %v809 = vld [vmem:[%s305 + $0xef8] sm:$0xff]
      %v810 = vld [vmem:[%s305 + $0xf00] sm:$0xff]
      %v811 = vld [vmem:[%s305 + $0xf08] sm:$0xff]
      %v812 = vld [vmem:[%s305 + $0xf10] sm:$0xff]
      %v813 = vld [vmem:[%s305 + $0xf18] sm:$0xff]
      %v814 = vld [vmem:[%s305 + $0xf20] sm:$0xff]
      %v815 = vld [vmem:[%s305 + $0xf28] sm:$0xff]
      %v816 = vld [vmem:[%s305 + $0xf30] sm:$0xff]
      %v817 = vld [vmem:[%s305 + $0xf38] sm:$0xff]
      %v818 = vld [vmem:[%s305 + $0xf40] sm:$0xff]
      %v819 = vld [vmem:[%s305 + $0xf48] sm:$0xff]
      %v820 = vld [vmem:[%s305 + $0xf50] sm:$0xff]
      %v821 = vld [vmem:[%s305 + $0xf58] sm:$0xff]
      %v822 = vld [vmem:[%s305 + $0xf60] sm:$0xff]
      %v823 = vld [vmem:[%s305 + $0xf68] sm:$0xff]
      %v824 = vld [vmem:[%s305 + $0xf70] sm:$0xff]
      %v825 = vld [vmem:[%s305 + $0xf78] sm:$0xff]
      %v826 = vld [vmem:[%s305 + $0xf80] sm:$0xff]
      %v827 = vld [vmem:[%s305 + $0xf88] sm:$0xff]
      %v828 = vld [vmem:[%s305 + $0xf90] sm:$0xff]
      %v829 = vld [vmem:[%s305 + $0xf98] sm:$0xff]
      %v830 = vld [vmem:[%s305 + $0xfa0] sm:$0xff]
      %v831 = vld [vmem:[%s305 + $0xfa8] sm:$0xff]
      %v832 = vld [vmem:[%s305 + $0xfb0] sm:$0xff]
      %v833 = vld [vmem:[%s305 + $0xfb8] sm:$0xff]
      %v834 = vld [vmem:[%s305 + $0xfc0] sm:$0xff]
      %v835 = vld [vmem:[%s305 + $0xfc8] sm:$0xff]
      %v836 = vld [vmem:[%s305 + $0xfd0] sm:$0xff]
      %v837 = vld [vmem:[%s305 + $0xfd8] sm:$0xff]
      %v838 = vld [vmem:[%s305 + $0xfe0] sm:$0xff]
      %v839 = vld [vmem:[%s305 + $0xfe8] sm:$0xff]
      %v840 = vld [vmem:[%s305 + $0xff0] sm:$0xff]
      %v841 = vld [vmem:[%s305 + $0xff8] sm:$0xff]
      %v842 = vld [vmem:[%s305 + $0x1000] sm:$0xff]
      %v843 = vld [vmem:[%s305 + $0x1008] sm:$0xff]
      %v844 = vld [vmem:[%s305 + $0x1010] sm:$0xff]
      %v845 = vld [vmem:[%s305 + $0x1018] sm:$0xff]
      %v846 = vld [vmem:[%s305 + $0x1020] sm:$0xff]
      %v847 = vld [vmem:[%s305 + $0x1028] sm:$0xff]
      %v848 = vld [vmem:[%s305 + $0x1030] sm:$0xff]
      %v849 = vld [vmem:[%s305 + $0x1038] sm:$0xff]
      %v850 = vld [vmem:[%s305 + $0x1040] sm:$0xff]
      %v851 = vld [vmem:[%s305 + $0x1048] sm:$0xff]
      %v852 = vld [vmem:[%s305 + $0x1050] sm:$0xff]
      %v853 = vld [vmem:[%s305 + $0x1058] sm:$0xff]
      %v854 = vld [vmem:[%s305 + $0x1060] sm:$0xff]
      %v855 = vld [vmem:[%s305 + $0x1068] sm:$0xff]
      %v856 = vld [vmem:[%s305 + $0x1070] sm:$0xff]
      %v857 = vld [vmem:[%s305 + $0x1078] sm:$0xff]
      %v858 = vld [vmem:[%s305 + $0x1080] sm:$0xff]
      %v859 = vld [vmem:[%s305 + $0x1088] sm:$0xff]
      %v860 = vld [vmem:[%s305 + $0x1090] sm:$0xff]
      %v861 = vld [vmem:[%s305 + $0x1098] sm:$0xff]
      %v862 = vld [vmem:[%s305 + $0x10a0] sm:$0xff]
      %v863 = vld [vmem:[%s305 + $0x10a8] sm:$0xff]
      %v864 = vld [vmem:[%s305 + $0x10b0] sm:$0xff]
      %v865 = vld [vmem:[%s305 + $0x10b8] sm:$0xff]
      %v866 = vld [vmem:[%s305 + $0x10c0] sm:$0xff]
      %v867 = vld [vmem:[%s305 + $0x10c8] sm:$0xff]
      %v868 = vld [vmem:[%s305 + $0x10d0] sm:$0xff]
      %v869 = vld [vmem:[%s305 + $0x10d8] sm:$0xff]
      %v870 = vld [vmem:[%s305 + $0x10e0] sm:$0xff]
      %v871 = vld [vmem:[%s305 + $0x10e8] sm:$0xff]
      %v872 = vld [vmem:[%s305 + $0x10f0] sm:$0xff]
      %v873 = vld [vmem:[%s305 + $0x10f8] sm:$0xff]
      %v874 = vld [vmem:[%s305 + $0x1100] sm:$0xff]
      %v875 = vld [vmem:[%s305 + $0x1108] sm:$0xff]
      %v876 = vld [vmem:[%s305 + $0x1110] sm:$0xff]
      %v877 = vld [vmem:[%s305 + $0x1118] sm:$0xff]
      %v878 = vld [vmem:[%s305 + $0x1120] sm:$0xff]
      %v879 = vld [vmem:[%s305 + $0x1128] sm:$0xff]
      %v880 = vld [vmem:[%s305 + $0x1130] sm:$0xff]
      %v881 = vld [vmem:[%s305 + $0x1138] sm:$0xff]
      %v882 = vld [vmem:[%s305 + $0x1140] sm:$0xff]
      %v883 = vld [vmem:[%s305 + $0x1148] sm:$0xff]
      %v884 = vld [vmem:[%s305 + $0x1150] sm:$0xff]
      %v885 = vld [vmem:[%s305 + $0x1158] sm:$0xff]
      %v886 = vld [vmem:[%s305 + $0x1160] sm:$0xff]
      %v887 = vld [vmem:[%s305 + $0x1168] sm:$0xff]
      %v888 = vld [vmem:[%s305 + $0x1170] sm:$0xff]
      %v889 = vld [vmem:[%s305 + $0x1178] sm:$0xff]
      %v890 = vld [vmem:[%s305 + $0x1180] sm:$0xff]
      %v891 = vld [vmem:[%s305 + $0x1188] sm:$0xff]
      %v892 = vld [vmem:[%s305 + $0x1190] sm:$0xff]
      %v893 = vld [vmem:[%s305 + $0x1198] sm:$0xff]
      %v894 = vld [vmem:[%s305 + $0x11a0] sm:$0xff]
      %v895 = vld [vmem:[%s305 + $0x11a8] sm:$0xff]
      %v896 = vld [vmem:[%s305 + $0x11b0] sm:$0xff]
      %v897 = vld [vmem:[%s305 + $0x11b8] sm:$0xff]
      %v898 = vld [vmem:[%s305 + $0x11c0] sm:$0xff]
      %v899 = vld [vmem:[%s305 + $0x11c8] sm:$0xff]
      %v900 = vld [vmem:[%s305 + $0x11d0] sm:$0xff]
      %v901 = vld [vmem:[%s305 + $0x11d8] sm:$0xff]
      %v902 = vld [vmem:[%s305 + $0x11e0] sm:$0xff]
      %v903 = vld [vmem:[%s305 + $0x11e8] sm:$0xff]
      %v904 = vld [vmem:[%s305 + $0x11f0] sm:$0xff]
      %v905 = vld [vmem:[%s305 + $0x11f8] sm:$0xff]
      %v906 = vld [vmem:[%s305 + $0x1200] sm:$0xff]
      %v907 = vld [vmem:[%s305 + $0x1208] sm:$0xff]
      %v908 = vld [vmem:[%s305 + $0x1210] sm:$0xff]
      %v909 = vld [vmem:[%s305 + $0x1218] sm:$0xff]
      %v910 = vld [vmem:[%s305 + $0x1220] sm:$0xff]
      %v911 = vld [vmem:[%s305 + $0x1228] sm:$0xff]
      %v912 = vld [vmem:[%s305 + $0x1230] sm:$0xff]
      %v913 = vld [vmem:[%s305 + $0x1238] sm:$0xff]
      %v914 = vld [vmem:[%s305 + $0x1240] sm:$0xff]
      %v915 = vld [vmem:[%s305 + $0x1248] sm:$0xff]
      %v916 = vld [vmem:[%s305 + $0x1250] sm:$0xff]
      %v917 = vld [vmem:[%s305 + $0x1258] sm:$0xff]
      %v918 = vld [vmem:[%s305 + $0x1260] sm:$0xff]
      %v919 = vld [vmem:[%s305 + $0x1268] sm:$0xff]
      %v920 = vld [vmem:[%s305 + $0x1270] sm:$0xff]
      %v921 = vld [vmem:[%s305 + $0x1278] sm:$0xff]
      %v922 = vld [vmem:[%s305 + $0x1280] sm:$0xff]
      %v923 = vld [vmem:[%s305 + $0x1288] sm:$0xff]
      %v924 = vld [vmem:[%s305 + $0x1290] sm:$0xff]
      %v925 = vld [vmem:[%s305 + $0x1298] sm:$0xff]
      %v926 = vld [vmem:[%s305 + $0x12a0] sm:$0xff]
      %v927 = vld [vmem:[%s305 + $0x12a8] sm:$0xff]
      %v928 = vld [vmem:[%s305 + $0x12b0] sm:$0xff]
      %v929 = vld [vmem:[%s305 + $0x12b8] sm:$0xff]
      %v930 = vld [vmem:[%s305 + $0x12c0] sm:$0xff]
      %v931 = vld [vmem:[%s305 + $0x12c8] sm:$0xff]
      %v932 = vld [vmem:[%s305 + $0x12d0] sm:$0xff]
      %v933 = vld [vmem:[%s305 + $0x12d8] sm:$0xff]
      %v934 = vld [vmem:[%s305 + $0x12e0] sm:$0xff]
      %v935 = vld [vmem:[%s305 + $0x12e8] sm:$0xff]
      %v936 = vld [vmem:[%s305 + $0x12f0] sm:$0xff]
      %v937 = vld [vmem:[%s305 + $0x12f8] sm:$0xff]
      %v938 = vld [vmem:[%s305 + $0x1300] sm:$0xff]
      %v939 = vld [vmem:[%s305 + $0x1308] sm:$0xff]
      %v940 = vld [vmem:[%s305 + $0x1310] sm:$0xff]
      %v941 = vld [vmem:[%s305 + $0x1318] sm:$0xff]
      %v942 = vld [vmem:[%s305 + $0x1320] sm:$0xff]
      %v943 = vld [vmem:[%s305 + $0x1328] sm:$0xff]
      %v944 = vld [vmem:[%s305 + $0x1330] sm:$0xff]
      %v945 = vld [vmem:[%s305 + $0x1338] sm:$0xff]
      %v946 = vld [vmem:[%s305 + $0x1340] sm:$0xff]
      %v947 = vld [vmem:[%s305 + $0x1348] sm:$0xff]
      %v948 = vld [vmem:[%s305 + $0x1350] sm:$0xff]
      %v949 = vld [vmem:[%s305 + $0x1358] sm:$0xff]
      %v950 = vld [vmem:[%s305 + $0x1360] sm:$0xff]
      %v951 = vld [vmem:[%s305 + $0x1368] sm:$0xff]
      %v952 = vld [vmem:[%s305 + $0x1370] sm:$0xff]
      %v953 = vld [vmem:[%s305 + $0x1378] sm:$0xff]
      %v954 = vld [vmem:[%s305 + $0x1380] sm:$0xff]
      %v955 = vld [vmem:[%s305 + $0x1388] sm:$0xff]
      %v956 = vld [vmem:[%s305 + $0x1390] sm:$0xff]
      %v957 = vld [vmem:[%s305 + $0x1398] sm:$0xff]
      %v958 = vld [vmem:[%s305 + $0x13a0] sm:$0xff]
      %v959 = vld [vmem:[%s305 + $0x13a8] sm:$0xff]
      %v960 = vld [vmem:[%s305 + $0x13b0] sm:$0xff]
      %v961 = vld [vmem:[%s305 + $0x13b8] sm:$0xff]
      %v962 = vld [vmem:[%s305 + $0x13c0] sm:$0xff]
      %v963 = vld [vmem:[%s305 + $0x13c8] sm:$0xff]
      %v964 = vld [vmem:[%s305 + $0x13d0] sm:$0xff]
      %v965 = vld [vmem:[%s305 + $0x13d8] sm:$0xff]
      %v966 = vld [vmem:[%s305 + $0x13e0] sm:$0xff]
      %v967 = vld [vmem:[%s305 + $0x13e8] sm:$0xff]
      %v968 = vld [vmem:[%s305 + $0x13f0] sm:$0xff]
      %v969 = vld [vmem:[%s305 + $0x13f8] sm:$0xff]
      %v970 = vld [vmem:[%s305 + $0x1400] sm:$0xff]
      %v971 = vld [vmem:[%s305 + $0x1408] sm:$0xff]
      %v972 = vld [vmem:[%s305 + $0x1410] sm:$0xff]
      %v973 = vld [vmem:[%s305 + $0x1418] sm:$0xff]
      %v974 = vld [vmem:[%s305 + $0x1420] sm:$0xff]
      %v975 = vld [vmem:[%s305 + $0x1428] sm:$0xff]
      %v976 = vld [vmem:[%s305 + $0x1430] sm:$0xff]
      %v977 = vld [vmem:[%s305 + $0x1438] sm:$0xff]
      %v978 = vld [vmem:[%s305 + $0x1440] sm:$0xff]
      %v979 = vld [vmem:[%s305 + $0x1448] sm:$0xff]
      %v980 = vld [vmem:[%s305 + $0x1450] sm:$0xff]
      %v981 = vld [vmem:[%s305 + $0x1458] sm:$0xff]
      %v982 = vld [vmem:[%s305 + $0x1460] sm:$0xff]
      %v983 = vld [vmem:[%s305 + $0x1468] sm:$0xff]
      %v984 = vld [vmem:[%s305 + $0x1470] sm:$0xff]
      %v985 = vld [vmem:[%s305 + $0x1478] sm:$0xff]
      %v986 = vld [vmem:[%s305 + $0x1480] sm:$0xff]
      %v987 = vld [vmem:[%s305 + $0x1488] sm:$0xff]
      %v988 = vld [vmem:[%s305 + $0x1490] sm:$0xff]
      %v989 = vld [vmem:[%s305 + $0x1498] sm:$0xff]
      %v990 = vld [vmem:[%s305 + $0x14a0] sm:$0xff]
      %v991 = vld [vmem:[%s305 + $0x14a8] sm:$0xff]
      %v992 = vld [vmem:[%s305 + $0x14b0] sm:$0xff]
      %v993 = vld [vmem:[%s305 + $0x14b8] sm:$0xff]
      %v994 = vld [vmem:[%s305 + $0x14c0] sm:$0xff]
      %v995 = vld [vmem:[%s305 + $0x14c8] sm:$0xff]
      %v996 = vld [vmem:[%s305 + $0x14d0] sm:$0xff]
      %v997 = vld [vmem:[%s305 + $0x14d8] sm:$0xff]
      %v998 = vld [vmem:[%s305 + $0x14e0] sm:$0xff]
      %v999 = vld [vmem:[%s305 + $0x14e8] sm:$0xff]
      %v1000 = vld [vmem:[%s305 + $0x14f0] sm:$0xff]
      %v1001 = vld [vmem:[%s305 + $0x14f8] sm:$0xff]
      %v1002 = vld [vmem:[%s305 + $0x1500] sm:$0xff]
      %v1003 = vld [vmem:[%s305 + $0x1508] sm:$0xff]
      %v1004 = vld [vmem:[%s305 + $0x1510] sm:$0xff]
      %v1005 = vld [vmem:[%s305 + $0x1518] sm:$0xff]
      %v1006 = vld [vmem:[%s305 + $0x1520] sm:$0xff]
      %v1007 = vld [vmem:[%s305 + $0x1528] sm:$0xff]
      %v1008 = vld [vmem:[%s305 + $0x1530] sm:$0xff]
      %v1009 = vld [vmem:[%s305 + $0x1538] sm:$0xff]
      %v1010 = vld [vmem:[%s305 + $0x1540] sm:$0xff]
      %v1011 = vld [vmem:[%s305 + $0x1548] sm:$0xff]
      %v1012 = vld [vmem:[%s305 + $0x1550] sm:$0xff]
      %v1013 = vld [vmem:[%s305 + $0x1558] sm:$0xff]
      %v1014 = vld [vmem:[%s305 + $0x1560] sm:$0xff]
      %v1015 = vld [vmem:[%s305 + $0x1568] sm:$0xff]
      %v1016 = vld [vmem:[%s305 + $0x1570] sm:$0xff]
      %v1017 = vld [vmem:[%s305 + $0x1578] sm:$0xff]
      %v1018 = vld [vmem:[%s305 + $0x1580] sm:$0xff]
      %v1019 = vld [vmem:[%s305 + $0x1588] sm:$0xff]
      %v1020 = vld [vmem:[%s305 + $0x1590] sm:$0xff]
      %v1021 = vld [vmem:[%s305 + $0x1598] sm:$0xff]
      %v1022 = vld [vmem:[%s305 + $0x15a0] sm:$0xff]
      %v1023 = vld [vmem:[%s305 + $0x15a8] sm:$0xff]
      %v1024 = vld [vmem:[%s305 + $0x15b0] sm:$0xff]
      %v1025 = vld [vmem:[%s305 + $0x15b8] sm:$0xff]
      %v1026 = vld [vmem:[%s305 + $0x15c0] sm:$0xff]
      %v1027 = vld [vmem:[%s305 + $0x15c8] sm:$0xff]
      %v1028 = vld [vmem:[%s305 + $0x15d0] sm:$0xff]
      %v1029 = vld [vmem:[%s305 + $0x15d8] sm:$0xff]
      %v1030 = vld [vmem:[%s305 + $0x15e0] sm:$0xff]
      %v1031 = vld [vmem:[%s305 + $0x15e8] sm:$0xff]
      %v1032 = vld [vmem:[%s305 + $0x15f0] sm:$0xff]
      %v1033 = vld [vmem:[%s305 + $0x15f8] sm:$0xff]
      %v1034 = vld [vmem:[%s305 + $0x1600] sm:$0xff]
      %v1035 = vld [vmem:[%s305 + $0x1608] sm:$0xff]
      %v1036 = vld [vmem:[%s305 + $0x1610] sm:$0xff]
      %v1037 = vld [vmem:[%s305 + $0x1618] sm:$0xff]
      %v1038 = vld [vmem:[%s305 + $0x1620] sm:$0xff]
      %v1039 = vld [vmem:[%s305 + $0x1628] sm:$0xff]
      %v1040 = vld [vmem:[%s305 + $0x1630] sm:$0xff]
      %v1041 = vld [vmem:[%s305 + $0x1638] sm:$0xff]
      %v1042 = vld [vmem:[%s305 + $0x1640] sm:$0xff]
      %v1043 = vld [vmem:[%s305 + $0x1648] sm:$0xff]
      %v1044 = vld [vmem:[%s305 + $0x1650] sm:$0xff]
      %v1045 = vld [vmem:[%s305 + $0x1658] sm:$0xff]
      %v1046 = vld [vmem:[%s305 + $0x1660] sm:$0xff]
      %v1047 = vld [vmem:[%s305 + $0x1668] sm:$0xff]
      %v1048 = vld [vmem:[%s305 + $0x1670] sm:$0xff]
      %v1049 = vld [vmem:[%s305 + $0x1678] sm:$0xff]
      %v1050 = vld [vmem:[%s305 + $0x1680] sm:$0xff]
      %v1051 = vld [vmem:[%s305 + $0x1688] sm:$0xff]
      %v1052 = vld [vmem:[%s305 + $0x1690] sm:$0xff]
      %v1053 = vld [vmem:[%s305 + $0x1698] sm:$0xff]
      %v1054 = vld [vmem:[%s305 + $0x16a0] sm:$0xff]
      %v1055 = vld [vmem:[%s305 + $0x16a8] sm:$0xff]
      %v1056 = vld [vmem:[%s305 + $0x16b0] sm:$0xff]
      %v1057 = vld [vmem:[%s305 + $0x16b8] sm:$0xff]
      %v1058 = vld [vmem:[%s305 + $0x16c0] sm:$0xff]
      %v1059 = vld [vmem:[%s305 + $0x16c8] sm:$0xff]
      %v1060 = vld [vmem:[%s305 + $0x16d0] sm:$0xff]
      %v1061 = vld [vmem:[%s305 + $0x16d8] sm:$0xff]
      %v1062 = vld [vmem:[%s305 + $0x16e0] sm:$0xff]
      %v1063 = vld [vmem:[%s305 + $0x16e8] sm:$0xff]
      %v1064 = vld [vmem:[%s305 + $0x16f0] sm:$0xff]
      %v1065 = vld [vmem:[%s305 + $0x16f8] sm:$0xff]
      %v1066 = vld [vmem:[%s305 + $0x1700] sm:$0xff]
      %v1067 = vld [vmem:[%s305 + $0x1708] sm:$0xff]
      %v1068 = vld [vmem:[%s305 + $0x1710] sm:$0xff]
      %v1069 = vld [vmem:[%s305 + $0x1718] sm:$0xff]
      %v1070 = vld [vmem:[%s305 + $0x1720] sm:$0xff]
      %v1071 = vld [vmem:[%s305 + $0x1728] sm:$0xff]
      %v1072 = vld [vmem:[%s305 + $0x1730] sm:$0xff]
      %v1073 = vld [vmem:[%s305 + $0x1738] sm:$0xff]
      %v1074 = vld [vmem:[%s305 + $0x1740] sm:$0xff]
      %v1075 = vld [vmem:[%s305 + $0x1748] sm:$0xff]
      %v1076 = vld [vmem:[%s305 + $0x1750] sm:$0xff]
      %v1077 = vld [vmem:[%s305 + $0x1758] sm:$0xff]
      %v1078 = vld [vmem:[%s305 + $0x1760] sm:$0xff]
      %v1079 = vld [vmem:[%s305 + $0x1768] sm:$0xff]
      %v1080 = vld [vmem:[%s305 + $0x1770] sm:$0xff]
      %v1081 = vld [vmem:[%s305 + $0x1778] sm:$0xff]
      %v1082 = vld [vmem:[%s305 + $0x1780] sm:$0xff]
      %v1083 = vld [vmem:[%s305 + $0x1788] sm:$0xff]
      %v1084 = vld [vmem:[%s305 + $0x1790] sm:$0xff]
      %v1085 = vld [vmem:[%s305 + $0x1798] sm:$0xff]
      %v1086 = vld [vmem:[%s305 + $0x17a0] sm:$0xff]
      %v1087 = vld [vmem:[%s305 + $0x17a8] sm:$0xff]
      %v1088 = vld [vmem:[%s305 + $0x17b0] sm:$0xff]
      %v1089 = vld [vmem:[%s305 + $0x17b8] sm:$0xff]
      %v1090 = vld [vmem:[%s305 + $0x17c0] sm:$0xff]
      %v1091 = vld [vmem:[%s305 + $0x17c8] sm:$0xff]
      %v1092 = vld [vmem:[%s305 + $0x17d0] sm:$0xff]
      %v1093 = vld [vmem:[%s305 + $0x17d8] sm:$0xff]
      %v1094 = vld [vmem:[%s305 + $0x17e0] sm:$0xff]
      %v1095 = vld [vmem:[%s305 + $0x17e8] sm:$0xff]
      %v1096 = vld [vmem:[%s305 + $0x17f0] sm:$0xff]
      %v1097 = vld [vmem:[%s305 + $0x17f8] sm:$0xff]
      %v1098 = vld [vmem:[%s305 + $0x1800] sm:$0xff]
      %v1099 = vld [vmem:[%s305 + $0x1808] sm:$0xff]
      %v1100 = vld [vmem:[%s305 + $0x1810] sm:$0xff]
      %v1101 = vld [vmem:[%s305 + $0x1818] sm:$0xff]
      %v1102 = vld [vmem:[%s305 + $0x1820] sm:$0xff]
      %v1103 = vld [vmem:[%s305 + $0x1828] sm:$0xff]
      %v1104 = vld [vmem:[%s305 + $0x1830] sm:$0xff]
      %v1105 = vld [vmem:[%s305 + $0x1838] sm:$0xff]
      %v1106 = vld [vmem:[%s305 + $0x1840] sm:$0xff]
      %v1107 = vld [vmem:[%s305 + $0x1848] sm:$0xff]
      %v1108 = vld [vmem:[%s305 + $0x1850] sm:$0xff]
      %v1109 = vld [vmem:[%s305 + $0x1858] sm:$0xff]
      %v1110 = vld [vmem:[%s305 + $0x1860] sm:$0xff]
      %v1111 = vld [vmem:[%s305 + $0x1868] sm:$0xff]
      %v1112 = vld [vmem:[%s305 + $0x1870] sm:$0xff]
      %v1113 = vld [vmem:[%s305 + $0x1878] sm:$0xff]
      %v1114 = vld [vmem:[%s309] sm:$0xf]
      %v1116 = vlaneseq
      %v1117 = vshrl.u32 %v1116, 7
      %v1118 = vsub.s32 0, %v1117
      %v1119 = vrot.slane %v1114, %v1118
      %v1120 = vlaneseq
      %v1121 = vshrl.u32 %v1120, 7
      %v1122 = vsub.s32 1, %v1121
      %v1123 = vrot.slane %v1114, %v1122
      %v1124 = vlaneseq
      %v1125 = vshrl.u32 %v1124, 7
      %v1126 = vsub.s32 2, %v1125
      %v1127 = vrot.slane %v1114, %v1126
      %v1128 = vlaneseq
      %v1129 = vshrl.u32 %v1128, 7
      %v1130 = vsub.s32 3, %v1129
      %v1131 = vrot.slane %v1114, %v1130
      %v1140 = vcombine.high %v326, %v326
      %v1142 = vunpack.c.l.s4 1966171168
      %v1143 = vunpack.c.0.s8 %v1142
      %v1144 = vlaneseq
      %v1145 = vshrl.u32 %v1144, 7
      %v1146 = vsub.s32 %v1143, %v1145
      %v1147 = vrot.slane %v326, %v1146
      %v1149 = vunpack.c.l.s4 1966171168
      %v1150 = vunpack.c.0.s8 %v1149
      %v1151 = vlaneseq
      %v1152 = vshrl.u32 %v1151, 7
      %v1153 = vsub.s32 %v1150, %v1152
      %v1154 = vrot.slane %v1140, %v1153
      %v1155 = vcombine.high %v1147, %v1147
      %v1156 = vcombine.high %v1154, %v1154
      %v1158 = vunpack.c.l.s4 1966171168
      %v1159 = vunpack.c.0.s8 %v1158
      %v1160 = vlaneseq
      %v1161 = vshrl.u32 %v1160, 7
      %v1162 = vsub.s32 %v1159, %v1161
      %v1163 = vrot.slane %v1147, %v1162
      %v1165 = vunpack.c.l.s4 1966171168
      %v1166 = vunpack.c.0.s8 %v1165
      %v1167 = vlaneseq
      %v1168 = vshrl.u32 %v1167, 7
      %v1169 = vsub.s32 %v1166, %v1168
      %v1170 = vrot.slane %v1154, %v1169
      %v1172 = vunpack.c.l.s4 1966171168
      %v1173 = vunpack.c.0.s8 %v1172
      %v1174 = vlaneseq
      %v1175 = vshrl.u32 %v1174, 7
      %v1176 = vsub.s32 %v1173, %v1175
      %v1177 = vrot.slane %v1155, %v1176
      %v1179 = vunpack.c.l.s4 1966171168
      %v1180 = vunpack.c.0.s8 %v1179
      %v1181 = vlaneseq
      %v1182 = vshrl.u32 %v1181, 7
      %v1183 = vsub.s32 %v1180, %v1182
      %v1184 = vrot.slane %v1156, %v1183
      %v1185 = vcombine.high %v1163, %v1163
      %v1186 = vcombine.high %v1170, %v1170
      %v1187 = vcombine.high %v1177, %v1177
      %v1188 = vcombine.high %v1184, %v1184
      %v1189 = vcombine.high %v327, %v327
      %v1191 = vunpack.c.l.s4 1966171168
      %v1192 = vunpack.c.0.s8 %v1191
      %v1193 = vlaneseq
      %v1194 = vshrl.u32 %v1193, 7
      %v1195 = vsub.s32 %v1192, %v1194
      %v1196 = vrot.slane %v327, %v1195
      %v1198 = vunpack.c.l.s4 1966171168
      %v1199 = vunpack.c.0.s8 %v1198
      %v1200 = vlaneseq
      %v1201 = vshrl.u32 %v1200, 7
      %v1202 = vsub.s32 %v1199, %v1201
      %v1203 = vrot.slane %v1189, %v1202
      %v1204 = vcombine.high %v1196, %v1196
      %v1205 = vcombine.high %v1203, %v1203
      %v1207 = vunpack.c.l.s4 1966171168
      %v1208 = vunpack.c.0.s8 %v1207
      %v1209 = vlaneseq
      %v1210 = vshrl.u32 %v1209, 7
      %v1211 = vsub.s32 %v1208, %v1210
      %v1212 = vrot.slane %v1196, %v1211
      %v1214 = vunpack.c.l.s4 1966171168
      %v1215 = vunpack.c.0.s8 %v1214
      %v1216 = vlaneseq
      %v1217 = vshrl.u32 %v1216, 7
      %v1218 = vsub.s32 %v1215, %v1217
      %v1219 = vrot.slane %v1203, %v1218
      %v1221 = vunpack.c.l.s4 1966171168
      %v1222 = vunpack.c.0.s8 %v1221
      %v1223 = vlaneseq
      %v1224 = vshrl.u32 %v1223, 7
      %v1225 = vsub.s32 %v1222, %v1224
      %v1226 = vrot.slane %v1204, %v1225
      %v1228 = vunpack.c.l.s4 1966171168
      %v1229 = vunpack.c.0.s8 %v1228
      %v1230 = vlaneseq
      %v1231 = vshrl.u32 %v1230, 7
      %v1232 = vsub.s32 %v1229, %v1231
      %v1233 = vrot.slane %v1205, %v1232
      %v1234 = vcombine.high %v1212, %v1212
      %v1235 = vcombine.high %v1219, %v1219
      %v1236 = vcombine.high %v1226, %v1226
      %v1237 = vcombine.high %v1233, %v1233
      %v1238 = vcombine.high %v328, %v328
      %v1240 = vunpack.c.l.s4 1966171168
      %v1241 = vunpack.c.0.s8 %v1240
      %v1242 = vlaneseq
      %v1243 = vshrl.u32 %v1242, 7
      %v1244 = vsub.s32 %v1241, %v1243
      %v1245 = vrot.slane %v328, %v1244
      %v1247 = vunpack.c.l.s4 1966171168
      %v1248 = vunpack.c.0.s8 %v1247
      %v1249 = vlaneseq
      %v1250 = vshrl.u32 %v1249, 7
      %v1251 = vsub.s32 %v1248, %v1250
      %v1252 = vrot.slane %v1238, %v1251
      %v1253 = vcombine.high %v1245, %v1245
      %v1254 = vcombine.high %v1252, %v1252
      %v1256 = vunpack.c.l.s4 1966171168
      %v1257 = vunpack.c.0.s8 %v1256
      %v1258 = vlaneseq
      %v1259 = vshrl.u32 %v1258, 7
      %v1260 = vsub.s32 %v1257, %v1259
      %v1261 = vrot.slane %v1245, %v1260
      %v1263 = vunpack.c.l.s4 1966171168
      %v1264 = vunpack.c.0.s8 %v1263
      %v1265 = vlaneseq
      %v1266 = vshrl.u32 %v1265, 7
      %v1267 = vsub.s32 %v1264, %v1266
      %v1268 = vrot.slane %v1252, %v1267
      %v1270 = vunpack.c.l.s4 1966171168
      %v1271 = vunpack.c.0.s8 %v1270
      %v1272 = vlaneseq
      %v1273 = vshrl.u32 %v1272, 7
      %v1274 = vsub.s32 %v1271, %v1273
      %v1275 = vrot.slane %v1253, %v1274
      %v1277 = vunpack.c.l.s4 1966171168
      %v1278 = vunpack.c.0.s8 %v1277
      %v1279 = vlaneseq
      %v1280 = vshrl.u32 %v1279, 7
      %v1281 = vsub.s32 %v1278, %v1280
      %v1282 = vrot.slane %v1254, %v1281
      %v1283 = vcombine.high %v1261, %v1261
      %v1284 = vcombine.high %v1268, %v1268
      %v1285 = vcombine.high %v1275, %v1275
      %v1286 = vcombine.high %v1282, %v1282
      %v1288 = vunpack.c.l.s4 1966171168
      %v1289 = vunpack.c.0.s8 %v1288
      %v1290 = vlaneseq
      %v1291 = vshrl.u32 %v1290, 7
      %v1292 = vsub.s32 %v1289, %v1291
      %v1293 = vrot.slane %v329, %v1292
      %v1295 = vunpack.c.l.s4 1966171168
      %v1296 = vunpack.c.0.s8 %v1295
      %v1297 = vlaneseq
      %v1298 = vshrl.u32 %v1297, 7
      %v1299 = vsub.s32 %v1296, %v1298
      %v1300 = vrot.slane %v1293, %v1299
      %v2109 = vunpack.c.l.b16 %v330
      %v2110 = vunpack.c.h.b16 %v330
      %v2111 = vunpack.c.l.b16 %v331
      %v2112 = vunpack.c.h.b16 %v331
      %v2113 = vunpack.c.l.b16 %v332
      %v2114 = vunpack.c.h.b16 %v332
      %v2115 = vunpack.c.l.b16 %v333
      %v2116 = vunpack.c.h.b16 %v333
      %v2117 = vunpack.c.l.b16 %v334
      %v2118 = vunpack.c.h.b16 %v334
      %v2119 = vunpack.c.l.b16 %v335
      %v2120 = vunpack.c.h.b16 %v335
      %v2121 = vunpack.c.l.b16 %v336
      %v2122 = vunpack.c.h.b16 %v336
      %v2123 = vunpack.c.l.b16 %v337
      %v2124 = vunpack.c.h.b16 %v337
      %v2125 = vunpack.c.l.b16 %v338
      %v2126 = vunpack.c.h.b16 %v338
      %v2127 = vunpack.c.l.b16 %v339
      %v2128 = vunpack.c.h.b16 %v339
      %v2129 = vunpack.c.l.b16 %v340
      %v2130 = vunpack.c.h.b16 %v340
      %v2131 = vunpack.c.l.b16 %v341
      %v2132 = vunpack.c.h.b16 %v341
      %v2133 = vunpack.c.l.b16 %v342
      %v2134 = vunpack.c.h.b16 %v342
      %v2135 = vunpack.c.l.b16 %v343
      %v2136 = vunpack.c.h.b16 %v343
      %v2137 = vunpack.c.l.b16 %v344
      %v2138 = vunpack.c.h.b16 %v344
      %v2139 = vunpack.c.l.b16 %v345
      %v2140 = vunpack.c.h.b16 %v345
      %v2141 = vunpack.c.l.b16 %v346
      %v2142 = vunpack.c.h.b16 %v346
      %v2143 = vunpack.c.l.b16 %v347
      %v2144 = vunpack.c.h.b16 %v347
      %v2145 = vunpack.c.l.b16 %v348
      %v2146 = vunpack.c.h.b16 %v348
      %v2147 = vunpack.c.l.b16 %v349
      %v2148 = vunpack.c.h.b16 %v349
      %v2149 = vunpack.c.l.b16 %v350
      %v2150 = vunpack.c.h.b16 %v350
      %v2151 = vunpack.c.l.b16 %v351
      %v2152 = vunpack.c.h.b16 %v351
      %v2153 = vunpack.c.l.b16 %v352
      %v2154 = vunpack.c.h.b16 %v352
      %v2155 = vunpack.c.l.b16 %v353
      %v2156 = vunpack.c.h.b16 %v353
      %v2157 = vunpack.c.l.b16 %v354
      %v2158 = vunpack.c.h.b16 %v354
      %v2159 = vunpack.c.l.b16 %v355
      %v2160 = vunpack.c.h.b16 %v355
      %v2161 = vunpack.c.l.b16 %v356
      %v2162 = vunpack.c.h.b16 %v356
      %v2163 = vunpack.c.l.b16 %v357
      %v2164 = vunpack.c.h.b16 %v357
      %v2165 = vunpack.c.l.b16 %v358
      %v2166 = vunpack.c.h.b16 %v358
      %v2167 = vunpack.c.l.b16 %v359
      %v2168 = vunpack.c.h.b16 %v359
      %v2169 = vunpack.c.l.b16 %v360
      %v2170 = vunpack.c.h.b16 %v360
      %v2171 = vunpack.c.l.b16 %v361
      %v2172 = vunpack.c.h.b16 %v361
      %v2173 = vunpack.c.l.b16 %v362
      %v2174 = vunpack.c.h.b16 %v362
      %v2175 = vunpack.c.l.b16 %v363
      %v2176 = vunpack.c.h.b16 %v363
      %v2177 = vunpack.c.l.b16 %v364
      %v2178 = vunpack.c.h.b16 %v364
      %v2179 = vunpack.c.l.b16 %v365
      %v2180 = vunpack.c.h.b16 %v365
      %v2181 = vunpack.c.l.b16 %v366
      %v2182 = vunpack.c.h.b16 %v366
      %v2183 = vunpack.c.l.b16 %v367
      %v2184 = vunpack.c.h.b16 %v367
      %v2185 = vunpack.c.l.b16 %v368
      %v2186 = vunpack.c.h.b16 %v368
      %v2187 = vunpack.c.l.b16 %v369
      %v2188 = vunpack.c.h.b16 %v369
      %v2189 = vunpack.c.l.b16 %v370
      %v2190 = vunpack.c.h.b16 %v370
      %v2191 = vunpack.c.l.b16 %v371
      %v2192 = vunpack.c.h.b16 %v371
      %v2193 = vunpack.c.l.b16 %v372
      %v2194 = vunpack.c.h.b16 %v372
      %v2195 = vunpack.c.l.b16 %v373
      %v2196 = vunpack.c.h.b16 %v373
      %v2197 = vunpack.c.l.b16 %v374
      %v2198 = vunpack.c.h.b16 %v374
      %v2199 = vunpack.c.l.b16 %v375
      %v2200 = vunpack.c.h.b16 %v375
      %v2201 = vunpack.c.l.b16 %v376
      %v2202 = vunpack.c.h.b16 %v376
      %v2203 = vunpack.c.l.b16 %v377
      %v2204 = vunpack.c.h.b16 %v377
      %v2205 = vunpack.c.l.b16 %v378
      %v2206 = vunpack.c.h.b16 %v378
      %v2207 = vunpack.c.l.b16 %v379
      %v2208 = vunpack.c.h.b16 %v379
      %v2209 = vunpack.c.l.b16 %v380
      %v2210 = vunpack.c.h.b16 %v380
      %v2211 = vunpack.c.l.b16 %v381
      %v2212 = vunpack.c.h.b16 %v381
      %v2213 = vunpack.c.l.b16 %v382
      %v2214 = vunpack.c.h.b16 %v382
      %v2215 = vunpack.c.l.b16 %v383
      %v2216 = vunpack.c.h.b16 %v383
      %v2217 = vunpack.c.l.b16 %v384
      %v2218 = vunpack.c.h.b16 %v384
      %v2219 = vunpack.c.l.b16 %v385
      %v2220 = vunpack.c.h.b16 %v385
      %v2221 = vunpack.c.l.b16 %v386
      %v2222 = vunpack.c.h.b16 %v386
      %v2223 = vunpack.c.l.b16 %v387
      %v2224 = vunpack.c.h.b16 %v387
      %v2225 = vunpack.c.l.b16 %v388
      %v2226 = vunpack.c.h.b16 %v388
      %v2227 = vunpack.c.l.b16 %v389
      %v2228 = vunpack.c.h.b16 %v389
      %v2229 = vunpack.c.l.b16 %v390
      %v2230 = vunpack.c.h.b16 %v390
      %v2231 = vunpack.c.l.b16 %v391
      %v2232 = vunpack.c.h.b16 %v391
      %v2233 = vunpack.c.l.b16 %v392
      %v2234 = vunpack.c.h.b16 %v392
      %v2235 = vunpack.c.l.b16 %v393
      %v2236 = vunpack.c.h.b16 %v393
      %v2237 = vunpack.c.l.b16 %v394
      %v2238 = vunpack.c.h.b16 %v394
      %v2239 = vunpack.c.l.b16 %v395
      %v2240 = vunpack.c.h.b16 %v395
      %v2241 = vunpack.c.l.b16 %v396
      %v2242 = vunpack.c.h.b16 %v396
      %v2243 = vunpack.c.l.b16 %v397
      %v2244 = vunpack.c.h.b16 %v397
      %v2245 = vunpack.c.l.b16 %v398
      %v2246 = vunpack.c.h.b16 %v398
      %v2247 = vunpack.c.l.b16 %v399
      %v2248 = vunpack.c.h.b16 %v399
      %v2249 = vunpack.c.l.b16 %v400
      %v2250 = vunpack.c.h.b16 %v400
      %v2251 = vunpack.c.l.b16 %v401
      %v2252 = vunpack.c.h.b16 %v401
      %v2253 = vunpack.c.l.b16 %v402
      %v2254 = vunpack.c.h.b16 %v402
      %v2255 = vunpack.c.l.b16 %v403
      %v2256 = vunpack.c.h.b16 %v403
      %v2257 = vunpack.c.l.b16 %v404
      %v2258 = vunpack.c.h.b16 %v404
      %v2259 = vunpack.c.l.b16 %v405
      %v2260 = vunpack.c.h.b16 %v405
      %v2261 = vunpack.c.l.b16 %v406
      %v2262 = vunpack.c.h.b16 %v406
      %v2263 = vunpack.c.l.b16 %v407
      %v2264 = vunpack.c.h.b16 %v407
      %v2265 = vunpack.c.l.b16 %v408
      %v2266 = vunpack.c.h.b16 %v408
      %v2267 = vunpack.c.l.b16 %v409
      %v2268 = vunpack.c.h.b16 %v409
      %v2269 = vunpack.c.l.b16 %v410
      %v2270 = vunpack.c.h.b16 %v410
      %v2271 = vunpack.c.l.b16 %v411
      %v2272 = vunpack.c.h.b16 %v411
      %v2273 = vunpack.c.l.b16 %v412
      %v2274 = vunpack.c.h.b16 %v412
      %v2275 = vunpack.c.l.b16 %v413
      %v2276 = vunpack.c.h.b16 %v413
      %v2277 = vunpack.c.l.b16 %v414
      %v2278 = vunpack.c.h.b16 %v414
      %v2279 = vunpack.c.l.b16 %v415
      %v2280 = vunpack.c.h.b16 %v415
      %v2281 = vunpack.c.l.b16 %v416
      %v2282 = vunpack.c.h.b16 %v416
      %v2283 = vunpack.c.l.b16 %v417
      %v2284 = vunpack.c.h.b16 %v417
      %v2285 = vunpack.c.l.b16 %v418
      %v2286 = vunpack.c.h.b16 %v418
      %v2287 = vunpack.c.l.b16 %v419
      %v2288 = vunpack.c.h.b16 %v419
      %v2289 = vunpack.c.l.b16 %v420
      %v2290 = vunpack.c.h.b16 %v420
      %v2291 = vunpack.c.l.b16 %v421
      %v2292 = vunpack.c.h.b16 %v421
      %v2293 = vunpack.c.l.b16 %v422
      %v2294 = vunpack.c.h.b16 %v422
      %v2295 = vunpack.c.l.b16 %v423
      %v2296 = vunpack.c.h.b16 %v423
      %v2297 = vunpack.c.l.b16 %v424
      %v2298 = vunpack.c.h.b16 %v424
      %v2299 = vunpack.c.l.b16 %v425
      %v2300 = vunpack.c.h.b16 %v425
      %v2301 = vunpack.c.l.b16 %v426
      %v2302 = vunpack.c.h.b16 %v426
      %v2303 = vunpack.c.l.b16 %v427
      %v2304 = vunpack.c.h.b16 %v427
      %v2305 = vunpack.c.l.b16 %v428
      %v2306 = vunpack.c.h.b16 %v428
      %v2307 = vunpack.c.l.b16 %v429
      %v2308 = vunpack.c.h.b16 %v429
      %v2309 = vunpack.c.l.b16 %v430
      %v2310 = vunpack.c.h.b16 %v430
      %v2311 = vunpack.c.l.b16 %v431
      %v2312 = vunpack.c.h.b16 %v431
      %v2313 = vunpack.c.l.b16 %v432
      %v2314 = vunpack.c.h.b16 %v432
      %v2315 = vunpack.c.l.b16 %v433
      %v2316 = vunpack.c.h.b16 %v433
      %v2317 = vunpack.c.l.b16 %v434
      %v2318 = vunpack.c.h.b16 %v434
      %v2319 = vunpack.c.l.b16 %v435
      %v2320 = vunpack.c.h.b16 %v435
      %v2321 = vunpack.c.l.b16 %v436
      %v2322 = vunpack.c.h.b16 %v436
      %v2323 = vunpack.c.l.b16 %v437
      %v2324 = vunpack.c.h.b16 %v437
      %v2325 = vunpack.c.l.b16 %v438
      %v2326 = vunpack.c.h.b16 %v438
      %v2327 = vunpack.c.l.b16 %v439
      %v2328 = vunpack.c.h.b16 %v439
      %v2329 = vunpack.c.l.b16 %v440
      %v2330 = vunpack.c.h.b16 %v440
      %v2331 = vunpack.c.l.b16 %v441
      %v2332 = vunpack.c.h.b16 %v441
      %v2333 = vunpack.c.l.b16 %v442
      %v2334 = vunpack.c.h.b16 %v442
      %v2335 = vunpack.c.l.b16 %v443
      %v2336 = vunpack.c.h.b16 %v443
      %v2337 = vunpack.c.l.b16 %v444
      %v2338 = vunpack.c.h.b16 %v444
      %v2339 = vunpack.c.l.b16 %v445
      %v2340 = vunpack.c.h.b16 %v445
      %v2341 = vunpack.c.l.b16 %v446
      %v2342 = vunpack.c.h.b16 %v446
      %v2343 = vunpack.c.l.b16 %v447
      %v2344 = vunpack.c.h.b16 %v447
      %v2345 = vunpack.c.l.b16 %v448
      %v2346 = vunpack.c.h.b16 %v448
      %v2347 = vunpack.c.l.b16 %v449
      %v2348 = vunpack.c.h.b16 %v449
      %v2349 = vunpack.c.l.b16 %v450
      %v2350 = vunpack.c.h.b16 %v450
      %v2351 = vunpack.c.l.b16 %v451
      %v2352 = vunpack.c.h.b16 %v451
      %v2353 = vunpack.c.l.b16 %v452
      %v2354 = vunpack.c.h.b16 %v452
      %v2355 = vunpack.c.l.b16 %v453
      %v2356 = vunpack.c.h.b16 %v453
      %v2357 = vunpack.c.l.b16 %v454
      %v2358 = vunpack.c.h.b16 %v454
      %v2359 = vunpack.c.l.b16 %v455
      %v2360 = vunpack.c.h.b16 %v455
      %v2361 = vunpack.c.l.b16 %v456
      %v2362 = vunpack.c.h.b16 %v456
      %v2363 = vunpack.c.l.b16 %v457
      %v2364 = vunpack.c.h.b16 %v457
      %v2365 = vunpack.c.l.b16 %v458
      %v2366 = vunpack.c.h.b16 %v458
      %v2367 = vunpack.c.l.b16 %v459
      %v2368 = vunpack.c.h.b16 %v459
      %v2369 = vunpack.c.l.b16 %v460
      %v2370 = vunpack.c.h.b16 %v460
      %v2371 = vunpack.c.l.b16 %v461
      %v2372 = vunpack.c.h.b16 %v461
      %v2373 = vunpack.c.l.b16 %v462
      %v2374 = vunpack.c.h.b16 %v462
      %v2375 = vunpack.c.l.b16 %v463
      %v2376 = vunpack.c.h.b16 %v463
      %v2377 = vunpack.c.l.b16 %v464
      %v2378 = vunpack.c.h.b16 %v464
      %v2379 = vunpack.c.l.b16 %v465
      %v2380 = vunpack.c.h.b16 %v465
      %v2381 = vunpack.c.l.b16 %v466
      %v2382 = vunpack.c.h.b16 %v466
      %v2383 = vunpack.c.l.b16 %v467
      %v2384 = vunpack.c.h.b16 %v467
      %v2385 = vunpack.c.l.b16 %v468
      %v2386 = vunpack.c.h.b16 %v468
      %v2387 = vunpack.c.l.b16 %v469
      %v2388 = vunpack.c.h.b16 %v469
      %v2389 = vunpack.c.l.b16 %v470
      %v2390 = vunpack.c.h.b16 %v470
      %v2391 = vunpack.c.l.b16 %v471
      %v2392 = vunpack.c.h.b16 %v471
      %v2393 = vunpack.c.l.b16 %v472
      %v2394 = vunpack.c.h.b16 %v472
      %v2395 = vunpack.c.l.b16 %v473
      %v2396 = vunpack.c.h.b16 %v473
      %v2397 = vunpack.c.l.b16 %v474
      %v2398 = vunpack.c.h.b16 %v474
      %v2399 = vunpack.c.l.b16 %v475
      %v2400 = vunpack.c.h.b16 %v475
      %v2401 = vunpack.c.l.b16 %v476
      %v2402 = vunpack.c.h.b16 %v476
      %v2403 = vunpack.c.l.b16 %v477
      %v2404 = vunpack.c.h.b16 %v477
      %v2405 = vunpack.c.l.b16 %v478
      %v2406 = vunpack.c.h.b16 %v478
      %v2407 = vunpack.c.l.b16 %v479
      %v2408 = vunpack.c.h.b16 %v479
      %v2409 = vunpack.c.l.b16 %v480
      %v2410 = vunpack.c.h.b16 %v480
      %v2411 = vunpack.c.l.b16 %v481
      %v2412 = vunpack.c.h.b16 %v481
      %v2413 = vunpack.c.l.b16 %v482
      %v2414 = vunpack.c.h.b16 %v482
      %v2415 = vunpack.c.l.b16 %v483
      %v2416 = vunpack.c.h.b16 %v483
      %v2417 = vunpack.c.l.b16 %v484
      %v2418 = vunpack.c.h.b16 %v484
      %v2419 = vunpack.c.l.b16 %v485
      %v2420 = vunpack.c.h.b16 %v485
      %v2421 = vunpack.c.l.b16 %v486
      %v2422 = vunpack.c.h.b16 %v486
      %v2423 = vunpack.c.l.b16 %v487
      %v2424 = vunpack.c.h.b16 %v487
      %v2425 = vunpack.c.l.b16 %v488
      %v2426 = vunpack.c.h.b16 %v488
      %v2427 = vunpack.c.l.b16 %v489
      %v2428 = vunpack.c.h.b16 %v489
      %v2429 = vunpack.c.l.b16 %v490
      %v2430 = vunpack.c.h.b16 %v490
      %v2431 = vunpack.c.l.b16 %v491
      %v2432 = vunpack.c.h.b16 %v491
      %v2433 = vunpack.c.l.b16 %v492
      %v2434 = vunpack.c.h.b16 %v492
      %v2435 = vunpack.c.l.b16 %v493
      %v2436 = vunpack.c.h.b16 %v493
      %v2437 = vunpack.c.l.b16 %v494
      %v2438 = vunpack.c.h.b16 %v494
      %v2439 = vunpack.c.l.b16 %v495
      %v2440 = vunpack.c.h.b16 %v495
      %v2441 = vunpack.c.l.b16 %v496
      %v2442 = vunpack.c.h.b16 %v496
      %v2443 = vunpack.c.l.b16 %v497
      %v2444 = vunpack.c.h.b16 %v497
      %v2445 = vunpack.c.l.b16 %v498
      %v2446 = vunpack.c.h.b16 %v498
      %v2447 = vunpack.c.l.b16 %v499
      %v2448 = vunpack.c.h.b16 %v499
      %v2449 = vunpack.c.l.b16 %v500
      %v2450 = vunpack.c.h.b16 %v500
      %v2451 = vunpack.c.l.b16 %v501
      %v2452 = vunpack.c.h.b16 %v501
      %v2453 = vunpack.c.l.b16 %v502
      %v2454 = vunpack.c.h.b16 %v502
      %v2455 = vunpack.c.l.b16 %v503
      %v2456 = vunpack.c.h.b16 %v503
      %v2457 = vunpack.c.l.b16 %v504
      %v2458 = vunpack.c.h.b16 %v504
      %v2459 = vunpack.c.l.b16 %v505
      %v2460 = vunpack.c.h.b16 %v505
      %v2461 = vunpack.c.l.b16 %v506
      %v2462 = vunpack.c.h.b16 %v506
      %v2463 = vunpack.c.l.b16 %v507
      %v2464 = vunpack.c.h.b16 %v507
      %v2465 = vunpack.c.l.b16 %v508
      %v2466 = vunpack.c.h.b16 %v508
      %v2467 = vunpack.c.l.b16 %v509
      %v2468 = vunpack.c.h.b16 %v509
      %v2469 = vunpack.c.l.b16 %v510
      %v2470 = vunpack.c.h.b16 %v510
      %v2471 = vunpack.c.l.b16 %v511
      %v2472 = vunpack.c.h.b16 %v511
      %v2473 = vunpack.c.l.b16 %v512
      %v2474 = vunpack.c.h.b16 %v512
      %v2475 = vunpack.c.l.b16 %v513
      %v2476 = vunpack.c.h.b16 %v513
      %v2477 = vunpack.c.l.b16 %v514
      %v2478 = vunpack.c.h.b16 %v514
      %v2479 = vunpack.c.l.b16 %v515
      %v2480 = vunpack.c.h.b16 %v515
      %v2481 = vunpack.c.l.b16 %v516
      %v2482 = vunpack.c.h.b16 %v516
      %v2483 = vunpack.c.l.b16 %v517
      %v2484 = vunpack.c.h.b16 %v517
      %v2485 = vunpack.c.l.b16 %v518
      %v2486 = vunpack.c.h.b16 %v518
      %v2487 = vunpack.c.l.b16 %v519
      %v2488 = vunpack.c.h.b16 %v519
      %v2489 = vunpack.c.l.b16 %v520
      %v2490 = vunpack.c.h.b16 %v520
      %v2491 = vunpack.c.l.b16 %v521
      %v2492 = vunpack.c.h.b16 %v521
      %v2493 = vunpack.c.l.b16 %v522
      %v2494 = vunpack.c.h.b16 %v522
      %v2495 = vunpack.c.l.b16 %v523
      %v2496 = vunpack.c.h.b16 %v523
      %v2497 = vunpack.c.l.b16 %v524
      %v2498 = vunpack.c.h.b16 %v524
      %v2499 = vunpack.c.l.b16 %v525
      %v2500 = vunpack.c.h.b16 %v525
      %v2501 = vunpack.c.l.b16 %v526
      %v2502 = vunpack.c.h.b16 %v526
      %v2503 = vunpack.c.l.b16 %v527
      %v2504 = vunpack.c.h.b16 %v527
      %v2505 = vunpack.c.l.b16 %v528
      %v2506 = vunpack.c.h.b16 %v528
      %v2507 = vunpack.c.l.b16 %v529
      %v2508 = vunpack.c.h.b16 %v529
      %v2509 = vunpack.c.l.b16 %v530
      %v2510 = vunpack.c.h.b16 %v530
      %v2511 = vunpack.c.l.b16 %v531
      %v2512 = vunpack.c.h.b16 %v531
      %v2513 = vunpack.c.l.b16 %v532
      %v2514 = vunpack.c.h.b16 %v532
      %v2515 = vunpack.c.l.b16 %v533
      %v2516 = vunpack.c.h.b16 %v533
      %v2517 = vunpack.c.l.b16 %v534
      %v2518 = vunpack.c.h.b16 %v534
      %v2519 = vunpack.c.l.b16 %v535
      %v2520 = vunpack.c.h.b16 %v535
      %v2521 = vunpack.c.l.b16 %v536
      %v2522 = vunpack.c.h.b16 %v536
      %v2523 = vunpack.c.l.b16 %v537
      %v2524 = vunpack.c.h.b16 %v537
      %v2525 = vunpack.c.l.b16 %v538
      %v2526 = vunpack.c.h.b16 %v538
      %v2527 = vunpack.c.l.b16 %v539
      %v2528 = vunpack.c.h.b16 %v539
      %v2529 = vunpack.c.l.b16 %v540
      %v2530 = vunpack.c.h.b16 %v540
      %v2531 = vunpack.c.l.b16 %v541
      %v2532 = vunpack.c.h.b16 %v541
      %v2533 = vunpack.c.l.b16 %v542
      %v2534 = vunpack.c.h.b16 %v542
      %v2535 = vunpack.c.l.b16 %v543
      %v2536 = vunpack.c.h.b16 %v543
      %v2537 = vunpack.c.l.b16 %v544
      %v2538 = vunpack.c.h.b16 %v544
      %v2539 = vunpack.c.l.b16 %v545
      %v2540 = vunpack.c.h.b16 %v545
      %v2541 = vunpack.c.l.b16 %v546
      %v2542 = vunpack.c.h.b16 %v546
      %v2543 = vunpack.c.l.b16 %v547
      %v2544 = vunpack.c.h.b16 %v547
      %v2545 = vunpack.c.l.b16 %v548
      %v2546 = vunpack.c.h.b16 %v548
      %v2547 = vunpack.c.l.b16 %v549
      %v2548 = vunpack.c.h.b16 %v549
      %v2549 = vunpack.c.l.b16 %v550
      %v2550 = vunpack.c.h.b16 %v550
      %v2551 = vunpack.c.l.b16 %v551
      %v2552 = vunpack.c.h.b16 %v551
      %v2553 = vunpack.c.l.b16 %v552
      %v2554 = vunpack.c.h.b16 %v552
      %v2555 = vunpack.c.l.b16 %v553
      %v2556 = vunpack.c.h.b16 %v553
      %v2557 = vunpack.c.l.b16 %v554
      %v2558 = vunpack.c.h.b16 %v554
      %v2559 = vunpack.c.l.b16 %v555
      %v2560 = vunpack.c.h.b16 %v555
      %v2561 = vunpack.c.l.b16 %v556
      %v2562 = vunpack.c.h.b16 %v556
      %v2563 = vunpack.c.l.b16 %v557
      %v2564 = vunpack.c.h.b16 %v557
      %v2565 = vunpack.c.l.b16 %v558
      %v2566 = vunpack.c.h.b16 %v558
      %v2567 = vunpack.c.l.b16 %v559
      %v2568 = vunpack.c.h.b16 %v559
      %v2569 = vunpack.c.l.b16 %v560
      %v2570 = vunpack.c.h.b16 %v560
      %v2571 = vunpack.c.l.b16 %v561
      %v2572 = vunpack.c.h.b16 %v561
      %v2573 = vunpack.c.l.b16 %v562
      %v2574 = vunpack.c.h.b16 %v562
      %v2575 = vunpack.c.l.b16 %v563
      %v2576 = vunpack.c.h.b16 %v563
      %v2577 = vunpack.c.l.b16 %v564
      %v2578 = vunpack.c.h.b16 %v564
      %v2579 = vunpack.c.l.b16 %v565
      %v2580 = vunpack.c.h.b16 %v565
      %v2581 = vunpack.c.l.b16 %v566
      %v2582 = vunpack.c.h.b16 %v566
      %v2583 = vunpack.c.l.b16 %v567
      %v2584 = vunpack.c.h.b16 %v567
      %v2585 = vunpack.c.l.b16 %v568
      %v2586 = vunpack.c.h.b16 %v568
      %v2587 = vunpack.c.l.b16 %v569
      %v2588 = vunpack.c.h.b16 %v569
      %v2589 = vunpack.c.l.b16 %v570
      %v2590 = vunpack.c.h.b16 %v570
      %v2591 = vunpack.c.l.b16 %v571
      %v2592 = vunpack.c.h.b16 %v571
      %v2593 = vunpack.c.l.b16 %v572
      %v2594 = vunpack.c.h.b16 %v572
      %v2595 = vunpack.c.l.b16 %v573
      %v2596 = vunpack.c.h.b16 %v573
      %v2597 = vunpack.c.l.b16 %v574
      %v2598 = vunpack.c.h.b16 %v574
      %v2599 = vunpack.c.l.b16 %v575
      %v2600 = vunpack.c.h.b16 %v575
      %v2601 = vunpack.c.l.b16 %v576
      %v2602 = vunpack.c.h.b16 %v576
      %v2603 = vunpack.c.l.b16 %v577
      %v2604 = vunpack.c.h.b16 %v577
      %v2605 = vunpack.c.l.b16 %v578
      %v2606 = vunpack.c.h.b16 %v578
      %v2607 = vunpack.c.l.b16 %v579
      %v2608 = vunpack.c.h.b16 %v579
      %v2609 = vunpack.c.l.b16 %v580
      %v2610 = vunpack.c.h.b16 %v580
      %v2611 = vunpack.c.l.b16 %v581
      %v2612 = vunpack.c.h.b16 %v581
      %v2613 = vunpack.c.l.b16 %v582
      %v2614 = vunpack.c.h.b16 %v582
      %v2615 = vunpack.c.l.b16 %v583
      %v2616 = vunpack.c.h.b16 %v583
      %v2617 = vunpack.c.l.b16 %v584
      %v2618 = vunpack.c.h.b16 %v584
      %v2619 = vunpack.c.l.b16 %v585
      %v2620 = vunpack.c.h.b16 %v585
      %v2621 = vunpack.c.l.b16 %v586
      %v2622 = vunpack.c.h.b16 %v586
      %v2623 = vunpack.c.l.b16 %v587
      %v2624 = vunpack.c.h.b16 %v587
      %v2625 = vunpack.c.l.b16 %v588
      %v2626 = vunpack.c.h.b16 %v588
      %v2627 = vunpack.c.l.b16 %v589
      %v2628 = vunpack.c.h.b16 %v589
      %v2629 = vunpack.c.l.b16 %v590
      %v2630 = vunpack.c.h.b16 %v590
      %v2631 = vunpack.c.l.b16 %v591
      %v2632 = vunpack.c.h.b16 %v591
      %v2633 = vunpack.c.l.b16 %v592
      %v2634 = vunpack.c.h.b16 %v592
      %v2635 = vunpack.c.l.b16 %v593
      %v2636 = vunpack.c.h.b16 %v593
      %v2637 = vunpack.c.l.b16 %v594
      %v2638 = vunpack.c.h.b16 %v594
      %v2639 = vunpack.c.l.b16 %v595
      %v2640 = vunpack.c.h.b16 %v595
      %v2641 = vunpack.c.l.b16 %v596
      %v2642 = vunpack.c.h.b16 %v596
      %v2643 = vunpack.c.l.b16 %v597
      %v2644 = vunpack.c.h.b16 %v597
      %v2645 = vunpack.c.l.b16 %v598
      %v2646 = vunpack.c.h.b16 %v598
      %v2647 = vunpack.c.l.b16 %v599
      %v2648 = vunpack.c.h.b16 %v599
      %v2649 = vunpack.c.l.b16 %v600
      %v2650 = vunpack.c.h.b16 %v600
      %v2651 = vunpack.c.l.b16 %v601
      %v2652 = vunpack.c.h.b16 %v601
      %v2653 = vunpack.c.l.b16 %v602
      %v2654 = vunpack.c.h.b16 %v602
      %v2655 = vunpack.c.l.b16 %v603
      %v2656 = vunpack.c.h.b16 %v603
      %v2657 = vunpack.c.l.b16 %v604
      %v2658 = vunpack.c.h.b16 %v604
      %v2659 = vunpack.c.l.b16 %v605
      %v2660 = vunpack.c.h.b16 %v605
      %v2661 = vunpack.c.l.b16 %v606
      %v2662 = vunpack.c.h.b16 %v606
      %v2663 = vunpack.c.l.b16 %v607
      %v2664 = vunpack.c.h.b16 %v607
      %v2665 = vunpack.c.l.b16 %v608
      %v2666 = vunpack.c.h.b16 %v608
      %v2667 = vunpack.c.l.b16 %v609
      %v2668 = vunpack.c.h.b16 %v609
      %v2669 = vunpack.c.l.b16 %v610
      %v2670 = vunpack.c.h.b16 %v610
      %v2671 = vunpack.c.l.b16 %v611
      %v2672 = vunpack.c.h.b16 %v611
      %v2673 = vunpack.c.l.b16 %v612
      %v2674 = vunpack.c.h.b16 %v612
      %v2675 = vunpack.c.l.b16 %v613
      %v2676 = vunpack.c.h.b16 %v613
      %v2677 = vunpack.c.l.b16 %v614
      %v2678 = vunpack.c.h.b16 %v614
      %v2679 = vunpack.c.l.b16 %v615
      %v2680 = vunpack.c.h.b16 %v615
      %v2681 = vunpack.c.l.b16 %v616
      %v2682 = vunpack.c.h.b16 %v616
      %v2683 = vunpack.c.l.b16 %v617
      %v2684 = vunpack.c.h.b16 %v617
      %v2685 = vunpack.c.l.b16 %v618
      %v2686 = vunpack.c.h.b16 %v618
      %v2687 = vunpack.c.l.b16 %v619
      %v2688 = vunpack.c.h.b16 %v619
      %v2689 = vunpack.c.l.b16 %v620
      %v2690 = vunpack.c.h.b16 %v620
      %v2691 = vunpack.c.l.b16 %v621
      %v2692 = vunpack.c.h.b16 %v621
      %v2693 = vunpack.c.l.b16 %v622
      %v2694 = vunpack.c.h.b16 %v622
      %v2695 = vunpack.c.l.b16 %v623
      %v2696 = vunpack.c.h.b16 %v623
      %v2697 = vunpack.c.l.b16 %v624
      %v2698 = vunpack.c.h.b16 %v624
      %v2699 = vunpack.c.l.b16 %v625
      %v2700 = vunpack.c.h.b16 %v625
      %v2701 = vunpack.c.l.b16 %v626
      %v2702 = vunpack.c.h.b16 %v626
      %v2703 = vunpack.c.l.b16 %v627
      %v2704 = vunpack.c.h.b16 %v627
      %v2705 = vunpack.c.l.b16 %v628
      %v2706 = vunpack.c.h.b16 %v628
      %v2707 = vunpack.c.l.b16 %v629
      %v2708 = vunpack.c.h.b16 %v629
      %v2709 = vunpack.c.l.b16 %v630
      %v2710 = vunpack.c.h.b16 %v630
      %v2711 = vunpack.c.l.b16 %v631
      %v2712 = vunpack.c.h.b16 %v631
      %v2713 = vunpack.c.l.b16 %v632
      %v2714 = vunpack.c.h.b16 %v632
      %v2715 = vunpack.c.l.b16 %v633
      %v2716 = vunpack.c.h.b16 %v633
      %v2717 = vunpack.c.l.b16 %v634
      %v2718 = vunpack.c.h.b16 %v634
      %v2719 = vunpack.c.l.b16 %v635
      %v2720 = vunpack.c.h.b16 %v635
      %v2721 = vunpack.c.l.b16 %v636
      %v2722 = vunpack.c.h.b16 %v636
      %v2723 = vunpack.c.l.b16 %v637
      %v2724 = vunpack.c.h.b16 %v637
      %v2725 = vunpack.c.l.b16 %v638
      %v2726 = vunpack.c.h.b16 %v638
      %v2727 = vunpack.c.l.b16 %v639
      %v2728 = vunpack.c.h.b16 %v639
      %v2729 = vunpack.c.l.b16 %v640
      %v2730 = vunpack.c.h.b16 %v640
      %v2731 = vunpack.c.l.b16 %v641
      %v2732 = vunpack.c.h.b16 %v641
      %v2733 = vunpack.c.l.b16 %v642
      %v2734 = vunpack.c.h.b16 %v642
      %v2735 = vunpack.c.l.b16 %v643
      %v2736 = vunpack.c.h.b16 %v643
      %v2737 = vunpack.c.l.b16 %v644
      %v2738 = vunpack.c.h.b16 %v644
      %v2739 = vunpack.c.l.b16 %v645
      %v2740 = vunpack.c.h.b16 %v645
      %v2741 = vunpack.c.l.b16 %v646
      %v2742 = vunpack.c.h.b16 %v646
      %v2743 = vunpack.c.l.b16 %v647
      %v2744 = vunpack.c.h.b16 %v647
      %v2745 = vunpack.c.l.b16 %v648
      %v2746 = vunpack.c.h.b16 %v648
      %v2747 = vunpack.c.l.b16 %v649
      %v2748 = vunpack.c.h.b16 %v649
      %v2749 = vunpack.c.l.b16 %v650
      %v2750 = vunpack.c.h.b16 %v650
      %v2751 = vunpack.c.l.b16 %v651
      %v2752 = vunpack.c.h.b16 %v651
      %v2753 = vunpack.c.l.b16 %v652
      %v2754 = vunpack.c.h.b16 %v652
      %v2755 = vunpack.c.l.b16 %v653
      %v2756 = vunpack.c.h.b16 %v653
      %v2757 = vunpack.c.l.b16 %v654
      %v2758 = vunpack.c.h.b16 %v654
      %v2759 = vunpack.c.l.b16 %v655
      %v2760 = vunpack.c.h.b16 %v655
      %v2761 = vunpack.c.l.b16 %v656
      %v2762 = vunpack.c.h.b16 %v656
      %v2763 = vunpack.c.l.b16 %v657
      %v2764 = vunpack.c.h.b16 %v657
      %v2765 = vunpack.c.l.b16 %v658
      %v2766 = vunpack.c.h.b16 %v658
      %v2767 = vunpack.c.l.b16 %v659
      %v2768 = vunpack.c.h.b16 %v659
      %v2769 = vunpack.c.l.b16 %v660
      %v2770 = vunpack.c.h.b16 %v660
      %v2771 = vunpack.c.l.b16 %v661
      %v2772 = vunpack.c.h.b16 %v661
      %v2773 = vunpack.c.l.b16 %v662
      %v2774 = vunpack.c.h.b16 %v662
      %v2775 = vunpack.c.l.b16 %v663
      %v2776 = vunpack.c.h.b16 %v663
      %v2777 = vunpack.c.l.b16 %v664
      %v2778 = vunpack.c.h.b16 %v664
      %v2779 = vunpack.c.l.b16 %v665
      %v2780 = vunpack.c.h.b16 %v665
      %v2781 = vunpack.c.l.b16 %v666
      %v2782 = vunpack.c.h.b16 %v666
      %v2783 = vunpack.c.l.b16 %v667
      %v2784 = vunpack.c.h.b16 %v667
      %v2785 = vunpack.c.l.b16 %v668
      %v2786 = vunpack.c.h.b16 %v668
      %v2787 = vunpack.c.l.b16 %v669
      %v2788 = vunpack.c.h.b16 %v669
      %v2789 = vunpack.c.l.b16 %v670
      %v2790 = vunpack.c.h.b16 %v670
      %v2791 = vunpack.c.l.b16 %v671
      %v2792 = vunpack.c.h.b16 %v671
      %v2793 = vunpack.c.l.b16 %v672
      %v2794 = vunpack.c.h.b16 %v672
      %v2795 = vunpack.c.l.b16 %v673
      %v2796 = vunpack.c.h.b16 %v673
      %v2797 = vunpack.c.l.b16 %v674
      %v2798 = vunpack.c.h.b16 %v674
      %v2799 = vunpack.c.l.b16 %v675
      %v2800 = vunpack.c.h.b16 %v675
      %v2801 = vunpack.c.l.b16 %v676
      %v2802 = vunpack.c.h.b16 %v676
      %v2803 = vunpack.c.l.b16 %v677
      %v2804 = vunpack.c.h.b16 %v677
      %v2805 = vunpack.c.l.b16 %v678
      %v2806 = vunpack.c.h.b16 %v678
      %v2807 = vunpack.c.l.b16 %v679
      %v2808 = vunpack.c.h.b16 %v679
      %v2809 = vunpack.c.l.b16 %v680
      %v2810 = vunpack.c.h.b16 %v680
      %v2811 = vunpack.c.l.b16 %v681
      %v2812 = vunpack.c.h.b16 %v681
      %v2813 = vunpack.c.l.b16 %v682
      %v2814 = vunpack.c.h.b16 %v682
      %v2815 = vunpack.c.l.b16 %v683
      %v2816 = vunpack.c.h.b16 %v683
      %v2817 = vunpack.c.l.b16 %v684
      %v2818 = vunpack.c.h.b16 %v684
      %v2819 = vunpack.c.l.b16 %v685
      %v2820 = vunpack.c.h.b16 %v685
      %v2821 = vunpack.c.l.b16 %v686
      %v2822 = vunpack.c.h.b16 %v686
      %v2823 = vunpack.c.l.b16 %v687
      %v2824 = vunpack.c.h.b16 %v687
      %v2825 = vunpack.c.l.b16 %v688
      %v2826 = vunpack.c.h.b16 %v688
      %v2827 = vunpack.c.l.b16 %v689
      %v2828 = vunpack.c.h.b16 %v689
      %v2829 = vunpack.c.l.b16 %v690
      %v2830 = vunpack.c.h.b16 %v690
      %v2831 = vunpack.c.l.b16 %v691
      %v2832 = vunpack.c.h.b16 %v691
      %v2833 = vunpack.c.l.b16 %v692
      %v2834 = vunpack.c.h.b16 %v692
      %v2835 = vunpack.c.l.b16 %v693
      %v2836 = vunpack.c.h.b16 %v693
      %v2837 = vunpack.c.l.b16 %v694
      %v2838 = vunpack.c.h.b16 %v694
      %v2839 = vunpack.c.l.b16 %v695
      %v2840 = vunpack.c.h.b16 %v695
      %v2841 = vunpack.c.l.b16 %v696
      %v2842 = vunpack.c.h.b16 %v696
      %v2843 = vunpack.c.l.b16 %v697
      %v2844 = vunpack.c.h.b16 %v697
      %v2845 = vunpack.c.l.b16 %v698
      %v2846 = vunpack.c.h.b16 %v698
      %v2847 = vunpack.c.l.b16 %v699
      %v2848 = vunpack.c.h.b16 %v699
      %v2849 = vunpack.c.l.b16 %v700
      %v2850 = vunpack.c.h.b16 %v700
      %v2851 = vunpack.c.l.b16 %v701
      %v2852 = vunpack.c.h.b16 %v701
      %v2853 = vunpack.c.l.b16 %v702
      %v2854 = vunpack.c.h.b16 %v702
      %v2855 = vunpack.c.l.b16 %v703
      %v2856 = vunpack.c.h.b16 %v703
      %v2857 = vunpack.c.l.b16 %v704
      %v2858 = vunpack.c.h.b16 %v704
      %v2859 = vunpack.c.l.b16 %v705
      %v2860 = vunpack.c.h.b16 %v705
      %v2861 = vunpack.c.l.b16 %v706
      %v2862 = vunpack.c.h.b16 %v706
      %v2863 = vunpack.c.l.b16 %v707
      %v2864 = vunpack.c.h.b16 %v707
      %v2865 = vunpack.c.l.b16 %v708
      %v2866 = vunpack.c.h.b16 %v708
      %v2867 = vunpack.c.l.b16 %v709
      %v2868 = vunpack.c.h.b16 %v709
      %v2869 = vunpack.c.l.b16 %v710
      %v2870 = vunpack.c.h.b16 %v710
      %v2871 = vunpack.c.l.b16 %v711
      %v2872 = vunpack.c.h.b16 %v711
      %v2873 = vunpack.c.l.b16 %v712
      %v2874 = vunpack.c.h.b16 %v712
      %v2875 = vunpack.c.l.b16 %v713
      %v2876 = vunpack.c.h.b16 %v713
      %v2877 = vunpack.c.l.b16 %v714
      %v2878 = vunpack.c.h.b16 %v714
      %v2879 = vunpack.c.l.b16 %v715
      %v2880 = vunpack.c.h.b16 %v715
      %v2881 = vunpack.c.l.b16 %v716
      %v2882 = vunpack.c.h.b16 %v716
      %v2883 = vunpack.c.l.b16 %v717
      %v2884 = vunpack.c.h.b16 %v717
      %v2885 = vunpack.c.l.b16 %v718
      %v2886 = vunpack.c.h.b16 %v718
      %v2887 = vunpack.c.l.b16 %v719
      %v2888 = vunpack.c.h.b16 %v719
      %v2889 = vunpack.c.l.b16 %v720
      %v2890 = vunpack.c.h.b16 %v720
      %v2891 = vunpack.c.l.b16 %v721
      %v2892 = vunpack.c.h.b16 %v721
      %v2893 = vunpack.c.l.b16 %v722
      %v2894 = vunpack.c.h.b16 %v722
      %v2895 = vunpack.c.l.b16 %v723
      %v2896 = vunpack.c.h.b16 %v723
      %v2897 = vunpack.c.l.b16 %v724
      %v2898 = vunpack.c.h.b16 %v724
      %v2899 = vunpack.c.l.b16 %v725
      %v2900 = vunpack.c.h.b16 %v725
      %v2901 = vunpack.c.l.b16 %v726
      %v2902 = vunpack.c.h.b16 %v726
      %v2903 = vunpack.c.l.b16 %v727
      %v2904 = vunpack.c.h.b16 %v727
      %v2905 = vunpack.c.l.b16 %v728
      %v2906 = vunpack.c.h.b16 %v728
      %v2907 = vunpack.c.l.b16 %v729
      %v2908 = vunpack.c.h.b16 %v729
      %v2909 = vunpack.c.l.b16 %v730
      %v2910 = vunpack.c.h.b16 %v730
      %v2911 = vunpack.c.l.b16 %v731
      %v2912 = vunpack.c.h.b16 %v731
      %v2913 = vunpack.c.l.b16 %v732
      %v2914 = vunpack.c.h.b16 %v732
      %v2915 = vunpack.c.l.b16 %v733
      %v2916 = vunpack.c.h.b16 %v733
      %v2917 = vunpack.c.l.b16 %v734
      %v2918 = vunpack.c.h.b16 %v734
      %v2919 = vunpack.c.l.b16 %v735
      %v2920 = vunpack.c.h.b16 %v735
      %v2921 = vunpack.c.l.b16 %v736
      %v2922 = vunpack.c.h.b16 %v736
      %v2923 = vunpack.c.l.b16 %v737
      %v2924 = vunpack.c.h.b16 %v737
      %v2925 = vunpack.c.l.b16 %v738
      %v2926 = vunpack.c.h.b16 %v738
      %v2927 = vunpack.c.l.b16 %v739
      %v2928 = vunpack.c.h.b16 %v739
      %v2929 = vunpack.c.l.b16 %v740
      %v2930 = vunpack.c.h.b16 %v740
      %v2931 = vunpack.c.l.b16 %v741
      %v2932 = vunpack.c.h.b16 %v741
      %v2933 = vunpack.c.l.b16 %v742
      %v2934 = vunpack.c.h.b16 %v742
      %v2935 = vunpack.c.l.b16 %v743
      %v2936 = vunpack.c.h.b16 %v743
      %v2937 = vunpack.c.l.b16 %v744
      %v2938 = vunpack.c.h.b16 %v744
      %v2939 = vunpack.c.l.b16 %v745
      %v2940 = vunpack.c.h.b16 %v745
      %v2941 = vunpack.c.l.b16 %v746
      %v2942 = vunpack.c.h.b16 %v746
      %v2943 = vunpack.c.l.b16 %v747
      %v2944 = vunpack.c.h.b16 %v747
      %v2945 = vunpack.c.l.b16 %v748
      %v2946 = vunpack.c.h.b16 %v748
      %v2947 = vunpack.c.l.b16 %v749
      %v2948 = vunpack.c.h.b16 %v749
      %v2949 = vunpack.c.l.b16 %v750
      %v2950 = vunpack.c.h.b16 %v750
      %v2951 = vunpack.c.l.b16 %v751
      %v2952 = vunpack.c.h.b16 %v751
      %v2953 = vunpack.c.l.b16 %v752
      %v2954 = vunpack.c.h.b16 %v752
      %v2955 = vunpack.c.l.b16 %v753
      %v2956 = vunpack.c.h.b16 %v753
      %v2957 = vunpack.c.l.b16 %v754
      %v2958 = vunpack.c.h.b16 %v754
      %v2959 = vunpack.c.l.b16 %v755
      %v2960 = vunpack.c.h.b16 %v755
      %v2961 = vunpack.c.l.b16 %v756
      %v2962 = vunpack.c.h.b16 %v756
      %v2963 = vunpack.c.l.b16 %v757
      %v2964 = vunpack.c.h.b16 %v757
      %v2965 = vunpack.c.l.b16 %v758
      %v2966 = vunpack.c.h.b16 %v758
      %v2967 = vunpack.c.l.b16 %v759
      %v2968 = vunpack.c.h.b16 %v759
      %v2969 = vunpack.c.l.b16 %v760
      %v2970 = vunpack.c.h.b16 %v760
      %v2971 = vunpack.c.l.b16 %v761
      %v2972 = vunpack.c.h.b16 %v761
      %v2973 = vunpack.c.l.b16 %v762
      %v2974 = vunpack.c.h.b16 %v762
      %v2975 = vunpack.c.l.b16 %v763
      %v2976 = vunpack.c.h.b16 %v763
      %v2977 = vunpack.c.l.b16 %v764
      %v2978 = vunpack.c.h.b16 %v764
      %v2979 = vunpack.c.l.b16 %v765
      %v2980 = vunpack.c.h.b16 %v765
      %v2981 = vunpack.c.l.b16 %v766
      %v2982 = vunpack.c.h.b16 %v766
      %v2983 = vunpack.c.l.b16 %v767
      %v2984 = vunpack.c.h.b16 %v767
      %v2985 = vunpack.c.l.b16 %v768
      %v2986 = vunpack.c.h.b16 %v768
      %v2987 = vunpack.c.l.b16 %v769
      %v2988 = vunpack.c.h.b16 %v769
      %v2989 = vunpack.c.l.b16 %v770
      %v2990 = vunpack.c.h.b16 %v770
      %v2991 = vunpack.c.l.b16 %v771
      %v2992 = vunpack.c.h.b16 %v771
      %v2993 = vunpack.c.l.b16 %v772
      %v2994 = vunpack.c.h.b16 %v772
      %v2995 = vunpack.c.l.b16 %v773
      %v2996 = vunpack.c.h.b16 %v773
      %v2997 = vunpack.c.l.b16 %v774
      %v2998 = vunpack.c.h.b16 %v774
      %v2999 = vunpack.c.l.b16 %v775
      %v3000 = vunpack.c.h.b16 %v775
      %v3001 = vunpack.c.l.b16 %v776
      %v3002 = vunpack.c.h.b16 %v776
      %v3003 = vunpack.c.l.b16 %v777
      %v3004 = vunpack.c.h.b16 %v777
      %v3005 = vunpack.c.l.b16 %v778
      %v3006 = vunpack.c.h.b16 %v778
      %v3007 = vunpack.c.l.b16 %v779
      %v3008 = vunpack.c.h.b16 %v779
      %v3009 = vunpack.c.l.b16 %v780
      %v3010 = vunpack.c.h.b16 %v780
      %v3011 = vunpack.c.l.b16 %v781
      %v3012 = vunpack.c.h.b16 %v781
      %v3013 = vunpack.c.l.b16 %v782
      %v3014 = vunpack.c.h.b16 %v782
      %v3015 = vunpack.c.l.b16 %v783
      %v3016 = vunpack.c.h.b16 %v783
      %v3017 = vunpack.c.l.b16 %v784
      %v3018 = vunpack.c.h.b16 %v784
      %v3019 = vunpack.c.l.b16 %v785
      %v3020 = vunpack.c.h.b16 %v785
      %v3021 = vunpack.c.l.b16 %v786
      %v3022 = vunpack.c.h.b16 %v786
      %v3023 = vunpack.c.l.b16 %v787
      %v3024 = vunpack.c.h.b16 %v787
      %v3025 = vunpack.c.l.b16 %v788
      %v3026 = vunpack.c.h.b16 %v788
      %v3027 = vunpack.c.l.b16 %v789
      %v3028 = vunpack.c.h.b16 %v789
      %v3029 = vunpack.c.l.b16 %v790
      %v3030 = vunpack.c.h.b16 %v790
      %v3031 = vunpack.c.l.b16 %v791
      %v3032 = vunpack.c.h.b16 %v791
      %v3033 = vunpack.c.l.b16 %v792
      %v3034 = vunpack.c.h.b16 %v792
      %v3035 = vunpack.c.l.b16 %v793
      %v3036 = vunpack.c.h.b16 %v793
      %v3037 = vunpack.c.l.b16 %v794
      %v3038 = vunpack.c.h.b16 %v794
      %v3039 = vunpack.c.l.b16 %v795
      %v3040 = vunpack.c.h.b16 %v795
      %v3041 = vunpack.c.l.b16 %v796
      %v3042 = vunpack.c.h.b16 %v796
      %v3043 = vunpack.c.l.b16 %v797
      %v3044 = vunpack.c.h.b16 %v797
      %v3045 = vunpack.c.l.b16 %v798
      %v3046 = vunpack.c.h.b16 %v798
      %v3047 = vunpack.c.l.b16 %v799
      %v3048 = vunpack.c.h.b16 %v799
      %v3049 = vunpack.c.l.b16 %v800
      %v3050 = vunpack.c.h.b16 %v800
      %v3051 = vunpack.c.l.b16 %v801
      %v3052 = vunpack.c.h.b16 %v801
      %v3053 = vunpack.c.l.b16 %v802
      %v3054 = vunpack.c.h.b16 %v802
      %v3055 = vunpack.c.l.b16 %v803
      %v3056 = vunpack.c.h.b16 %v803
      %v3057 = vunpack.c.l.b16 %v804
      %v3058 = vunpack.c.h.b16 %v804
      %v3059 = vunpack.c.l.b16 %v805
      %v3060 = vunpack.c.h.b16 %v805
      %v3061 = vunpack.c.l.b16 %v806
      %v3062 = vunpack.c.h.b16 %v806
      %v3063 = vunpack.c.l.b16 %v807
      %v3064 = vunpack.c.h.b16 %v807
      %v3065 = vunpack.c.l.b16 %v808
      %v3066 = vunpack.c.h.b16 %v808
      %v3067 = vunpack.c.l.b16 %v809
      %v3068 = vunpack.c.h.b16 %v809
      %v3069 = vunpack.c.l.b16 %v810
      %v3070 = vunpack.c.h.b16 %v810
      %v3071 = vunpack.c.l.b16 %v811
      %v3072 = vunpack.c.h.b16 %v811
      %v3073 = vunpack.c.l.b16 %v812
      %v3074 = vunpack.c.h.b16 %v812
      %v3075 = vunpack.c.l.b16 %v813
      %v3076 = vunpack.c.h.b16 %v813
      %v3077 = vunpack.c.l.b16 %v814
      %v3078 = vunpack.c.h.b16 %v814
      %v3079 = vunpack.c.l.b16 %v815
      %v3080 = vunpack.c.h.b16 %v815
      %v3081 = vunpack.c.l.b16 %v816
      %v3082 = vunpack.c.h.b16 %v816
      %v3083 = vunpack.c.l.b16 %v817
      %v3084 = vunpack.c.h.b16 %v817
      %v3085 = vunpack.c.l.b16 %v818
      %v3086 = vunpack.c.h.b16 %v818
      %v3087 = vunpack.c.l.b16 %v819
      %v3088 = vunpack.c.h.b16 %v819
      %v3089 = vunpack.c.l.b16 %v820
      %v3090 = vunpack.c.h.b16 %v820
      %v3091 = vunpack.c.l.b16 %v821
      %v3092 = vunpack.c.h.b16 %v821
      %v3093 = vunpack.c.l.b16 %v822
      %v3094 = vunpack.c.h.b16 %v822
      %v3095 = vunpack.c.l.b16 %v823
      %v3096 = vunpack.c.h.b16 %v823
      %v3097 = vunpack.c.l.b16 %v824
      %v3098 = vunpack.c.h.b16 %v824
      %v3099 = vunpack.c.l.b16 %v825
      %v3100 = vunpack.c.h.b16 %v825
      %v3101 = vunpack.c.l.b16 %v826
      %v3102 = vunpack.c.h.b16 %v826
      %v3103 = vunpack.c.l.b16 %v827
      %v3104 = vunpack.c.h.b16 %v827
      %v3105 = vunpack.c.l.b16 %v828
      %v3106 = vunpack.c.h.b16 %v828
      %v3107 = vunpack.c.l.b16 %v829
      %v3108 = vunpack.c.h.b16 %v829
      %v3109 = vunpack.c.l.b16 %v830
      %v3110 = vunpack.c.h.b16 %v830
      %v3111 = vunpack.c.l.b16 %v831
      %v3112 = vunpack.c.h.b16 %v831
      %v3113 = vunpack.c.l.b16 %v832
      %v3114 = vunpack.c.h.b16 %v832
      %v3115 = vunpack.c.l.b16 %v833
      %v3116 = vunpack.c.h.b16 %v833
      %v3117 = vunpack.c.l.b16 %v834
      %v3118 = vunpack.c.h.b16 %v834
      %v3119 = vunpack.c.l.b16 %v835
      %v3120 = vunpack.c.h.b16 %v835
      %v3121 = vunpack.c.l.b16 %v836
      %v3122 = vunpack.c.h.b16 %v836
      %v3123 = vunpack.c.l.b16 %v837
      %v3124 = vunpack.c.h.b16 %v837
      %v3125 = vunpack.c.l.b16 %v838
      %v3126 = vunpack.c.h.b16 %v838
      %v3127 = vunpack.c.l.b16 %v839
      %v3128 = vunpack.c.h.b16 %v839
      %v3129 = vunpack.c.l.b16 %v840
      %v3130 = vunpack.c.h.b16 %v840
      %v3131 = vunpack.c.l.b16 %v841
      %v3132 = vunpack.c.h.b16 %v841
      %v3133 = vunpack.c.l.b16 %v842
      %v3134 = vunpack.c.h.b16 %v842
      %v3135 = vunpack.c.l.b16 %v843
      %v3136 = vunpack.c.h.b16 %v843
      %v3137 = vunpack.c.l.b16 %v844
      %v3138 = vunpack.c.h.b16 %v844
      %v3139 = vunpack.c.l.b16 %v845
      %v3140 = vunpack.c.h.b16 %v845
      %v3141 = vunpack.c.l.b16 %v846
      %v3142 = vunpack.c.h.b16 %v846
      %v3143 = vunpack.c.l.b16 %v847
      %v3144 = vunpack.c.h.b16 %v847
      %v3145 = vunpack.c.l.b16 %v848
      %v3146 = vunpack.c.h.b16 %v848
      %v3147 = vunpack.c.l.b16 %v849
      %v3148 = vunpack.c.h.b16 %v849
      %v3149 = vunpack.c.l.b16 %v850
      %v3150 = vunpack.c.h.b16 %v850
      %v3151 = vunpack.c.l.b16 %v851
      %v3152 = vunpack.c.h.b16 %v851
      %v3153 = vunpack.c.l.b16 %v852
      %v3154 = vunpack.c.h.b16 %v852
      %v3155 = vunpack.c.l.b16 %v853
      %v3156 = vunpack.c.h.b16 %v853
      %v3157 = vunpack.c.l.b16 %v854
      %v3158 = vunpack.c.h.b16 %v854
      %v3159 = vunpack.c.l.b16 %v855
      %v3160 = vunpack.c.h.b16 %v855
      %v3161 = vunpack.c.l.b16 %v856
      %v3162 = vunpack.c.h.b16 %v856
      %v3163 = vunpack.c.l.b16 %v857
      %v3164 = vunpack.c.h.b16 %v857
      %v3165 = vunpack.c.l.b16 %v858
      %v3166 = vunpack.c.h.b16 %v858
      %v3167 = vunpack.c.l.b16 %v859
      %v3168 = vunpack.c.h.b16 %v859
      %v3169 = vunpack.c.l.b16 %v860
      %v3170 = vunpack.c.h.b16 %v860
      %v3171 = vunpack.c.l.b16 %v861
      %v3172 = vunpack.c.h.b16 %v861
      %v3173 = vunpack.c.l.b16 %v862
      %v3174 = vunpack.c.h.b16 %v862
      %v3175 = vunpack.c.l.b16 %v863
      %v3176 = vunpack.c.h.b16 %v863
      %v3177 = vunpack.c.l.b16 %v864
      %v3178 = vunpack.c.h.b16 %v864
      %v3179 = vunpack.c.l.b16 %v865
      %v3180 = vunpack.c.h.b16 %v865
      %v3181 = vunpack.c.l.b16 %v866
      %v3182 = vunpack.c.h.b16 %v866
      %v3183 = vunpack.c.l.b16 %v867
      %v3184 = vunpack.c.h.b16 %v867
      %v3185 = vunpack.c.l.b16 %v868
      %v3186 = vunpack.c.h.b16 %v868
      %v3187 = vunpack.c.l.b16 %v869
      %v3188 = vunpack.c.h.b16 %v869
      %v3189 = vunpack.c.l.b16 %v870
      %v3190 = vunpack.c.h.b16 %v870
      %v3191 = vunpack.c.l.b16 %v871
      %v3192 = vunpack.c.h.b16 %v871
      %v3193 = vunpack.c.l.b16 %v872
      %v3194 = vunpack.c.h.b16 %v872
      %v3195 = vunpack.c.l.b16 %v873
      %v3196 = vunpack.c.h.b16 %v873
      %v3197 = vunpack.c.l.b16 %v874
      %v3198 = vunpack.c.h.b16 %v874
      %v3199 = vunpack.c.l.b16 %v875
      %v3200 = vunpack.c.h.b16 %v875
      %v3201 = vunpack.c.l.b16 %v876
      %v3202 = vunpack.c.h.b16 %v876
      %v3203 = vunpack.c.l.b16 %v877
      %v3204 = vunpack.c.h.b16 %v877
      %v3205 = vunpack.c.l.b16 %v878
      %v3206 = vunpack.c.h.b16 %v878
      %v3207 = vunpack.c.l.b16 %v879
      %v3208 = vunpack.c.h.b16 %v879
      %v3209 = vunpack.c.l.b16 %v880
      %v3210 = vunpack.c.h.b16 %v880
      %v3211 = vunpack.c.l.b16 %v881
      %v3212 = vunpack.c.h.b16 %v881
      %v3213 = vunpack.c.l.b16 %v882
      %v3214 = vunpack.c.h.b16 %v882
      %v3215 = vunpack.c.l.b16 %v883
      %v3216 = vunpack.c.h.b16 %v883
      %v3217 = vunpack.c.l.b16 %v884
      %v3218 = vunpack.c.h.b16 %v884
      %v3219 = vunpack.c.l.b16 %v885
      %v3220 = vunpack.c.h.b16 %v885
      %v3221 = vunpack.c.l.b16 %v886
      %v3222 = vunpack.c.h.b16 %v886
      %v3223 = vunpack.c.l.b16 %v887
      %v3224 = vunpack.c.h.b16 %v887
      %v3225 = vunpack.c.l.b16 %v888
      %v3226 = vunpack.c.h.b16 %v888
      %v3227 = vunpack.c.l.b16 %v889
      %v3228 = vunpack.c.h.b16 %v889
      %v3229 = vunpack.c.l.b16 %v890
      %v3230 = vunpack.c.h.b16 %v890
      %v3231 = vunpack.c.l.b16 %v891
      %v3232 = vunpack.c.h.b16 %v891
      %v3233 = vunpack.c.l.b16 %v892
      %v3234 = vunpack.c.h.b16 %v892
      %v3235 = vunpack.c.l.b16 %v893
      %v3236 = vunpack.c.h.b16 %v893
      %v3237 = vunpack.c.l.b16 %v894
      %v3238 = vunpack.c.h.b16 %v894
      %v3239 = vunpack.c.l.b16 %v895
      %v3240 = vunpack.c.h.b16 %v895
      %v3241 = vunpack.c.l.b16 %v896
      %v3242 = vunpack.c.h.b16 %v896
      %v3243 = vunpack.c.l.b16 %v897
      %v3244 = vunpack.c.h.b16 %v897
      %v3245 = vunpack.c.l.b16 %v898
      %v3246 = vunpack.c.h.b16 %v898
      %v3247 = vunpack.c.l.b16 %v899
      %v3248 = vunpack.c.h.b16 %v899
      %v3249 = vunpack.c.l.b16 %v900
      %v3250 = vunpack.c.h.b16 %v900
      %v3251 = vunpack.c.l.b16 %v901
      %v3252 = vunpack.c.h.b16 %v901
      %v3253 = vunpack.c.l.b16 %v902
      %v3254 = vunpack.c.h.b16 %v902
      %v3255 = vunpack.c.l.b16 %v903
      %v3256 = vunpack.c.h.b16 %v903
      %v3257 = vunpack.c.l.b16 %v904
      %v3258 = vunpack.c.h.b16 %v904
      %v3259 = vunpack.c.l.b16 %v905
      %v3260 = vunpack.c.h.b16 %v905
      %v3261 = vunpack.c.l.b16 %v906
      %v3262 = vunpack.c.h.b16 %v906
      %v3263 = vunpack.c.l.b16 %v907
      %v3264 = vunpack.c.h.b16 %v907
      %v3265 = vunpack.c.l.b16 %v908
      %v3266 = vunpack.c.h.b16 %v908
      %v3267 = vunpack.c.l.b16 %v909
      %v3268 = vunpack.c.h.b16 %v909
      %v3269 = vunpack.c.l.b16 %v910
      %v3270 = vunpack.c.h.b16 %v910
      %v3271 = vunpack.c.l.b16 %v911
      %v3272 = vunpack.c.h.b16 %v911
      %v3273 = vunpack.c.l.b16 %v912
      %v3274 = vunpack.c.h.b16 %v912
      %v3275 = vunpack.c.l.b16 %v913
      %v3276 = vunpack.c.h.b16 %v913
      %v3277 = vunpack.c.l.b16 %v914
      %v3278 = vunpack.c.h.b16 %v914
      %v3279 = vunpack.c.l.b16 %v915
      %v3280 = vunpack.c.h.b16 %v915
      %v3281 = vunpack.c.l.b16 %v916
      %v3282 = vunpack.c.h.b16 %v916
      %v3283 = vunpack.c.l.b16 %v917
      %v3284 = vunpack.c.h.b16 %v917
      %v3285 = vunpack.c.l.b16 %v918
      %v3286 = vunpack.c.h.b16 %v918
      %v3287 = vunpack.c.l.b16 %v919
      %v3288 = vunpack.c.h.b16 %v919
      %v3289 = vunpack.c.l.b16 %v920
      %v3290 = vunpack.c.h.b16 %v920
      %v3291 = vunpack.c.l.b16 %v921
      %v3292 = vunpack.c.h.b16 %v921
      %v3293 = vunpack.c.l.b16 %v922
      %v3294 = vunpack.c.h.b16 %v922
      %v3295 = vunpack.c.l.b16 %v923
      %v3296 = vunpack.c.h.b16 %v923
      %v3297 = vunpack.c.l.b16 %v924
      %v3298 = vunpack.c.h.b16 %v924
      %v3299 = vunpack.c.l.b16 %v925
      %v3300 = vunpack.c.h.b16 %v925
      %v3301 = vunpack.c.l.b16 %v926
      %v3302 = vunpack.c.h.b16 %v926
      %v3303 = vunpack.c.l.b16 %v927
      %v3304 = vunpack.c.h.b16 %v927
      %v3305 = vunpack.c.l.b16 %v928
      %v3306 = vunpack.c.h.b16 %v928
      %v3307 = vunpack.c.l.b16 %v929
      %v3308 = vunpack.c.h.b16 %v929
      %v3309 = vunpack.c.l.b16 %v930
      %v3310 = vunpack.c.h.b16 %v930
      %v3311 = vunpack.c.l.b16 %v931
      %v3312 = vunpack.c.h.b16 %v931
      %v3313 = vunpack.c.l.b16 %v932
      %v3314 = vunpack.c.h.b16 %v932
      %v3315 = vunpack.c.l.b16 %v933
      %v3316 = vunpack.c.h.b16 %v933
      %v3317 = vunpack.c.l.b16 %v934
      %v3318 = vunpack.c.h.b16 %v934
      %v3319 = vunpack.c.l.b16 %v935
      %v3320 = vunpack.c.h.b16 %v935
      %v3321 = vunpack.c.l.b16 %v936
      %v3322 = vunpack.c.h.b16 %v936
      %v3323 = vunpack.c.l.b16 %v937
      %v3324 = vunpack.c.h.b16 %v937
      %v3325 = vunpack.c.l.b16 %v938
      %v3326 = vunpack.c.h.b16 %v938
      %v3327 = vunpack.c.l.b16 %v939
      %v3328 = vunpack.c.h.b16 %v939
      %v3329 = vunpack.c.l.b16 %v940
      %v3330 = vunpack.c.h.b16 %v940
      %v3331 = vunpack.c.l.b16 %v941
      %v3332 = vunpack.c.h.b16 %v941
      %v3333 = vunpack.c.l.b16 %v942
      %v3334 = vunpack.c.h.b16 %v942
      %v3335 = vunpack.c.l.b16 %v943
      %v3336 = vunpack.c.h.b16 %v943
      %v3337 = vunpack.c.l.b16 %v944
      %v3338 = vunpack.c.h.b16 %v944
      %v3339 = vunpack.c.l.b16 %v945
      %v3340 = vunpack.c.h.b16 %v945
      %v3341 = vunpack.c.l.b16 %v946
      %v3342 = vunpack.c.h.b16 %v946
      %v3343 = vunpack.c.l.b16 %v947
      %v3344 = vunpack.c.h.b16 %v947
      %v3345 = vunpack.c.l.b16 %v948
      %v3346 = vunpack.c.h.b16 %v948
      %v3347 = vunpack.c.l.b16 %v949
      %v3348 = vunpack.c.h.b16 %v949
      %v3349 = vunpack.c.l.b16 %v950
      %v3350 = vunpack.c.h.b16 %v950
      %v3351 = vunpack.c.l.b16 %v951
      %v3352 = vunpack.c.h.b16 %v951
      %v3353 = vunpack.c.l.b16 %v952
      %v3354 = vunpack.c.h.b16 %v952
      %v3355 = vunpack.c.l.b16 %v953
      %v3356 = vunpack.c.h.b16 %v953
      %v3357 = vunpack.c.l.b16 %v954
      %v3358 = vunpack.c.h.b16 %v954
      %v3359 = vunpack.c.l.b16 %v955
      %v3360 = vunpack.c.h.b16 %v955
      %v3361 = vunpack.c.l.b16 %v956
      %v3362 = vunpack.c.h.b16 %v956
      %v3363 = vunpack.c.l.b16 %v957
      %v3364 = vunpack.c.h.b16 %v957
      %v3365 = vunpack.c.l.b16 %v958
      %v3366 = vunpack.c.h.b16 %v958
      %v3367 = vunpack.c.l.b16 %v959
      %v3368 = vunpack.c.h.b16 %v959
      %v3369 = vunpack.c.l.b16 %v960
      %v3370 = vunpack.c.h.b16 %v960
      %v3371 = vunpack.c.l.b16 %v961
      %v3372 = vunpack.c.h.b16 %v961
      %v3373 = vunpack.c.l.b16 %v962
      %v3374 = vunpack.c.h.b16 %v962
      %v3375 = vunpack.c.l.b16 %v963
      %v3376 = vunpack.c.h.b16 %v963
      %v3377 = vunpack.c.l.b16 %v964
      %v3378 = vunpack.c.h.b16 %v964
      %v3379 = vunpack.c.l.b16 %v965
      %v3380 = vunpack.c.h.b16 %v965
      %v3381 = vunpack.c.l.b16 %v966
      %v3382 = vunpack.c.h.b16 %v966
      %v3383 = vunpack.c.l.b16 %v967
      %v3384 = vunpack.c.h.b16 %v967
      %v3385 = vunpack.c.l.b16 %v968
      %v3386 = vunpack.c.h.b16 %v968
      %v3387 = vunpack.c.l.b16 %v969
      %v3388 = vunpack.c.h.b16 %v969
      %v3389 = vunpack.c.l.b16 %v970
      %v3390 = vunpack.c.h.b16 %v970
      %v3391 = vunpack.c.l.b16 %v971
      %v3392 = vunpack.c.h.b16 %v971
      %v3393 = vunpack.c.l.b16 %v972
      %v3394 = vunpack.c.h.b16 %v972
      %v3395 = vunpack.c.l.b16 %v973
      %v3396 = vunpack.c.h.b16 %v973
      %v3397 = vunpack.c.l.b16 %v974
      %v3398 = vunpack.c.h.b16 %v974
      %v3399 = vunpack.c.l.b16 %v975
      %v3400 = vunpack.c.h.b16 %v975
      %v3401 = vunpack.c.l.b16 %v976
      %v3402 = vunpack.c.h.b16 %v976
      %v3403 = vunpack.c.l.b16 %v977
      %v3404 = vunpack.c.h.b16 %v977
      %v3405 = vunpack.c.l.b16 %v978
      %v3406 = vunpack.c.h.b16 %v978
      %v3407 = vunpack.c.l.b16 %v979
      %v3408 = vunpack.c.h.b16 %v979
      %v3409 = vunpack.c.l.b16 %v980
      %v3410 = vunpack.c.h.b16 %v980
      %v3411 = vunpack.c.l.b16 %v981
      %v3412 = vunpack.c.h.b16 %v981
      %v3413 = vunpack.c.l.b16 %v982
      %v3414 = vunpack.c.h.b16 %v982
      %v3415 = vunpack.c.l.b16 %v983
      %v3416 = vunpack.c.h.b16 %v983
      %v3417 = vunpack.c.l.b16 %v984
      %v3418 = vunpack.c.h.b16 %v984
      %v3419 = vunpack.c.l.b16 %v985
      %v3420 = vunpack.c.h.b16 %v985
      %v3421 = vunpack.c.l.b16 %v986
      %v3422 = vunpack.c.h.b16 %v986
      %v3423 = vunpack.c.l.b16 %v987
      %v3424 = vunpack.c.h.b16 %v987
      %v3425 = vunpack.c.l.b16 %v988
      %v3426 = vunpack.c.h.b16 %v988
      %v3427 = vunpack.c.l.b16 %v989
      %v3428 = vunpack.c.h.b16 %v989
      %v3429 = vunpack.c.l.b16 %v990
      %v3430 = vunpack.c.h.b16 %v990
      %v3431 = vunpack.c.l.b16 %v991
      %v3432 = vunpack.c.h.b16 %v991
      %v3433 = vunpack.c.l.b16 %v992
      %v3434 = vunpack.c.h.b16 %v992
      %v3435 = vunpack.c.l.b16 %v993
      %v3436 = vunpack.c.h.b16 %v993
      %v3437 = vunpack.c.l.b16 %v994
      %v3438 = vunpack.c.h.b16 %v994
      %v3439 = vunpack.c.l.b16 %v995
      %v3440 = vunpack.c.h.b16 %v995
      %v3441 = vunpack.c.l.b16 %v996
      %v3442 = vunpack.c.h.b16 %v996
      %v3443 = vunpack.c.l.b16 %v997
      %v3444 = vunpack.c.h.b16 %v997
      %v3445 = vunpack.c.l.b16 %v998
      %v3446 = vunpack.c.h.b16 %v998
      %v3447 = vunpack.c.l.b16 %v999
      %v3448 = vunpack.c.h.b16 %v999
      %v3449 = vunpack.c.l.b16 %v1000
      %v3450 = vunpack.c.h.b16 %v1000
      %v3451 = vunpack.c.l.b16 %v1001
      %v3452 = vunpack.c.h.b16 %v1001
      %v3453 = vunpack.c.l.b16 %v1002
      %v3454 = vunpack.c.h.b16 %v1002
      %v3455 = vunpack.c.l.b16 %v1003
      %v3456 = vunpack.c.h.b16 %v1003
      %v3457 = vunpack.c.l.b16 %v1004
      %v3458 = vunpack.c.h.b16 %v1004
      %v3459 = vunpack.c.l.b16 %v1005
      %v3460 = vunpack.c.h.b16 %v1005
      %v3461 = vunpack.c.l.b16 %v1006
      %v3462 = vunpack.c.h.b16 %v1006
      %v3463 = vunpack.c.l.b16 %v1007
      %v3464 = vunpack.c.h.b16 %v1007
      %v3465 = vunpack.c.l.b16 %v1008
      %v3466 = vunpack.c.h.b16 %v1008
      %v3467 = vunpack.c.l.b16 %v1009
      %v3468 = vunpack.c.h.b16 %v1009
      %v3469 = vunpack.c.l.b16 %v1010
      %v3470 = vunpack.c.h.b16 %v1010
      %v3471 = vunpack.c.l.b16 %v1011
      %v3472 = vunpack.c.h.b16 %v1011
      %v3473 = vunpack.c.l.b16 %v1012
      %v3474 = vunpack.c.h.b16 %v1012
      %v3475 = vunpack.c.l.b16 %v1013
      %v3476 = vunpack.c.h.b16 %v1013
      %v3477 = vunpack.c.l.b16 %v1014
      %v3478 = vunpack.c.h.b16 %v1014
      %v3479 = vunpack.c.l.b16 %v1015
      %v3480 = vunpack.c.h.b16 %v1015
      %v3481 = vunpack.c.l.b16 %v1016
      %v3482 = vunpack.c.h.b16 %v1016
      %v3483 = vunpack.c.l.b16 %v1017
      %v3484 = vunpack.c.h.b16 %v1017
      %v3485 = vunpack.c.l.b16 %v1018
      %v3486 = vunpack.c.h.b16 %v1018
      %v3487 = vunpack.c.l.b16 %v1019
      %v3488 = vunpack.c.h.b16 %v1019
      %v3489 = vunpack.c.l.b16 %v1020
      %v3490 = vunpack.c.h.b16 %v1020
      %v3491 = vunpack.c.l.b16 %v1021
      %v3492 = vunpack.c.h.b16 %v1021
      %v3493 = vunpack.c.l.b16 %v1022
      %v3494 = vunpack.c.h.b16 %v1022
      %v3495 = vunpack.c.l.b16 %v1023
      %v3496 = vunpack.c.h.b16 %v1023
      %v3497 = vunpack.c.l.b16 %v1024
      %v3498 = vunpack.c.h.b16 %v1024
      %v3499 = vunpack.c.l.b16 %v1025
      %v3500 = vunpack.c.h.b16 %v1025
      %v3501 = vunpack.c.l.b16 %v1026
      %v3502 = vunpack.c.h.b16 %v1026
      %v3503 = vunpack.c.l.b16 %v1027
      %v3504 = vunpack.c.h.b16 %v1027
      %v3505 = vunpack.c.l.b16 %v1028
      %v3506 = vunpack.c.h.b16 %v1028
      %v3507 = vunpack.c.l.b16 %v1029
      %v3508 = vunpack.c.h.b16 %v1029
      %v3509 = vunpack.c.l.b16 %v1030
      %v3510 = vunpack.c.h.b16 %v1030
      %v3511 = vunpack.c.l.b16 %v1031
      %v3512 = vunpack.c.h.b16 %v1031
      %v3513 = vunpack.c.l.b16 %v1032
      %v3514 = vunpack.c.h.b16 %v1032
      %v3515 = vunpack.c.l.b16 %v1033
      %v3516 = vunpack.c.h.b16 %v1033
      %v3517 = vunpack.c.l.b16 %v1034
      %v3518 = vunpack.c.h.b16 %v1034
      %v3519 = vunpack.c.l.b16 %v1035
      %v3520 = vunpack.c.h.b16 %v1035
      %v3521 = vunpack.c.l.b16 %v1036
      %v3522 = vunpack.c.h.b16 %v1036
      %v3523 = vunpack.c.l.b16 %v1037
      %v3524 = vunpack.c.h.b16 %v1037
      %v3525 = vunpack.c.l.b16 %v1038
      %v3526 = vunpack.c.h.b16 %v1038
      %v3527 = vunpack.c.l.b16 %v1039
      %v3528 = vunpack.c.h.b16 %v1039
      %v3529 = vunpack.c.l.b16 %v1040
      %v3530 = vunpack.c.h.b16 %v1040
      %v3531 = vunpack.c.l.b16 %v1041
      %v3532 = vunpack.c.h.b16 %v1041
      %v3533 = vunpack.c.l.b16 %v1042
      %v3534 = vunpack.c.h.b16 %v1042
      %v3535 = vunpack.c.l.b16 %v1043
      %v3536 = vunpack.c.h.b16 %v1043
      %v3537 = vunpack.c.l.b16 %v1044
      %v3538 = vunpack.c.h.b16 %v1044
      %v3539 = vunpack.c.l.b16 %v1045
      %v3540 = vunpack.c.h.b16 %v1045
      %v3541 = vunpack.c.l.b16 %v1046
      %v3542 = vunpack.c.h.b16 %v1046
      %v3543 = vunpack.c.l.b16 %v1047
      %v3544 = vunpack.c.h.b16 %v1047
      %v3545 = vunpack.c.l.b16 %v1048
      %v3546 = vunpack.c.h.b16 %v1048
      %v3547 = vunpack.c.l.b16 %v1049
      %v3548 = vunpack.c.h.b16 %v1049
      %v3549 = vunpack.c.l.b16 %v1050
      %v3550 = vunpack.c.h.b16 %v1050
      %v3551 = vunpack.c.l.b16 %v1051
      %v3552 = vunpack.c.h.b16 %v1051
      %v3553 = vunpack.c.l.b16 %v1052
      %v3554 = vunpack.c.h.b16 %v1052
      %v3555 = vunpack.c.l.b16 %v1053
      %v3556 = vunpack.c.h.b16 %v1053
      %v3557 = vunpack.c.l.b16 %v1054
      %v3558 = vunpack.c.h.b16 %v1054
      %v3559 = vunpack.c.l.b16 %v1055
      %v3560 = vunpack.c.h.b16 %v1055
      %v3561 = vunpack.c.l.b16 %v1056
      %v3562 = vunpack.c.h.b16 %v1056
      %v3563 = vunpack.c.l.b16 %v1057
      %v3564 = vunpack.c.h.b16 %v1057
      %v3565 = vunpack.c.l.b16 %v1058
      %v3566 = vunpack.c.h.b16 %v1058
      %v3567 = vunpack.c.l.b16 %v1059
      %v3568 = vunpack.c.h.b16 %v1059
      %v3569 = vunpack.c.l.b16 %v1060
      %v3570 = vunpack.c.h.b16 %v1060
      %v3571 = vunpack.c.l.b16 %v1061
      %v3572 = vunpack.c.h.b16 %v1061
      %v3573 = vunpack.c.l.b16 %v1062
      %v3574 = vunpack.c.h.b16 %v1062
      %v3575 = vunpack.c.l.b16 %v1063
      %v3576 = vunpack.c.h.b16 %v1063
      %v3577 = vunpack.c.l.b16 %v1064
      %v3578 = vunpack.c.h.b16 %v1064
      %v3579 = vunpack.c.l.b16 %v1065
      %v3580 = vunpack.c.h.b16 %v1065
      %v3581 = vunpack.c.l.b16 %v1066
      %v3582 = vunpack.c.h.b16 %v1066
      %v3583 = vunpack.c.l.b16 %v1067
      %v3584 = vunpack.c.h.b16 %v1067
      %v3585 = vunpack.c.l.b16 %v1068
      %v3586 = vunpack.c.h.b16 %v1068
      %v3587 = vunpack.c.l.b16 %v1069
      %v3588 = vunpack.c.h.b16 %v1069
      %v3589 = vunpack.c.l.b16 %v1070
      %v3590 = vunpack.c.h.b16 %v1070
      %v3591 = vunpack.c.l.b16 %v1071
      %v3592 = vunpack.c.h.b16 %v1071
      %v3593 = vunpack.c.l.b16 %v1072
      %v3594 = vunpack.c.h.b16 %v1072
      %v3595 = vunpack.c.l.b16 %v1073
      %v3596 = vunpack.c.h.b16 %v1073
      %v3597 = vunpack.c.l.b16 %v1074
      %v3598 = vunpack.c.h.b16 %v1074
      %v3599 = vunpack.c.l.b16 %v1075
      %v3600 = vunpack.c.h.b16 %v1075
      %v3601 = vunpack.c.l.b16 %v1076
      %v3602 = vunpack.c.h.b16 %v1076
      %v3603 = vunpack.c.l.b16 %v1077
      %v3604 = vunpack.c.h.b16 %v1077
      %v3605 = vunpack.c.l.b16 %v1078
      %v3606 = vunpack.c.h.b16 %v1078
      %v3607 = vunpack.c.l.b16 %v1079
      %v3608 = vunpack.c.h.b16 %v1079
      %v3609 = vunpack.c.l.b16 %v1080
      %v3610 = vunpack.c.h.b16 %v1080
      %v3611 = vunpack.c.l.b16 %v1081
      %v3612 = vunpack.c.h.b16 %v1081
      %v3613 = vunpack.c.l.b16 %v1082
      %v3614 = vunpack.c.h.b16 %v1082
      %v3615 = vunpack.c.l.b16 %v1083
      %v3616 = vunpack.c.h.b16 %v1083
      %v3617 = vunpack.c.l.b16 %v1084
      %v3618 = vunpack.c.h.b16 %v1084
      %v3619 = vunpack.c.l.b16 %v1085
      %v3620 = vunpack.c.h.b16 %v1085
      %v3621 = vunpack.c.l.b16 %v1086
      %v3622 = vunpack.c.h.b16 %v1086
      %v3623 = vunpack.c.l.b16 %v1087
      %v3624 = vunpack.c.h.b16 %v1087
      %v3625 = vunpack.c.l.b16 %v1088
      %v3626 = vunpack.c.h.b16 %v1088
      %v3627 = vunpack.c.l.b16 %v1089
      %v3628 = vunpack.c.h.b16 %v1089
      %v3629 = vunpack.c.l.b16 %v1090
      %v3630 = vunpack.c.h.b16 %v1090
      %v3631 = vunpack.c.l.b16 %v1091
      %v3632 = vunpack.c.h.b16 %v1091
      %v3633 = vunpack.c.l.b16 %v1092
      %v3634 = vunpack.c.h.b16 %v1092
      %v3635 = vunpack.c.l.b16 %v1093
      %v3636 = vunpack.c.h.b16 %v1093
      %v3637 = vunpack.c.l.b16 %v1094
      %v3638 = vunpack.c.h.b16 %v1094
      %v3639 = vunpack.c.l.b16 %v1095
      %v3640 = vunpack.c.h.b16 %v1095
      %v3641 = vunpack.c.l.b16 %v1096
      %v3642 = vunpack.c.h.b16 %v1096
      %v3643 = vunpack.c.l.b16 %v1097
      %v3644 = vunpack.c.h.b16 %v1097
      %v3645 = vunpack.c.l.b16 %v1098
      %v3646 = vunpack.c.h.b16 %v1098
      %v3647 = vunpack.c.l.b16 %v1099
      %v3648 = vunpack.c.h.b16 %v1099
      %v3649 = vunpack.c.l.b16 %v1100
      %v3650 = vunpack.c.h.b16 %v1100
      %v3651 = vunpack.c.l.b16 %v1101
      %v3652 = vunpack.c.h.b16 %v1101
      %v3653 = vunpack.c.l.b16 %v1102
      %v3654 = vunpack.c.h.b16 %v1102
      %v3655 = vunpack.c.l.b16 %v1103
      %v3656 = vunpack.c.h.b16 %v1103
      %v3657 = vunpack.c.l.b16 %v1104
      %v3658 = vunpack.c.h.b16 %v1104
      %v3659 = vunpack.c.l.b16 %v1105
      %v3660 = vunpack.c.h.b16 %v1105
      %v3661 = vunpack.c.l.b16 %v1106
      %v3662 = vunpack.c.h.b16 %v1106
      %v3663 = vunpack.c.l.b16 %v1107
      %v3664 = vunpack.c.h.b16 %v1107
      %v3665 = vunpack.c.l.b16 %v1108
      %v3666 = vunpack.c.h.b16 %v1108
      %v3667 = vunpack.c.l.b16 %v1109
      %v3668 = vunpack.c.h.b16 %v1109
      %v3669 = vunpack.c.l.b16 %v1110
      %v3670 = vunpack.c.h.b16 %v1110
      %v3671 = vunpack.c.l.b16 %v1111
      %v3672 = vunpack.c.h.b16 %v1111
      %v3673 = vunpack.c.l.b16 %v1112
      %v3674 = vunpack.c.h.b16 %v1112
      %v3675 = vunpack.c.l.b16 %v1113
      %v3676 = vunpack.c.h.b16 %v1113
      %v3677 = vpack.c.b16 %v2113, %v2109
      %v3678 = vpack.c.b16 %v2114, %v2110
      %v3679 = vpack.c.b16 %v2115, %v2111
      %v3680 = vpack.c.b16 %v2116, %v2112
      %v3681 = vpack.c.b16 %v2121, %v2117
      %v3682 = vpack.c.b16 %v2122, %v2118
      %v3683 = vpack.c.b16 %v2123, %v2119
      %v3684 = vpack.c.b16 %v2124, %v2120
      %v3685 = vpack.c.b16 %v2129, %v2125
      %v3686 = vpack.c.b16 %v2130, %v2126
      %v3687 = vpack.c.b16 %v2131, %v2127
      %v3688 = vpack.c.b16 %v2132, %v2128
      %v3689 = vpack.c.b16 %v2137, %v2133
      %v3690 = vpack.c.b16 %v2138, %v2134
      %v3691 = vpack.c.b16 %v2139, %v2135
      %v3692 = vpack.c.b16 %v2140, %v2136
      %v3693 = vpack.c.b16 %v2145, %v2141
      %v3694 = vpack.c.b16 %v2146, %v2142
      %v3695 = vpack.c.b16 %v2147, %v2143
      %v3696 = vpack.c.b16 %v2148, %v2144
      %v3697 = vpack.c.b16 %v2153, %v2149
      %v3698 = vpack.c.b16 %v2154, %v2150
      %v3699 = vpack.c.b16 %v2155, %v2151
      %v3700 = vpack.c.b16 %v2156, %v2152
      %v3701 = vpack.c.b16 %v2161, %v2157
      %v3702 = vpack.c.b16 %v2162, %v2158
      %v3703 = vpack.c.b16 %v2163, %v2159
      %v3704 = vpack.c.b16 %v2164, %v2160
      %v3705 = vpack.c.b16 %v2169, %v2165
      %v3706 = vpack.c.b16 %v2170, %v2166
      %v3707 = vpack.c.b16 %v2171, %v2167
      %v3708 = vpack.c.b16 %v2172, %v2168
      %v3709 = vpack.c.b16 %v2177, %v2173
      %v3710 = vpack.c.b16 %v2178, %v2174
      %v3711 = vpack.c.b16 %v2179, %v2175
      %v3712 = vpack.c.b16 %v2180, %v2176
      %v3713 = vpack.c.b16 %v2185, %v2181
      %v3714 = vpack.c.b16 %v2186, %v2182
      %v3715 = vpack.c.b16 %v2187, %v2183
      %v3716 = vpack.c.b16 %v2188, %v2184
      %v3717 = vpack.c.b16 %v2193, %v2189
      %v3718 = vpack.c.b16 %v2194, %v2190
      %v3719 = vpack.c.b16 %v2195, %v2191
      %v3720 = vpack.c.b16 %v2196, %v2192
      %v3721 = vpack.c.b16 %v2201, %v2197
      %v3722 = vpack.c.b16 %v2202, %v2198
      %v3723 = vpack.c.b16 %v2203, %v2199
      %v3724 = vpack.c.b16 %v2204, %v2200
      %v3725 = vpack.c.b16 %v2209, %v2205
      %v3726 = vpack.c.b16 %v2210, %v2206
      %v3727 = vpack.c.b16 %v2211, %v2207
      %v3728 = vpack.c.b16 %v2212, %v2208
      %v3729 = vpack.c.b16 %v2217, %v2213
      %v3730 = vpack.c.b16 %v2218, %v2214
      %v3731 = vpack.c.b16 %v2219, %v2215
      %v3732 = vpack.c.b16 %v2220, %v2216
      %v3733 = vpack.c.b16 %v2225, %v2221
      %v3734 = vpack.c.b16 %v2226, %v2222
      %v3735 = vpack.c.b16 %v2227, %v2223
      %v3736 = vpack.c.b16 %v2228, %v2224
      %v3737 = vpack.c.b16 %v2233, %v2229
      %v3738 = vpack.c.b16 %v2234, %v2230
      %v3739 = vpack.c.b16 %v2235, %v2231
      %v3740 = vpack.c.b16 %v2236, %v2232
      %v3741 = vpack.c.b16 %v2241, %v2237
      %v3742 = vpack.c.b16 %v2242, %v2238
      %v3743 = vpack.c.b16 %v2243, %v2239
      %v3744 = vpack.c.b16 %v2244, %v2240
      %v3745 = vpack.c.b16 %v2249, %v2245
      %v3746 = vpack.c.b16 %v2250, %v2246
      %v3747 = vpack.c.b16 %v2251, %v2247
      %v3748 = vpack.c.b16 %v2252, %v2248
      %v3749 = vpack.c.b16 %v2257, %v2253
      %v3750 = vpack.c.b16 %v2258, %v2254
      %v3751 = vpack.c.b16 %v2259, %v2255
      %v3752 = vpack.c.b16 %v2260, %v2256
      %v3753 = vpack.c.b16 %v2265, %v2261
      %v3754 = vpack.c.b16 %v2266, %v2262
      %v3755 = vpack.c.b16 %v2267, %v2263
      %v3756 = vpack.c.b16 %v2268, %v2264
      %v3757 = vpack.c.b16 %v2273, %v2269
      %v3758 = vpack.c.b16 %v2274, %v2270
      %v3759 = vpack.c.b16 %v2275, %v2271
      %v3760 = vpack.c.b16 %v2276, %v2272
      %v3761 = vpack.c.b16 %v2281, %v2277
      %v3762 = vpack.c.b16 %v2282, %v2278
      %v3763 = vpack.c.b16 %v2283, %v2279
      %v3764 = vpack.c.b16 %v2284, %v2280
      %v3765 = vpack.c.b16 %v2289, %v2285
      %v3766 = vpack.c.b16 %v2290, %v2286
      %v3767 = vpack.c.b16 %v2291, %v2287
      %v3768 = vpack.c.b16 %v2292, %v2288
      %v3769 = vpack.c.b16 %v2297, %v2293
      %v3770 = vpack.c.b16 %v2298, %v2294
      %v3771 = vpack.c.b16 %v2299, %v2295
      %v3772 = vpack.c.b16 %v2300, %v2296
      %v3773 = vpack.c.b16 %v2305, %v2301
      %v3774 = vpack.c.b16 %v2306, %v2302
      %v3775 = vpack.c.b16 %v2307, %v2303
      %v3776 = vpack.c.b16 %v2308, %v2304
      %v3777 = vpack.c.b16 %v2313, %v2309
      %v3778 = vpack.c.b16 %v2314, %v2310
      %v3779 = vpack.c.b16 %v2315, %v2311
      %v3780 = vpack.c.b16 %v2316, %v2312
      %v3781 = vpack.c.b16 %v2321, %v2317
      %v3782 = vpack.c.b16 %v2322, %v2318
      %v3783 = vpack.c.b16 %v2323, %v2319
      %v3784 = vpack.c.b16 %v2324, %v2320
      %v3785 = vpack.c.b16 %v2329, %v2325
      %v3786 = vpack.c.b16 %v2330, %v2326
      %v3787 = vpack.c.b16 %v2331, %v2327
      %v3788 = vpack.c.b16 %v2332, %v2328
      %v3789 = vpack.c.b16 %v2337, %v2333
      %v3790 = vpack.c.b16 %v2338, %v2334
      %v3791 = vpack.c.b16 %v2339, %v2335
      %v3792 = vpack.c.b16 %v2340, %v2336
      %v3793 = vpack.c.b16 %v2345, %v2341
      %v3794 = vpack.c.b16 %v2346, %v2342
      %v3795 = vpack.c.b16 %v2347, %v2343
      %v3796 = vpack.c.b16 %v2348, %v2344
      %v3797 = vpack.c.b16 %v2353, %v2349
      %v3798 = vpack.c.b16 %v2354, %v2350
      %v3799 = vpack.c.b16 %v2355, %v2351
      %v3800 = vpack.c.b16 %v2356, %v2352
      %v3801 = vpack.c.b16 %v2361, %v2357
      %v3802 = vpack.c.b16 %v2362, %v2358
      %v3803 = vpack.c.b16 %v2363, %v2359
      %v3804 = vpack.c.b16 %v2364, %v2360
      %v3805 = vpack.c.b16 %v2369, %v2365
      %v3806 = vpack.c.b16 %v2370, %v2366
      %v3807 = vpack.c.b16 %v2371, %v2367
      %v3808 = vpack.c.b16 %v2372, %v2368
      %v3809 = vpack.c.b16 %v2377, %v2373
      %v3810 = vpack.c.b16 %v2378, %v2374
      %v3811 = vpack.c.b16 %v2379, %v2375
      %v3812 = vpack.c.b16 %v2380, %v2376
      %v3813 = vpack.c.b16 %v2385, %v2381
      %v3814 = vpack.c.b16 %v2386, %v2382
      %v3815 = vpack.c.b16 %v2387, %v2383
      %v3816 = vpack.c.b16 %v2388, %v2384
      %v3817 = vpack.c.b16 %v2393, %v2389
      %v3818 = vpack.c.b16 %v2394, %v2390
      %v3819 = vpack.c.b16 %v2395, %v2391
      %v3820 = vpack.c.b16 %v2396, %v2392
      %v3821 = vpack.c.b16 %v2401, %v2397
      %v3822 = vpack.c.b16 %v2402, %v2398
      %v3823 = vpack.c.b16 %v2403, %v2399
      %v3824 = vpack.c.b16 %v2404, %v2400
      %v3825 = vpack.c.b16 %v2409, %v2405
      %v3826 = vpack.c.b16 %v2410, %v2406
      %v3827 = vpack.c.b16 %v2411, %v2407
      %v3828 = vpack.c.b16 %v2412, %v2408
      %v3829 = vpack.c.b16 %v2417, %v2413
      %v3830 = vpack.c.b16 %v2418, %v2414
      %v3831 = vpack.c.b16 %v2419, %v2415
      %v3832 = vpack.c.b16 %v2420, %v2416
      %v3833 = vpack.c.b16 %v2425, %v2421
      %v3834 = vpack.c.b16 %v2426, %v2422
      %v3835 = vpack.c.b16 %v2427, %v2423
      %v3836 = vpack.c.b16 %v2428, %v2424
      %v3837 = vpack.c.b16 %v2433, %v2429
      %v3838 = vpack.c.b16 %v2434, %v2430
      %v3839 = vpack.c.b16 %v2435, %v2431
      %v3840 = vpack.c.b16 %v2436, %v2432
      %v3841 = vpack.c.b16 %v2441, %v2437
      %v3842 = vpack.c.b16 %v2442, %v2438
      %v3843 = vpack.c.b16 %v2443, %v2439
      %v3844 = vpack.c.b16 %v2444, %v2440
      %v3845 = vpack.c.b16 %v2449, %v2445
      %v3846 = vpack.c.b16 %v2450, %v2446
      %v3847 = vpack.c.b16 %v2451, %v2447
      %v3848 = vpack.c.b16 %v2452, %v2448
      %v3849 = vpack.c.b16 %v2457, %v2453
      %v3850 = vpack.c.b16 %v2458, %v2454
      %v3851 = vpack.c.b16 %v2459, %v2455
      %v3852 = vpack.c.b16 %v2460, %v2456
      %v3853 = vpack.c.b16 %v2465, %v2461
      %v3854 = vpack.c.b16 %v2466, %v2462
      %v3855 = vpack.c.b16 %v2467, %v2463
      %v3856 = vpack.c.b16 %v2468, %v2464
      %v3857 = vpack.c.b16 %v2473, %v2469
      %v3858 = vpack.c.b16 %v2474, %v2470
      %v3859 = vpack.c.b16 %v2475, %v2471
      %v3860 = vpack.c.b16 %v2476, %v2472
      %v3861 = vpack.c.b16 %v2481, %v2477
      %v3862 = vpack.c.b16 %v2482, %v2478
      %v3863 = vpack.c.b16 %v2483, %v2479
      %v3864 = vpack.c.b16 %v2484, %v2480
      %v3865 = vpack.c.b16 %v2489, %v2485
      %v3866 = vpack.c.b16 %v2490, %v2486
      %v3867 = vpack.c.b16 %v2491, %v2487
      %v3868 = vpack.c.b16 %v2492, %v2488
      %v3869 = vpack.c.b16 %v2497, %v2493
      %v3870 = vpack.c.b16 %v2498, %v2494
      %v3871 = vpack.c.b16 %v2499, %v2495
      %v3872 = vpack.c.b16 %v2500, %v2496
      %v3873 = vpack.c.b16 %v2505, %v2501
      %v3874 = vpack.c.b16 %v2506, %v2502
      %v3875 = vpack.c.b16 %v2507, %v2503
      %v3876 = vpack.c.b16 %v2508, %v2504
      %v3877 = vpack.c.b16 %v2513, %v2509
      %v3878 = vpack.c.b16 %v2514, %v2510
      %v3879 = vpack.c.b16 %v2515, %v2511
      %v3880 = vpack.c.b16 %v2516, %v2512
      %v3881 = vpack.c.b16 %v2521, %v2517
      %v3882 = vpack.c.b16 %v2522, %v2518
      %v3883 = vpack.c.b16 %v2523, %v2519
      %v3884 = vpack.c.b16 %v2524, %v2520
      %v3885 = vpack.c.b16 %v2529, %v2525
      %v3886 = vpack.c.b16 %v2530, %v2526
      %v3887 = vpack.c.b16 %v2531, %v2527
      %v3888 = vpack.c.b16 %v2532, %v2528
      %v3889 = vpack.c.b16 %v2537, %v2533
      %v3890 = vpack.c.b16 %v2538, %v2534
      %v3891 = vpack.c.b16 %v2539, %v2535
      %v3892 = vpack.c.b16 %v2540, %v2536
      %v3893 = vpack.c.b16 %v2545, %v2541
      %v3894 = vpack.c.b16 %v2546, %v2542
      %v3895 = vpack.c.b16 %v2547, %v2543
      %v3896 = vpack.c.b16 %v2548, %v2544
      %v3897 = vpack.c.b16 %v2553, %v2549
      %v3898 = vpack.c.b16 %v2554, %v2550
      %v3899 = vpack.c.b16 %v2555, %v2551
      %v3900 = vpack.c.b16 %v2556, %v2552
      %v3901 = vpack.c.b16 %v2561, %v2557
      %v3902 = vpack.c.b16 %v2562, %v2558
      %v3903 = vpack.c.b16 %v2563, %v2559
      %v3904 = vpack.c.b16 %v2564, %v2560
      %v3905 = vpack.c.b16 %v2569, %v2565
      %v3906 = vpack.c.b16 %v2570, %v2566
      %v3907 = vpack.c.b16 %v2571, %v2567
      %v3908 = vpack.c.b16 %v2572, %v2568
      %v3909 = vpack.c.b16 %v2577, %v2573
      %v3910 = vpack.c.b16 %v2578, %v2574
      %v3911 = vpack.c.b16 %v2579, %v2575
      %v3912 = vpack.c.b16 %v2580, %v2576
      %v3913 = vpack.c.b16 %v2585, %v2581
      %v3914 = vpack.c.b16 %v2586, %v2582
      %v3915 = vpack.c.b16 %v2587, %v2583
      %v3916 = vpack.c.b16 %v2588, %v2584
      %v3917 = vpack.c.b16 %v2593, %v2589
      %v3918 = vpack.c.b16 %v2594, %v2590
      %v3919 = vpack.c.b16 %v2595, %v2591
      %v3920 = vpack.c.b16 %v2596, %v2592
      %v3921 = vpack.c.b16 %v2601, %v2597
      %v3922 = vpack.c.b16 %v2602, %v2598
      %v3923 = vpack.c.b16 %v2603, %v2599
      %v3924 = vpack.c.b16 %v2604, %v2600
      %v3925 = vpack.c.b16 %v2609, %v2605
      %v3926 = vpack.c.b16 %v2610, %v2606
      %v3927 = vpack.c.b16 %v2611, %v2607
      %v3928 = vpack.c.b16 %v2612, %v2608
      %v3929 = vpack.c.b16 %v2617, %v2613
      %v3930 = vpack.c.b16 %v2618, %v2614
      %v3931 = vpack.c.b16 %v2619, %v2615
      %v3932 = vpack.c.b16 %v2620, %v2616
      %v3933 = vpack.c.b16 %v2625, %v2621
      %v3934 = vpack.c.b16 %v2626, %v2622
      %v3935 = vpack.c.b16 %v2627, %v2623
      %v3936 = vpack.c.b16 %v2628, %v2624
      %v3937 = vpack.c.b16 %v2633, %v2629
      %v3938 = vpack.c.b16 %v2634, %v2630
      %v3939 = vpack.c.b16 %v2635, %v2631
      %v3940 = vpack.c.b16 %v2636, %v2632
      %v3941 = vpack.c.b16 %v2641, %v2637
      %v3942 = vpack.c.b16 %v2642, %v2638
      %v3943 = vpack.c.b16 %v2643, %v2639
      %v3944 = vpack.c.b16 %v2644, %v2640
      %v3945 = vpack.c.b16 %v2649, %v2645
      %v3946 = vpack.c.b16 %v2650, %v2646
      %v3947 = vpack.c.b16 %v2651, %v2647
      %v3948 = vpack.c.b16 %v2652, %v2648
      %v3949 = vpack.c.b16 %v2657, %v2653
      %v3950 = vpack.c.b16 %v2658, %v2654
      %v3951 = vpack.c.b16 %v2659, %v2655
      %v3952 = vpack.c.b16 %v2660, %v2656
      %v3953 = vpack.c.b16 %v2665, %v2661
      %v3954 = vpack.c.b16 %v2666, %v2662
      %v3955 = vpack.c.b16 %v2667, %v2663
      %v3956 = vpack.c.b16 %v2668, %v2664
      %v3957 = vpack.c.b16 %v2673, %v2669
      %v3958 = vpack.c.b16 %v2674, %v2670
      %v3959 = vpack.c.b16 %v2675, %v2671
      %v3960 = vpack.c.b16 %v2676, %v2672
      %v3961 = vpack.c.b16 %v2681, %v2677
      %v3962 = vpack.c.b16 %v2682, %v2678
      %v3963 = vpack.c.b16 %v2683, %v2679
      %v3964 = vpack.c.b16 %v2684, %v2680
      %v3965 = vpack.c.b16 %v2689, %v2685
      %v3966 = vpack.c.b16 %v2690, %v2686
      %v3967 = vpack.c.b16 %v2691, %v2687
      %v3968 = vpack.c.b16 %v2692, %v2688
      %v3969 = vpack.c.b16 %v2697, %v2693
      %v3970 = vpack.c.b16 %v2698, %v2694
      %v3971 = vpack.c.b16 %v2699, %v2695
      %v3972 = vpack.c.b16 %v2700, %v2696
      %v3973 = vpack.c.b16 %v2705, %v2701
      %v3974 = vpack.c.b16 %v2706, %v2702
      %v3975 = vpack.c.b16 %v2707, %v2703
      %v3976 = vpack.c.b16 %v2708, %v2704
      %v3977 = vpack.c.b16 %v2713, %v2709
      %v3978 = vpack.c.b16 %v2714, %v2710
      %v3979 = vpack.c.b16 %v2715, %v2711
      %v3980 = vpack.c.b16 %v2716, %v2712
      %v3981 = vpack.c.b16 %v2721, %v2717
      %v3982 = vpack.c.b16 %v2722, %v2718
      %v3983 = vpack.c.b16 %v2723, %v2719
      %v3984 = vpack.c.b16 %v2724, %v2720
      %v3985 = vpack.c.b16 %v2729, %v2725
      %v3986 = vpack.c.b16 %v2730, %v2726
      %v3987 = vpack.c.b16 %v2731, %v2727
      %v3988 = vpack.c.b16 %v2732, %v2728
      %v3989 = vpack.c.b16 %v2737, %v2733
      %v3990 = vpack.c.b16 %v2738, %v2734
      %v3991 = vpack.c.b16 %v2739, %v2735
      %v3992 = vpack.c.b16 %v2740, %v2736
      %v3993 = vpack.c.b16 %v2745, %v2741
      %v3994 = vpack.c.b16 %v2746, %v2742
      %v3995 = vpack.c.b16 %v2747, %v2743
      %v3996 = vpack.c.b16 %v2748, %v2744
      %v3997 = vpack.c.b16 %v2753, %v2749
      %v3998 = vpack.c.b16 %v2754, %v2750
      %v3999 = vpack.c.b16 %v2755, %v2751
      %v4000 = vpack.c.b16 %v2756, %v2752
      %v4001 = vpack.c.b16 %v2761, %v2757
      %v4002 = vpack.c.b16 %v2762, %v2758
      %v4003 = vpack.c.b16 %v2763, %v2759
      %v4004 = vpack.c.b16 %v2764, %v2760
      %v4005 = vpack.c.b16 %v2769, %v2765
      %v4006 = vpack.c.b16 %v2770, %v2766
      %v4007 = vpack.c.b16 %v2771, %v2767
      %v4008 = vpack.c.b16 %v2772, %v2768
      %v4009 = vpack.c.b16 %v2777, %v2773
      %v4010 = vpack.c.b16 %v2778, %v2774
      %v4011 = vpack.c.b16 %v2779, %v2775
      %v4012 = vpack.c.b16 %v2780, %v2776
      %v4013 = vpack.c.b16 %v2785, %v2781
      %v4014 = vpack.c.b16 %v2786, %v2782
      %v4015 = vpack.c.b16 %v2787, %v2783
      %v4016 = vpack.c.b16 %v2788, %v2784
      %v4017 = vpack.c.b16 %v2793, %v2789
      %v4018 = vpack.c.b16 %v2794, %v2790
      %v4019 = vpack.c.b16 %v2795, %v2791
      %v4020 = vpack.c.b16 %v2796, %v2792
      %v4021 = vpack.c.b16 %v2801, %v2797
      %v4022 = vpack.c.b16 %v2802, %v2798
      %v4023 = vpack.c.b16 %v2803, %v2799
      %v4024 = vpack.c.b16 %v2804, %v2800
      %v4025 = vpack.c.b16 %v2809, %v2805
      %v4026 = vpack.c.b16 %v2810, %v2806
      %v4027 = vpack.c.b16 %v2811, %v2807
      %v4028 = vpack.c.b16 %v2812, %v2808
      %v4029 = vpack.c.b16 %v2817, %v2813
      %v4030 = vpack.c.b16 %v2818, %v2814
      %v4031 = vpack.c.b16 %v2819, %v2815
      %v4032 = vpack.c.b16 %v2820, %v2816
      %v4033 = vpack.c.b16 %v2825, %v2821
      %v4034 = vpack.c.b16 %v2826, %v2822
      %v4035 = vpack.c.b16 %v2827, %v2823
      %v4036 = vpack.c.b16 %v2828, %v2824
      %v4037 = vpack.c.b16 %v2833, %v2829
      %v4038 = vpack.c.b16 %v2834, %v2830
      %v4039 = vpack.c.b16 %v2835, %v2831
      %v4040 = vpack.c.b16 %v2836, %v2832
      %v4041 = vpack.c.b16 %v2841, %v2837
      %v4042 = vpack.c.b16 %v2842, %v2838
      %v4043 = vpack.c.b16 %v2843, %v2839
      %v4044 = vpack.c.b16 %v2844, %v2840
      %v4045 = vpack.c.b16 %v2849, %v2845
      %v4046 = vpack.c.b16 %v2850, %v2846
      %v4047 = vpack.c.b16 %v2851, %v2847
      %v4048 = vpack.c.b16 %v2852, %v2848
      %v4049 = vpack.c.b16 %v2857, %v2853
      %v4050 = vpack.c.b16 %v2858, %v2854
      %v4051 = vpack.c.b16 %v2859, %v2855
      %v4052 = vpack.c.b16 %v2860, %v2856
      %v4053 = vpack.c.b16 %v2865, %v2861
      %v4054 = vpack.c.b16 %v2866, %v2862
      %v4055 = vpack.c.b16 %v2867, %v2863
      %v4056 = vpack.c.b16 %v2868, %v2864
      %v4057 = vpack.c.b16 %v2873, %v2869
      %v4058 = vpack.c.b16 %v2874, %v2870
      %v4059 = vpack.c.b16 %v2875, %v2871
      %v4060 = vpack.c.b16 %v2876, %v2872
      %v4061 = vpack.c.b16 %v2881, %v2877
      %v4062 = vpack.c.b16 %v2882, %v2878
      %v4063 = vpack.c.b16 %v2883, %v2879
      %v4064 = vpack.c.b16 %v2884, %v2880
      %v4065 = vpack.c.b16 %v2889, %v2885
      %v4066 = vpack.c.b16 %v2890, %v2886
      %v4067 = vpack.c.b16 %v2891, %v2887
      %v4068 = vpack.c.b16 %v2892, %v2888
      %v4069 = vpack.c.b16 %v2897, %v2893
      %v4070 = vpack.c.b16 %v2898, %v2894
      %v4071 = vpack.c.b16 %v2899, %v2895
      %v4072 = vpack.c.b16 %v2900, %v2896
      %v4073 = vpack.c.b16 %v2905, %v2901
      %v4074 = vpack.c.b16 %v2906, %v2902
      %v4075 = vpack.c.b16 %v2907, %v2903
      %v4076 = vpack.c.b16 %v2908, %v2904
      %v4077 = vpack.c.b16 %v2913, %v2909
      %v4078 = vpack.c.b16 %v2914, %v2910
      %v4079 = vpack.c.b16 %v2915, %v2911
      %v4080 = vpack.c.b16 %v2916, %v2912
      %v4081 = vpack.c.b16 %v2921, %v2917
      %v4082 = vpack.c.b16 %v2922, %v2918
      %v4083 = vpack.c.b16 %v2923, %v2919
      %v4084 = vpack.c.b16 %v2924, %v2920
      %v4085 = vpack.c.b16 %v2929, %v2925
      %v4086 = vpack.c.b16 %v2930, %v2926
      %v4087 = vpack.c.b16 %v2931, %v2927
      %v4088 = vpack.c.b16 %v2932, %v2928
      %v4089 = vpack.c.b16 %v2937, %v2933
      %v4090 = vpack.c.b16 %v2938, %v2934
      %v4091 = vpack.c.b16 %v2939, %v2935
      %v4092 = vpack.c.b16 %v2940, %v2936
      %v4093 = vpack.c.b16 %v2945, %v2941
      %v4094 = vpack.c.b16 %v2946, %v2942
      %v4095 = vpack.c.b16 %v2947, %v2943
      %v4096 = vpack.c.b16 %v2948, %v2944
      %v4097 = vpack.c.b16 %v2953, %v2949
      %v4098 = vpack.c.b16 %v2954, %v2950
      %v4099 = vpack.c.b16 %v2955, %v2951
      %v4100 = vpack.c.b16 %v2956, %v2952
      %v4101 = vpack.c.b16 %v2961, %v2957
      %v4102 = vpack.c.b16 %v2962, %v2958
      %v4103 = vpack.c.b16 %v2963, %v2959
      %v4104 = vpack.c.b16 %v2964, %v2960
      %v4105 = vpack.c.b16 %v2969, %v2965
      %v4106 = vpack.c.b16 %v2970, %v2966
      %v4107 = vpack.c.b16 %v2971, %v2967
      %v4108 = vpack.c.b16 %v2972, %v2968
      %v4109 = vpack.c.b16 %v2977, %v2973
      %v4110 = vpack.c.b16 %v2978, %v2974
      %v4111 = vpack.c.b16 %v2979, %v2975
      %v4112 = vpack.c.b16 %v2980, %v2976
      %v4113 = vpack.c.b16 %v2985, %v2981
      %v4114 = vpack.c.b16 %v2986, %v2982
      %v4115 = vpack.c.b16 %v2987, %v2983
      %v4116 = vpack.c.b16 %v2988, %v2984
      %v4117 = vpack.c.b16 %v2993, %v2989
      %v4118 = vpack.c.b16 %v2994, %v2990
      %v4119 = vpack.c.b16 %v2995, %v2991
      %v4120 = vpack.c.b16 %v2996, %v2992
      %v4121 = vpack.c.b16 %v3001, %v2997
      %v4122 = vpack.c.b16 %v3002, %v2998
      %v4123 = vpack.c.b16 %v3003, %v2999
      %v4124 = vpack.c.b16 %v3004, %v3000
      %v4125 = vpack.c.b16 %v3009, %v3005
      %v4126 = vpack.c.b16 %v3010, %v3006
      %v4127 = vpack.c.b16 %v3011, %v3007
      %v4128 = vpack.c.b16 %v3012, %v3008
      %v4129 = vpack.c.b16 %v3017, %v3013
      %v4130 = vpack.c.b16 %v3018, %v3014
      %v4131 = vpack.c.b16 %v3019, %v3015
      %v4132 = vpack.c.b16 %v3020, %v3016
      %v4133 = vpack.c.b16 %v3025, %v3021
      %v4134 = vpack.c.b16 %v3026, %v3022
      %v4135 = vpack.c.b16 %v3027, %v3023
      %v4136 = vpack.c.b16 %v3028, %v3024
      %v4137 = vpack.c.b16 %v3033, %v3029
      %v4138 = vpack.c.b16 %v3034, %v3030
      %v4139 = vpack.c.b16 %v3035, %v3031
      %v4140 = vpack.c.b16 %v3036, %v3032
      %v4141 = vpack.c.b16 %v3041, %v3037
      %v4142 = vpack.c.b16 %v3042, %v3038
      %v4143 = vpack.c.b16 %v3043, %v3039
      %v4144 = vpack.c.b16 %v3044, %v3040
      %v4145 = vpack.c.b16 %v3049, %v3045
      %v4146 = vpack.c.b16 %v3050, %v3046
      %v4147 = vpack.c.b16 %v3051, %v3047
      %v4148 = vpack.c.b16 %v3052, %v3048
      %v4149 = vpack.c.b16 %v3057, %v3053
      %v4150 = vpack.c.b16 %v3058, %v3054
      %v4151 = vpack.c.b16 %v3059, %v3055
      %v4152 = vpack.c.b16 %v3060, %v3056
      %v4153 = vpack.c.b16 %v3065, %v3061
      %v4154 = vpack.c.b16 %v3066, %v3062
      %v4155 = vpack.c.b16 %v3067, %v3063
      %v4156 = vpack.c.b16 %v3068, %v3064
      %v4157 = vpack.c.b16 %v3073, %v3069
      %v4158 = vpack.c.b16 %v3074, %v3070
      %v4159 = vpack.c.b16 %v3075, %v3071
      %v4160 = vpack.c.b16 %v3076, %v3072
      %v4161 = vpack.c.b16 %v3081, %v3077
      %v4162 = vpack.c.b16 %v3082, %v3078
      %v4163 = vpack.c.b16 %v3083, %v3079
      %v4164 = vpack.c.b16 %v3084, %v3080
      %v4165 = vpack.c.b16 %v3089, %v3085
      %v4166 = vpack.c.b16 %v3090, %v3086
      %v4167 = vpack.c.b16 %v3091, %v3087
      %v4168 = vpack.c.b16 %v3092, %v3088
      %v4169 = vpack.c.b16 %v3097, %v3093
      %v4170 = vpack.c.b16 %v3098, %v3094
      %v4171 = vpack.c.b16 %v3099, %v3095
      %v4172 = vpack.c.b16 %v3100, %v3096
      %v4173 = vpack.c.b16 %v3105, %v3101
      %v4174 = vpack.c.b16 %v3106, %v3102
      %v4175 = vpack.c.b16 %v3107, %v3103
      %v4176 = vpack.c.b16 %v3108, %v3104
      %v4177 = vpack.c.b16 %v3113, %v3109
      %v4178 = vpack.c.b16 %v3114, %v3110
      %v4179 = vpack.c.b16 %v3115, %v3111
      %v4180 = vpack.c.b16 %v3116, %v3112
      %v4181 = vpack.c.b16 %v3121, %v3117
      %v4182 = vpack.c.b16 %v3122, %v3118
      %v4183 = vpack.c.b16 %v3123, %v3119
      %v4184 = vpack.c.b16 %v3124, %v3120
      %v4185 = vpack.c.b16 %v3129, %v3125
      %v4186 = vpack.c.b16 %v3130, %v3126
      %v4187 = vpack.c.b16 %v3131, %v3127
      %v4188 = vpack.c.b16 %v3132, %v3128
      %v4189 = vpack.c.b16 %v3137, %v3133
      %v4190 = vpack.c.b16 %v3138, %v3134
      %v4191 = vpack.c.b16 %v3139, %v3135
      %v4192 = vpack.c.b16 %v3140, %v3136
      %v4193 = vpack.c.b16 %v3145, %v3141
      %v4194 = vpack.c.b16 %v3146, %v3142
      %v4195 = vpack.c.b16 %v3147, %v3143
      %v4196 = vpack.c.b16 %v3148, %v3144
      %v4197 = vpack.c.b16 %v3153, %v3149
      %v4198 = vpack.c.b16 %v3154, %v3150
      %v4199 = vpack.c.b16 %v3155, %v3151
      %v4200 = vpack.c.b16 %v3156, %v3152
      %v4201 = vpack.c.b16 %v3161, %v3157
      %v4202 = vpack.c.b16 %v3162, %v3158
      %v4203 = vpack.c.b16 %v3163, %v3159
      %v4204 = vpack.c.b16 %v3164, %v3160
      %v4205 = vpack.c.b16 %v3169, %v3165
      %v4206 = vpack.c.b16 %v3170, %v3166
      %v4207 = vpack.c.b16 %v3171, %v3167
      %v4208 = vpack.c.b16 %v3172, %v3168
      %v4209 = vpack.c.b16 %v3177, %v3173
      %v4210 = vpack.c.b16 %v3178, %v3174
      %v4211 = vpack.c.b16 %v3179, %v3175
      %v4212 = vpack.c.b16 %v3180, %v3176
      %v4213 = vpack.c.b16 %v3185, %v3181
      %v4214 = vpack.c.b16 %v3186, %v3182
      %v4215 = vpack.c.b16 %v3187, %v3183
      %v4216 = vpack.c.b16 %v3188, %v3184
      %v4217 = vpack.c.b16 %v3193, %v3189
      %v4218 = vpack.c.b16 %v3194, %v3190
      %v4219 = vpack.c.b16 %v3195, %v3191
      %v4220 = vpack.c.b16 %v3196, %v3192
      %v4221 = vpack.c.b16 %v3201, %v3197
      %v4222 = vpack.c.b16 %v3202, %v3198
      %v4223 = vpack.c.b16 %v3203, %v3199
      %v4224 = vpack.c.b16 %v3204, %v3200
      %v4225 = vpack.c.b16 %v3209, %v3205
      %v4226 = vpack.c.b16 %v3210, %v3206
      %v4227 = vpack.c.b16 %v3211, %v3207
      %v4228 = vpack.c.b16 %v3212, %v3208
      %v4229 = vpack.c.b16 %v3217, %v3213
      %v4230 = vpack.c.b16 %v3218, %v3214
      %v4231 = vpack.c.b16 %v3219, %v3215
      %v4232 = vpack.c.b16 %v3220, %v3216
      %v4233 = vpack.c.b16 %v3225, %v3221
      %v4234 = vpack.c.b16 %v3226, %v3222
      %v4235 = vpack.c.b16 %v3227, %v3223
      %v4236 = vpack.c.b16 %v3228, %v3224
      %v4237 = vpack.c.b16 %v3233, %v3229
      %v4238 = vpack.c.b16 %v3234, %v3230
      %v4239 = vpack.c.b16 %v3235, %v3231
      %v4240 = vpack.c.b16 %v3236, %v3232
      %v4241 = vpack.c.b16 %v3241, %v3237
      %v4242 = vpack.c.b16 %v3242, %v3238
      %v4243 = vpack.c.b16 %v3243, %v3239
      %v4244 = vpack.c.b16 %v3244, %v3240
      %v4245 = vpack.c.b16 %v3249, %v3245
      %v4246 = vpack.c.b16 %v3250, %v3246
      %v4247 = vpack.c.b16 %v3251, %v3247
      %v4248 = vpack.c.b16 %v3252, %v3248
      %v4249 = vpack.c.b16 %v3257, %v3253
      %v4250 = vpack.c.b16 %v3258, %v3254
      %v4251 = vpack.c.b16 %v3259, %v3255
      %v4252 = vpack.c.b16 %v3260, %v3256
      %v4253 = vpack.c.b16 %v3265, %v3261
      %v4254 = vpack.c.b16 %v3266, %v3262
      %v4255 = vpack.c.b16 %v3267, %v3263
      %v4256 = vpack.c.b16 %v3268, %v3264
      %v4257 = vpack.c.b16 %v3273, %v3269
      %v4258 = vpack.c.b16 %v3274, %v3270
      %v4259 = vpack.c.b16 %v3275, %v3271
      %v4260 = vpack.c.b16 %v3276, %v3272
      %v4261 = vpack.c.b16 %v3281, %v3277
      %v4262 = vpack.c.b16 %v3282, %v3278
      %v4263 = vpack.c.b16 %v3283, %v3279
      %v4264 = vpack.c.b16 %v3284, %v3280
      %v4265 = vpack.c.b16 %v3289, %v3285
      %v4266 = vpack.c.b16 %v3290, %v3286
      %v4267 = vpack.c.b16 %v3291, %v3287
      %v4268 = vpack.c.b16 %v3292, %v3288
      %v4269 = vpack.c.b16 %v3297, %v3293
      %v4270 = vpack.c.b16 %v3298, %v3294
      %v4271 = vpack.c.b16 %v3299, %v3295
      %v4272 = vpack.c.b16 %v3300, %v3296
      %v4273 = vpack.c.b16 %v3305, %v3301
      %v4274 = vpack.c.b16 %v3306, %v3302
      %v4275 = vpack.c.b16 %v3307, %v3303
      %v4276 = vpack.c.b16 %v3308, %v3304
      %v4277 = vpack.c.b16 %v3313, %v3309
      %v4278 = vpack.c.b16 %v3314, %v3310
      %v4279 = vpack.c.b16 %v3315, %v3311
      %v4280 = vpack.c.b16 %v3316, %v3312
      %v4281 = vpack.c.b16 %v3321, %v3317
      %v4282 = vpack.c.b16 %v3322, %v3318
      %v4283 = vpack.c.b16 %v3323, %v3319
      %v4284 = vpack.c.b16 %v3324, %v3320
      %v4285 = vpack.c.b16 %v3329, %v3325
      %v4286 = vpack.c.b16 %v3330, %v3326
      %v4287 = vpack.c.b16 %v3331, %v3327
      %v4288 = vpack.c.b16 %v3332, %v3328
      %v4289 = vpack.c.b16 %v3337, %v3333
      %v4290 = vpack.c.b16 %v3338, %v3334
      %v4291 = vpack.c.b16 %v3339, %v3335
      %v4292 = vpack.c.b16 %v3340, %v3336
      %v4293 = vpack.c.b16 %v3345, %v3341
      %v4294 = vpack.c.b16 %v3346, %v3342
      %v4295 = vpack.c.b16 %v3347, %v3343
      %v4296 = vpack.c.b16 %v3348, %v3344
      %v4297 = vpack.c.b16 %v3353, %v3349
      %v4298 = vpack.c.b16 %v3354, %v3350
      %v4299 = vpack.c.b16 %v3355, %v3351
      %v4300 = vpack.c.b16 %v3356, %v3352
      %v4301 = vpack.c.b16 %v3361, %v3357
      %v4302 = vpack.c.b16 %v3362, %v3358
      %v4303 = vpack.c.b16 %v3363, %v3359
      %v4304 = vpack.c.b16 %v3364, %v3360
      %v4305 = vpack.c.b16 %v3369, %v3365
      %v4306 = vpack.c.b16 %v3370, %v3366
      %v4307 = vpack.c.b16 %v3371, %v3367
      %v4308 = vpack.c.b16 %v3372, %v3368
      %v4309 = vpack.c.b16 %v3377, %v3373
      %v4310 = vpack.c.b16 %v3378, %v3374
      %v4311 = vpack.c.b16 %v3379, %v3375
      %v4312 = vpack.c.b16 %v3380, %v3376
      %v4313 = vpack.c.b16 %v3385, %v3381
      %v4314 = vpack.c.b16 %v3386, %v3382
      %v4315 = vpack.c.b16 %v3387, %v3383
      %v4316 = vpack.c.b16 %v3388, %v3384
      %v4317 = vpack.c.b16 %v3393, %v3389
      %v4318 = vpack.c.b16 %v3394, %v3390
      %v4319 = vpack.c.b16 %v3395, %v3391
      %v4320 = vpack.c.b16 %v3396, %v3392
      %v4321 = vpack.c.b16 %v3401, %v3397
      %v4322 = vpack.c.b16 %v3402, %v3398
      %v4323 = vpack.c.b16 %v3403, %v3399
      %v4324 = vpack.c.b16 %v3404, %v3400
      %v4325 = vpack.c.b16 %v3409, %v3405
      %v4326 = vpack.c.b16 %v3410, %v3406
      %v4327 = vpack.c.b16 %v3411, %v3407
      %v4328 = vpack.c.b16 %v3412, %v3408
      %v4329 = vpack.c.b16 %v3417, %v3413
      %v4330 = vpack.c.b16 %v3418, %v3414
      %v4331 = vpack.c.b16 %v3419, %v3415
      %v4332 = vpack.c.b16 %v3420, %v3416
      %v4333 = vpack.c.b16 %v3425, %v3421
      %v4334 = vpack.c.b16 %v3426, %v3422
      %v4335 = vpack.c.b16 %v3427, %v3423
      %v4336 = vpack.c.b16 %v3428, %v3424
      %v4337 = vpack.c.b16 %v3433, %v3429
      %v4338 = vpack.c.b16 %v3434, %v3430
      %v4339 = vpack.c.b16 %v3435, %v3431
      %v4340 = vpack.c.b16 %v3436, %v3432
      %v4341 = vpack.c.b16 %v3441, %v3437
      %v4342 = vpack.c.b16 %v3442, %v3438
      %v4343 = vpack.c.b16 %v3443, %v3439
      %v4344 = vpack.c.b16 %v3444, %v3440
      %v4345 = vpack.c.b16 %v3449, %v3445
      %v4346 = vpack.c.b16 %v3450, %v3446
      %v4347 = vpack.c.b16 %v3451, %v3447
      %v4348 = vpack.c.b16 %v3452, %v3448
      %v4349 = vpack.c.b16 %v3457, %v3453
      %v4350 = vpack.c.b16 %v3458, %v3454
      %v4351 = vpack.c.b16 %v3459, %v3455
      %v4352 = vpack.c.b16 %v3460, %v3456
      %v4353 = vpack.c.b16 %v3465, %v3461
      %v4354 = vpack.c.b16 %v3466, %v3462
      %v4355 = vpack.c.b16 %v3467, %v3463
      %v4356 = vpack.c.b16 %v3468, %v3464
      %v4357 = vpack.c.b16 %v3473, %v3469
      %v4358 = vpack.c.b16 %v3474, %v3470
      %v4359 = vpack.c.b16 %v3475, %v3471
      %v4360 = vpack.c.b16 %v3476, %v3472
      %v4361 = vpack.c.b16 %v3481, %v3477
      %v4362 = vpack.c.b16 %v3482, %v3478
      %v4363 = vpack.c.b16 %v3483, %v3479
      %v4364 = vpack.c.b16 %v3484, %v3480
      %v4365 = vpack.c.b16 %v3489, %v3485
      %v4366 = vpack.c.b16 %v3490, %v3486
      %v4367 = vpack.c.b16 %v3491, %v3487
      %v4368 = vpack.c.b16 %v3492, %v3488
      %v4369 = vpack.c.b16 %v3497, %v3493
      %v4370 = vpack.c.b16 %v3498, %v3494
      %v4371 = vpack.c.b16 %v3499, %v3495
      %v4372 = vpack.c.b16 %v3500, %v3496
      %v4373 = vpack.c.b16 %v3505, %v3501
      %v4374 = vpack.c.b16 %v3506, %v3502
      %v4375 = vpack.c.b16 %v3507, %v3503
      %v4376 = vpack.c.b16 %v3508, %v3504
      %v4377 = vpack.c.b16 %v3513, %v3509
      %v4378 = vpack.c.b16 %v3514, %v3510
      %v4379 = vpack.c.b16 %v3515, %v3511
      %v4380 = vpack.c.b16 %v3516, %v3512
      %v4381 = vpack.c.b16 %v3521, %v3517
      %v4382 = vpack.c.b16 %v3522, %v3518
      %v4383 = vpack.c.b16 %v3523, %v3519
      %v4384 = vpack.c.b16 %v3524, %v3520
      %v4385 = vpack.c.b16 %v3529, %v3525
      %v4386 = vpack.c.b16 %v3530, %v3526
      %v4387 = vpack.c.b16 %v3531, %v3527
      %v4388 = vpack.c.b16 %v3532, %v3528
      %v4389 = vpack.c.b16 %v3537, %v3533
      %v4390 = vpack.c.b16 %v3538, %v3534
      %v4391 = vpack.c.b16 %v3539, %v3535
      %v4392 = vpack.c.b16 %v3540, %v3536
      %v4393 = vpack.c.b16 %v3545, %v3541
      %v4394 = vpack.c.b16 %v3546, %v3542
      %v4395 = vpack.c.b16 %v3547, %v3543
      %v4396 = vpack.c.b16 %v3548, %v3544
      %v4397 = vpack.c.b16 %v3553, %v3549
      %v4398 = vpack.c.b16 %v3554, %v3550
      %v4399 = vpack.c.b16 %v3555, %v3551
      %v4400 = vpack.c.b16 %v3556, %v3552
      %v4401 = vpack.c.b16 %v3561, %v3557
      %v4402 = vpack.c.b16 %v3562, %v3558
      %v4403 = vpack.c.b16 %v3563, %v3559
      %v4404 = vpack.c.b16 %v3564, %v3560
      %v4405 = vpack.c.b16 %v3569, %v3565
      %v4406 = vpack.c.b16 %v3570, %v3566
      %v4407 = vpack.c.b16 %v3571, %v3567
      %v4408 = vpack.c.b16 %v3572, %v3568
      %v4409 = vpack.c.b16 %v3577, %v3573
      %v4410 = vpack.c.b16 %v3578, %v3574
      %v4411 = vpack.c.b16 %v3579, %v3575
      %v4412 = vpack.c.b16 %v3580, %v3576
      %v4413 = vpack.c.b16 %v3585, %v3581
      %v4414 = vpack.c.b16 %v3586, %v3582
      %v4415 = vpack.c.b16 %v3587, %v3583
      %v4416 = vpack.c.b16 %v3588, %v3584
      %v4417 = vpack.c.b16 %v3593, %v3589
      %v4418 = vpack.c.b16 %v3594, %v3590
      %v4419 = vpack.c.b16 %v3595, %v3591
      %v4420 = vpack.c.b16 %v3596, %v3592
      %v4421 = vpack.c.b16 %v3601, %v3597
      %v4422 = vpack.c.b16 %v3602, %v3598
      %v4423 = vpack.c.b16 %v3603, %v3599
      %v4424 = vpack.c.b16 %v3604, %v3600
      %v4425 = vpack.c.b16 %v3609, %v3605
      %v4426 = vpack.c.b16 %v3610, %v3606
      %v4427 = vpack.c.b16 %v3611, %v3607
      %v4428 = vpack.c.b16 %v3612, %v3608
      %v4429 = vpack.c.b16 %v3617, %v3613
      %v4430 = vpack.c.b16 %v3618, %v3614
      %v4431 = vpack.c.b16 %v3619, %v3615
      %v4432 = vpack.c.b16 %v3620, %v3616
      %v4433 = vpack.c.b16 %v3625, %v3621
      %v4434 = vpack.c.b16 %v3626, %v3622
      %v4435 = vpack.c.b16 %v3627, %v3623
      %v4436 = vpack.c.b16 %v3628, %v3624
      %v4437 = vpack.c.b16 %v3633, %v3629
      %v4438 = vpack.c.b16 %v3634, %v3630
      %v4439 = vpack.c.b16 %v3635, %v3631
      %v4440 = vpack.c.b16 %v3636, %v3632
      %v4441 = vpack.c.b16 %v3641, %v3637
      %v4442 = vpack.c.b16 %v3642, %v3638
      %v4443 = vpack.c.b16 %v3643, %v3639
      %v4444 = vpack.c.b16 %v3644, %v3640
      %v4445 = vpack.c.b16 %v3649, %v3645
      %v4446 = vpack.c.b16 %v3650, %v3646
      %v4447 = vpack.c.b16 %v3651, %v3647
      %v4448 = vpack.c.b16 %v3652, %v3648
      %v4449 = vpack.c.b16 %v3657, %v3653
      %v4450 = vpack.c.b16 %v3658, %v3654
      %v4451 = vpack.c.b16 %v3659, %v3655
      %v4452 = vpack.c.b16 %v3660, %v3656
      %v4453 = vpack.c.b16 %v3665, %v3661
      %v4454 = vpack.c.b16 %v3666, %v3662
      %v4455 = vpack.c.b16 %v3667, %v3663
      %v4456 = vpack.c.b16 %v3668, %v3664
      %v4457 = vpack.c.b16 %v3673, %v3669
      %v4458 = vpack.c.b16 %v3674, %v3670
      %v4459 = vpack.c.b16 %v3675, %v3671
      %v4460 = vpack.c.b16 %v3676, %v3672
      %vm5245 = vcmask 523264
      %v5247 = vsel %vm5245, %v1300, 0
      %5249 = vmatprep.subr.bf16.mxu0 %v3678
      %5250 = vmatpush1.bf16.msra.mxu0 %v3677
      %5251 = vmatprep.subr.bf16.mxu0 %v3682
      %5252 = vmatpush1.bf16.msra.mxu0 %v3681
      %5253 = vmatprep.subr.bf16.mxu0 %v3686
      %5254 = vmatpush1.bf16.msra.mxu0 %v3685
      %5255 = vmatprep.subr.bf16.mxu0 %v3690
      %5256 = vmatpush1.bf16.msra.mxu0 %v3689
      %5257 = vmatprep.subr.bf16.mxu0 %v3694
      %5258 = vmatpush1.bf16.msra.mxu0 %v3693
      %5259 = vmatprep.subr.bf16.mxu0 %v3698
      %5260 = vmatpush1.bf16.msra.mxu0 %v3697
      %5261 = vmatprep.subr.bf16.mxu0 %v3702
      %5262 = vmatpush1.bf16.msra.mxu0 %v3701
      %5263 = vmatprep.subr.bf16.mxu0 %v3706
      %5264 = vmatpush1.bf16.msra.mxu0 %v3705
      %5265 = vmatprep.subr.bf16.mxu0 %v3710
      %5266 = vmatpush1.bf16.msra.mxu0 %v3709
      %5267 = vmatprep.subr.bf16.mxu0 %v3714
      %5268 = vmatpush1.bf16.msra.mxu0 %v3713
      %5269 = vmatprep.subr.bf16.mxu0 %v3718
      %5270 = vmatpush1.bf16.msra.mxu0 %v3717
      %5271 = vmatprep.subr.bf16.mxu0 %v3722
      %5272 = vmatpush1.bf16.msra.mxu0 %v3721
      %5273 = vmatprep.subr.bf16.mxu0 %v3726
      %5274 = vmatpush1.bf16.msra.mxu0 %v3725
      %5275 = vmatprep.subr.bf16.mxu0 %v3730
      %5276 = vmatpush1.bf16.msra.mxu0 %v3729
      %5277 = vmatprep.subr.bf16.mxu0 %v3734
      %5278 = vmatpush1.bf16.msra.mxu0 %v3733
      %5279 = vmatprep.subr.bf16.mxu0 %v3738
      %5280 = vmatpush1.bf16.msra.mxu0 %v3737
      %5281 = vmatprep.mubr.bf16.mxu0 %v1177
      %5282 = vmatmul.mubr.bf16.gmra.mrb[0].mxu0 %v1163
      %v5283 = vpop.f32.mrb[0].mxu0
      %v5284 = vadd.f32 %v1119, %v5283
      %v5285 = vpop.f32.mrb[0].mxu0
      %v5286 = vadd.f32 %v1123, %v5285
      %v5287 = vpop.f32.mrb[0].mxu0
      %v5288 = vpop.f32.mrb[0].mxu0
      %5289 = vdwg.mxu0
      %5290 = vmatprep.subr.bf16.mxu0 %v3742
      %5291 = vmatpush1.bf16.msra.mxu0 %v3741
      %5292 = vmatprep.subr.bf16.mxu0 %v3746
      %5293 = vmatpush1.bf16.msra.mxu0 %v3745
      %5294 = vmatprep.subr.bf16.mxu0 %v3750
      %5295 = vmatpush1.bf16.msra.mxu0 %v3749
      %5296 = vmatprep.subr.bf16.mxu0 %v3754
      %5297 = vmatpush1.bf16.msra.mxu0 %v3753
      %5298 = vmatprep.subr.bf16.mxu0 %v3758
      %5299 = vmatpush1.bf16.msra.mxu0 %v3757
      %5300 = vmatprep.subr.bf16.mxu0 %v3762
      %5301 = vmatpush1.bf16.msra.mxu0 %v3761
      %5302 = vmatprep.subr.bf16.mxu0 %v3766
      %5303 = vmatpush1.bf16.msra.mxu0 %v3765
      %5304 = vmatprep.subr.bf16.mxu0 %v3770
      %5305 = vmatpush1.bf16.msra.mxu0 %v3769
      %5306 = vmatprep.subr.bf16.mxu0 %v3774
      %5307 = vmatpush1.bf16.msra.mxu0 %v3773
      %5308 = vmatprep.subr.bf16.mxu0 %v3778
      %5309 = vmatpush1.bf16.msra.mxu0 %v3777
      %5310 = vmatprep.subr.bf16.mxu0 %v3782
      %5311 = vmatpush1.bf16.msra.mxu0 %v3781
      %5312 = vmatprep.subr.bf16.mxu0 %v3786
      %5313 = vmatpush1.bf16.msra.mxu0 %v3785
      %5314 = vmatprep.subr.bf16.mxu0 %v3790
      %5315 = vmatpush1.bf16.msra.mxu0 %v3789
      %5316 = vmatprep.subr.bf16.mxu0 %v3794
      %5317 = vmatpush1.bf16.msra.mxu0 %v3793
      %5318 = vmatprep.subr.bf16.mxu0 %v3798
      %5319 = vmatpush1.bf16.msra.mxu0 %v3797
      %5320 = vmatprep.subr.bf16.mxu0 %v3802
      %5321 = vmatpush1.bf16.msra.mxu0 %v3801
      %5322 = vmatprep.mubr.bf16.mxu0 %v1187
      %5323 = vmatmul.mubr.bf16.gmra.mrb[0].mxu0 %v1185
      %v5324 = vpop.f32.mrb[0].mxu0
      %v5325 = vadd.f32 %v5284, %v5324
      %v5326 = vpop.f32.mrb[0].mxu0
      %v5327 = vadd.f32 %v5286, %v5326
      %v5328 = vpop.f32.mrb[0].mxu0
      %v5329 = vpop.f32.mrb[0].mxu0
      %5330 = vdwg.mxu0
      %5331 = vmatprep.subr.bf16.mxu0 %v3806
      %5332 = vmatpush1.bf16.msra.mxu0 %v3805
      %5333 = vmatprep.subr.bf16.mxu0 %v3810
      %5334 = vmatpush1.bf16.msra.mxu0 %v3809
      %5335 = vmatprep.subr.bf16.mxu0 %v3814
      %5336 = vmatpush1.bf16.msra.mxu0 %v3813
      %5337 = vmatprep.subr.bf16.mxu0 %v3818
      %5338 = vmatpush1.bf16.msra.mxu0 %v3817
      %5339 = vmatprep.subr.bf16.mxu0 %v3822
      %5340 = vmatpush1.bf16.msra.mxu0 %v3821
      %5341 = vmatprep.subr.bf16.mxu0 %v3826
      %5342 = vmatpush1.bf16.msra.mxu0 %v3825
      %5343 = vmatprep.subr.bf16.mxu0 %v3830
      %5344 = vmatpush1.bf16.msra.mxu0 %v3829
      %5345 = vmatprep.subr.bf16.mxu0 %v3834
      %5346 = vmatpush1.bf16.msra.mxu0 %v3833
      %5347 = vmatprep.subr.bf16.mxu0 %v3838
      %5348 = vmatpush1.bf16.msra.mxu0 %v3837
      %5349 = vmatprep.subr.bf16.mxu0 %v3842
      %5350 = vmatpush1.bf16.msra.mxu0 %v3841
      %5351 = vmatprep.subr.bf16.mxu0 %v3846
      %5352 = vmatpush1.bf16.msra.mxu0 %v3845
      %5353 = vmatprep.subr.bf16.mxu0 %v3850
      %5354 = vmatpush1.bf16.msra.mxu0 %v3849
      %5355 = vmatprep.subr.bf16.mxu0 %v3854
      %5356 = vmatpush1.bf16.msra.mxu0 %v3853
      %5357 = vmatprep.subr.bf16.mxu0 %v3858
      %5358 = vmatpush1.bf16.msra.mxu0 %v3857
      %5359 = vmatprep.subr.bf16.mxu0 %v3862
      %5360 = vmatpush1.bf16.msra.mxu0 %v3861
      %5361 = vmatprep.subr.bf16.mxu0 %v3866
      %5362 = vmatpush1.bf16.msra.mxu0 %v3865
      %5363 = vmatprep.mubr.bf16.mxu0 %v1184
      %5364 = vmatmul.mubr.bf16.gmra.mrb[0].mxu0 %v1170
      %v5365 = vpop.f32.mrb[0].mxu0
      %v5366 = vadd.f32 %v5325, %v5365
      %v5367 = vpop.f32.mrb[0].mxu0
      %v5368 = vadd.f32 %v5327, %v5367
      %v5369 = vpop.f32.mrb[0].mxu0
      %v5370 = vpop.f32.mrb[0].mxu0
      %5371 = vdwg.mxu0
      %5372 = vmatprep.subr.bf16.mxu0 %v3870
      %5373 = vmatpush1.bf16.msra.mxu0 %v3869
      %5374 = vmatprep.subr.bf16.mxu0 %v3874
      %5375 = vmatpush1.bf16.msra.mxu0 %v3873
      %5376 = vmatprep.subr.bf16.mxu0 %v3878
      %5377 = vmatpush1.bf16.msra.mxu0 %v3877
      %5378 = vmatprep.subr.bf16.mxu0 %v3882
      %5379 = vmatpush1.bf16.msra.mxu0 %v3881
      %5380 = vmatprep.subr.bf16.mxu0 %v3886
      %5381 = vmatpush1.bf16.msra.mxu0 %v3885
      %5382 = vmatprep.subr.bf16.mxu0 %v3890
      %5383 = vmatpush1.bf16.msra.mxu0 %v3889
      %5384 = vmatprep.subr.bf16.mxu0 %v3894
      %5385 = vmatpush1.bf16.msra.mxu0 %v3893
      %5386 = vmatprep.subr.bf16.mxu0 %v3898
      %5387 = vmatpush1.bf16.msra.mxu0 %v3897
      %5388 = vmatprep.subr.bf16.mxu0 %v3902
      %5389 = vmatpush1.bf16.msra.mxu0 %v3901
      %5390 = vmatprep.subr.bf16.mxu0 %v3906
      %5391 = vmatpush1.bf16.msra.mxu0 %v3905
      %5392 = vmatprep.subr.bf16.mxu0 %v3910
      %5393 = vmatpush1.bf16.msra.mxu0 %v3909
      %5394 = vmatprep.subr.bf16.mxu0 %v3914
      %5395 = vmatpush1.bf16.msra.mxu0 %v3913
      %5396 = vmatprep.subr.bf16.mxu0 %v3918
      %5397 = vmatpush1.bf16.msra.mxu0 %v3917
      %5398 = vmatprep.subr.bf16.mxu0 %v3922
      %5399 = vmatpush1.bf16.msra.mxu0 %v3921
      %5400 = vmatprep.subr.bf16.mxu0 %v3926
      %5401 = vmatpush1.bf16.msra.mxu0 %v3925
      %5402 = vmatprep.subr.bf16.mxu0 %v3930
      %5403 = vmatpush1.bf16.msra.mxu0 %v3929
      %5404 = vmatprep.mubr.bf16.mxu0 %v1188
      %5405 = vmatmul.mubr.bf16.gmra.mrb[0].mxu0 %v1186
      %v5406 = vpop.f32.mrb[0].mxu0
      %v5407 = vadd.f32 %v5366, %v5406
      %v5408 = vpop.f32.mrb[0].mxu0
      %v5409 = vadd.f32 %v5368, %v5408
      %v5410 = vpop.f32.mrb[0].mxu0
      %v5411 = vpop.f32.mrb[0].mxu0
      %5412 = vdwg.mxu0
      %5413 = vmatprep.subr.bf16.mxu0 %v3934
      %5414 = vmatpush1.bf16.msra.mxu0 %v3933
      %5415 = vmatprep.subr.bf16.mxu0 %v3938
      %5416 = vmatpush1.bf16.msra.mxu0 %v3937
      %5417 = vmatprep.subr.bf16.mxu0 %v3942
      %5418 = vmatpush1.bf16.msra.mxu0 %v3941
      %5419 = vmatprep.subr.bf16.mxu0 %v3946
      %5420 = vmatpush1.bf16.msra.mxu0 %v3945
      %5421 = vmatprep.subr.bf16.mxu0 %v3950
      %5422 = vmatpush1.bf16.msra.mxu0 %v3949
      %5423 = vmatprep.subr.bf16.mxu0 %v3954
      %5424 = vmatpush1.bf16.msra.mxu0 %v3953
      %5425 = vmatprep.subr.bf16.mxu0 %v3958
      %5426 = vmatpush1.bf16.msra.mxu0 %v3957
      %5427 = vmatprep.subr.bf16.mxu0 %v3962
      %5428 = vmatpush1.bf16.msra.mxu0 %v3961
      %5429 = vmatprep.subr.bf16.mxu0 %v3966
      %5430 = vmatpush1.bf16.msra.mxu0 %v3965
      %5431 = vmatprep.subr.bf16.mxu0 %v3970
      %5432 = vmatpush1.bf16.msra.mxu0 %v3969
      %5433 = vmatprep.subr.bf16.mxu0 %v3974
      %5434 = vmatpush1.bf16.msra.mxu0 %v3973
      %5435 = vmatprep.subr.bf16.mxu0 %v3978
      %5436 = vmatpush1.bf16.msra.mxu0 %v3977
      %5437 = vmatprep.subr.bf16.mxu0 %v3982
      %5438 = vmatpush1.bf16.msra.mxu0 %v3981
      %5439 = vmatprep.subr.bf16.mxu0 %v3986
      %5440 = vmatpush1.bf16.msra.mxu0 %v3985
      %5441 = vmatprep.subr.bf16.mxu0 %v3990
      %5442 = vmatpush1.bf16.msra.mxu0 %v3989
      %5443 = vmatprep.subr.bf16.mxu0 %v3994
      %5444 = vmatpush1.bf16.msra.mxu0 %v3993
      %5445 = vmatprep.mubr.bf16.mxu0 %v1226
      %5446 = vmatmul.mubr.bf16.gmra.mrb[0].mxu0 %v1212
      %v5447 = vpop.f32.mrb[0].mxu0
      %v5448 = vadd.f32 %v5407, %v5447
      %v5449 = vpop.f32.mrb[0].mxu0
      %v5450 = vadd.f32 %v5409, %v5449
      %v5451 = vpop.f32.mrb[0].mxu0
      %v5452 = vpop.f32.mrb[0].mxu0
      %5453 = vdwg.mxu0
      %5454 = vmatprep.subr.bf16.mxu0 %v3998
      %5455 = vmatpush1.bf16.msra.mxu0 %v3997
      %5456 = vmatprep.subr.bf16.mxu0 %v4002
      %5457 = vmatpush1.bf16.msra.mxu0 %v4001
      %5458 = vmatprep.subr.bf16.mxu0 %v4006
      %5459 = vmatpush1.bf16.msra.mxu0 %v4005
      %5460 = vmatprep.subr.bf16.mxu0 %v4010
      %5461 = vmatpush1.bf16.msra.mxu0 %v4009
      %5462 = vmatprep.subr.bf16.mxu0 %v4014
      %5463 = vmatpush1.bf16.msra.mxu0 %v4013
      %5464 = vmatprep.subr.bf16.mxu0 %v4018
      %5465 = vmatpush1.bf16.msra.mxu0 %v4017
      %5466 = vmatprep.subr.bf16.mxu0 %v4022
      %5467 = vmatpush1.bf16.msra.mxu0 %v4021
      %5468 = vmatprep.subr.bf16.mxu0 %v4026
      %5469 = vmatpush1.bf16.msra.mxu0 %v4025
      %5470 = vmatprep.subr.bf16.mxu0 %v4030
      %5471 = vmatpush1.bf16.msra.mxu0 %v4029
      %5472 = vmatprep.subr.bf16.mxu0 %v4034
      %5473 = vmatpush1.bf16.msra.mxu0 %v4033
      %5474 = vmatprep.subr.bf16.mxu0 %v4038
      %5475 = vmatpush1.bf16.msra.mxu0 %v4037
      %5476 = vmatprep.subr.bf16.mxu0 %v4042
      %5477 = vmatpush1.bf16.msra.mxu0 %v4041
      %5478 = vmatprep.subr.bf16.mxu0 %v4046
      %5479 = vmatpush1.bf16.msra.mxu0 %v4045
      %5480 = vmatprep.subr.bf16.mxu0 %v4050
      %5481 = vmatpush1.bf16.msra.mxu0 %v4049
      %5482 = vmatprep.subr.bf16.mxu0 %v4054
      %5483 = vmatpush1.bf16.msra.mxu0 %v4053
      %5484 = vmatprep.subr.bf16.mxu0 %v4058
      %5485 = vmatpush1.bf16.msra.mxu0 %v4057
      %5486 = vmatprep.mubr.bf16.mxu0 %v1236
      %5487 = vmatmul.mubr.bf16.gmra.mrb[0].mxu0 %v1234
      %v5488 = vpop.f32.mrb[0].mxu0
      %v5489 = vadd.f32 %v5448, %v5488
      %v5490 = vpop.f32.mrb[0].mxu0
      %v5491 = vadd.f32 %v5450, %v5490
      %v5492 = vpop.f32.mrb[0].mxu0
      %v5493 = vpop.f32.mrb[0].mxu0
      %5494 = vdwg.mxu0
      %5495 = vmatprep.subr.bf16.mxu0 %v4062
      %5496 = vmatpush1.bf16.msra.mxu0 %v4061
      %5497 = vmatprep.subr.bf16.mxu0 %v4066
      %5498 = vmatpush1.bf16.msra.mxu0 %v4065
      %5499 = vmatprep.subr.bf16.mxu0 %v4070
      %5500 = vmatpush1.bf16.msra.mxu0 %v4069
      %5501 = vmatprep.subr.bf16.mxu0 %v4074
      %5502 = vmatpush1.bf16.msra.mxu0 %v4073
      %5503 = vmatprep.subr.bf16.mxu0 %v4078
      %5504 = vmatpush1.bf16.msra.mxu0 %v4077
      %5505 = vmatprep.subr.bf16.mxu0 %v4082
      %5506 = vmatpush1.bf16.msra.mxu0 %v4081
      %5507 = vmatprep.subr.bf16.mxu0 %v4086
      %5508 = vmatpush1.bf16.msra.mxu0 %v4085
      %5509 = vmatprep.subr.bf16.mxu0 %v4090
      %5510 = vmatpush1.bf16.msra.mxu0 %v4089
      %5511 = vmatprep.subr.bf16.mxu0 %v4094
      %5512 = vmatpush1.bf16.msra.mxu0 %v4093
      %5513 = vmatprep.subr.bf16.mxu0 %v4098
      %5514 = vmatpush1.bf16.msra.mxu0 %v4097
      %5515 = vmatprep.subr.bf16.mxu0 %v4102
      %5516 = vmatpush1.bf16.msra.mxu0 %v4101
      %5517 = vmatprep.subr.bf16.mxu0 %v4106
      %5518 = vmatpush1.bf16.msra.mxu0 %v4105
      %5519 = vmatprep.subr.bf16.mxu0 %v4110
      %5520 = vmatpush1.bf16.msra.mxu0 %v4109
      %5521 = vmatprep.subr.bf16.mxu0 %v4114
      %5522 = vmatpush1.bf16.msra.mxu0 %v4113
      %5523 = vmatprep.subr.bf16.mxu0 %v4118
      %5524 = vmatpush1.bf16.msra.mxu0 %v4117
      %5525 = vmatprep.subr.bf16.mxu0 %v4122
      %5526 = vmatpush1.bf16.msra.mxu0 %v4121
      %5527 = vmatprep.mubr.bf16.mxu0 %v1233
      %5528 = vmatmul.mubr.bf16.gmra.mrb[0].mxu0 %v1219
      %v5529 = vpop.f32.mrb[0].mxu0
      %v5530 = vadd.f32 %v5489, %v5529
      %v5531 = vpop.f32.mrb[0].mxu0
      %v5532 = vadd.f32 %v5491, %v5531
      %v5533 = vpop.f32.mrb[0].mxu0
      %v5534 = vpop.f32.mrb[0].mxu0
      %5535 = vdwg.mxu0
      %5536 = vmatprep.subr.bf16.mxu0 %v4126
      %5537 = vmatpush1.bf16.msra.mxu0 %v4125
      %5538 = vmatprep.subr.bf16.mxu0 %v4130
      %5539 = vmatpush1.bf16.msra.mxu0 %v4129
      %5540 = vmatprep.subr.bf16.mxu0 %v4134
      %5541 = vmatpush1.bf16.msra.mxu0 %v4133
      %5542 = vmatprep.subr.bf16.mxu0 %v4138
      %5543 = vmatpush1.bf16.msra.mxu0 %v4137
      %5544 = vmatprep.subr.bf16.mxu0 %v4142
      %5545 = vmatpush1.bf16.msra.mxu0 %v4141
      %5546 = vmatprep.subr.bf16.mxu0 %v4146
      %5547 = vmatpush1.bf16.msra.mxu0 %v4145
      %5548 = vmatprep.subr.bf16.mxu0 %v4150
      %5549 = vmatpush1.bf16.msra.mxu0 %v4149
      %5550 = vmatprep.subr.bf16.mxu0 %v4154
      %5551 = vmatpush1.bf16.msra.mxu0 %v4153
      %5552 = vmatprep.subr.bf16.mxu0 %v4158
      %5553 = vmatpush1.bf16.msra.mxu0 %v4157
      %5554 = vmatprep.subr.bf16.mxu0 %v4162
      %5555 = vmatpush1.bf16.msra.mxu0 %v4161
      %5556 = vmatprep.subr.bf16.mxu0 %v4166
      %5557 = vmatpush1.bf16.msra.mxu0 %v4165
      %5558 = vmatprep.subr.bf16.mxu0 %v4170
      %5559 = vmatpush1.bf16.msra.mxu0 %v4169
      %5560 = vmatprep.subr.bf16.mxu0 %v4174
      %5561 = vmatpush1.bf16.msra.mxu0 %v4173
      %5562 = vmatprep.subr.bf16.mxu0 %v4178
      %5563 = vmatpush1.bf16.msra.mxu0 %v4177
      %5564 = vmatprep.subr.bf16.mxu0 %v4182
      %5565 = vmatpush1.bf16.msra.mxu0 %v4181
      %5566 = vmatprep.subr.bf16.mxu0 %v4186
      %5567 = vmatpush1.bf16.msra.mxu0 %v4185
      %5568 = vmatprep.mubr.bf16.mxu0 %v1237
      %5569 = vmatmul.mubr.bf16.gmra.mrb[0].mxu0 %v1235
      %v5570 = vpop.f32.mrb[0].mxu0
      %v5571 = vadd.f32 %v5530, %v5570
      %v5572 = vpop.f32.mrb[0].mxu0
      %v5573 = vadd.f32 %v5532, %v5572
      %v5574 = vpop.f32.mrb[0].mxu0
      %v5575 = vpop.f32.mrb[0].mxu0
      %5576 = vdwg.mxu0
      %5577 = vmatprep.subr.bf16.mxu0 %v4190
      %5578 = vmatpush1.bf16.msra.mxu0 %v4189
      %5579 = vmatprep.subr.bf16.mxu0 %v4194
      %5580 = vmatpush1.bf16.msra.mxu0 %v4193
      %5581 = vmatprep.subr.bf16.mxu0 %v4198
      %5582 = vmatpush1.bf16.msra.mxu0 %v4197
      %5583 = vmatprep.subr.bf16.mxu0 %v4202
      %5584 = vmatpush1.bf16.msra.mxu0 %v4201
      %5585 = vmatprep.subr.bf16.mxu0 %v4206
      %5586 = vmatpush1.bf16.msra.mxu0 %v4205
      %5587 = vmatprep.subr.bf16.mxu0 %v4210
      %5588 = vmatpush1.bf16.msra.mxu0 %v4209
      %5589 = vmatprep.subr.bf16.mxu0 %v4214
      %5590 = vmatpush1.bf16.msra.mxu0 %v4213
      %5591 = vmatprep.subr.bf16.mxu0 %v4218
      %5592 = vmatpush1.bf16.msra.mxu0 %v4217
      %5593 = vmatprep.subr.bf16.mxu0 %v4222
      %5594 = vmatpush1.bf16.msra.mxu0 %v4221
      %5595 = vmatprep.subr.bf16.mxu0 %v4226
      %5596 = vmatpush1.bf16.msra.mxu0 %v4225
      %5597 = vmatprep.subr.bf16.mxu0 %v4230
      %5598 = vmatpush1.bf16.msra.mxu0 %v4229
      %5599 = vmatprep.subr.bf16.mxu0 %v4234
      %5600 = vmatpush1.bf16.msra.mxu0 %v4233
      %5601 = vmatprep.subr.bf16.mxu0 %v4238
      %5602 = vmatpush1.bf16.msra.mxu0 %v4237
      %5603 = vmatprep.subr.bf16.mxu0 %v4242
      %5604 = vmatpush1.bf16.msra.mxu0 %v4241
      %5605 = vmatprep.subr.bf16.mxu0 %v4246
      %5606 = vmatpush1.bf16.msra.mxu0 %v4245
      %5607 = vmatprep.subr.bf16.mxu0 %v4250
      %5608 = vmatpush1.bf16.msra.mxu0 %v4249
      %5609 = vmatprep.mubr.bf16.mxu0 %v1275
      %5610 = vmatmul.mubr.bf16.gmra.mrb[0].mxu0 %v1261
      %v5611 = vpop.f32.mrb[0].mxu0
      %v5612 = vadd.f32 %v5571, %v5611
      %v5613 = vpop.f32.mrb[0].mxu0
      %v5614 = vadd.f32 %v5573, %v5613
      %v5615 = vpop.f32.mrb[0].mxu0
      %v5616 = vpop.f32.mrb[0].mxu0
      %5617 = vdwg.mxu0
      %5618 = vmatprep.subr.bf16.mxu0 %v4254
      %5619 = vmatpush1.bf16.msra.mxu0 %v4253
      %5620 = vmatprep.subr.bf16.mxu0 %v4258
      %5621 = vmatpush1.bf16.msra.mxu0 %v4257
      %5622 = vmatprep.subr.bf16.mxu0 %v4262
      %5623 = vmatpush1.bf16.msra.mxu0 %v4261
      %5624 = vmatprep.subr.bf16.mxu0 %v4266
      %5625 = vmatpush1.bf16.msra.mxu0 %v4265
      %5626 = vmatprep.subr.bf16.mxu0 %v4270
      %5627 = vmatpush1.bf16.msra.mxu0 %v4269
      %5628 = vmatprep.subr.bf16.mxu0 %v4274
      %5629 = vmatpush1.bf16.msra.mxu0 %v4273
      %5630 = vmatprep.subr.bf16.mxu0 %v4278
      %5631 = vmatpush1.bf16.msra.mxu0 %v4277
      %5632 = vmatprep.subr.bf16.mxu0 %v4282
      %5633 = vmatpush1.bf16.msra.mxu0 %v4281
      %5634 = vmatprep.subr.bf16.mxu0 %v4286
      %5635 = vmatpush1.bf16.msra.mxu0 %v4285
      %5636 = vmatprep.subr.bf16.mxu0 %v4290
      %5637 = vmatpush1.bf16.msra.mxu0 %v4289
      %5638 = vmatprep.subr.bf16.mxu0 %v4294
      %5639 = vmatpush1.bf16.msra.mxu0 %v4293
      %5640 = vmatprep.subr.bf16.mxu0 %v4298
      %5641 = vmatpush1.bf16.msra.mxu0 %v4297
      %5642 = vmatprep.subr.bf16.mxu0 %v4302
      %5643 = vmatpush1.bf16.msra.mxu0 %v4301
      %5644 = vmatprep.subr.bf16.mxu0 %v4306
      %5645 = vmatpush1.bf16.msra.mxu0 %v4305
      %5646 = vmatprep.subr.bf16.mxu0 %v4310
      %5647 = vmatpush1.bf16.msra.mxu0 %v4309
      %5648 = vmatprep.subr.bf16.mxu0 %v4314
      %5649 = vmatpush1.bf16.msra.mxu0 %v4313
      %5650 = vmatprep.mubr.bf16.mxu0 %v1285
      %5651 = vmatmul.mubr.bf16.gmra.mrb[0].mxu0 %v1283
      %v5652 = vpop.f32.mrb[0].mxu0
      %v5653 = vadd.f32 %v5612, %v5652
      %v5654 = vpop.f32.mrb[0].mxu0
      %v5655 = vadd.f32 %v5614, %v5654
      %v5656 = vpop.f32.mrb[0].mxu0
      %v5657 = vpop.f32.mrb[0].mxu0
      %5658 = vdwg.mxu0
      %5659 = vmatprep.subr.bf16.mxu0 %v4318
      %5660 = vmatpush1.bf16.msra.mxu0 %v4317
      %5661 = vmatprep.subr.bf16.mxu0 %v4322
      %5662 = vmatpush1.bf16.msra.mxu0 %v4321
      %5663 = vmatprep.subr.bf16.mxu0 %v4326
      %5664 = vmatpush1.bf16.msra.mxu0 %v4325
      %5665 = vmatprep.subr.bf16.mxu0 %v4330
      %5666 = vmatpush1.bf16.msra.mxu0 %v4329
      %5667 = vmatprep.subr.bf16.mxu0 %v4334
      %5668 = vmatpush1.bf16.msra.mxu0 %v4333
      %5669 = vmatprep.subr.bf16.mxu0 %v4338
      %5670 = vmatpush1.bf16.msra.mxu0 %v4337
      %5671 = vmatprep.subr.bf16.mxu0 %v4342
      %5672 = vmatpush1.bf16.msra.mxu0 %v4341
      %5673 = vmatprep.subr.bf16.mxu0 %v4346
      %5674 = vmatpush1.bf16.msra.mxu0 %v4345
      %5675 = vmatprep.subr.bf16.mxu0 %v4350
      %5676 = vmatpush1.bf16.msra.mxu0 %v4349
      %5677 = vmatprep.subr.bf16.mxu0 %v4354
      %5678 = vmatpush1.bf16.msra.mxu0 %v4353
      %5679 = vmatprep.subr.bf16.mxu0 %v4358
      %5680 = vmatpush1.bf16.msra.mxu0 %v4357
      %5681 = vmatprep.subr.bf16.mxu0 %v4362
      %5682 = vmatpush1.bf16.msra.mxu0 %v4361
      %5683 = vmatprep.subr.bf16.mxu0 %v4366
      %5684 = vmatpush1.bf16.msra.mxu0 %v4365
      %5685 = vmatprep.subr.bf16.mxu0 %v4370
      %5686 = vmatpush1.bf16.msra.mxu0 %v4369
      %5687 = vmatprep.subr.bf16.mxu0 %v4374
      %5688 = vmatpush1.bf16.msra.mxu0 %v4373
      %5689 = vmatprep.subr.bf16.mxu0 %v4378
      %5690 = vmatpush1.bf16.msra.mxu0 %v4377
      %5691 = vmatprep.mubr.bf16.mxu0 %v1282
      %5692 = vmatmul.mubr.bf16.gmra.mrb[0].mxu0 %v1268
      %v5693 = vpop.f32.mrb[0].mxu0
      %v5694 = vadd.f32 %v5653, %v5693
      %v5695 = vpop.f32.mrb[0].mxu0
      %v5696 = vadd.f32 %v5655, %v5695
      %v5697 = vpop.f32.mrb[0].mxu0
      %v5698 = vpop.f32.mrb[0].mxu0
      %5699 = vdwg.mxu0
      %5700 = vmatprep.subr.bf16.mxu0 %v4382
      %5701 = vmatpush1.bf16.msra.mxu0 %v4381
      %5702 = vmatprep.subr.bf16.mxu0 %v4386
      %5703 = vmatpush1.bf16.msra.mxu0 %v4385
      %5704 = vmatprep.subr.bf16.mxu0 %v4390
      %5705 = vmatpush1.bf16.msra.mxu0 %v4389
      %5706 = vmatprep.subr.bf16.mxu0 %v4394
      %5707 = vmatpush1.bf16.msra.mxu0 %v4393
      %5708 = vmatprep.subr.bf16.mxu0 %v4398
      %5709 = vmatpush1.bf16.msra.mxu0 %v4397
      %5710 = vmatprep.subr.bf16.mxu0 %v4402
      %5711 = vmatpush1.bf16.msra.mxu0 %v4401
      %5712 = vmatprep.subr.bf16.mxu0 %v4406
      %5713 = vmatpush1.bf16.msra.mxu0 %v4405
      %5714 = vmatprep.subr.bf16.mxu0 %v4410
      %5715 = vmatpush1.bf16.msra.mxu0 %v4409
      %5716 = vmatprep.subr.bf16.mxu0 %v4414
      %5717 = vmatpush1.bf16.msra.mxu0 %v4413
      %5718 = vmatprep.subr.bf16.mxu0 %v4418
      %5719 = vmatpush1.bf16.msra.mxu0 %v4417
      %5720 = vmatprep.subr.bf16.mxu0 %v4422
      %5721 = vmatpush1.bf16.msra.mxu0 %v4421
      %5722 = vmatprep.subr.bf16.mxu0 %v4426
      %5723 = vmatpush1.bf16.msra.mxu0 %v4425
      %5724 = vmatprep.subr.bf16.mxu0 %v4430
      %5725 = vmatpush1.bf16.msra.mxu0 %v4429
      %5726 = vmatprep.subr.bf16.mxu0 %v4434
      %5727 = vmatpush1.bf16.msra.mxu0 %v4433
      %5728 = vmatprep.subr.bf16.mxu0 %v4438
      %5729 = vmatpush1.bf16.msra.mxu0 %v4437
      %5730 = vmatprep.subr.bf16.mxu0 %v4442
      %5731 = vmatpush1.bf16.msra.mxu0 %v4441
      %5732 = vmatprep.mubr.bf16.mxu0 %v1286
      %5733 = vmatmul.mubr.bf16.gmra.mrb[0].mxu0 %v1284
      %v5734 = vpop.f32.mrb[0].mxu0
      %v5735 = vadd.f32 %v5694, %v5734
      %v5736 = vpop.f32.mrb[0].mxu0
      %v5737 = vadd.f32 %v5696, %v5736
      %v5738 = vpop.f32.mrb[0].mxu0
      %v5739 = vpop.f32.mrb[0].mxu0
      %5740 = vdwg.mxu0
      %5741 = vmatprep.subr.bf16.mxu0 %v4446
      %5742 = vmatpush1.bf16.msra.mxu0 %v4445
      %5743 = vmatprep.subr.bf16.mxu0 %v4450
      %5744 = vmatpush1.bf16.msra.mxu0 %v4449
      %5745 = vmatprep.subr.bf16.mxu0 %v4454
      %5746 = vmatpush1.bf16.msra.mxu0 %v4453
      %5747 = vmatprep.subr.bf16.mxu0 %v4458
      %5748 = vmatpush1.bf16.msra.mxu0 %v4457
      %5749 = vmatprep.subr.bf16.mxu0 0
      %5750 = vmatpush1.bf16.msra.mxu0 0
      %5751 = vmatprep.subr.bf16.mxu0 0
      %5752 = vmatpush1.bf16.msra.mxu0 0
      %5753 = vmatprep.subr.bf16.mxu0 0
      %5754 = vmatpush1.bf16.msra.mxu0 0
      %5755 = vmatprep.subr.bf16.mxu0 0
      %5756 = vmatpush1.bf16.msra.mxu0 0
      %5757 = vmatprep.subr.bf16.mxu0 0
      %5758 = vmatpush1.bf16.msra.mxu0 0
      %5759 = vmatprep.subr.bf16.mxu0 0
      %5760 = vmatpush1.bf16.msra.mxu0 0
      %5761 = vmatprep.subr.bf16.mxu0 0
      %5762 = vmatpush1.bf16.msra.mxu0 0
      %5763 = vmatprep.subr.bf16.mxu0 0
      %5764 = vmatpush1.bf16.msra.mxu0 0
      %5765 = vmatprep.subr.bf16.mxu0 0
      %5766 = vmatpush1.bf16.msra.mxu0 0
      %5767 = vmatprep.subr.bf16.mxu0 0
      %5768 = vmatpush1.bf16.msra.mxu0 0
      %5769 = vmatprep.subr.bf16.mxu0 0
      %5770 = vmatpush1.bf16.msra.mxu0 0
      %5771 = vmatprep.subr.bf16.mxu0 0
      %5772 = vmatpush1.bf16.msra.mxu0 0
      %5773 = vmatprep.mubr.bf16.mxu0 0
      %5774 = vmatmul.mubr.bf16.gmra.mrb[0].mxu0 %v5247
      %v5775 = vpop.f32.mrb[0].mxu0
      %v5776 = vadd.f32 %v5735, %v5775
      %v5777 = vpop.f32.mrb[0].mxu0
      %v5778 = vadd.f32 %v5737, %v5777
      %v5779 = vpop.f32.mrb[0].mxu0
      %v5780 = vpop.f32.mrb[0].mxu0
      %5781 = vdwg.mxu0
      %5782 = vmatprep.subr.bf16.mxu0 %v3680
      %5783 = vmatpush1.bf16.msra.mxu0 %v3679
      %5784 = vmatprep.subr.bf16.mxu0 %v3684
      %5785 = vmatpush1.bf16.msra.mxu0 %v3683
      %5786 = vmatprep.subr.bf16.mxu0 %v3688
      %5787 = vmatpush1.bf16.msra.mxu0 %v3687
      %5788 = vmatprep.subr.bf16.mxu0 %v3692
      %5789 = vmatpush1.bf16.msra.mxu0 %v3691
      %5790 = vmatprep.subr.bf16.mxu0 %v3696
      %5791 = vmatpush1.bf16.msra.mxu0 %v3695
      %5792 = vmatprep.subr.bf16.mxu0 %v3700
      %5793 = vmatpush1.bf16.msra.mxu0 %v3699
      %5794 = vmatprep.subr.bf16.mxu0 %v3704
      %5795 = vmatpush1.bf16.msra.mxu0 %v3703
      %5796 = vmatprep.subr.bf16.mxu0 %v3708
      %5797 = vmatpush1.bf16.msra.mxu0 %v3707
      %5798 = vmatprep.subr.bf16.mxu0 %v3712
      %5799 = vmatpush1.bf16.msra.mxu0 %v3711
      %5800 = vmatprep.subr.bf16.mxu0 %v3716
      %5801 = vmatpush1.bf16.msra.mxu0 %v3715
      %5802 = vmatprep.subr.bf16.mxu0 %v3720
      %5803 = vmatpush1.bf16.msra.mxu0 %v3719
      %5804 = vmatprep.subr.bf16.mxu0 %v3724
      %5805 = vmatpush1.bf16.msra.mxu0 %v3723
      %5806 = vmatprep.subr.bf16.mxu0 %v3728
      %5807 = vmatpush1.bf16.msra.mxu0 %v3727
      %5808 = vmatprep.subr.bf16.mxu0 %v3732
      %5809 = vmatpush1.bf16.msra.mxu0 %v3731
      %5810 = vmatprep.subr.bf16.mxu0 %v3736
      %5811 = vmatpush1.bf16.msra.mxu0 %v3735
      %5812 = vmatprep.subr.bf16.mxu0 %v3740
      %5813 = vmatpush1.bf16.msra.mxu0 %v3739
      %5814 = vmatprep.mubr.bf16.mxu0 %v1177
      %5815 = vmatmul.mubr.bf16.gmra.mrb[0].mxu0 %v1163
      %v5816 = vpop.f32.mrb[0].mxu0
      %v5817 = vadd.f32 %v1127, %v5816
      %v5818 = vpop.f32.mrb[0].mxu0
      %v5819 = vadd.f32 %v1131, %v5818
      %v5820 = vpop.f32.mrb[0].mxu0
      %v5821 = vpop.f32.mrb[0].mxu0
      %5822 = vdwg.mxu0
      %5823 = vmatprep.subr.bf16.mxu0 %v3744
      %5824 = vmatpush1.bf16.msra.mxu0 %v3743
      %5825 = vmatprep.subr.bf16.mxu0 %v3748
      %5826 = vmatpush1.bf16.msra.mxu0 %v3747
      %5827 = vmatprep.subr.bf16.mxu0 %v3752
      %5828 = vmatpush1.bf16.msra.mxu0 %v3751
      %5829 = vmatprep.subr.bf16.mxu0 %v3756
      %5830 = vmatpush1.bf16.msra.mxu0 %v3755
      %5831 = vmatprep.subr.bf16.mxu0 %v3760
      %5832 = vmatpush1.bf16.msra.mxu0 %v3759
      %5833 = vmatprep.subr.bf16.mxu0 %v3764
      %5834 = vmatpush1.bf16.msra.mxu0 %v3763
      %5835 = vmatprep.subr.bf16.mxu0 %v3768
      %5836 = vmatpush1.bf16.msra.mxu0 %v3767
      %5837 = vmatprep.subr.bf16.mxu0 %v3772
      %5838 = vmatpush1.bf16.msra.mxu0 %v3771
      %5839 = vmatprep.subr.bf16.mxu0 %v3776
      %5840 = vmatpush1.bf16.msra.mxu0 %v3775
      %5841 = vmatprep.subr.bf16.mxu0 %v3780
      %5842 = vmatpush1.bf16.msra.mxu0 %v3779
      %5843 = vmatprep.subr.bf16.mxu0 %v3784
      %5844 = vmatpush1.bf16.msra.mxu0 %v3783
      %5845 = vmatprep.subr.bf16.mxu0 %v3788
      %5846 = vmatpush1.bf16.msra.mxu0 %v3787
      %5847 = vmatprep.subr.bf16.mxu0 %v3792
      %5848 = vmatpush1.bf16.msra.mxu0 %v3791
      %5849 = vmatprep.subr.bf16.mxu0 %v3796
      %5850 = vmatpush1.bf16.msra.mxu0 %v3795
      %5851 = vmatprep.subr.bf16.mxu0 %v3800
      %5852 = vmatpush1.bf16.msra.mxu0 %v3799
      %5853 = vmatprep.subr.bf16.mxu0 %v3804
      %5854 = vmatpush1.bf16.msra.mxu0 %v3803
      %5855 = vmatprep.mubr.bf16.mxu0 %v1187
      %5856 = vmatmul.mubr.bf16.gmra.mrb[0].mxu0 %v1185
      %v5857 = vpop.f32.mrb[0].mxu0
      %v5858 = vadd.f32 %v5817, %v5857
      %v5859 = vpop.f32.mrb[0].mxu0
      %v5860 = vadd.f32 %v5819, %v5859
      %v5861 = vpop.f32.mrb[0].mxu0
      %v5862 = vpop.f32.mrb[0].mxu0
      %5863 = vdwg.mxu0
      %5864 = vmatprep.subr.bf16.mxu0 %v3808
      %5865 = vmatpush1.bf16.msra.mxu0 %v3807
      %5866 = vmatprep.subr.bf16.mxu0 %v3812
      %5867 = vmatpush1.bf16.msra.mxu0 %v3811
      %5868 = vmatprep.subr.bf16.mxu0 %v3816
      %5869 = vmatpush1.bf16.msra.mxu0 %v3815
      %5870 = vmatprep.subr.bf16.mxu0 %v3820
      %5871 = vmatpush1.bf16.msra.mxu0 %v3819
      %5872 = vmatprep.subr.bf16.mxu0 %v3824
      %5873 = vmatpush1.bf16.msra.mxu0 %v3823
      %5874 = vmatprep.subr.bf16.mxu0 %v3828
      %5875 = vmatpush1.bf16.msra.mxu0 %v3827
      %5876 = vmatprep.subr.bf16.mxu0 %v3832
      %5877 = vmatpush1.bf16.msra.mxu0 %v3831
      %5878 = vmatprep.subr.bf16.mxu0 %v3836
      %5879 = vmatpush1.bf16.msra.mxu0 %v3835
      %5880 = vmatprep.subr.bf16.mxu0 %v3840
      %5881 = vmatpush1.bf16.msra.mxu0 %v3839
      %5882 = vmatprep.subr.bf16.mxu0 %v3844
      %5883 = vmatpush1.bf16.msra.mxu0 %v3843
      %5884 = vmatprep.subr.bf16.mxu0 %v3848
      %5885 = vmatpush1.bf16.msra.mxu0 %v3847
      %5886 = vmatprep.subr.bf16.mxu0 %v3852
      %5887 = vmatpush1.bf16.msra.mxu0 %v3851
      %5888 = vmatprep.subr.bf16.mxu0 %v3856
      %5889 = vmatpush1.bf16.msra.mxu0 %v3855
      %5890 = vmatprep.subr.bf16.mxu0 %v3860
      %5891 = vmatpush1.bf16.msra.mxu0 %v3859
      %5892 = vmatprep.subr.bf16.mxu0 %v3864
      %5893 = vmatpush1.bf16.msra.mxu0 %v3863
      %5894 = vmatprep.subr.bf16.mxu0 %v3868
      %5895 = vmatpush1.bf16.msra.mxu0 %v3867
      %5896 = vmatprep.mubr.bf16.mxu0 %v1184
      %5897 = vmatmul.mubr.bf16.gmra.mrb[0].mxu0 %v1170
      %v5898 = vpop.f32.mrb[0].mxu0
      %v5899 = vadd.f32 %v5858, %v5898
      %v5900 = vpop.f32.mrb[0].mxu0
      %v5901 = vadd.f32 %v5860, %v5900
      %v5902 = vpop.f32.mrb[0].mxu0
      %v5903 = vpop.f32.mrb[0].mxu0
      %5904 = vdwg.mxu0
      %5905 = vmatprep.subr.bf16.mxu0 %v3872
      %5906 = vmatpush1.bf16.msra.mxu0 %v3871
      %5907 = vmatprep.subr.bf16.mxu0 %v3876
      %5908 = vmatpush1.bf16.msra.mxu0 %v3875
      %5909 = vmatprep.subr.bf16.mxu0 %v3880
      %5910 = vmatpush1.bf16.msra.mxu0 %v3879
      %5911 = vmatprep.subr.bf16.mxu0 %v3884
      %5912 = vmatpush1.bf16.msra.mxu0 %v3883
      %5913 = vmatprep.subr.bf16.mxu0 %v3888
      %5914 = vmatpush1.bf16.msra.mxu0 %v3887
      %5915 = vmatprep.subr.bf16.mxu0 %v3892
      %5916 = vmatpush1.bf16.msra.mxu0 %v3891
      %5917 = vmatprep.subr.bf16.mxu0 %v3896
      %5918 = vmatpush1.bf16.msra.mxu0 %v3895
      %5919 = vmatprep.subr.bf16.mxu0 %v3900
      %5920 = vmatpush1.bf16.msra.mxu0 %v3899
      %5921 = vmatprep.subr.bf16.mxu0 %v3904
      %5922 = vmatpush1.bf16.msra.mxu0 %v3903
      %5923 = vmatprep.subr.bf16.mxu0 %v3908
      %5924 = vmatpush1.bf16.msra.mxu0 %v3907
      %5925 = vmatprep.subr.bf16.mxu0 %v3912
      %5926 = vmatpush1.bf16.msra.mxu0 %v3911
      %5927 = vmatprep.subr.bf16.mxu0 %v3916
      %5928 = vmatpush1.bf16.msra.mxu0 %v3915
      %5929 = vmatprep.subr.bf16.mxu0 %v3920
      %5930 = vmatpush1.bf16.msra.mxu0 %v3919
      %5931 = vmatprep.subr.bf16.mxu0 %v3924
      %5932 = vmatpush1.bf16.msra.mxu0 %v3923
      %5933 = vmatprep.subr.bf16.mxu0 %v3928
      %5934 = vmatpush1.bf16.msra.mxu0 %v3927
      %5935 = vmatprep.subr.bf16.mxu0 %v3932
      %5936 = vmatpush1.bf16.msra.mxu0 %v3931
      %5937 = vmatprep.mubr.bf16.mxu0 %v1188
      %5938 = vmatmul.mubr.bf16.gmra.mrb[0].mxu0 %v1186
      %v5939 = vpop.f32.mrb[0].mxu0
      %v5940 = vadd.f32 %v5899, %v5939
      %v5941 = vpop.f32.mrb[0].mxu0
      %v5942 = vadd.f32 %v5901, %v5941
      %v5943 = vpop.f32.mrb[0].mxu0
      %v5944 = vpop.f32.mrb[0].mxu0
      %5945 = vdwg.mxu0
      %5946 = vmatprep.subr.bf16.mxu0 %v3936
      %5947 = vmatpush1.bf16.msra.mxu0 %v3935
      %5948 = vmatprep.subr.bf16.mxu0 %v3940
      %5949 = vmatpush1.bf16.msra.mxu0 %v3939
      %5950 = vmatprep.subr.bf16.mxu0 %v3944
      %5951 = vmatpush1.bf16.msra.mxu0 %v3943
      %5952 = vmatprep.subr.bf16.mxu0 %v3948
      %5953 = vmatpush1.bf16.msra.mxu0 %v3947
      %5954 = vmatprep.subr.bf16.mxu0 %v3952
      %5955 = vmatpush1.bf16.msra.mxu0 %v3951
      %5956 = vmatprep.subr.bf16.mxu0 %v3956
      %5957 = vmatpush1.bf16.msra.mxu0 %v3955
      %5958 = vmatprep.subr.bf16.mxu0 %v3960
      %5959 = vmatpush1.bf16.msra.mxu0 %v3959
      %5960 = vmatprep.subr.bf16.mxu0 %v3964
      %5961 = vmatpush1.bf16.msra.mxu0 %v3963
      %5962 = vmatprep.subr.bf16.mxu0 %v3968
      %5963 = vmatpush1.bf16.msra.mxu0 %v3967
      %5964 = vmatprep.subr.bf16.mxu0 %v3972
      %5965 = vmatpush1.bf16.msra.mxu0 %v3971
      %5966 = vmatprep.subr.bf16.mxu0 %v3976
      %5967 = vmatpush1.bf16.msra.mxu0 %v3975
      %5968 = vmatprep.subr.bf16.mxu0 %v3980
      %5969 = vmatpush1.bf16.msra.mxu0 %v3979
      %5970 = vmatprep.subr.bf16.mxu0 %v3984
      %5971 = vmatpush1.bf16.msra.mxu0 %v3983
      %5972 = vmatprep.subr.bf16.mxu0 %v3988
      %5973 = vmatpush1.bf16.msra.mxu0 %v3987
      %5974 = vmatprep.subr.bf16.mxu0 %v3992
      %5975 = vmatpush1.bf16.msra.mxu0 %v3991
      %5976 = vmatprep.subr.bf16.mxu0 %v3996
      %5977 = vmatpush1.bf16.msra.mxu0 %v3995
      %5978 = vmatprep.mubr.bf16.mxu0 %v1226
      %5979 = vmatmul.mubr.bf16.gmra.mrb[0].mxu0 %v1212
      %v5980 = vpop.f32.mrb[0].mxu0
      %v5981 = vadd.f32 %v5940, %v5980
      %v5982 = vpop.f32.mrb[0].mxu0
      %v5983 = vadd.f32 %v5942, %v5982
      %v5984 = vpop.f32.mrb[0].mxu0
      %v5985 = vpop.f32.mrb[0].mxu0
      %5986 = vdwg.mxu0
      %5987 = vmatprep.subr.bf16.mxu0 %v4000
      %5988 = vmatpush1.bf16.msra.mxu0 %v3999
      %5989 = vmatprep.subr.bf16.mxu0 %v4004
      %5990 = vmatpush1.bf16.msra.mxu0 %v4003
      %5991 = vmatprep.subr.bf16.mxu0 %v4008
      %5992 = vmatpush1.bf16.msra.mxu0 %v4007
      %5993 = vmatprep.subr.bf16.mxu0 %v4012
      %5994 = vmatpush1.bf16.msra.mxu0 %v4011
      %5995 = vmatprep.subr.bf16.mxu0 %v4016
      %5996 = vmatpush1.bf16.msra.mxu0 %v4015
      %5997 = vmatprep.subr.bf16.mxu0 %v4020
      %5998 = vmatpush1.bf16.msra.mxu0 %v4019
      %5999 = vmatprep.subr.bf16.mxu0 %v4024
      %6000 = vmatpush1.bf16.msra.mxu0 %v4023
      %6001 = vmatprep.subr.bf16.mxu0 %v4028
      %6002 = vmatpush1.bf16.msra.mxu0 %v4027
      %6003 = vmatprep.subr.bf16.mxu0 %v4032
      %6004 = vmatpush1.bf16.msra.mxu0 %v4031
      %6005 = vmatprep.subr.bf16.mxu0 %v4036
      %6006 = vmatpush1.bf16.msra.mxu0 %v4035
      %6007 = vmatprep.subr.bf16.mxu0 %v4040
      %6008 = vmatpush1.bf16.msra.mxu0 %v4039
      %6009 = vmatprep.subr.bf16.mxu0 %v4044
      %6010 = vmatpush1.bf16.msra.mxu0 %v4043
      %6011 = vmatprep.subr.bf16.mxu0 %v4048
      %6012 = vmatpush1.bf16.msra.mxu0 %v4047
      %6013 = vmatprep.subr.bf16.mxu0 %v4052
      %6014 = vmatpush1.bf16.msra.mxu0 %v4051
      %6015 = vmatprep.subr.bf16.mxu0 %v4056
      %6016 = vmatpush1.bf16.msra.mxu0 %v4055
      %6017 = vmatprep.subr.bf16.mxu0 %v4060
      %6018 = vmatpush1.bf16.msra.mxu0 %v4059
      %6019 = vmatprep.mubr.bf16.mxu0 %v1236
      %6020 = vmatmul.mubr.bf16.gmra.mrb[0].mxu0 %v1234
      %v6021 = vpop.f32.mrb[0].mxu0
      %v6022 = vadd.f32 %v5981, %v6021
      %v6023 = vpop.f32.mrb[0].mxu0
      %v6024 = vadd.f32 %v5983, %v6023
      %v6025 = vpop.f32.mrb[0].mxu0
      %v6026 = vpop.f32.mrb[0].mxu0
      %6027 = vdwg.mxu0
      %6028 = vmatprep.subr.bf16.mxu0 %v4064
      %6029 = vmatpush1.bf16.msra.mxu0 %v4063
      %6030 = vmatprep.subr.bf16.mxu0 %v4068
      %6031 = vmatpush1.bf16.msra.mxu0 %v4067
      %6032 = vmatprep.subr.bf16.mxu0 %v4072
      %6033 = vmatpush1.bf16.msra.mxu0 %v4071
      %6034 = vmatprep.subr.bf16.mxu0 %v4076
      %6035 = vmatpush1.bf16.msra.mxu0 %v4075
      %6036 = vmatprep.subr.bf16.mxu0 %v4080
      %6037 = vmatpush1.bf16.msra.mxu0 %v4079
      %6038 = vmatprep.subr.bf16.mxu0 %v4084
      %6039 = vmatpush1.bf16.msra.mxu0 %v4083
      %6040 = vmatprep.subr.bf16.mxu0 %v4088
      %6041 = vmatpush1.bf16.msra.mxu0 %v4087
      %6042 = vmatprep.subr.bf16.mxu0 %v4092
      %6043 = vmatpush1.bf16.msra.mxu0 %v4091
      %6044 = vmatprep.subr.bf16.mxu0 %v4096
      %6045 = vmatpush1.bf16.msra.mxu0 %v4095
      %6046 = vmatprep.subr.bf16.mxu0 %v4100
      %6047 = vmatpush1.bf16.msra.mxu0 %v4099
      %6048 = vmatprep.subr.bf16.mxu0 %v4104
      %6049 = vmatpush1.bf16.msra.mxu0 %v4103
      %6050 = vmatprep.subr.bf16.mxu0 %v4108
      %6051 = vmatpush1.bf16.msra.mxu0 %v4107
      %6052 = vmatprep.subr.bf16.mxu0 %v4112
      %6053 = vmatpush1.bf16.msra.mxu0 %v4111
      %6054 = vmatprep.subr.bf16.mxu0 %v4116
      %6055 = vmatpush1.bf16.msra.mxu0 %v4115
      %6056 = vmatprep.subr.bf16.mxu0 %v4120
      %6057 = vmatpush1.bf16.msra.mxu0 %v4119
      %6058 = vmatprep.subr.bf16.mxu0 %v4124
      %6059 = vmatpush1.bf16.msra.mxu0 %v4123
      %6060 = vmatprep.mubr.bf16.mxu0 %v1233
      %6061 = vmatmul.mubr.bf16.gmra.mrb[0].mxu0 %v1219
      %v6062 = vpop.f32.mrb[0].mxu0
      %v6063 = vadd.f32 %v6022, %v6062
      %v6064 = vpop.f32.mrb[0].mxu0
      %v6065 = vadd.f32 %v6024, %v6064
      %v6066 = vpop.f32.mrb[0].mxu0
      %v6067 = vpop.f32.mrb[0].mxu0
      %6068 = vdwg.mxu0
      %6069 = vmatprep.subr.bf16.mxu0 %v4128
      %6070 = vmatpush1.bf16.msra.mxu0 %v4127
      %6071 = vmatprep.subr.bf16.mxu0 %v4132
      %6072 = vmatpush1.bf16.msra.mxu0 %v4131
      %6073 = vmatprep.subr.bf16.mxu0 %v4136
      %6074 = vmatpush1.bf16.msra.mxu0 %v4135
      %6075 = vmatprep.subr.bf16.mxu0 %v4140
      %6076 = vmatpush1.bf16.msra.mxu0 %v4139
      %6077 = vmatprep.subr.bf16.mxu0 %v4144
      %6078 = vmatpush1.bf16.msra.mxu0 %v4143
      %6079 = vmatprep.subr.bf16.mxu0 %v4148
      %6080 = vmatpush1.bf16.msra.mxu0 %v4147
      %6081 = vmatprep.subr.bf16.mxu0 %v4152
      %6082 = vmatpush1.bf16.msra.mxu0 %v4151
      %6083 = vmatprep.subr.bf16.mxu0 %v4156
      %6084 = vmatpush1.bf16.msra.mxu0 %v4155
      %6085 = vmatprep.subr.bf16.mxu0 %v4160
      %6086 = vmatpush1.bf16.msra.mxu0 %v4159
      %6087 = vmatprep.subr.bf16.mxu0 %v4164
      %6088 = vmatpush1.bf16.msra.mxu0 %v4163
      %6089 = vmatprep.subr.bf16.mxu0 %v4168
      %6090 = vmatpush1.bf16.msra.mxu0 %v4167
      %6091 = vmatprep.subr.bf16.mxu0 %v4172
      %6092 = vmatpush1.bf16.msra.mxu0 %v4171
      %6093 = vmatprep.subr.bf16.mxu0 %v4176
      %6094 = vmatpush1.bf16.msra.mxu0 %v4175
      %6095 = vmatprep.subr.bf16.mxu0 %v4180
      %6096 = vmatpush1.bf16.msra.mxu0 %v4179
      %6097 = vmatprep.subr.bf16.mxu0 %v4184
      %6098 = vmatpush1.bf16.msra.mxu0 %v4183
      %6099 = vmatprep.subr.bf16.mxu0 %v4188
      %6100 = vmatpush1.bf16.msra.mxu0 %v4187
      %6101 = vmatprep.mubr.bf16.mxu0 %v1237
      %6102 = vmatmul.mubr.bf16.gmra.mrb[0].mxu0 %v1235
      %v6103 = vpop.f32.mrb[0].mxu0
      %v6104 = vadd.f32 %v6063, %v6103
      %v6105 = vpop.f32.mrb[0].mxu0
      %v6106 = vadd.f32 %v6065, %v6105
      %v6107 = vpop.f32.mrb[0].mxu0
      %v6108 = vpop.f32.mrb[0].mxu0
      %6109 = vdwg.mxu0
      %6110 = vmatprep.subr.bf16.mxu0 %v4192
      %6111 = vmatpush1.bf16.msra.mxu0 %v4191
      %6112 = vmatprep.subr.bf16.mxu0 %v4196
      %6113 = vmatpush1.bf16.msra.mxu0 %v4195
      %6114 = vmatprep.subr.bf16.mxu0 %v4200
      %6115 = vmatpush1.bf16.msra.mxu0 %v4199
      %6116 = vmatprep.subr.bf16.mxu0 %v4204
      %6117 = vmatpush1.bf16.msra.mxu0 %v4203
      %6118 = vmatprep.subr.bf16.mxu0 %v4208
      %6119 = vmatpush1.bf16.msra.mxu0 %v4207
      %6120 = vmatprep.subr.bf16.mxu0 %v4212
      %6121 = vmatpush1.bf16.msra.mxu0 %v4211
      %6122 = vmatprep.subr.bf16.mxu0 %v4216
      %6123 = vmatpush1.bf16.msra.mxu0 %v4215
      %6124 = vmatprep.subr.bf16.mxu0 %v4220
      %6125 = vmatpush1.bf16.msra.mxu0 %v4219
      %6126 = vmatprep.subr.bf16.mxu0 %v4224
      %6127 = vmatpush1.bf16.msra.mxu0 %v4223
      %6128 = vmatprep.subr.bf16.mxu0 %v4228
      %6129 = vmatpush1.bf16.msra.mxu0 %v4227
      %6130 = vmatprep.subr.bf16.mxu0 %v4232
      %6131 = vmatpush1.bf16.msra.mxu0 %v4231
      %6132 = vmatprep.subr.bf16.mxu0 %v4236
      %6133 = vmatpush1.bf16.msra.mxu0 %v4235
      %6134 = vmatprep.subr.bf16.mxu0 %v4240
      %6135 = vmatpush1.bf16.msra.mxu0 %v4239
      %6136 = vmatprep.subr.bf16.mxu0 %v4244
      %6137 = vmatpush1.bf16.msra.mxu0 %v4243
      %6138 = vmatprep.subr.bf16.mxu0 %v4248
      %6139 = vmatpush1.bf16.msra.mxu0 %v4247
      %6140 = vmatprep.subr.bf16.mxu0 %v4252
      %6141 = vmatpush1.bf16.msra.mxu0 %v4251
      %6142 = vmatprep.mubr.bf16.mxu0 %v1275
      %6143 = vmatmul.mubr.bf16.gmra.mrb[0].mxu0 %v1261
      %v6144 = vpop.f32.mrb[0].mxu0
      %v6145 = vadd.f32 %v6104, %v6144
      %v6146 = vpop.f32.mrb[0].mxu0
      %v6147 = vadd.f32 %v6106, %v6146
      %v6148 = vpop.f32.mrb[0].mxu0
      %v6149 = vpop.f32.mrb[0].mxu0
      %6150 = vdwg.mxu0
      %6151 = vmatprep.subr.bf16.mxu0 %v4256
      %6152 = vmatpush1.bf16.msra.mxu0 %v4255
      %6153 = vmatprep.subr.bf16.mxu0 %v4260
      %6154 = vmatpush1.bf16.msra.mxu0 %v4259
      %6155 = vmatprep.subr.bf16.mxu0 %v4264
      %6156 = vmatpush1.bf16.msra.mxu0 %v4263
      %6157 = vmatprep.subr.bf16.mxu0 %v4268
      %6158 = vmatpush1.bf16.msra.mxu0 %v4267
      %6159 = vmatprep.subr.bf16.mxu0 %v4272
      %6160 = vmatpush1.bf16.msra.mxu0 %v4271
      %6161 = vmatprep.subr.bf16.mxu0 %v4276
      %6162 = vmatpush1.bf16.msra.mxu0 %v4275
      %6163 = vmatprep.subr.bf16.mxu0 %v4280
      %6164 = vmatpush1.bf16.msra.mxu0 %v4279
      %6165 = vmatprep.subr.bf16.mxu0 %v4284
      %6166 = vmatpush1.bf16.msra.mxu0 %v4283
      %6167 = vmatprep.subr.bf16.mxu0 %v4288
      %6168 = vmatpush1.bf16.msra.mxu0 %v4287
      %6169 = vmatprep.subr.bf16.mxu0 %v4292
      %6170 = vmatpush1.bf16.msra.mxu0 %v4291
      %6171 = vmatprep.subr.bf16.mxu0 %v4296
      %6172 = vmatpush1.bf16.msra.mxu0 %v4295
      %6173 = vmatprep.subr.bf16.mxu0 %v4300
      %6174 = vmatpush1.bf16.msra.mxu0 %v4299
      %6175 = vmatprep.subr.bf16.mxu0 %v4304
      %6176 = vmatpush1.bf16.msra.mxu0 %v4303
      %6177 = vmatprep.subr.bf16.mxu0 %v4308
      %6178 = vmatpush1.bf16.msra.mxu0 %v4307
      %6179 = vmatprep.subr.bf16.mxu0 %v4312
      %6180 = vmatpush1.bf16.msra.mxu0 %v4311
      %6181 = vmatprep.subr.bf16.mxu0 %v4316
      %6182 = vmatpush1.bf16.msra.mxu0 %v4315
      %6183 = vmatprep.mubr.bf16.mxu0 %v1285
      %6184 = vmatmul.mubr.bf16.gmra.mrb[0].mxu0 %v1283
      %v6185 = vpop.f32.mrb[0].mxu0
      %v6186 = vadd.f32 %v6145, %v6185
      %v6187 = vpop.f32.mrb[0].mxu0
      %v6188 = vadd.f32 %v6147, %v6187
      %v6189 = vpop.f32.mrb[0].mxu0
      %v6190 = vpop.f32.mrb[0].mxu0
      %6191 = vdwg.mxu0
      %6192 = vmatprep.subr.bf16.mxu0 %v4320
      %6193 = vmatpush1.bf16.msra.mxu0 %v4319
      %6194 = vmatprep.subr.bf16.mxu0 %v4324
      %6195 = vmatpush1.bf16.msra.mxu0 %v4323
      %6196 = vmatprep.subr.bf16.mxu0 %v4328
      %6197 = vmatpush1.bf16.msra.mxu0 %v4327
      %6198 = vmatprep.subr.bf16.mxu0 %v4332
      %6199 = vmatpush1.bf16.msra.mxu0 %v4331
      %6200 = vmatprep.subr.bf16.mxu0 %v4336
      %6201 = vmatpush1.bf16.msra.mxu0 %v4335
      %6202 = vmatprep.subr.bf16.mxu0 %v4340
      %6203 = vmatpush1.bf16.msra.mxu0 %v4339
      %6204 = vmatprep.subr.bf16.mxu0 %v4344
      %6205 = vmatpush1.bf16.msra.mxu0 %v4343
      %6206 = vmatprep.subr.bf16.mxu0 %v4348
      %6207 = vmatpush1.bf16.msra.mxu0 %v4347
      %6208 = vmatprep.subr.bf16.mxu0 %v4352
      %6209 = vmatpush1.bf16.msra.mxu0 %v4351
      %6210 = vmatprep.subr.bf16.mxu0 %v4356
      %6211 = vmatpush1.bf16.msra.mxu0 %v4355
      %6212 = vmatprep.subr.bf16.mxu0 %v4360
      %6213 = vmatpush1.bf16.msra.mxu0 %v4359
      %6214 = vmatprep.subr.bf16.mxu0 %v4364
      %6215 = vmatpush1.bf16.msra.mxu0 %v4363
      %6216 = vmatprep.subr.bf16.mxu0 %v4368
      %6217 = vmatpush1.bf16.msra.mxu0 %v4367
      %6218 = vmatprep.subr.bf16.mxu0 %v4372
      %6219 = vmatpush1.bf16.msra.mxu0 %v4371
      %6220 = vmatprep.subr.bf16.mxu0 %v4376
      %6221 = vmatpush1.bf16.msra.mxu0 %v4375
      %6222 = vmatprep.subr.bf16.mxu0 %v4380
      %6223 = vmatpush1.bf16.msra.mxu0 %v4379
      %6224 = vmatprep.mubr.bf16.mxu0 %v1282
      %6225 = vmatmul.mubr.bf16.gmra.mrb[0].mxu0 %v1268
      %v6226 = vpop.f32.mrb[0].mxu0
      %v6227 = vadd.f32 %v6186, %v6226
      %v6228 = vpop.f32.mrb[0].mxu0
      %v6229 = vadd.f32 %v6188, %v6228
      %v6230 = vpop.f32.mrb[0].mxu0
      %v6231 = vpop.f32.mrb[0].mxu0
      %6232 = vdwg.mxu0
      %6233 = vmatprep.subr.bf16.mxu0 %v4384
      %6234 = vmatpush1.bf16.msra.mxu0 %v4383
      %6235 = vmatprep.subr.bf16.mxu0 %v4388
      %6236 = vmatpush1.bf16.msra.mxu0 %v4387
      %6237 = vmatprep.subr.bf16.mxu0 %v4392
      %6238 = vmatpush1.bf16.msra.mxu0 %v4391
      %6239 = vmatprep.subr.bf16.mxu0 %v4396
      %6240 = vmatpush1.bf16.msra.mxu0 %v4395
      %6241 = vmatprep.subr.bf16.mxu0 %v4400
      %6242 = vmatpush1.bf16.msra.mxu0 %v4399
      %6243 = vmatprep.subr.bf16.mxu0 %v4404
      %6244 = vmatpush1.bf16.msra.mxu0 %v4403
      %6245 = vmatprep.subr.bf16.mxu0 %v4408
      %6246 = vmatpush1.bf16.msra.mxu0 %v4407
      %6247 = vmatprep.subr.bf16.mxu0 %v4412
      %6248 = vmatpush1.bf16.msra.mxu0 %v4411
      %6249 = vmatprep.subr.bf16.mxu0 %v4416
      %6250 = vmatpush1.bf16.msra.mxu0 %v4415
      %6251 = vmatprep.subr.bf16.mxu0 %v4420
      %6252 = vmatpush1.bf16.msra.mxu0 %v4419
      %6253 = vmatprep.subr.bf16.mxu0 %v4424
      %6254 = vmatpush1.bf16.msra.mxu0 %v4423
      %6255 = vmatprep.subr.bf16.mxu0 %v4428
      %6256 = vmatpush1.bf16.msra.mxu0 %v4427
      %6257 = vmatprep.subr.bf16.mxu0 %v4432
      %6258 = vmatpush1.bf16.msra.mxu0 %v4431
      %6259 = vmatprep.subr.bf16.mxu0 %v4436
      %6260 = vmatpush1.bf16.msra.mxu0 %v4435
      %6261 = vmatprep.subr.bf16.mxu0 %v4440
      %6262 = vmatpush1.bf16.msra.mxu0 %v4439
      %6263 = vmatprep.subr.bf16.mxu0 %v4444
      %6264 = vmatpush1.bf16.msra.mxu0 %v4443
      %6265 = vmatprep.mubr.bf16.mxu0 %v1286
      %6266 = vmatmul.mubr.bf16.gmra.mrb[0].mxu0 %v1284
      %v6267 = vpop.f32.mrb[0].mxu0
      %v6268 = vadd.f32 %v6227, %v6267
      %v6269 = vpop.f32.mrb[0].mxu0
      %v6270 = vadd.f32 %v6229, %v6269
      %v6271 = vpop.f32.mrb[0].mxu0
      %v6272 = vpop.f32.mrb[0].mxu0
      %6273 = vdwg.mxu0
      %6274 = vmatprep.subr.bf16.mxu0 %v4448
      %6275 = vmatpush1.bf16.msra.mxu0 %v4447
      %6276 = vmatprep.subr.bf16.mxu0 %v4452
      %6277 = vmatpush1.bf16.msra.mxu0 %v4451
      %6278 = vmatprep.subr.bf16.mxu0 %v4456
      %6279 = vmatpush1.bf16.msra.mxu0 %v4455
      %6280 = vmatprep.subr.bf16.mxu0 %v4460
      %6281 = vmatpush1.bf16.msra.mxu0 %v4459
      %6282 = vmatprep.subr.bf16.mxu0 0
      %6283 = vmatpush1.bf16.msra.mxu0 0
      %6284 = vmatprep.subr.bf16.mxu0 0
      %6285 = vmatpush1.bf16.msra.mxu0 0
      %6286 = vmatprep.subr.bf16.mxu0 0
      %6287 = vmatpush1.bf16.msra.mxu0 0
      %6288 = vmatprep.subr.bf16.mxu0 0
      %6289 = vmatpush1.bf16.msra.mxu0 0
      %6290 = vmatprep.subr.bf16.mxu0 0
      %6291 = vmatpush1.bf16.msra.mxu0 0
      %6292 = vmatprep.subr.bf16.mxu0 0
      %6293 = vmatpush1.bf16.msra.mxu0 0
      %6294 = vmatprep.subr.bf16.mxu0 0
      %6295 = vmatpush1.bf16.msra.mxu0 0
      %6296 = vmatprep.subr.bf16.mxu0 0
      %6297 = vmatpush1.bf16.msra.mxu0 0
      %6298 = vmatprep.subr.bf16.mxu0 0
      %6299 = vmatpush1.bf16.msra.mxu0 0
      %6300 = vmatprep.subr.bf16.mxu0 0
      %6301 = vmatpush1.bf16.msra.mxu0 0
      %6302 = vmatprep.subr.bf16.mxu0 0
      %6303 = vmatpush1.bf16.msra.mxu0 0
      %6304 = vmatprep.subr.bf16.mxu0 0
      %6305 = vmatpush1.bf16.msra.mxu0 0
      %6306 = vmatprep.mubr.bf16.mxu0 0
      %6307 = vmatmul.mubr.bf16.gmra.mrb[0].mxu0 %v5247
      %v6308 = vpop.f32.mrb[0].mxu0
      %v6309 = vadd.f32 %v6268, %v6308
      %v6310 = vpop.f32.mrb[0].mxu0
      %v6311 = vadd.f32 %v6270, %v6310
      %v6312 = vpop.f32.mrb[0].mxu0
      %v6313 = vpop.f32.mrb[0].mxu0
      %6314 = vdwg.mxu0
      %v6315 = vmax.f32 %v5776, 0.0
      %v6316 = vmax.f32 %v5778, 0.0
      %v6317 = vmax.f32 %v6309, 0.0
      %v6318 = vmax.f32 %v6311, 0.0
      %v6319 = vpack.c.bf16 %v6315, %v6315
      %v6320 = vpack.c.bf16 %v6316, %v6316
      %v6321 = vpack.c.bf16 %v6317, %v6317
      %v6322 = vpack.c.bf16 %v6318, %v6318
      %v6323 = vld [vmem:[%s314] sm:$0xf]
      %v6324 = vld [vmem:[%s314 + $0x4] sm:$0xf]
      %v6325 = vld [vmem:[%s314 + $0x8] sm:$0xf]
      %v6326 = vld [vmem:[%s314 + $0xc] sm:$0xf]
      %v6327 = vld [vmem:[%s314 + $0x10] sm:$0xf]
      %v6328 = vld [vmem:[%s314 + $0x14] sm:$0xf]
      %v6329 = vld [vmem:[%s314 + $0x18] sm:$0xf]
      %v6330 = vld [vmem:[%s314 + $0x1c] sm:$0xf]
      %v6331 = vld [vmem:[%s314 + $0x20] sm:$0xf]
      %v6332 = vld [vmem:[%s314 + $0x24] sm:$0xf]
      %v6333 = vld [vmem:[%s314 + $0x28] sm:$0xf]
      %v6334 = vld [vmem:[%s314 + $0x2c] sm:$0xf]
      %v6335 = vld [vmem:[%s314 + $0x30] sm:$0xf]
      %v6336 = vld [vmem:[%s314 + $0x34] sm:$0xf]
      %v6337 = vld [vmem:[%s314 + $0x38] sm:$0xf]
      %v6338 = vld [vmem:[%s314 + $0x3c] sm:$0xf]
      %v6339 = vld [vmem:[%s314 + $0x40] sm:$0xf]
      %v6340 = vld [vmem:[%s314 + $0x44] sm:$0xf]
      %v6341 = vld [vmem:[%s314 + $0x48] sm:$0xf]
      %v6342 = vld [vmem:[%s314 + $0x4c] sm:$0xf]
      %v6343 = vld [vmem:[%s314 + $0x50] sm:$0xf]
      %v6344 = vld [vmem:[%s314 + $0x54] sm:$0xf]
      %v6345 = vld [vmem:[%s314 + $0x58] sm:$0xf]
      %v6346 = vld [vmem:[%s314 + $0x5c] sm:$0xf]
      %v6347 = vld [vmem:[%s314 + $0x60] sm:$0xf]
      %v6348 = vld [vmem:[%s314 + $0x64] sm:$0xf]
      %v6349 = vld [vmem:[%s314 + $0x68] sm:$0xf]
      %v6350 = vld [vmem:[%s314 + $0x6c] sm:$0xf]
      %v6351 = vld [vmem:[%s314 + $0x70] sm:$0xf]
      %v6352 = vld [vmem:[%s314 + $0x74] sm:$0xf]
      %v6353 = vld [vmem:[%s314 + $0x78] sm:$0xf]
      %v6354 = vld [vmem:[%s314 + $0x7c] sm:$0xf]
      %v6355 = vld [vmem:[%s314 + $0x80] sm:$0xf]
      %v6356 = vld [vmem:[%s314 + $0x84] sm:$0xf]
      %v6357 = vld [vmem:[%s314 + $0x88] sm:$0xf]
      %v6358 = vld [vmem:[%s314 + $0x8c] sm:$0xf]
      %v6359 = vld [vmem:[%s314 + $0x90] sm:$0xf]
      %v6360 = vld [vmem:[%s314 + $0x94] sm:$0xf]
      %v6361 = vld [vmem:[%s314 + $0x98] sm:$0xf]
      %v6362 = vld [vmem:[%s314 + $0x9c] sm:$0xf]
      %v6363 = vld [vmem:[%s314 + $0xa0] sm:$0xf]
      %v6364 = vld [vmem:[%s314 + $0xa4] sm:$0xf]
      %v6365 = vld [vmem:[%s314 + $0xa8] sm:$0xf]
      %v6366 = vld [vmem:[%s314 + $0xac] sm:$0xf]
      %v6367 = vld [vmem:[%s314 + $0xb0] sm:$0xf]
      %v6368 = vld [vmem:[%s314 + $0xb4] sm:$0xf]
      %v6369 = vld [vmem:[%s314 + $0xb8] sm:$0xf]
      %v6370 = vld [vmem:[%s314 + $0xbc] sm:$0xf]
      %v6371 = vld [vmem:[%s314 + $0xc0] sm:$0xf]
      %v6372 = vld [vmem:[%s314 + $0xc4] sm:$0xf]
      %v6373 = vld [vmem:[%s314 + $0xc8] sm:$0xf]
      %v6374 = vld [vmem:[%s314 + $0xcc] sm:$0xf]
      %v6375 = vld [vmem:[%s314 + $0xd0] sm:$0xf]
      %v6376 = vld [vmem:[%s314 + $0xd4] sm:$0xf]
      %v6377 = vld [vmem:[%s314 + $0xd8] sm:$0xf]
      %v6378 = vld [vmem:[%s314 + $0xdc] sm:$0xf]
      %v6379 = vld [vmem:[%s314 + $0xe0] sm:$0xf]
      %v6380 = vld [vmem:[%s314 + $0xe4] sm:$0xf]
      %v6381 = vld [vmem:[%s314 + $0xe8] sm:$0xf]
      %v6382 = vld [vmem:[%s314 + $0xec] sm:$0xf]
      %v6383 = vld [vmem:[%s314 + $0xf0] sm:$0xf]
      %v6384 = vld [vmem:[%s314 + $0xf4] sm:$0xf]
      %v6385 = vld [vmem:[%s314 + $0xf8] sm:$0xf]
      %v6386 = vld [vmem:[%s314 + $0xfc] sm:$0xf]
      %v6387 = vld [vmem:[%s317] sm:$0x1]
      %v6389 = vlaneseq
      %v6390 = vshrl.u32 %v6389, 7
      %v6391 = vsub.s32 0, %v6390
      %v6392 = vrot.slane %v6387, %v6391
      %v6458 = vunpack.c.l.b16 %v6323
      %v6459 = vunpack.c.l.b16 %v6324
      %v6460 = vunpack.c.l.b16 %v6325
      %v6461 = vunpack.c.l.b16 %v6326
      %v6462 = vunpack.c.l.b16 %v6327
      %v6463 = vunpack.c.l.b16 %v6328
      %v6464 = vunpack.c.l.b16 %v6329
      %v6465 = vunpack.c.l.b16 %v6330
      %v6466 = vunpack.c.l.b16 %v6331
      %v6467 = vunpack.c.l.b16 %v6332
      %v6468 = vunpack.c.l.b16 %v6333
      %v6469 = vunpack.c.l.b16 %v6334
      %v6470 = vunpack.c.l.b16 %v6335
      %v6471 = vunpack.c.l.b16 %v6336
      %v6472 = vunpack.c.l.b16 %v6337
      %v6473 = vunpack.c.l.b16 %v6338
      %v6474 = vunpack.c.l.b16 %v6339
      %v6475 = vunpack.c.l.b16 %v6340
      %v6476 = vunpack.c.l.b16 %v6341
      %v6477 = vunpack.c.l.b16 %v6342
      %v6478 = vunpack.c.l.b16 %v6343
      %v6479 = vunpack.c.l.b16 %v6344
      %v6480 = vunpack.c.l.b16 %v6345
      %v6481 = vunpack.c.l.b16 %v6346
      %v6482 = vunpack.c.l.b16 %v6347
      %v6483 = vunpack.c.l.b16 %v6348
      %v6484 = vunpack.c.l.b16 %v6349
      %v6485 = vunpack.c.l.b16 %v6350
      %v6486 = vunpack.c.l.b16 %v6351
      %v6487 = vunpack.c.l.b16 %v6352
      %v6488 = vunpack.c.l.b16 %v6353
      %v6489 = vunpack.c.l.b16 %v6354
      %v6490 = vunpack.c.l.b16 %v6355
      %v6491 = vunpack.c.l.b16 %v6356
      %v6492 = vunpack.c.l.b16 %v6357
      %v6493 = vunpack.c.l.b16 %v6358
      %v6494 = vunpack.c.l.b16 %v6359
      %v6495 = vunpack.c.l.b16 %v6360
      %v6496 = vunpack.c.l.b16 %v6361
      %v6497 = vunpack.c.l.b16 %v6362
      %v6498 = vunpack.c.l.b16 %v6363
      %v6499 = vunpack.c.l.b16 %v6364
      %v6500 = vunpack.c.l.b16 %v6365
      %v6501 = vunpack.c.l.b16 %v6366
      %v6502 = vunpack.c.l.b16 %v6367
      %v6503 = vunpack.c.l.b16 %v6368
      %v6504 = vunpack.c.l.b16 %v6369
      %v6505 = vunpack.c.l.b16 %v6370
      %v6506 = vunpack.c.l.b16 %v6371
      %v6507 = vunpack.c.l.b16 %v6372
      %v6508 = vunpack.c.l.b16 %v6373
      %v6509 = vunpack.c.l.b16 %v6374
      %v6510 = vunpack.c.l.b16 %v6375
      %v6511 = vunpack.c.l.b16 %v6376
      %v6512 = vunpack.c.l.b16 %v6377
      %v6513 = vunpack.c.l.b16 %v6378
      %v6514 = vunpack.c.l.b16 %v6379
      %v6515 = vunpack.c.l.b16 %v6380
      %v6516 = vunpack.c.l.b16 %v6381
      %v6517 = vunpack.c.l.b16 %v6382
      %v6518 = vunpack.c.l.b16 %v6383
      %v6519 = vunpack.c.l.b16 %v6384
      %v6520 = vunpack.c.l.b16 %v6385
      %v6521 = vunpack.c.l.b16 %v6386
      %v6522 = vpack.c.b16 %v6459, %v6458
      %v6523 = vpack.c.b16 %v6461, %v6460
      %v6524 = vpack.c.b16 %v6463, %v6462
      %v6525 = vpack.c.b16 %v6465, %v6464
      %v6526 = vpack.c.b16 %v6467, %v6466
      %v6527 = vpack.c.b16 %v6469, %v6468
      %v6528 = vpack.c.b16 %v6471, %v6470
      %v6529 = vpack.c.b16 %v6473, %v6472
      %v6530 = vpack.c.b16 %v6475, %v6474
      %v6531 = vpack.c.b16 %v6477, %v6476
      %v6532 = vpack.c.b16 %v6479, %v6478
      %v6533 = vpack.c.b16 %v6481, %v6480
      %v6534 = vpack.c.b16 %v6483, %v6482
      %v6535 = vpack.c.b16 %v6485, %v6484
      %v6536 = vpack.c.b16 %v6487, %v6486
      %v6537 = vpack.c.b16 %v6489, %v6488
      %v6538 = vpack.c.b16 %v6491, %v6490
      %v6539 = vpack.c.b16 %v6493, %v6492
      %v6540 = vpack.c.b16 %v6495, %v6494
      %v6541 = vpack.c.b16 %v6497, %v6496
      %v6542 = vpack.c.b16 %v6499, %v6498
      %v6543 = vpack.c.b16 %v6501, %v6500
      %v6544 = vpack.c.b16 %v6503, %v6502
      %v6545 = vpack.c.b16 %v6505, %v6504
      %v6546 = vpack.c.b16 %v6507, %v6506
      %v6547 = vpack.c.b16 %v6509, %v6508
      %v6548 = vpack.c.b16 %v6511, %v6510
      %v6549 = vpack.c.b16 %v6513, %v6512
      %v6550 = vpack.c.b16 %v6515, %v6514
      %v6551 = vpack.c.b16 %v6517, %v6516
      %v6552 = vpack.c.b16 %v6519, %v6518
      %v6553 = vpack.c.b16 %v6521, %v6520
      %6586 = vmatprep.subr.bf16.mxu0 0
      %6587 = vmatpush1.bf16.msra.mxu0 %v6522
      %6588 = vmatprep.subr.bf16.mxu0 0
      %6589 = vmatpush1.bf16.msra.mxu0 %v6523
      %6590 = vmatprep.subr.bf16.mxu0 0
      %6591 = vmatpush1.bf16.msra.mxu0 %v6524
      %6592 = vmatprep.subr.bf16.mxu0 0
      %6593 = vmatpush1.bf16.msra.mxu0 %v6525
      %6594 = vmatprep.subr.bf16.mxu0 0
      %6595 = vmatpush1.bf16.msra.mxu0 %v6526
      %6596 = vmatprep.subr.bf16.mxu0 0
      %6597 = vmatpush1.bf16.msra.mxu0 %v6527
      %6598 = vmatprep.subr.bf16.mxu0 0
      %6599 = vmatpush1.bf16.msra.mxu0 %v6528
      %6600 = vmatprep.subr.bf16.mxu0 0
      %6601 = vmatpush1.bf16.msra.mxu0 %v6529
      %6602 = vmatprep.subr.bf16.mxu0 0
      %6603 = vmatpush1.bf16.msra.mxu0 %v6530
      %6604 = vmatprep.subr.bf16.mxu0 0
      %6605 = vmatpush1.bf16.msra.mxu0 %v6531
      %6606 = vmatprep.subr.bf16.mxu0 0
      %6607 = vmatpush1.bf16.msra.mxu0 %v6532
      %6608 = vmatprep.subr.bf16.mxu0 0
      %6609 = vmatpush1.bf16.msra.mxu0 %v6533
      %6610 = vmatprep.subr.bf16.mxu0 0
      %6611 = vmatpush1.bf16.msra.mxu0 %v6534
      %6612 = vmatprep.subr.bf16.mxu0 0
      %6613 = vmatpush1.bf16.msra.mxu0 %v6535
      %6614 = vmatprep.subr.bf16.mxu0 0
      %6615 = vmatpush1.bf16.msra.mxu0 %v6536
      %6616 = vmatprep.subr.bf16.mxu0 0
      %6617 = vmatpush1.bf16.msra.mxu0 %v6537
      %6618 = vmatprep.mubr.bf16.mxu0 %v6320
      %6619 = vmatmul.mubr.bf16.gmra.mrb[0].mxu0 %v6319
      %v6620 = vpop.f32.mrb[0].mxu0
      %v6621 = vadd.f32 %v6392, %v6620
      %v6622 = vpop.f32.mrb[0].mxu0
      %v6623 = vpop.f32.mrb[0].mxu0
      %v6624 = vpop.f32.mrb[0].mxu0
      %6625 = vdwg.mxu0
      %6626 = vmatprep.subr.bf16.mxu0 0
      %6627 = vmatpush1.bf16.msra.mxu0 %v6538
      %6628 = vmatprep.subr.bf16.mxu0 0
      %6629 = vmatpush1.bf16.msra.mxu0 %v6539
      %6630 = vmatprep.subr.bf16.mxu0 0
      %6631 = vmatpush1.bf16.msra.mxu0 %v6540
      %6632 = vmatprep.subr.bf16.mxu0 0
      %6633 = vmatpush1.bf16.msra.mxu0 %v6541
      %6634 = vmatprep.subr.bf16.mxu0 0
      %6635 = vmatpush1.bf16.msra.mxu0 %v6542
      %6636 = vmatprep.subr.bf16.mxu0 0
      %6637 = vmatpush1.bf16.msra.mxu0 %v6543
      %6638 = vmatprep.subr.bf16.mxu0 0
      %6639 = vmatpush1.bf16.msra.mxu0 %v6544
      %6640 = vmatprep.subr.bf16.mxu0 0
      %6641 = vmatpush1.bf16.msra.mxu0 %v6545
      %6642 = vmatprep.subr.bf16.mxu0 0
      %6643 = vmatpush1.bf16.msra.mxu0 %v6546
      %6644 = vmatprep.subr.bf16.mxu0 0
      %6645 = vmatpush1.bf16.msra.mxu0 %v6547
      %6646 = vmatprep.subr.bf16.mxu0 0
      %6647 = vmatpush1.bf16.msra.mxu0 %v6548
      %6648 = vmatprep.subr.bf16.mxu0 0
      %6649 = vmatpush1.bf16.msra.mxu0 %v6549
      %6650 = vmatprep.subr.bf16.mxu0 0
      %6651 = vmatpush1.bf16.msra.mxu0 %v6550
      %6652 = vmatprep.subr.bf16.mxu0 0
      %6653 = vmatpush1.bf16.msra.mxu0 %v6551
      %6654 = vmatprep.subr.bf16.mxu0 0
      %6655 = vmatpush1.bf16.msra.mxu0 %v6552
      %6656 = vmatprep.subr.bf16.mxu0 0
      %6657 = vmatpush1.bf16.msra.mxu0 %v6553
      %6658 = vmatprep.mubr.bf16.mxu0 %v6322
      %6659 = vmatmul.mubr.bf16.gmra.mrb[0].mxu0 %v6321
      %v6660 = vpop.f32.mrb[0].mxu0
      %v6661 = vadd.f32 %v6621, %v6660
      %v6662 = vpop.f32.mrb[0].mxu0
      %v6663 = vpop.f32.mrb[0].mxu0
      %v6664 = vpop.f32.mrb[0].mxu0
      %6665 = vdwg.mxu0
      %6666 = vst [vmem:[%s324] sm:$0x3] %v6661
      %p6667 = scmp.lt.s32.totalorder %s20, 1
      %s6668 = scalar_select %p6667, %s20, 1
      %p6669 = scmp.lt.s32.totalorder %s21, 0
      %s6670 = scalar_select %p6669, %s21, 0
      %s6671 = sadd.s32 %s6670, %s6668
      %s6672 = smul.addr %s6671, 2
      %s6673 = scalar_lea.vmem %s5, %s6672
      // Predicated region
      $region41: #{model_forward.7} parent=39 // pred_check
        %p6674 = pneg %p180
      $region42: #{model_forward.7} parent=39 // pred_check_branch
        %6676 = sbr.rel (%p6674) target = $region44
      $region43: #{model_forward.7} parent=39 // pred_region
        _
      $region44: #{model_forward.7} parent=39 // pred_fallthru
        _
    $region40: #{model_forward.7} parent=5 // pred_fallthru
      _
    %p6677 = scmp.le.s32.totalorder 2, %s11
    // Predicated region
    $region45: #{model_forward.7} parent=5 // pred_check
      %p6678 = pneg %p6677
    $region46: #{model_forward.7} parent=5 // pred_check_branch
      %6680 = sbr.rel (%p6678) target = $region48
    $region47: #{model_forward.7} parent=5 // pred_region
      %s6681 = ssub.s32 %s11, 2
      // Predicated region
      $region49: #{model_forward.7} parent=47 // pred_check
        %p6682 = pneg %p186
      $region50: #{model_forward.7} parent=47 // pred_check_branch
        %6684 = sbr.rel (%p6682) target = $region52
      $region51: #{model_forward.7} parent=47 // pred_region
        %p6685 = scmp.lt.s32.totalorder %s22, 1
        %s6686 = scalar_select %p6685, %s22, 1
        %p6687 = scmp.lt.s32.totalorder %s23, 0
        %s6688 = scalar_select %p6687, %s23, 0
        %s6689 = sadd.s32 %s6688, %s6686
        %s6690 = smul.addr %s6689, 2
        %s6691 = scalar_lea.vmem %s5, %s6690
      $region52: #{model_forward.7} parent=47 // pred_fallthru
        _
    $region48: #{model_forward.7} parent=5 // pred_fallthru
      _
  $region6: #{model_forward.7} parent=0 // loop_footer
    %s15 = sadd.s32 1, %s11
  $region7: #{model_forward.7} parent=0 // loop_footer_branch
    %10 = sbr.rel target = $region3
  $region8: #{model_forward.7} parent=0 // loop_exit
    _

</llo_original>
